<compile_context>
chip_gen: v7x
topology: tpu7x:2x2x1
jax: 0.10.0
libtpu: 0.0.40
codegen_flags: <defaults>
</compile_context>

<pallas_src>
import math
import jax
import jax.numpy as jnp
from jax.experimental import pallas as pl
from jax.experimental.pallas import tpu as pltpu


# ------------------------ weight packing (host side) ------------------------

def _pack_gate_cols(w_f, w_b):
    """PyTorch (4H, In) fwd/bwd ih-style weights -> (In, 8H) RHS.

    Column layout is gate-major [i, f, g, o]; each gate block is
    [fwd H | bwd H], matching the in-kernel [h_fwd | h_bwd] state layout.
    """
    H = w_f.shape[0] // 4
    cols = []
    for g in range(4):
        cols.append(w_f[g * H:(g + 1) * H, :].T)      # (In, H)  fwd gate cols
        cols.append(w_b[g * H:(g + 1) * H, :].T)      # (In, H)  bwd gate cols
    return jnp.concatenate(cols, axis=1)              # (In, 8H)


def _pack_recur(whh_f, whh_b):
    """PyTorch (4H, H) hh weights (fwd, bwd) -> block-diagonal (2H, 8H) RHS."""
    H = whh_f.shape[1]
    z = jnp.zeros((H, H), jnp.float32)
    cols = []
    for g in range(4):
        wf = whh_f[g * H:(g + 1) * H, :].T            # (H, H)
        wb = whh_b[g * H:(g + 1) * H, :].T
        cols.append(jnp.concatenate([wf, z], axis=0))  # fwd gate cols: h_fwd rows
        cols.append(jnp.concatenate([z, wb], axis=0))  # bwd gate cols: h_bwd rows
    return jnp.concatenate(cols, axis=1)              # (2H, 8H)


def _pack_bias(bih_f, bhh_f, bih_b, bhh_b, batch):
    """Combined bias, gate-major [fwd|bwd] layout, pre-broadcast to (B, 8H)."""
    H = bih_f.shape[0] // 4
    bf, bb = bih_f + bhh_f, bih_b + bhh_b
    segs = []
    for g in range(4):
        segs.append(bf[g * H:(g + 1) * H])
        segs.append(bb[g * H:(g + 1) * H])
    b = jnp.concatenate(segs)[None, :]                 # (1, 8H)
    return jnp.broadcast_to(b, (batch, 4 * 2 * H)).astype(jnp.float32)


def make_modality_params(key, feat_size, H, H_o1, H_o2, nlayers, batch):
    """Random PyTorch-default init + fused packing for one bidirectional LSTM.

    Returns [(W_fused, bias)] per layer:
      layer 0:  W_fused (F + 2*H_o1 + 2*H_o2 + 2H, 8H), rows ordered
                [x | other1 [fwd(zero)|bwd] | other2 [fwd(zero)|bwd] | own h]
      layer >0: W_fused (2H + 2H, 8H), rows [layer input | own h]
      bias:     (B, 8H) pre-broadcast.
    """
    bound = 1.0 / math.sqrt(H)

    def u(k, shape):
        return jax.random.uniform(k, shape, minval=-bound, maxval=bound,
                                  dtype=jnp.float32)

    in0 = feat_size + H_o1 + H_o2
    params = []
    for l in range(nlayers):
        in_sz = in0 if l == 0 else 2 * H
        key, k1, k2, k3, k4, k5, k6, k7, k8 = jax.random.split(key, 9)
        wih_f, whh_f = u(k1, (4 * H, in_sz)), u(k2, (4 * H, H))
        bih_f, bhh_f = u(k3, (4 * H,)), u(k4, (4 * H,))
        wih_b, whh_b = u(k5, (4 * H, in_sz)), u(k6, (4 * H, H))
        bih_b, bhh_b = u(k7, (4 * H,)), u(k8, (4 * H,))

        w_in = _pack_gate_cols(wih_f, wih_b)           # (in_sz, 8H)
        w_h = _pack_recur(whh_f, whh_b)                # (2H, 8H)
        b = _pack_bias(bih_f, bhh_f, bih_b, bhh_b, batch)

        if l == 0:
            wx = w_in[0:feat_size]                               # (F, 8H)
            wo1 = w_in[feat_size:feat_size + H_o1]               # (H_o1, 8H)
            wo2 = w_in[feat_size + H_o1:feat_size + H_o1 + H_o2]  # (H_o2, 8H)
            z1 = jnp.zeros((H_o1, 8 * H), jnp.float32)           # fwd half unused
            z2 = jnp.zeros((H_o2, 8 * H), jnp.float32)
            w_fused = jnp.concatenate([wx, z1, wo1, z2, wo2, w_h], axis=0)
        else:
            w_fused = jnp.concatenate([w_in, w_h], axis=0)       # (4H, 8H)
        params.append((w_fused, b))
    return params


# ------------------------------ fused kernel ------------------------------

def make_fclstm_kernel(nlayers, seq_len, th, vh, ah, batch):

    def dot(a, b):
        return jnp.dot(a, b, preferred_element_type=jnp.float32)

    def cell(gates, c_prev, H2):
        # gates: (B, 8H), gate-major [i|f|g|o], each gate [fwd H | bwd H].
        # One full-128-lane sigmoid + one full-128-lane tanh, then slice.
        sig = jax.nn.sigmoid(gates)
        tnh = jnp.tanh(gates)
        i_g = sig[:, 0 * H2:1 * H2]
        f_g = sig[:, 1 * H2:2 * H2]
        g_g = tnh[:, 2 * H2:3 * H2]
        o_g = sig[:, 3 * H2:4 * H2]
        c_new = f_g * c_prev + i_g * g_g
        h_new = o_g * jnp.tanh(c_new)
        return h_new, c_new

    def kernel(xt_ref, xv_ref, xa_ref, *rest):
        it = iter(rest)
        tws = [(next(it), next(it)) for _ in range(nlayers)]
        vws = [(next(it), next(it)) for _ in range(nlayers)]
        aws = [(next(it), next(it)) for _ in range(nlayers)]
        dec_w_ref = next(it)
        dec_b_ref = next(it)
        out_ref = next(it)

        def zero_state(H):
            return [(jnp.zeros((batch, 2 * H), jnp.float32),
                     jnp.zeros((batch, 2 * H), jnp.float32))
                    for _ in range(nlayers)]

        st_t, st_v, st_a = zero_state(th), zero_state(vh), zero_state(ah)
        s_t = jnp.zeros((batch, 2 * th), jnp.float32)
        s_v = jnp.zeros((batch, 2 * vh), jnp.float32)
        s_a = jnp.zeros((batch, 2 * ah), jnp.float32)

        def run_stack(x_t, feat1, feat2, state, ws, H):
            H2 = 2 * H
            new_state = []
            # layer 0: ONE fused matmul for x + both cross-modal features +
            # own recurrent state (row-stacked RHS built on the host).
            w0, b0 = ws[0]
            h0, c0 = state[0]
            lhs0 = jnp.concatenate([x_t, feat1, feat2, h0], axis=1)
            gates = dot(lhs0, w0[...]) + b0[...]
            h_new, c_new = cell(gates, c0, H2)
            new_state.append((h_new, c_new))
            layer_in = h_new
            for l in range(1, nlayers):
                wl, bl = ws[l]
                hl, cl = state[l]
                lhs = jnp.concatenate([layer_in, hl], axis=1)
                gates = dot(lhs, wl[...]) + bl[...]
                h_new, c_new = cell(gates, cl, H2)
                new_state.append((h_new, c_new))
                layer_in = h_new
            return layer_in, new_state       # last-layer [fwd|bwd] hidden

        # Time recurrence fully unrolled (seq_len is static): equivalent to
        # lax.fori_loop(0, seq_len, ..., unroll=True) — single straight-line
        # trace, no per-step grid overhead, states live in vregs.
        for t in range(seq_len):
            x_t = xt_ref[t]
            x_v = xv_ref[t]
            x_a = xa_ref[t]
            # previous-step last-layer hiddens (zeros at t == 0) — all three
            # LSTM inputs use the pre-update features, as in the reference.
            ht_prev = st_t[nlayers - 1][0]
            hv_prev = st_v[nlayers - 1][0]
            ha_prev = st_a[nlayers - 1][0]

            ht_new, st_t = run_stack(x_t, hv_prev, ha_prev, st_t, tws, th)
            hv_new, st_v = run_stack(x_v, ht_prev, ha_prev, st_v, vws, vh)
            ha_new, st_a = run_stack(x_a, ht_prev, hv_prev, st_a, aws, ah)

            s_t = s_t + ht_new
            s_v = s_v + hv_new
            s_a = s_a + ha_new

        # decoder: VPU multiply + lane reduction.  dec_w already folds in the
        # 1/seq_len mean and zeros the fwd halves (only h_n[-1] counts).
        dec_in = jnp.concatenate([s_t, s_v, s_a], axis=1)
        out = jnp.sum(dec_in * dec_w_ref[...], axis=-1, keepdims=True)
        out_ref[...] = out + dec_b_ref[...]

    return kernel


def fclstm_forward(t_in, v_in, a_in, t_params, v_params, a_params,
                   dec_w, dec_b, nlayers, th, vh, ah):
    B, S, _ = t_in.shape

    # time-major (S, B, F): the per-step slice is a cheap leading-axis index.
    xt = jnp.transpose(t_in, (1, 0, 2)).astype(jnp.float32)
    xv = jnp.transpose(v_in, (1, 0, 2)).astype(jnp.float32)
    xa = jnp.transpose(a_in, (1, 0, 2)).astype(jnp.float32)

    flat_w = []
    for params in (t_params, v_params, a_params):
        for (w, b) in params:
            flat_w += [w, b]

    inputs = [xt, xv, xa] + flat_w + [dec_w, dec_b]

    kernel = make_fclstm_kernel(nlayers, S, th, vh, ah, B)

    return pl.pallas_call(
        kernel,
        out_shape=jax.ShapeDtypeStruct((B, 1), jnp.float32),
        in_specs=[pl.BlockSpec(memory_space=pltpu.MemorySpace.VMEM)
                  for _ in inputs],
        out_specs=pl.BlockSpec(memory_space=pltpu.MemorySpace.VMEM),
    )(*inputs)


# ---------------------------------- main ----------------------------------

if __name__ == "__main__":
    SEQ_LEN = 8
    TEXT_SIZE, VISUAL_SIZE, ACC_SIZE = 10, 12, 6
    TH, VH, AH = 16, 16, 16
    BATCH = 2
    NLAYERS = 2

    key = jax.random.PRNGKey(0)
    k_t, k_v, k_a, k_tp, k_vp, k_ap, k_dec = jax.random.split(key, 7)

    t_input = jax.random.normal(k_t, (BATCH, SEQ_LEN, TEXT_SIZE), dtype=jnp.float32)
    v_input = jax.random.normal(k_v, (BATCH, SEQ_LEN, VISUAL_SIZE), dtype=jnp.float32)
    a_input = jax.random.normal(k_a, (BATCH, SEQ_LEN, ACC_SIZE), dtype=jnp.float32)

    # Bidirectional multi-layer LSTMs (PyTorch default uniform init), packed.
    t_params = make_modality_params(k_tp, TEXT_SIZE, TH, VH, AH, NLAYERS, BATCH)
    v_params = make_modality_params(k_vp, VISUAL_SIZE, VH, TH, AH, NLAYERS, BATCH)
    a_params = make_modality_params(k_ap, ACC_SIZE, AH, TH, VH, NLAYERS, BATCH)

    # decoder: nn.Linear(TH+VH+AH, 1); weight xavier_normal(fan_in=1, fan_out=D),
    # bias 0.  Packed as one lane row over [s_t | s_v | s_a] (each [fwd|bwd]):
    # fwd halves zeroed, 1/seq_len mean folded in.
    D = TH + VH + AH
    dec_std = math.sqrt(2.0 / (1 + D))
    dec_w_raw = jax.random.normal(k_dec, (1, D), dtype=jnp.float32) * dec_std
    inv_s = 1.0 / float(SEQ_LEN)

    def _dec_block(w_slice, H):
        return jnp.concatenate([jnp.zeros((H,), jnp.float32), w_slice * inv_s])

    dec_row = jnp.concatenate([
        _dec_block(dec_w_raw[0, 0:TH], TH),
        _dec_block(dec_w_raw[0, TH:TH + VH], VH),
        _dec_block(dec_w_raw[0, TH + VH:D], AH),
    ])[None, :]                                       # (1, 2*(TH+VH+AH))
    dec_w = jnp.broadcast_to(dec_row, (BATCH, 2 * D)).astype(jnp.float32)
    dec_b = jnp.zeros((BATCH, 1), jnp.float32)

    fwd = jax.jit(lambda t, v, a: fclstm_forward(
        t, v, a, t_params, v_params, a_params, dec_w, dec_b,
        NLAYERS, TH, VH, AH))

    out = jax.block_until_ready(fwd(t_input, v_input, a_input))
    assert out.shape == (BATCH, 1) and bool(jnp.all(jnp.isfinite(out)))
    print("KERNEL_OK")
</pallas_src>

<mosaic_0001>
module attributes {stable_mosaic.version = 11 : i64} {
  func.func @kernel(%arg0: memref<8x2x10xf32, #tpu.memory_space<vmem>>, %arg1: memref<8x2x12xf32, #tpu.memory_space<vmem>>, %arg2: memref<8x2x6xf32, #tpu.memory_space<vmem>>, %arg3: memref<106x128xf32, #tpu.memory_space<vmem>>, %arg4: memref<2x128xf32, #tpu.memory_space<vmem>>, %arg5: memref<64x128xf32, #tpu.memory_space<vmem>>, %arg6: memref<2x128xf32, #tpu.memory_space<vmem>>, %arg7: memref<108x128xf32, #tpu.memory_space<vmem>>, %arg8: memref<2x128xf32, #tpu.memory_space<vmem>>, %arg9: memref<64x128xf32, #tpu.memory_space<vmem>>, %arg10: memref<2x128xf32, #tpu.memory_space<vmem>>, %arg11: memref<102x128xf32, #tpu.memory_space<vmem>>, %arg12: memref<2x128xf32, #tpu.memory_space<vmem>>, %arg13: memref<64x128xf32, #tpu.memory_space<vmem>>, %arg14: memref<2x128xf32, #tpu.memory_space<vmem>>, %arg15: memref<2x96xf32, #tpu.memory_space<vmem>>, %arg16: memref<2x1xf32, #tpu.memory_space<vmem>>, %arg17: memref<2x1xf32, #tpu.memory_space<vmem>>) attributes {dimension_semantics = [], scalar_prefetch = 0 : i64, scratch_operands = 0 : i64, tpu.core_type = #tpu.core_type<tc>} {
    %cst = arith.constant 0.000000e+00 : f32
    %0 = vector.broadcast %cst : f32 to vector<2x32xf32>
    %cst_0 = arith.constant 0.000000e+00 : f32
    %1 = vector.broadcast %cst_0 : f32 to vector<2x32xf32>
    %cst_1 = arith.constant 0.000000e+00 : f32
    %2 = vector.broadcast %cst_1 : f32 to vector<2x32xf32>
    %cst_2 = arith.constant 0.000000e+00 : f32
    %3 = vector.broadcast %cst_2 : f32 to vector<2x32xf32>
    %cst_3 = arith.constant 0.000000e+00 : f32
    %4 = vector.broadcast %cst_3 : f32 to vector<2x32xf32>
    %cst_4 = arith.constant 0.000000e+00 : f32
    %5 = vector.broadcast %cst_4 : f32 to vector<2x32xf32>
    %cst_5 = arith.constant 0.000000e+00 : f32
    %6 = vector.broadcast %cst_5 : f32 to vector<2x32xf32>
    %cst_6 = arith.constant 0.000000e+00 : f32
    %7 = vector.broadcast %cst_6 : f32 to vector<2x32xf32>
    %cst_7 = arith.constant 0.000000e+00 : f32
    %8 = vector.broadcast %cst_7 : f32 to vector<2x32xf32>
    %cst_8 = arith.constant 0.000000e+00 : f32
    %9 = vector.broadcast %cst_8 : f32 to vector<2x32xf32>
    %cst_9 = arith.constant 0.000000e+00 : f32
    %10 = vector.broadcast %cst_9 : f32 to vector<2x32xf32>
    %cst_10 = arith.constant 0.000000e+00 : f32
    %11 = vector.broadcast %cst_10 : f32 to vector<2x32xf32>
    %cst_11 = arith.constant 0.000000e+00 : f32
    %12 = vector.broadcast %cst_11 : f32 to vector<2x32xf32>
    %cst_12 = arith.constant 0.000000e+00 : f32
    %13 = vector.broadcast %cst_12 : f32 to vector<2x32xf32>
    %cst_13 = arith.constant 0.000000e+00 : f32
    %14 = vector.broadcast %cst_13 : f32 to vector<2x32xf32>
    %c0 = arith.constant 0 : index
    %c0_14 = arith.constant 0 : index
    %c0_15 = arith.constant 0 : index
    %15 = vector.load %arg0[%c0, %c0_14, %c0_15] : memref<8x2x10xf32, #tpu.memory_space<vmem>>, vector<1x2x10xf32>
    %16 = vector.shape_cast %15 : vector<1x2x10xf32> to vector<2x10xf32>
    %c0_16 = arith.constant 0 : index
    %c0_17 = arith.constant 0 : index
    %c0_18 = arith.constant 0 : index
    %17 = vector.load %arg1[%c0_16, %c0_17, %c0_18] : memref<8x2x12xf32, #tpu.memory_space<vmem>>, vector<1x2x12xf32>
    %18 = vector.shape_cast %17 : vector<1x2x12xf32> to vector<2x12xf32>
    %c0_19 = arith.constant 0 : index
    %c0_20 = arith.constant 0 : index
    %c0_21 = arith.constant 0 : index
    %19 = vector.load %arg2[%c0_19, %c0_20, %c0_21] : memref<8x2x6xf32, #tpu.memory_space<vmem>>, vector<1x2x6xf32>
    %20 = vector.shape_cast %19 : vector<1x2x6xf32> to vector<2x6xf32>
    %21 = tpu.concatenate %16, %6, %10, %0 in 1 : vector<2x10xf32>, vector<2x32xf32>, vector<2x32xf32>, vector<2x32xf32> -> vector<2x106xf32>
    %c0_22 = arith.constant 0 : index
    %c0_23 = arith.constant 0 : index
    %22 = vector.load %arg3[%c0_22, %c0_23] : memref<106x128xf32, #tpu.memory_space<vmem>>, vector<106x128xf32>
    %cst_24 = arith.constant dense<0.000000e+00> : vector<2x128xf32>
    %23 = tpu.matmul %21, %22, %cst_24 {dimension_numbers = #tpu.dot_dimension_numbers<[1], [0], [0], [1], [0, 0, 1, 1], [], []>} : vector<2x106xf32>, vector<106x128xf32>, vector<2x128xf32> -> vector<2x128xf32>
    %c0_25 = arith.constant 0 : index
    %c0_26 = arith.constant 0 : index
    %24 = vector.load %arg4[%c0_25, %c0_26] : memref<2x128xf32, #tpu.memory_space<vmem>>, vector<2x128xf32>
    %25 = arith.addf %23, %24 : vector<2x128xf32>
    %26 = arith.negf %25 : vector<2x128xf32>
    %27 = math.exp %26 : vector<2x128xf32>
    %cst_27 = arith.constant 1.000000e+00 : f32
    %28 = vector.broadcast %cst_27 : f32 to vector<2x128xf32>
    %29 = arith.addf %28, %27 : vector<2x128xf32>
    %30 = arith.divf %28, %29 : vector<2x128xf32>
    %31 = math.tanh %25 : vector<2x128xf32>
    %32 = vector.extract_strided_slice %30 {offsets = [0, 0], sizes = [2, 32], strides = [1, 1]} : vector<2x128xf32> to vector<2x32xf32>
    %33 = vector.extract_strided_slice %30 {offsets = [0, 32], sizes = [2, 32], strides = [1, 1]} : vector<2x128xf32> to vector<2x32xf32>
    %34 = vector.extract_strided_slice %31 {offsets = [0, 64], sizes = [2, 32], strides = [1, 1]} : vector<2x128xf32> to vector<2x32xf32>
    %35 = vector.extract_strided_slice %30 {offsets = [0, 96], sizes = [2, 32], strides = [1, 1]} : vector<2x128xf32> to vector<2x32xf32>
    %36 = arith.mulf %33, %1 : vector<2x32xf32>
    %37 = arith.mulf %32, %34 : vector<2x32xf32>
    %38 = arith.addf %36, %37 : vector<2x32xf32>
    %39 = math.tanh %38 : vector<2x32xf32>
    %40 = arith.mulf %35, %39 : vector<2x32xf32>
    %41 = tpu.concatenate %40, %2 in 1 : vector<2x32xf32>, vector<2x32xf32> -> vector<2x64xf32>
    %c0_28 = arith.constant 0 : index
    %c0_29 = arith.constant 0 : index
    %42 = vector.load %arg5[%c0_28, %c0_29] : memref<64x128xf32, #tpu.memory_space<vmem>>, vector<64x128xf32>
    %cst_30 = arith.constant dense<0.000000e+00> : vector<2x128xf32>
    %43 = tpu.matmul %41, %42, %cst_30 {dimension_numbers = #tpu.dot_dimension_numbers<[1], [0], [0], [1], [0, 0, 1, 1], [], []>} : vector<2x64xf32>, vector<64x128xf32>, vector<2x128xf32> -> vector<2x128xf32>
    %c0_31 = arith.constant 0 : index
    %c0_32 = arith.constant 0 : index
    %44 = vector.load %arg6[%c0_31, %c0_32] : memref<2x128xf32, #tpu.memory_space<vmem>>, vector<2x128xf32>
    %45 = arith.addf %43, %44 : vector<2x128xf32>
    %46 = arith.negf %45 : vector<2x128xf32>
    %47 = math.exp %46 : vector<2x128xf32>
    %cst_33 = arith.constant 1.000000e+00 : f32
    %48 = vector.broadcast %cst_33 : f32 to vector<2x128xf32>
    %49 = arith.addf %48, %47 : vector<2x128xf32>
    %50 = arith.divf %48, %49 : vector<2x128xf32>
    %51 = math.tanh %45 : vector<2x128xf32>
    %52 = vector.extract_strided_slice %50 {offsets = [0, 0], sizes = [2, 32], strides = [1, 1]} : vector<2x128xf32> to vector<2x32xf32>
    %53 = vector.extract_strided_slice %50 {offsets = [0, 32], sizes = [2, 32], strides = [1, 1]} : vector<2x128xf32> to vector<2x32xf32>
    %54 = vector.extract_strided_slice %51 {offsets = [0, 64], sizes = [2, 32], strides = [1, 1]} : vector<2x128xf32> to vector<2x32xf32>
    %55 = vector.extract_strided_slice %50 {offsets = [0, 96], sizes = [2, 32], strides = [1, 1]} : vector<2x128xf32> to vector<2x32xf32>
    %56 = arith.mulf %53, %3 : vector<2x32xf32>
    %57 = arith.mulf %52, %54 : vector<2x32xf32>
    %58 = arith.addf %56, %57 : vector<2x32xf32>
    %59 = math.tanh %58 : vector<2x32xf32>
    %60 = arith.mulf %55, %59 : vector<2x32xf32>
    %61 = tpu.concatenate %18, %2, %10, %4 in 1 : vector<2x12xf32>, vector<2x32xf32>, vector<2x32xf32>, vector<2x32xf32> -> vector<2x108xf32>
    %c0_34 = arith.constant 0 : index
    %c0_35 = arith.constant 0 : index
    %62 = vector.load %arg7[%c0_34, %c0_35] : memref<108x128xf32, #tpu.memory_space<vmem>>, vector<108x128xf32>
    %cst_36 = arith.constant dense<0.000000e+00> : vector<2x128xf32>
    %63 = tpu.matmul %61, %62, %cst_36 {dimension_numbers = #tpu.dot_dimension_numbers<[1], [0], [0], [1], [0, 0, 1, 1], [], []>} : vector<2x108xf32>, vector<108x128xf32>, vector<2x128xf32> -> vector<2x128xf32>
    %c0_37 = arith.constant 0 : index
    %c0_38 = arith.constant 0 : index
    %64 = vector.load %arg8[%c0_37, %c0_38] : memref<2x128xf32, #tpu.memory_space<vmem>>, vector<2x128xf32>
    %65 = arith.addf %63, %64 : vector<2x128xf32>
    %66 = arith.negf %65 : vector<2x128xf32>
    %67 = math.exp %66 : vector<2x128xf32>
    %cst_39 = arith.constant 1.000000e+00 : f32
    %68 = vector.broadcast %cst_39 : f32 to vector<2x128xf32>
    %69 = arith.addf %68, %67 : vector<2x128xf32>
    %70 = arith.divf %68, %69 : vector<2x128xf32>
    %71 = math.tanh %65 : vector<2x128xf32>
    %72 = vector.extract_strided_slice %70 {offsets = [0, 0], sizes = [2, 32], strides = [1, 1]} : vector<2x128xf32> to vector<2x32xf32>
    %73 = vector.extract_strided_slice %70 {offsets = [0, 32], sizes = [2, 32], strides = [1, 1]} : vector<2x128xf32> to vector<2x32xf32>
    %74 = vector.extract_strided_slice %71 {offsets = [0, 64], sizes = [2, 32], strides = [1, 1]} : vector<2x128xf32> to vector<2x32xf32>
    %75 = vector.extract_strided_slice %70 {offsets = [0, 96], sizes = [2, 32], strides = [1, 1]} : vector<2x128xf32> to vector<2x32xf32>
    %76 = arith.mulf %73, %5 : vector<2x32xf32>
    %77 = arith.mulf %72, %74 : vector<2x32xf32>
    %78 = arith.addf %76, %77 : vector<2x32xf32>
    %79 = math.tanh %78 : vector<2x32xf32>
    %80 = arith.mulf %75, %79 : vector<2x32xf32>
    %81 = tpu.concatenate %80, %6 in 1 : vector<2x32xf32>, vector<2x32xf32> -> vector<2x64xf32>
    %c0_40 = arith.constant 0 : index
    %c0_41 = arith.constant 0 : index
    %82 = vector.load %arg9[%c0_40, %c0_41] : memref<64x128xf32, #tpu.memory_space<vmem>>, vector<64x128xf32>
    %cst_42 = arith.constant dense<0.000000e+00> : vector<2x128xf32>
    %83 = tpu.matmul %81, %82, %cst_42 {dimension_numbers = #tpu.dot_dimension_numbers<[1], [0], [0], [1], [0, 0, 1, 1], [], []>} : vector<2x64xf32>, vector<64x128xf32>, vector<2x128xf32> -> vector<2x128xf32>
    %c0_43 = arith.constant 0 : index
    %c0_44 = arith.constant 0 : index
    %84 = vector.load %arg10[%c0_43, %c0_44] : memref<2x128xf32, #tpu.memory_space<vmem>>, vector<2x128xf32>
    %85 = arith.addf %83, %84 : vector<2x128xf32>
    %86 = arith.negf %85 : vector<2x128xf32>
    %87 = math.exp %86 : vector<2x128xf32>
    %cst_45 = arith.constant 1.000000e+00 : f32
    %88 = vector.broadcast %cst_45 : f32 to vector<2x128xf32>
    %89 = arith.addf %88, %87 : vector<2x128xf32>
    %90 = arith.divf %88, %89 : vector<2x128xf32>
    %91 = math.tanh %85 : vector<2x128xf32>
    %92 = vector.extract_strided_slice %90 {offsets = [0, 0], sizes = [2, 32], strides = [1, 1]} : vector<2x128xf32> to vector<2x32xf32>
    %93 = vector.extract_strided_slice %90 {offsets = [0, 32], sizes = [2, 32], strides = [1, 1]} : vector<2x128xf32> to vector<2x32xf32>
    %94 = vector.extract_strided_slice %91 {offsets = [0, 64], sizes = [2, 32], strides = [1, 1]} : vector<2x128xf32> to vector<2x32xf32>
    %95 = vector.extract_strided_slice %90 {offsets = [0, 96], sizes = [2, 32], strides = [1, 1]} : vector<2x128xf32> to vector<2x32xf32>
    %96 = arith.mulf %93, %7 : vector<2x32xf32>
    %97 = arith.mulf %92, %94 : vector<2x32xf32>
    %98 = arith.addf %96, %97 : vector<2x32xf32>
    %99 = math.tanh %98 : vector<2x32xf32>
    %100 = arith.mulf %95, %99 : vector<2x32xf32>
    %101 = tpu.concatenate %20, %2, %6, %8 in 1 : vector<2x6xf32>, vector<2x32xf32>, vector<2x32xf32>, vector<2x32xf32> -> vector<2x102xf32>
    %c0_46 = arith.constant 0 : index
    %c0_47 = arith.constant 0 : index
    %102 = vector.load %arg11[%c0_46, %c0_47] : memref<102x128xf32, #tpu.memory_space<vmem>>, vector<102x128xf32>
    %cst_48 = arith.constant dense<0.000000e+00> : vector<2x128xf32>
    %103 = tpu.matmul %101, %102, %cst_48 {dimension_numbers = #tpu.dot_dimension_numbers<[1], [0], [0], [1], [0, 0, 1, 1], [], []>} : vector<2x102xf32>, vector<102x128xf32>, vector<2x128xf32> -> vector<2x128xf32>
    %c0_49 = arith.constant 0 : index
    %c0_50 = arith.constant 0 : index
    %104 = vector.load %arg12[%c0_49, %c0_50] : memref<2x128xf32, #tpu.memory_space<vmem>>, vector<2x128xf32>
    %105 = arith.addf %103, %104 : vector<2x128xf32>
    %106 = arith.negf %105 : vector<2x128xf32>
    %107 = math.exp %106 : vector<2x128xf32>
    %cst_51 = arith.constant 1.000000e+00 : f32
    %108 = vector.broadcast %cst_51 : f32 to vector<2x128xf32>
    %109 = arith.addf %108, %107 : vector<2x128xf32>
    %110 = arith.divf %108, %109 : vector<2x128xf32>
    %111 = math.tanh %105 : vector<2x128xf32>
    %112 = vector.extract_strided_slice %110 {offsets = [0, 0], sizes = [2, 32], strides = [1, 1]} : vector<2x128xf32> to vector<2x32xf32>
    %113 = vector.extract_strided_slice %110 {offsets = [0, 32], sizes = [2, 32], strides = [1, 1]} : vector<2x128xf32> to vector<2x32xf32>
    %114 = vector.extract_strided_slice %111 {offsets = [0, 64], sizes = [2, 32], strides = [1, 1]} : vector<2x128xf32> to vector<2x32xf32>
    %115 = vector.extract_strided_slice %110 {offsets = [0, 96], sizes = [2, 32], strides = [1, 1]} : vector<2x128xf32> to vector<2x32xf32>
    %116 = arith.mulf %113, %9 : vector<2x32xf32>
    %117 = arith.mulf %112, %114 : vector<2x32xf32>
    %118 = arith.addf %116, %117 : vector<2x32xf32>
    %119 = math.tanh %118 : vector<2x32xf32>
    %120 = arith.mulf %115, %119 : vector<2x32xf32>
    %121 = tpu.concatenate %120, %10 in 1 : vector<2x32xf32>, vector<2x32xf32> -> vector<2x64xf32>
    %c0_52 = arith.constant 0 : index
    %c0_53 = arith.constant 0 : index
    %122 = vector.load %arg13[%c0_52, %c0_53] : memref<64x128xf32, #tpu.memory_space<vmem>>, vector<64x128xf32>
    %cst_54 = arith.constant dense<0.000000e+00> : vector<2x128xf32>
    %123 = tpu.matmul %121, %122, %cst_54 {dimension_numbers = #tpu.dot_dimension_numbers<[1], [0], [0], [1], [0, 0, 1, 1], [], []>} : vector<2x64xf32>, vector<64x128xf32>, vector<2x128xf32> -> vector<2x128xf32>
    %c0_55 = arith.constant 0 : index
    %c0_56 = arith.constant 0 : index
    %124 = vector.load %arg14[%c0_55, %c0_56] : memref<2x128xf32, #tpu.memory_space<vmem>>, vector<2x128xf32>
    %125 = arith.addf %123, %124 : vector<2x128xf32>
    %126 = arith.negf %125 : vector<2x128xf32>
    %127 = math.exp %126 : vector<2x128xf32>
    %cst_57 = arith.constant 1.000000e+00 : f32
    %128 = vector.broadcast %cst_57 : f32 to vector<2x128xf32>
    %129 = arith.addf %128, %127 : vector<2x128xf32>
    %130 = arith.divf %128, %129 : vector<2x128xf32>
    %131 = math.tanh %125 : vector<2x128xf32>
    %132 = vector.extract_strided_slice %130 {offsets = [0, 0], sizes = [2, 32], strides = [1, 1]} : vector<2x128xf32> to vector<2x32xf32>
    %133 = vector.extract_strided_slice %130 {offsets = [0, 32], sizes = [2, 32], strides = [1, 1]} : vector<2x128xf32> to vector<2x32xf32>
    %134 = vector.extract_strided_slice %131 {offsets = [0, 64], sizes = [2, 32], strides = [1, 1]} : vector<2x128xf32> to vector<2x32xf32>
    %135 = vector.extract_strided_slice %130 {offsets = [0, 96], sizes = [2, 32], strides = [1, 1]} : vector<2x128xf32> to vector<2x32xf32>
    %136 = arith.mulf %133, %11 : vector<2x32xf32>
    %137 = arith.mulf %132, %134 : vector<2x32xf32>
    %138 = arith.addf %136, %137 : vector<2x32xf32>
    %139 = math.tanh %138 : vector<2x32xf32>
    %140 = arith.mulf %135, %139 : vector<2x32xf32>
    %141 = arith.addf %12, %60 : vector<2x32xf32>
    %142 = arith.addf %13, %100 : vector<2x32xf32>
    %143 = arith.addf %14, %140 : vector<2x32xf32>
    %c1 = arith.constant 1 : index
    %c0_58 = arith.constant 0 : index
    %c0_59 = arith.constant 0 : index
    %144 = vector.load %arg0[%c1, %c0_58, %c0_59] : memref<8x2x10xf32, #tpu.memory_space<vmem>>, vector<1x2x10xf32>
    %145 = vector.shape_cast %144 : vector<1x2x10xf32> to vector<2x10xf32>
    %c1_60 = arith.constant 1 : index
    %c0_61 = arith.constant 0 : index
    %c0_62 = arith.constant 0 : index
    %146 = vector.load %arg1[%c1_60, %c0_61, %c0_62] : memref<8x2x12xf32, #tpu.memory_space<vmem>>, vector<1x2x12xf32>
    %147 = vector.shape_cast %146 : vector<1x2x12xf32> to vector<2x12xf32>
    %c1_63 = arith.constant 1 : index
    %c0_64 = arith.constant 0 : index
    %c0_65 = arith.constant 0 : index
    %148 = vector.load %arg2[%c1_63, %c0_64, %c0_65] : memref<8x2x6xf32, #tpu.memory_space<vmem>>, vector<1x2x6xf32>
    %149 = vector.shape_cast %148 : vector<1x2x6xf32> to vector<2x6xf32>
    %150 = tpu.concatenate %145, %100, %140, %40 in 1 : vector<2x10xf32>, vector<2x32xf32>, vector<2x32xf32>, vector<2x32xf32> -> vector<2x106xf32>
    %c0_66 = arith.constant 0 : index
    %c0_67 = arith.constant 0 : index
    %151 = vector.load %arg3[%c0_66, %c0_67] : memref<106x128xf32, #tpu.memory_space<vmem>>, vector<106x128xf32>
    %cst_68 = arith.constant dense<0.000000e+00> : vector<2x128xf32>
    %152 = tpu.matmul %150, %151, %cst_68 {dimension_numbers = #tpu.dot_dimension_numbers<[1], [0], [0], [1], [0, 0, 1, 1], [], []>} : vector<2x106xf32>, vector<106x128xf32>, vector<2x128xf32> -> vector<2x128xf32>
    %c0_69 = arith.constant 0 : index
    %c0_70 = arith.constant 0 : index
    %153 = vector.load %arg4[%c0_69, %c0_70] : memref<2x128xf32, #tpu.memory_space<vmem>>, vector<2x128xf32>
    %154 = arith.addf %152, %153 : vector<2x128xf32>
    %155 = arith.negf %154 : vector<2x128xf32>
    %156 = math.exp %155 : vector<2x128xf32>
    %cst_71 = arith.constant 1.000000e+00 : f32
    %157 = vector.broadcast %cst_71 : f32 to vector<2x128xf32>
    %158 = arith.addf %157, %156 : vector<2x128xf32>
    %159 = arith.divf %157, %158 : vector<2x128xf32>
    %160 = math.tanh %154 : vector<2x128xf32>
    %161 = vector.extract_strided_slice %159 {offsets = [0, 0], sizes = [2, 32], strides = [1, 1]} : vector<2x128xf32> to vector<2x32xf32>
    %162 = vector.extract_strided_slice %159 {offsets = [0, 32], sizes = [2, 32], strides = [1, 1]} : vector<2x128xf32> to vector<2x32xf32>
    %163 = vector.extract_strided_slice %160 {offsets = [0, 64], sizes = [2, 32], strides = [1, 1]} : vector<2x128xf32> to vector<2x32xf32>
    %164 = vector.extract_strided_slice %159 {offsets = [0, 96], sizes = [2, 32], strides = [1, 1]} : vector<2x128xf32> to vector<2x32xf32>
    %165 = arith.mulf %162, %38 : vector<2x32xf32>
    %166 = arith.mulf %161, %163 : vector<2x32xf32>
    %167 = arith.addf %165, %166 : vector<2x32xf32>
    %168 = math.tanh %167 : vector<2x32xf32>
    %169 = arith.mulf %164, %168 : vector<2x32xf32>
    %170 = tpu.concatenate %169, %60 in 1 : vector<2x32xf32>, vector<2x32xf32> -> vector<2x64xf32>
    %c0_72 = arith.constant 0 : index
    %c0_73 = arith.constant 0 : index
    %171 = vector.load %arg5[%c0_72, %c0_73] : memref<64x128xf32, #tpu.memory_space<vmem>>, vector<64x128xf32>
    %cst_74 = arith.constant dense<0.000000e+00> : vector<2x128xf32>
    %172 = tpu.matmul %170, %171, %cst_74 {dimension_numbers = #tpu.dot_dimension_numbers<[1], [0], [0], [1], [0, 0, 1, 1], [], []>} : vector<2x64xf32>, vector<64x128xf32>, vector<2x128xf32> -> vector<2x128xf32>
    %c0_75 = arith.constant 0 : index
    %c0_76 = arith.constant 0 : index
    %173 = vector.load %arg6[%c0_75, %c0_76] : memref<2x128xf32, #tpu.memory_space<vmem>>, vector<2x128xf32>
    %174 = arith.addf %172, %173 : vector<2x128xf32>
    %175 = arith.negf %174 : vector<2x128xf32>
    %176 = math.exp %175 : vector<2x128xf32>
    %cst_77 = arith.constant 1.000000e+00 : f32
    %177 = vector.broadcast %cst_77 : f32 to vector<2x128xf32>
    %178 = arith.addf %177, %176 : vector<2x128xf32>
    %179 = arith.divf %177, %178 : vector<2x128xf32>
    %180 = math.tanh %174 : vector<2x128xf32>
    %181 = vector.extract_strided_slice %179 {offsets = [0, 0], sizes = [2, 32], strides = [1, 1]} : vector<2x128xf32> to vector<2x32xf32>
    %182 = vector.extract_strided_slice %179 {offsets = [0, 32], sizes = [2, 32], strides = [1, 1]} : vector<2x128xf32> to vector<2x32xf32>
    %183 = vector.extract_strided_slice %180 {offsets = [0, 64], sizes = [2, 32], strides = [1, 1]} : vector<2x128xf32> to vector<2x32xf32>
    %184 = vector.extract_strided_slice %179 {offsets = [0, 96], sizes = [2, 32], strides = [1, 1]} : vector<2x128xf32> to vector<2x32xf32>
    %185 = arith.mulf %182, %58 : vector<2x32xf32>
    %186 = arith.mulf %181, %183 : vector<2x32xf32>
    %187 = arith.addf %185, %186 : vector<2x32xf32>
    %188 = math.tanh %187 : vector<2x32xf32>
    %189 = arith.mulf %184, %188 : vector<2x32xf32>
    %190 = tpu.concatenate %147, %60, %140, %80 in 1 : vector<2x12xf32>, vector<2x32xf32>, vector<2x32xf32>, vector<2x32xf32> -> vector<2x108xf32>
    %c0_78 = arith.constant 0 : index
    %c0_79 = arith.constant 0 : index
    %191 = vector.load %arg7[%c0_78, %c0_79] : memref<108x128xf32, #tpu.memory_space<vmem>>, vector<108x128xf32>
    %cst_80 = arith.constant dense<0.000000e+00> : vector<2x128xf32>
    %192 = tpu.matmul %190, %191, %cst_80 {dimension_numbers = #tpu.dot_dimension_numbers<[1], [0], [0], [1], [0, 0, 1, 1], [], []>} : vector<2x108xf32>, vector<108x128xf32>, vector<2x128xf32> -> vector<2x128xf32>
    %c0_81 = arith.constant 0 : index
    %c0_82 = arith.constant 0 : index
    %193 = vector.load %arg8[%c0_81, %c0_82] : memref<2x128xf32, #tpu.memory_space<vmem>>, vector<2x128xf32>
    %194 = arith.addf %192, %193 : vector<2x128xf32>
    %195 = arith.negf %194 : vector<2x128xf32>
    %196 = math.exp %195 : vector<2x128xf32>
    %cst_83 = arith.constant 1.000000e+00 : f32
    %197 = vector.broadcast %cst_83 : f32 to vector<2x128xf32>
    %198 = arith.addf %197, %196 : vector<2x128xf32>
    %199 = arith.divf %197, %198 : vector<2x128xf32>
    %200 = math.tanh %194 : vector<2x128xf32>
    %201 = vector.extract_strided_slice %199 {offsets = [0, 0], sizes = [2, 32], strides = [1, 1]} : vector<2x128xf32> to vector<2x32xf32>
    %202 = vector.extract_strided_slice %199 {offsets = [0, 32], sizes = [2, 32], strides = [1, 1]} : vector<2x128xf32> to vector<2x32xf32>
    %203 = vector.extract_strided_slice %200 {offsets = [0, 64], sizes = [2, 32], strides = [1, 1]} : vector<2x128xf32> to vector<2x32xf32>
    %204 = vector.extract_strided_slice %199 {offsets = [0, 96], sizes = [2, 32], strides = [1, 1]} : vector<2x128xf32> to vector<2x32xf32>
    %205 = arith.mulf %202, %78 : vector<2x32xf32>
    %206 = arith.mulf %201, %203 : vector<2x32xf32>
    %207 = arith.addf %205, %206 : vector<2x32xf32>
    %208 = math.tanh %207 : vector<2x32xf32>
    %209 = arith.mulf %204, %208 : vector<2x32xf32>
    %210 = tpu.concatenate %209, %100 in 1 : vector<2x32xf32>, vector<2x32xf32> -> vector<2x64xf32>
    %c0_84 = arith.constant 0 : index
    %c0_85 = arith.constant 0 : index
    %211 = vector.load %arg9[%c0_84, %c0_85] : memref<64x128xf32, #tpu.memory_space<vmem>>, vector<64x128xf32>
    %cst_86 = arith.constant dense<0.000000e+00> : vector<2x128xf32>
    %212 = tpu.matmul %210, %211, %cst_86 {dimension_numbers = #tpu.dot_dimension_numbers<[1], [0], [0], [1], [0, 0, 1, 1], [], []>} : vector<2x64xf32>, vector<64x128xf32>, vector<2x128xf32> -> vector<2x128xf32>
    %c0_87 = arith.constant 0 : index
    %c0_88 = arith.constant 0 : index
    %213 = vector.load %arg10[%c0_87, %c0_88] : memref<2x128xf32, #tpu.memory_space<vmem>>, vector<2x128xf32>
    %214 = arith.addf %212, %213 : vector<2x128xf32>
    %215 = arith.negf %214 : vector<2x128xf32>
    %216 = math.exp %215 : vector<2x128xf32>
    %cst_89 = arith.constant 1.000000e+00 : f32
    %217 = vector.broadcast %cst_89 : f32 to vector<2x128xf32>
    %218 = arith.addf %217, %216 : vector<2x128xf32>
    %219 = arith.divf %217, %218 : vector<2x128xf32>
    %220 = math.tanh %214 : vector<2x128xf32>
    %221 = vector.extract_strided_slice %219 {offsets = [0, 0], sizes = [2, 32], strides = [1, 1]} : vector<2x128xf32> to vector<2x32xf32>
    %222 = vector.extract_strided_slice %219 {offsets = [0, 32], sizes = [2, 32], strides = [1, 1]} : vector<2x128xf32> to vector<2x32xf32>
    %223 = vector.extract_strided_slice %220 {offsets = [0, 64], sizes = [2, 32], strides = [1, 1]} : vector<2x128xf32> to vector<2x32xf32>
    %224 = vector.extract_strided_slice %219 {offsets = [0, 96], sizes = [2, 32], strides = [1, 1]} : vector<2x128xf32> to vector<2x32xf32>
    %225 = arith.mulf %222, %98 : vector<2x32xf32>
    %226 = arith.mulf %221, %223 : vector<2x32xf32>
    %227 = arith.addf %225, %226 : vector<2x32xf32>
    %228 = math.tanh %227 : vector<2x32xf32>
    %229 = arith.mulf %224, %228 : vector<2x32xf32>
    %230 = tpu.concatenate %149, %60, %100, %120 in 1 : vector<2x6xf32>, vector<2x32xf32>, vector<2x32xf32>, vector<2x32xf32> -> vector<2x102xf32>
    %c0_90 = arith.constant 0 : index
    %c0_91 = arith.constant 0 : index
    %231 = vector.load %arg11[%c0_90, %c0_91] : memref<102x128xf32, #tpu.memory_space<vmem>>, vector<102x128xf32>
    %cst_92 = arith.constant dense<0.000000e+00> : vector<2x128xf32>
    %232 = tpu.matmul %230, %231, %cst_92 {dimension_numbers = #tpu.dot_dimension_numbers<[1], [0], [0], [1], [0, 0, 1, 1], [], []>} : vector<2x102xf32>, vector<102x128xf32>, vector<2x128xf32> -> vector<2x128xf32>
    %c0_93 = arith.constant 0 : index
    %c0_94 = arith.constant 0 : index
    %233 = vector.load %arg12[%c0_93, %c0_94] : memref<2x128xf32, #tpu.memory_space<vmem>>, vector<2x128xf32>
    %234 = arith.addf %232, %233 : vector<2x128xf32>
    %235 = arith.negf %234 : vector<2x128xf32>
    %236 = math.exp %235 : vector<2x128xf32>
    %cst_95 = arith.constant 1.000000e+00 : f32
    %237 = vector.broadcast %cst_95 : f32 to vector<2x128xf32>
    %238 = arith.addf %237, %236 : vector<2x128xf32>
    %239 = arith.divf %237, %238 : vector<2x128xf32>
    %240 = math.tanh %234 : vector<2x128xf32>
    %241 = vector.extract_strided_slice %239 {offsets = [0, 0], sizes = [2, 32], strides = [1, 1]} : vector<2x128xf32> to vector<2x32xf32>
    %242 = vector.extract_strided_slice %239 {offsets = [0, 32], sizes = [2, 32], strides = [1, 1]} : vector<2x128xf32> to vector<2x32xf32>
    %243 = vector.extract_strided_slice %240 {offsets = [0, 64], sizes = [2, 32], strides = [1, 1]} : vector<2x128xf32> to vector<2x32xf32>
    %244 = vector.extract_strided_slice %239 {offsets = [0, 96], sizes = [2, 32], strides = [1, 1]} : vector<2x128xf32> to vector<2x32xf32>
    %245 = arith.mulf %242, %118 : vector<2x32xf32>
    %246 = arith.mulf %241, %243 : vector<2x32xf32>
    %247 = arith.addf %245, %246 : vector<2x32xf32>
    %248 = math.tanh %247 : vector<2x32xf32>
    %249 = arith.mulf %244, %248 : vector<2x32xf32>
    %250 = tpu.concatenate %249, %140 in 1 : vector<2x32xf32>, vector<2x32xf32> -> vector<2x64xf32>
    %c0_96 = arith.constant 0 : index
    %c0_97 = arith.constant 0 : index
    %251 = vector.load %arg13[%c0_96, %c0_97] : memref<64x128xf32, #tpu.memory_space<vmem>>, vector<64x128xf32>
    %cst_98 = arith.constant dense<0.000000e+00> : vector<2x128xf32>
    %252 = tpu.matmul %250, %251, %cst_98 {dimension_numbers = #tpu.dot_dimension_numbers<[1], [0], [0], [1], [0, 0, 1, 1], [], []>} : vector<2x64xf32>, vector<64x128xf32>, vector<2x128xf32> -> vector<2x128xf32>
    %c0_99 = arith.constant 0 : index
    %c0_100 = arith.constant 0 : index
    %253 = vector.load %arg14[%c0_99, %c0_100] : memref<2x128xf32, #tpu.memory_space<vmem>>, vector<2x128xf32>
    %254 = arith.addf %252, %253 : vector<2x128xf32>
    %255 = arith.negf %254 : vector<2x128xf32>
    %256 = math.exp %255 : vector<2x128xf32>
    %cst_101 = arith.constant 1.000000e+00 : f32
    %257 = vector.broadcast %cst_101 : f32 to vector<2x128xf32>
    %258 = arith.addf %257, %256 : vector<2x128xf32>
    %259 = arith.divf %257, %258 : vector<2x128xf32>
    %260 = math.tanh %254 : vector<2x128xf32>
    %261 = vector.extract_strided_slice %259 {offsets = [0, 0], sizes = [2, 32], strides = [1, 1]} : vector<2x128xf32> to vector<2x32xf32>
    %262 = vector.extract_strided_slice %259 {offsets = [0, 32], sizes = [2, 32], strides = [1, 1]} : vector<2x128xf32> to vector<2x32xf32>
    %263 = vector.extract_strided_slice %260 {offsets = [0, 64], sizes = [2, 32], strides = [1, 1]} : vector<2x128xf32> to vector<2x32xf32>
    %264 = vector.extract_strided_slice %259 {offsets = [0, 96], sizes = [2, 32], strides = [1, 1]} : vector<2x128xf32> to vector<2x32xf32>
    %265 = arith.mulf %262, %138 : vector<2x32xf32>
    %266 = arith.mulf %261, %263 : vector<2x32xf32>
    %267 = arith.addf %265, %266 : vector<2x32xf32>
    %268 = math.tanh %267 : vector<2x32xf32>
    %269 = arith.mulf %264, %268 : vector<2x32xf32>
    %270 = arith.addf %141, %189 : vector<2x32xf32>
    %271 = arith.addf %142, %229 : vector<2x32xf32>
    %272 = arith.addf %143, %269 : vector<2x32xf32>
    %c2 = arith.constant 2 : index
    %c0_102 = arith.constant 0 : index
    %c0_103 = arith.constant 0 : index
    %273 = vector.load %arg0[%c2, %c0_102, %c0_103] : memref<8x2x10xf32, #tpu.memory_space<vmem>>, vector<1x2x10xf32>
    %274 = vector.shape_cast %273 : vector<1x2x10xf32> to vector<2x10xf32>
    %c2_104 = arith.constant 2 : index
    %c0_105 = arith.constant 0 : index
    %c0_106 = arith.constant 0 : index
    %275 = vector.load %arg1[%c2_104, %c0_105, %c0_106] : memref<8x2x12xf32, #tpu.memory_space<vmem>>, vector<1x2x12xf32>
    %276 = vector.shape_cast %275 : vector<1x2x12xf32> to vector<2x12xf32>
    %c2_107 = arith.constant 2 : index
    %c0_108 = arith.constant 0 : index
    %c0_109 = arith.constant 0 : index
    %277 = vector.load %arg2[%c2_107, %c0_108, %c0_109] : memref<8x2x6xf32, #tpu.memory_space<vmem>>, vector<1x2x6xf32>
    %278 = vector.shape_cast %277 : vector<1x2x6xf32> to vector<2x6xf32>
    %279 = tpu.concatenate %274, %229, %269, %169 in 1 : vector<2x10xf32>, vector<2x32xf32>, vector<2x32xf32>, vector<2x32xf32> -> vector<2x106xf32>
    %c0_110 = arith.constant 0 : index
    %c0_111 = arith.constant 0 : index
    %280 = vector.load %arg3[%c0_110, %c0_111] : memref<106x128xf32, #tpu.memory_space<vmem>>, vector<106x128xf32>
    %cst_112 = arith.constant dense<0.000000e+00> : vector<2x128xf32>
    %281 = tpu.matmul %279, %280, %cst_112 {dimension_numbers = #tpu.dot_dimension_numbers<[1], [0], [0], [1], [0, 0, 1, 1], [], []>} : vector<2x106xf32>, vector<106x128xf32>, vector<2x128xf32> -> vector<2x128xf32>
    %c0_113 = arith.constant 0 : index
    %c0_114 = arith.constant 0 : index
    %282 = vector.load %arg4[%c0_113, %c0_114] : memref<2x128xf32, #tpu.memory_space<vmem>>, vector<2x128xf32>
    %283 = arith.addf %281, %282 : vector<2x128xf32>
    %284 = arith.negf %283 : vector<2x128xf32>
    %285 = math.exp %284 : vector<2x128xf32>
    %cst_115 = arith.constant 1.000000e+00 : f32
    %286 = vector.broadcast %cst_115 : f32 to vector<2x128xf32>
    %287 = arith.addf %286, %285 : vector<2x128xf32>
    %288 = arith.divf %286, %287 : vector<2x128xf32>
    %289 = math.tanh %283 : vector<2x128xf32>
    %290 = vector.extract_strided_slice %288 {offsets = [0, 0], sizes = [2, 32], strides = [1, 1]} : vector<2x128xf32> to vector<2x32xf32>
    %291 = vector.extract_strided_slice %288 {offsets = [0, 32], sizes = [2, 32], strides = [1, 1]} : vector<2x128xf32> to vector<2x32xf32>
    %292 = vector.extract_strided_slice %289 {offsets = [0, 64], sizes = [2, 32], strides = [1, 1]} : vector<2x128xf32> to vector<2x32xf32>
    %293 = vector.extract_strided_slice %288 {offsets = [0, 96], sizes = [2, 32], strides = [1, 1]} : vector<2x128xf32> to vector<2x32xf32>
    %294 = arith.mulf %291, %167 : vector<2x32xf32>
    %295 = arith.mulf %290, %292 : vector<2x32xf32>
    %296 = arith.addf %294, %295 : vector<2x32xf32>
    %297 = math.tanh %296 : vector<2x32xf32>
    %298 = arith.mulf %293, %297 : vector<2x32xf32>
    %299 = tpu.concatenate %298, %189 in 1 : vector<2x32xf32>, vector<2x32xf32> -> vector<2x64xf32>
    %c0_116 = arith.constant 0 : index
    %c0_117 = arith.constant 0 : index
    %300 = vector.load %arg5[%c0_116, %c0_117] : memref<64x128xf32, #tpu.memory_space<vmem>>, vector<64x128xf32>
    %cst_118 = arith.constant dense<0.000000e+00> : vector<2x128xf32>
    %301 = tpu.matmul %299, %300, %cst_118 {dimension_numbers = #tpu.dot_dimension_numbers<[1], [0], [0], [1], [0, 0, 1, 1], [], []>} : vector<2x64xf32>, vector<64x128xf32>, vector<2x128xf32> -> vector<2x128xf32>
    %c0_119 = arith.constant 0 : index
    %c0_120 = arith.constant 0 : index
    %302 = vector.load %arg6[%c0_119, %c0_120] : memref<2x128xf32, #tpu.memory_space<vmem>>, vector<2x128xf32>
    %303 = arith.addf %301, %302 : vector<2x128xf32>
    %304 = arith.negf %303 : vector<2x128xf32>
    %305 = math.exp %304 : vector<2x128xf32>
    %cst_121 = arith.constant 1.000000e+00 : f32
    %306 = vector.broadcast %cst_121 : f32 to vector<2x128xf32>
    %307 = arith.addf %306, %305 : vector<2x128xf32>
    %308 = arith.divf %306, %307 : vector<2x128xf32>
    %309 = math.tanh %303 : vector<2x128xf32>
    %310 = vector.extract_strided_slice %308 {offsets = [0, 0], sizes = [2, 32], strides = [1, 1]} : vector<2x128xf32> to vector<2x32xf32>
    %311 = vector.extract_strided_slice %308 {offsets = [0, 32], sizes = [2, 32], strides = [1, 1]} : vector<2x128xf32> to vector<2x32xf32>
    %312 = vector.extract_strided_slice %309 {offsets = [0, 64], sizes = [2, 32], strides = [1, 1]} : vector<2x128xf32> to vector<2x32xf32>
    %313 = vector.extract_strided_slice %308 {offsets = [0, 96], sizes = [2, 32], strides = [1, 1]} : vector<2x128xf32> to vector<2x32xf32>
    %314 = arith.mulf %311, %187 : vector<2x32xf32>
    %315 = arith.mulf %310, %312 : vector<2x32xf32>
    %316 = arith.addf %314, %315 : vector<2x32xf32>
    %317 = math.tanh %316 : vector<2x32xf32>
    %318 = arith.mulf %313, %317 : vector<2x32xf32>
    %319 = tpu.concatenate %276, %189, %269, %209 in 1 : vector<2x12xf32>, vector<2x32xf32>, vector<2x32xf32>, vector<2x32xf32> -> vector<2x108xf32>
    %c0_122 = arith.constant 0 : index
    %c0_123 = arith.constant 0 : index
    %320 = vector.load %arg7[%c0_122, %c0_123] : memref<108x128xf32, #tpu.memory_space<vmem>>, vector<108x128xf32>
    %cst_124 = arith.constant dense<0.000000e+00> : vector<2x128xf32>
    %321 = tpu.matmul %319, %320, %cst_124 {dimension_numbers = #tpu.dot_dimension_numbers<[1], [0], [0], [1], [0, 0, 1, 1], [], []>} : vector<2x108xf32>, vector<108x128xf32>, vector<2x128xf32> -> vector<2x128xf32>
    %c0_125 = arith.constant 0 : index
    %c0_126 = arith.constant 0 : index
    %322 = vector.load %arg8[%c0_125, %c0_126] : memref<2x128xf32, #tpu.memory_space<vmem>>, vector<2x128xf32>
    %323 = arith.addf %321, %322 : vector<2x128xf32>
    %324 = arith.negf %323 : vector<2x128xf32>
    %325 = math.exp %324 : vector<2x128xf32>
    %cst_127 = arith.constant 1.000000e+00 : f32
    %326 = vector.broadcast %cst_127 : f32 to vector<2x128xf32>
    %327 = arith.addf %326, %325 : vector<2x128xf32>
    %328 = arith.divf %326, %327 : vector<2x128xf32>
    %329 = math.tanh %323 : vector<2x128xf32>
    %330 = vector.extract_strided_slice %328 {offsets = [0, 0], sizes = [2, 32], strides = [1, 1]} : vector<2x128xf32> to vector<2x32xf32>
    %331 = vector.extract_strided_slice %328 {offsets = [0, 32], sizes = [2, 32], strides = [1, 1]} : vector<2x128xf32> to vector<2x32xf32>
    %332 = vector.extract_strided_slice %329 {offsets = [0, 64], sizes = [2, 32], strides = [1, 1]} : vector<2x128xf32> to vector<2x32xf32>
    %333 = vector.extract_strided_slice %328 {offsets = [0, 96], sizes = [2, 32], strides = [1, 1]} : vector<2x128xf32> to vector<2x32xf32>
    %334 = arith.mulf %331, %207 : vector<2x32xf32>
    %335 = arith.mulf %330, %332 : vector<2x32xf32>
    %336 = arith.addf %334, %335 : vector<2x32xf32>
    %337 = math.tanh %336 : vector<2x32xf32>
    %338 = arith.mulf %333, %337 : vector<2x32xf32>
    %339 = tpu.concatenate %338, %229 in 1 : vector<2x32xf32>, vector<2x32xf32> -> vector<2x64xf32>
    %c0_128 = arith.constant 0 : index
    %c0_129 = arith.constant 0 : index
    %340 = vector.load %arg9[%c0_128, %c0_129] : memref<64x128xf32, #tpu.memory_space<vmem>>, vector<64x128xf32>
    %cst_130 = arith.constant dense<0.000000e+00> : vector<2x128xf32>
    %341 = tpu.matmul %339, %340, %cst_130 {dimension_numbers = #tpu.dot_dimension_numbers<[1], [0], [0], [1], [0, 0, 1, 1], [], []>} : vector<2x64xf32>, vector<64x128xf32>, vector<2x128xf32> -> vector<2x128xf32>
    %c0_131 = arith.constant 0 : index
    %c0_132 = arith.constant 0 : index
    %342 = vector.load %arg10[%c0_131, %c0_132] : memref<2x128xf32, #tpu.memory_space<vmem>>, vector<2x128xf32>
    %343 = arith.addf %341, %342 : vector<2x128xf32>
    %344 = arith.negf %343 : vector<2x128xf32>
    %345 = math.exp %344 : vector<2x128xf32>
    %cst_133 = arith.constant 1.000000e+00 : f32
    %346 = vector.broadcast %cst_133 : f32 to vector<2x128xf32>
    %347 = arith.addf %346, %345 : vector<2x128xf32>
    %348 = arith.divf %346, %347 : vector<2x128xf32>
    %349 = math.tanh %343 : vector<2x128xf32>
    %350 = vector.extract_strided_slice %348 {offsets = [0, 0], sizes = [2, 32], strides = [1, 1]} : vector<2x128xf32> to vector<2x32xf32>
    %351 = vector.extract_strided_slice %348 {offsets = [0, 32], sizes = [2, 32], strides = [1, 1]} : vector<2x128xf32> to vector<2x32xf32>
    %352 = vector.extract_strided_slice %349 {offsets = [0, 64], sizes = [2, 32], strides = [1, 1]} : vector<2x128xf32> to vector<2x32xf32>
    %353 = vector.extract_strided_slice %348 {offsets = [0, 96], sizes = [2, 32], strides = [1, 1]} : vector<2x128xf32> to vector<2x32xf32>
    %354 = arith.mulf %351, %227 : vector<2x32xf32>
    %355 = arith.mulf %350, %352 : vector<2x32xf32>
    %356 = arith.addf %354, %355 : vector<2x32xf32>
    %357 = math.tanh %356 : vector<2x32xf32>
    %358 = arith.mulf %353, %357 : vector<2x32xf32>
    %359 = tpu.concatenate %278, %189, %229, %249 in 1 : vector<2x6xf32>, vector<2x32xf32>, vector<2x32xf32>, vector<2x32xf32> -> vector<2x102xf32>
    %c0_134 = arith.constant 0 : index
    %c0_135 = arith.constant 0 : index
    %360 = vector.load %arg11[%c0_134, %c0_135] : memref<102x128xf32, #tpu.memory_space<vmem>>, vector<102x128xf32>
    %cst_136 = arith.constant dense<0.000000e+00> : vector<2x128xf32>
    %361 = tpu.matmul %359, %360, %cst_136 {dimension_numbers = #tpu.dot_dimension_numbers<[1], [0], [0], [1], [0, 0, 1, 1], [], []>} : vector<2x102xf32>, vector<102x128xf32>, vector<2x128xf32> -> vector<2x128xf32>
    %c0_137 = arith.constant 0 : index
    %c0_138 = arith.constant 0 : index
    %362 = vector.load %arg12[%c0_137, %c0_138] : memref<2x128xf32, #tpu.memory_space<vmem>>, vector<2x128xf32>
    %363 = arith.addf %361, %362 : vector<2x128xf32>
    %364 = arith.negf %363 : vector<2x128xf32>
    %365 = math.exp %364 : vector<2x128xf32>
    %cst_139 = arith.constant 1.000000e+00 : f32
    %366 = vector.broadcast %cst_139 : f32 to vector<2x128xf32>
    %367 = arith.addf %366, %365 : vector<2x128xf32>
    %368 = arith.divf %366, %367 : vector<2x128xf32>
    %369 = math.tanh %363 : vector<2x128xf32>
    %370 = vector.extract_strided_slice %368 {offsets = [0, 0], sizes = [2, 32], strides = [1, 1]} : vector<2x128xf32> to vector<2x32xf32>
    %371 = vector.extract_strided_slice %368 {offsets = [0, 32], sizes = [2, 32], strides = [1, 1]} : vector<2x128xf32> to vector<2x32xf32>
    %372 = vector.extract_strided_slice %369 {offsets = [0, 64], sizes = [2, 32], strides = [1, 1]} : vector<2x128xf32> to vector<2x32xf32>
    %373 = vector.extract_strided_slice %368 {offsets = [0, 96], sizes = [2, 32], strides = [1, 1]} : vector<2x128xf32> to vector<2x32xf32>
    %374 = arith.mulf %371, %247 : vector<2x32xf32>
    %375 = arith.mulf %370, %372 : vector<2x32xf32>
    %376 = arith.addf %374, %375 : vector<2x32xf32>
    %377 = math.tanh %376 : vector<2x32xf32>
    %378 = arith.mulf %373, %377 : vector<2x32xf32>
    %379 = tpu.concatenate %378, %269 in 1 : vector<2x32xf32>, vector<2x32xf32> -> vector<2x64xf32>
    %c0_140 = arith.constant 0 : index
    %c0_141 = arith.constant 0 : index
    %380 = vector.load %arg13[%c0_140, %c0_141] : memref<64x128xf32, #tpu.memory_space<vmem>>, vector<64x128xf32>
    %cst_142 = arith.constant dense<0.000000e+00> : vector<2x128xf32>
    %381 = tpu.matmul %379, %380, %cst_142 {dimension_numbers = #tpu.dot_dimension_numbers<[1], [0], [0], [1], [0, 0, 1, 1], [], []>} : vector<2x64xf32>, vector<64x128xf32>, vector<2x128xf32> -> vector<2x128xf32>
    %c0_143 = arith.constant 0 : index
    %c0_144 = arith.constant 0 : index
    %382 = vector.load %arg14[%c0_143, %c0_144] : memref<2x128xf32, #tpu.memory_space<vmem>>, vector<2x128xf32>
    %383 = arith.addf %381, %382 : vector<2x128xf32>
    %384 = arith.negf %383 : vector<2x128xf32>
    %385 = math.exp %384 : vector<2x128xf32>
    %cst_145 = arith.constant 1.000000e+00 : f32
    %386 = vector.broadcast %cst_145 : f32 to vector<2x128xf32>
    %387 = arith.addf %386, %385 : vector<2x128xf32>
    %388 = arith.divf %386, %387 : vector<2x128xf32>
    %389 = math.tanh %383 : vector<2x128xf32>
    %390 = vector.extract_strided_slice %388 {offsets = [0, 0], sizes = [2, 32], strides = [1, 1]} : vector<2x128xf32> to vector<2x32xf32>
    %391 = vector.extract_strided_slice %388 {offsets = [0, 32], sizes = [2, 32], strides = [1, 1]} : vector<2x128xf32> to vector<2x32xf32>
    %392 = vector.extract_strided_slice %389 {offsets = [0, 64], sizes = [2, 32], strides = [1, 1]} : vector<2x128xf32> to vector<2x32xf32>
    %393 = vector.extract_strided_slice %388 {offsets = [0, 96], sizes = [2, 32], strides = [1, 1]} : vector<2x128xf32> to vector<2x32xf32>
    %394 = arith.mulf %391, %267 : vector<2x32xf32>
    %395 = arith.mulf %390, %392 : vector<2x32xf32>
    %396 = arith.addf %394, %395 : vector<2x32xf32>
    %397 = math.tanh %396 : vector<2x32xf32>
    %398 = arith.mulf %393, %397 : vector<2x32xf32>
    %399 = arith.addf %270, %318 : vector<2x32xf32>
    %400 = arith.addf %271, %358 : vector<2x32xf32>
    %401 = arith.addf %272, %398 : vector<2x32xf32>
    %c3 = arith.constant 3 : index
    %c0_146 = arith.constant 0 : index
    %c0_147 = arith.constant 0 : index
    %402 = vector.load %arg0[%c3, %c0_146, %c0_147] : memref<8x2x10xf32, #tpu.memory_space<vmem>>, vector<1x2x10xf32>
    %403 = vector.shape_cast %402 : vector<1x2x10xf32> to vector<2x10xf32>
    %c3_148 = arith.constant 3 : index
    %c0_149 = arith.constant 0 : index
    %c0_150 = arith.constant 0 : index
    %404 = vector.load %arg1[%c3_148, %c0_149, %c0_150] : memref<8x2x12xf32, #tpu.memory_space<vmem>>, vector<1x2x12xf32>
    %405 = vector.shape_cast %404 : vector<1x2x12xf32> to vector<2x12xf32>
    %c3_151 = arith.constant 3 : index
    %c0_152 = arith.constant 0 : index
    %c0_153 = arith.constant 0 : index
    %406 = vector.load %arg2[%c3_151, %c0_152, %c0_153] : memref<8x2x6xf32, #tpu.memory_space<vmem>>, vector<1x2x6xf32>
    %407 = vector.shape_cast %406 : vector<1x2x6xf32> to vector<2x6xf32>
    %408 = tpu.concatenate %403, %358, %398, %298 in 1 : vector<2x10xf32>, vector<2x32xf32>, vector<2x32xf32>, vector<2x32xf32> -> vector<2x106xf32>
    %c0_154 = arith.constant 0 : index
    %c0_155 = arith.constant 0 : index
    %409 = vector.load %arg3[%c0_154, %c0_155] : memref<106x128xf32, #tpu.memory_space<vmem>>, vector<106x128xf32>
    %cst_156 = arith.constant dense<0.000000e+00> : vector<2x128xf32>
    %410 = tpu.matmul %408, %409, %cst_156 {dimension_numbers = #tpu.dot_dimension_numbers<[1], [0], [0], [1], [0, 0, 1, 1], [], []>} : vector<2x106xf32>, vector<106x128xf32>, vector<2x128xf32> -> vector<2x128xf32>
    %c0_157 = arith.constant 0 : index
    %c0_158 = arith.constant 0 : index
    %411 = vector.load %arg4[%c0_157, %c0_158] : memref<2x128xf32, #tpu.memory_space<vmem>>, vector<2x128xf32>
    %412 = arith.addf %410, %411 : vector<2x128xf32>
    %413 = arith.negf %412 : vector<2x128xf32>
    %414 = math.exp %413 : vector<2x128xf32>
    %cst_159 = arith.constant 1.000000e+00 : f32
    %415 = vector.broadcast %cst_159 : f32 to vector<2x128xf32>
    %416 = arith.addf %415, %414 : vector<2x128xf32>
    %417 = arith.divf %415, %416 : vector<2x128xf32>
    %418 = math.tanh %412 : vector<2x128xf32>
    %419 = vector.extract_strided_slice %417 {offsets = [0, 0], sizes = [2, 32], strides = [1, 1]} : vector<2x128xf32> to vector<2x32xf32>
    %420 = vector.extract_strided_slice %417 {offsets = [0, 32], sizes = [2, 32], strides = [1, 1]} : vector<2x128xf32> to vector<2x32xf32>
    %421 = vector.extract_strided_slice %418 {offsets = [0, 64], sizes = [2, 32], strides = [1, 1]} : vector<2x128xf32> to vector<2x32xf32>
    %422 = vector.extract_strided_slice %417 {offsets = [0, 96], sizes = [2, 32], strides = [1, 1]} : vector<2x128xf32> to vector<2x32xf32>
    %423 = arith.mulf %420, %296 : vector<2x32xf32>
    %424 = arith.mulf %419, %421 : vector<2x32xf32>
    %425 = arith.addf %423, %424 : vector<2x32xf32>
    %426 = math.tanh %425 : vector<2x32xf32>
    %427 = arith.mulf %422, %426 : vector<2x32xf32>
    %428 = tpu.concatenate %427, %318 in 1 : vector<2x32xf32>, vector<2x32xf32> -> vector<2x64xf32>
    %c0_160 = arith.constant 0 : index
    %c0_161 = arith.constant 0 : index
    %429 = vector.load %arg5[%c0_160, %c0_161] : memref<64x128xf32, #tpu.memory_space<vmem>>, vector<64x128xf32>
    %cst_162 = arith.constant dense<0.000000e+00> : vector<2x128xf32>
    %430 = tpu.matmul %428, %429, %cst_162 {dimension_numbers = #tpu.dot_dimension_numbers<[1], [0], [0], [1], [0, 0, 1, 1], [], []>} : vector<2x64xf32>, vector<64x128xf32>, vector<2x128xf32> -> vector<2x128xf32>
    %c0_163 = arith.constant 0 : index
    %c0_164 = arith.constant 0 : index
    %431 = vector.load %arg6[%c0_163, %c0_164] : memref<2x128xf32, #tpu.memory_space<vmem>>, vector<2x128xf32>
    %432 = arith.addf %430, %431 : vector<2x128xf32>
    %433 = arith.negf %432 : vector<2x128xf32>
    %434 = math.exp %433 : vector<2x128xf32>
    %cst_165 = arith.constant 1.000000e+00 : f32
    %435 = vector.broadcast %cst_165 : f32 to vector<2x128xf32>
    %436 = arith.addf %435, %434 : vector<2x128xf32>
    %437 = arith.divf %435, %436 : vector<2x128xf32>
    %438 = math.tanh %432 : vector<2x128xf32>
    %439 = vector.extract_strided_slice %437 {offsets = [0, 0], sizes = [2, 32], strides = [1, 1]} : vector<2x128xf32> to vector<2x32xf32>
    %440 = vector.extract_strided_slice %437 {offsets = [0, 32], sizes = [2, 32], strides = [1, 1]} : vector<2x128xf32> to vector<2x32xf32>
    %441 = vector.extract_strided_slice %438 {offsets = [0, 64], sizes = [2, 32], strides = [1, 1]} : vector<2x128xf32> to vector<2x32xf32>
    %442 = vector.extract_strided_slice %437 {offsets = [0, 96], sizes = [2, 32], strides = [1, 1]} : vector<2x128xf32> to vector<2x32xf32>
    %443 = arith.mulf %440, %316 : vector<2x32xf32>
    %444 = arith.mulf %439, %441 : vector<2x32xf32>
    %445 = arith.addf %443, %444 : vector<2x32xf32>
    %446 = math.tanh %445 : vector<2x32xf32>
    %447 = arith.mulf %442, %446 : vector<2x32xf32>
    %448 = tpu.concatenate %405, %318, %398, %338 in 1 : vector<2x12xf32>, vector<2x32xf32>, vector<2x32xf32>, vector<2x32xf32> -> vector<2x108xf32>
    %c0_166 = arith.constant 0 : index
    %c0_167 = arith.constant 0 : index
    %449 = vector.load %arg7[%c0_166, %c0_167] : memref<108x128xf32, #tpu.memory_space<vmem>>, vector<108x128xf32>
    %cst_168 = arith.constant dense<0.000000e+00> : vector<2x128xf32>
    %450 = tpu.matmul %448, %449, %cst_168 {dimension_numbers = #tpu.dot_dimension_numbers<[1], [0], [0], [1], [0, 0, 1, 1], [], []>} : vector<2x108xf32>, vector<108x128xf32>, vector<2x128xf32> -> vector<2x128xf32>
    %c0_169 = arith.constant 0 : index
    %c0_170 = arith.constant 0 : index
    %451 = vector.load %arg8[%c0_169, %c0_170] : memref<2x128xf32, #tpu.memory_space<vmem>>, vector<2x128xf32>
    %452 = arith.addf %450, %451 : vector<2x128xf32>
    %453 = arith.negf %452 : vector<2x128xf32>
    %454 = math.exp %453 : vector<2x128xf32>
    %cst_171 = arith.constant 1.000000e+00 : f32
    %455 = vector.broadcast %cst_171 : f32 to vector<2x128xf32>
    %456 = arith.addf %455, %454 : vector<2x128xf32>
    %457 = arith.divf %455, %456 : vector<2x128xf32>
    %458 = math.tanh %452 : vector<2x128xf32>
    %459 = vector.extract_strided_slice %457 {offsets = [0, 0], sizes = [2, 32], strides = [1, 1]} : vector<2x128xf32> to vector<2x32xf32>
    %460 = vector.extract_strided_slice %457 {offsets = [0, 32], sizes = [2, 32], strides = [1, 1]} : vector<2x128xf32> to vector<2x32xf32>
    %461 = vector.extract_strided_slice %458 {offsets = [0, 64], sizes = [2, 32], strides = [1, 1]} : vector<2x128xf32> to vector<2x32xf32>
    %462 = vector.extract_strided_slice %457 {offsets = [0, 96], sizes = [2, 32], strides = [1, 1]} : vector<2x128xf32> to vector<2x32xf32>
    %463 = arith.mulf %460, %336 : vector<2x32xf32>
    %464 = arith.mulf %459, %461 : vector<2x32xf32>
    %465 = arith.addf %463, %464 : vector<2x32xf32>
    %466 = math.tanh %465 : vector<2x32xf32>
    %467 = arith.mulf %462, %466 : vector<2x32xf32>
    %468 = tpu.concatenate %467, %358 in 1 : vector<2x32xf32>, vector<2x32xf32> -> vector<2x64xf32>
    %c0_172 = arith.constant 0 : index
    %c0_173 = arith.constant 0 : index
    %469 = vector.load %arg9[%c0_172, %c0_173] : memref<64x128xf32, #tpu.memory_space<vmem>>, vector<64x128xf32>
    %cst_174 = arith.constant dense<0.000000e+00> : vector<2x128xf32>
    %470 = tpu.matmul %468, %469, %cst_174 {dimension_numbers = #tpu.dot_dimension_numbers<[1], [0], [0], [1], [0, 0, 1, 1], [], []>} : vector<2x64xf32>, vector<64x128xf32>, vector<2x128xf32> -> vector<2x128xf32>
    %c0_175 = arith.constant 0 : index
    %c0_176 = arith.constant 0 : index
    %471 = vector.load %arg10[%c0_175, %c0_176] : memref<2x128xf32, #tpu.memory_space<vmem>>, vector<2x128xf32>
    %472 = arith.addf %470, %471 : vector<2x128xf32>
    %473 = arith.negf %472 : vector<2x128xf32>
    %474 = math.exp %473 : vector<2x128xf32>
    %cst_177 = arith.constant 1.000000e+00 : f32
    %475 = vector.broadcast %cst_177 : f32 to vector<2x128xf32>
    %476 = arith.addf %475, %474 : vector<2x128xf32>
    %477 = arith.divf %475, %476 : vector<2x128xf32>
    %478 = math.tanh %472 : vector<2x128xf32>
    %479 = vector.extract_strided_slice %477 {offsets = [0, 0], sizes = [2, 32], strides = [1, 1]} : vector<2x128xf32> to vector<2x32xf32>
    %480 = vector.extract_strided_slice %477 {offsets = [0, 32], sizes = [2, 32], strides = [1, 1]} : vector<2x128xf32> to vector<2x32xf32>
    %481 = vector.extract_strided_slice %478 {offsets = [0, 64], sizes = [2, 32], strides = [1, 1]} : vector<2x128xf32> to vector<2x32xf32>
    %482 = vector.extract_strided_slice %477 {offsets = [0, 96], sizes = [2, 32], strides = [1, 1]} : vector<2x128xf32> to vector<2x32xf32>
    %483 = arith.mulf %480, %356 : vector<2x32xf32>
    %484 = arith.mulf %479, %481 : vector<2x32xf32>
    %485 = arith.addf %483, %484 : vector<2x32xf32>
    %486 = math.tanh %485 : vector<2x32xf32>
    %487 = arith.mulf %482, %486 : vector<2x32xf32>
    %488 = tpu.concatenate %407, %318, %358, %378 in 1 : vector<2x6xf32>, vector<2x32xf32>, vector<2x32xf32>, vector<2x32xf32> -> vector<2x102xf32>
    %c0_178 = arith.constant 0 : index
    %c0_179 = arith.constant 0 : index
    %489 = vector.load %arg11[%c0_178, %c0_179] : memref<102x128xf32, #tpu.memory_space<vmem>>, vector<102x128xf32>
    %cst_180 = arith.constant dense<0.000000e+00> : vector<2x128xf32>
    %490 = tpu.matmul %488, %489, %cst_180 {dimension_numbers = #tpu.dot_dimension_numbers<[1], [0], [0], [1], [0, 0, 1, 1], [], []>} : vector<2x102xf32>, vector<102x128xf32>, vector<2x128xf32> -> vector<2x128xf32>
    %c0_181 = arith.constant 0 : index
    %c0_182 = arith.constant 0 : index
    %491 = vector.load %arg12[%c0_181, %c0_182] : memref<2x128xf32, #tpu.memory_space<vmem>>, vector<2x128xf32>
    %492 = arith.addf %490, %491 : vector<2x128xf32>
    %493 = arith.negf %492 : vector<2x128xf32>
    %494 = math.exp %493 : vector<2x128xf32>
    %cst_183 = arith.constant 1.000000e+00 : f32
    %495 = vector.broadcast %cst_183 : f32 to vector<2x128xf32>
    %496 = arith.addf %495, %494 : vector<2x128xf32>
    %497 = arith.divf %495, %496 : vector<2x128xf32>
    %498 = math.tanh %492 : vector<2x128xf32>
    %499 = vector.extract_strided_slice %497 {offsets = [0, 0], sizes = [2, 32], strides = [1, 1]} : vector<2x128xf32> to vector<2x32xf32>
    %500 = vector.extract_strided_slice %497 {offsets = [0, 32], sizes = [2, 32], strides = [1, 1]} : vector<2x128xf32> to vector<2x32xf32>
    %501 = vector.extract_strided_slice %498 {offsets = [0, 64], sizes = [2, 32], strides = [1, 1]} : vector<2x128xf32> to vector<2x32xf32>
    %502 = vector.extract_strided_slice %497 {offsets = [0, 96], sizes = [2, 32], strides = [1, 1]} : vector<2x128xf32> to vector<2x32xf32>
    %503 = arith.mulf %500, %376 : vector<2x32xf32>
    %504 = arith.mulf %499, %501 : vector<2x32xf32>
    %505 = arith.addf %503, %504 : vector<2x32xf32>
    %506 = math.tanh %505 : vector<2x32xf32>
    %507 = arith.mulf %502, %506 : vector<2x32xf32>
    %508 = tpu.concatenate %507, %398 in 1 : vector<2x32xf32>, vector<2x32xf32> -> vector<2x64xf32>
    %c0_184 = arith.constant 0 : index
    %c0_185 = arith.constant 0 : index
    %509 = vector.load %arg13[%c0_184, %c0_185] : memref<64x128xf32, #tpu.memory_space<vmem>>, vector<64x128xf32>
    %cst_186 = arith.constant dense<0.000000e+00> : vector<2x128xf32>
    %510 = tpu.matmul %508, %509, %cst_186 {dimension_numbers = #tpu.dot_dimension_numbers<[1], [0], [0], [1], [0, 0, 1, 1], [], []>} : vector<2x64xf32>, vector<64x128xf32>, vector<2x128xf32> -> vector<2x128xf32>
    %c0_187 = arith.constant 0 : index
    %c0_188 = arith.constant 0 : index
    %511 = vector.load %arg14[%c0_187, %c0_188] : memref<2x128xf32, #tpu.memory_space<vmem>>, vector<2x128xf32>
    %512 = arith.addf %510, %511 : vector<2x128xf32>
    %513 = arith.negf %512 : vector<2x128xf32>
    %514 = math.exp %513 : vector<2x128xf32>
    %cst_189 = arith.constant 1.000000e+00 : f32
    %515 = vector.broadcast %cst_189 : f32 to vector<2x128xf32>
    %516 = arith.addf %515, %514 : vector<2x128xf32>
    %517 = arith.divf %515, %516 : vector<2x128xf32>
    %518 = math.tanh %512 : vector<2x128xf32>
    %519 = vector.extract_strided_slice %517 {offsets = [0, 0], sizes = [2, 32], strides = [1, 1]} : vector<2x128xf32> to vector<2x32xf32>
    %520 = vector.extract_strided_slice %517 {offsets = [0, 32], sizes = [2, 32], strides = [1, 1]} : vector<2x128xf32> to vector<2x32xf32>
    %521 = vector.extract_strided_slice %518 {offsets = [0, 64], sizes = [2, 32], strides = [1, 1]} : vector<2x128xf32> to vector<2x32xf32>
    %522 = vector.extract_strided_slice %517 {offsets = [0, 96], sizes = [2, 32], strides = [1, 1]} : vector<2x128xf32> to vector<2x32xf32>
    %523 = arith.mulf %520, %396 : vector<2x32xf32>
    %524 = arith.mulf %519, %521 : vector<2x32xf32>
    %525 = arith.addf %523, %524 : vector<2x32xf32>
    %526 = math.tanh %525 : vector<2x32xf32>
    %527 = arith.mulf %522, %526 : vector<2x32xf32>
    %528 = arith.addf %399, %447 : vector<2x32xf32>
    %529 = arith.addf %400, %487 : vector<2x32xf32>
    %530 = arith.addf %401, %527 : vector<2x32xf32>
    %c4 = arith.constant 4 : index
    %c0_190 = arith.constant 0 : index
    %c0_191 = arith.constant 0 : index
    %531 = vector.load %arg0[%c4, %c0_190, %c0_191] : memref<8x2x10xf32, #tpu.memory_space<vmem>>, vector<1x2x10xf32>
    %532 = vector.shape_cast %531 : vector<1x2x10xf32> to vector<2x10xf32>
    %c4_192 = arith.constant 4 : index
    %c0_193 = arith.constant 0 : index
    %c0_194 = arith.constant 0 : index
    %533 = vector.load %arg1[%c4_192, %c0_193, %c0_194] : memref<8x2x12xf32, #tpu.memory_space<vmem>>, vector<1x2x12xf32>
    %534 = vector.shape_cast %533 : vector<1x2x12xf32> to vector<2x12xf32>
    %c4_195 = arith.constant 4 : index
    %c0_196 = arith.constant 0 : index
    %c0_197 = arith.constant 0 : index
    %535 = vector.load %arg2[%c4_195, %c0_196, %c0_197] : memref<8x2x6xf32, #tpu.memory_space<vmem>>, vector<1x2x6xf32>
    %536 = vector.shape_cast %535 : vector<1x2x6xf32> to vector<2x6xf32>
    %537 = tpu.concatenate %532, %487, %527, %427 in 1 : vector<2x10xf32>, vector<2x32xf32>, vector<2x32xf32>, vector<2x32xf32> -> vector<2x106xf32>
    %c0_198 = arith.constant 0 : index
    %c0_199 = arith.constant 0 : index
    %538 = vector.load %arg3[%c0_198, %c0_199] : memref<106x128xf32, #tpu.memory_space<vmem>>, vector<106x128xf32>
    %cst_200 = arith.constant dense<0.000000e+00> : vector<2x128xf32>
    %539 = tpu.matmul %537, %538, %cst_200 {dimension_numbers = #tpu.dot_dimension_numbers<[1], [0], [0], [1], [0, 0, 1, 1], [], []>} : vector<2x106xf32>, vector<106x128xf32>, vector<2x128xf32> -> vector<2x128xf32>
    %c0_201 = arith.constant 0 : index
    %c0_202 = arith.constant 0 : index
    %540 = vector.load %arg4[%c0_201, %c0_202] : memref<2x128xf32, #tpu.memory_space<vmem>>, vector<2x128xf32>
    %541 = arith.addf %539, %540 : vector<2x128xf32>
    %542 = arith.negf %541 : vector<2x128xf32>
    %543 = math.exp %542 : vector<2x128xf32>
    %cst_203 = arith.constant 1.000000e+00 : f32
    %544 = vector.broadcast %cst_203 : f32 to vector<2x128xf32>
    %545 = arith.addf %544, %543 : vector<2x128xf32>
    %546 = arith.divf %544, %545 : vector<2x128xf32>
    %547 = math.tanh %541 : vector<2x128xf32>
    %548 = vector.extract_strided_slice %546 {offsets = [0, 0], sizes = [2, 32], strides = [1, 1]} : vector<2x128xf32> to vector<2x32xf32>
    %549 = vector.extract_strided_slice %546 {offsets = [0, 32], sizes = [2, 32], strides = [1, 1]} : vector<2x128xf32> to vector<2x32xf32>
    %550 = vector.extract_strided_slice %547 {offsets = [0, 64], sizes = [2, 32], strides = [1, 1]} : vector<2x128xf32> to vector<2x32xf32>
    %551 = vector.extract_strided_slice %546 {offsets = [0, 96], sizes = [2, 32], strides = [1, 1]} : vector<2x128xf32> to vector<2x32xf32>
    %552 = arith.mulf %549, %425 : vector<2x32xf32>
    %553 = arith.mulf %548, %550 : vector<2x32xf32>
    %554 = arith.addf %552, %553 : vector<2x32xf32>
    %555 = math.tanh %554 : vector<2x32xf32>
    %556 = arith.mulf %551, %555 : vector<2x32xf32>
    %557 = tpu.concatenate %556, %447 in 1 : vector<2x32xf32>, vector<2x32xf32> -> vector<2x64xf32>
    %c0_204 = arith.constant 0 : index
    %c0_205 = arith.constant 0 : index
    %558 = vector.load %arg5[%c0_204, %c0_205] : memref<64x128xf32, #tpu.memory_space<vmem>>, vector<64x128xf32>
    %cst_206 = arith.constant dense<0.000000e+00> : vector<2x128xf32>
    %559 = tpu.matmul %557, %558, %cst_206 {dimension_numbers = #tpu.dot_dimension_numbers<[1], [0], [0], [1], [0, 0, 1, 1], [], []>} : vector<2x64xf32>, vector<64x128xf32>, vector<2x128xf32> -> vector<2x128xf32>
    %c0_207 = arith.constant 0 : index
    %c0_208 = arith.constant 0 : index
    %560 = vector.load %arg6[%c0_207, %c0_208] : memref<2x128xf32, #tpu.memory_space<vmem>>, vector<2x128xf32>
    %561 = arith.addf %559, %560 : vector<2x128xf32>
    %562 = arith.negf %561 : vector<2x128xf32>
    %563 = math.exp %562 : vector<2x128xf32>
    %cst_209 = arith.constant 1.000000e+00 : f32
    %564 = vector.broadcast %cst_209 : f32 to vector<2x128xf32>
    %565 = arith.addf %564, %563 : vector<2x128xf32>
    %566 = arith.divf %564, %565 : vector<2x128xf32>
    %567 = math.tanh %561 : vector<2x128xf32>
    %568 = vector.extract_strided_slice %566 {offsets = [0, 0], sizes = [2, 32], strides = [1, 1]} : vector<2x128xf32> to vector<2x32xf32>
    %569 = vector.extract_strided_slice %566 {offsets = [0, 32], sizes = [2, 32], strides = [1, 1]} : vector<2x128xf32> to vector<2x32xf32>
    %570 = vector.extract_strided_slice %567 {offsets = [0, 64], sizes = [2, 32], strides = [1, 1]} : vector<2x128xf32> to vector<2x32xf32>
    %571 = vector.extract_strided_slice %566 {offsets = [0, 96], sizes = [2, 32], strides = [1, 1]} : vector<2x128xf32> to vector<2x32xf32>
    %572 = arith.mulf %569, %445 : vector<2x32xf32>
    %573 = arith.mulf %568, %570 : vector<2x32xf32>
    %574 = arith.addf %572, %573 : vector<2x32xf32>
    %575 = math.tanh %574 : vector<2x32xf32>
    %576 = arith.mulf %571, %575 : vector<2x32xf32>
    %577 = tpu.concatenate %534, %447, %527, %467 in 1 : vector<2x12xf32>, vector<2x32xf32>, vector<2x32xf32>, vector<2x32xf32> -> vector<2x108xf32>
    %c0_210 = arith.constant 0 : index
    %c0_211 = arith.constant 0 : index
    %578 = vector.load %arg7[%c0_210, %c0_211] : memref<108x128xf32, #tpu.memory_space<vmem>>, vector<108x128xf32>
    %cst_212 = arith.constant dense<0.000000e+00> : vector<2x128xf32>
    %579 = tpu.matmul %577, %578, %cst_212 {dimension_numbers = #tpu.dot_dimension_numbers<[1], [0], [0], [1], [0, 0, 1, 1], [], []>} : vector<2x108xf32>, vector<108x128xf32>, vector<2x128xf32> -> vector<2x128xf32>
    %c0_213 = arith.constant 0 : index
    %c0_214 = arith.constant 0 : index
    %580 = vector.load %arg8[%c0_213, %c0_214] : memref<2x128xf32, #tpu.memory_space<vmem>>, vector<2x128xf32>
    %581 = arith.addf %579, %580 : vector<2x128xf32>
    %582 = arith.negf %581 : vector<2x128xf32>
    %583 = math.exp %582 : vector<2x128xf32>
    %cst_215 = arith.constant 1.000000e+00 : f32
    %584 = vector.broadcast %cst_215 : f32 to vector<2x128xf32>
    %585 = arith.addf %584, %583 : vector<2x128xf32>
    %586 = arith.divf %584, %585 : vector<2x128xf32>
    %587 = math.tanh %581 : vector<2x128xf32>
    %588 = vector.extract_strided_slice %586 {offsets = [0, 0], sizes = [2, 32], strides = [1, 1]} : vector<2x128xf32> to vector<2x32xf32>
    %589 = vector.extract_strided_slice %586 {offsets = [0, 32], sizes = [2, 32], strides = [1, 1]} : vector<2x128xf32> to vector<2x32xf32>
    %590 = vector.extract_strided_slice %587 {offsets = [0, 64], sizes = [2, 32], strides = [1, 1]} : vector<2x128xf32> to vector<2x32xf32>
    %591 = vector.extract_strided_slice %586 {offsets = [0, 96], sizes = [2, 32], strides = [1, 1]} : vector<2x128xf32> to vector<2x32xf32>
    %592 = arith.mulf %589, %465 : vector<2x32xf32>
    %593 = arith.mulf %588, %590 : vector<2x32xf32>
    %594 = arith.addf %592, %593 : vector<2x32xf32>
    %595 = math.tanh %594 : vector<2x32xf32>
    %596 = arith.mulf %591, %595 : vector<2x32xf32>
    %597 = tpu.concatenate %596, %487 in 1 : vector<2x32xf32>, vector<2x32xf32> -> vector<2x64xf32>
    %c0_216 = arith.constant 0 : index
    %c0_217 = arith.constant 0 : index
    %598 = vector.load %arg9[%c0_216, %c0_217] : memref<64x128xf32, #tpu.memory_space<vmem>>, vector<64x128xf32>
    %cst_218 = arith.constant dense<0.000000e+00> : vector<2x128xf32>
    %599 = tpu.matmul %597, %598, %cst_218 {dimension_numbers = #tpu.dot_dimension_numbers<[1], [0], [0], [1], [0, 0, 1, 1], [], []>} : vector<2x64xf32>, vector<64x128xf32>, vector<2x128xf32> -> vector<2x128xf32>
    %c0_219 = arith.constant 0 : index
    %c0_220 = arith.constant 0 : index
    %600 = vector.load %arg10[%c0_219, %c0_220] : memref<2x128xf32, #tpu.memory_space<vmem>>, vector<2x128xf32>
    %601 = arith.addf %599, %600 : vector<2x128xf32>
    %602 = arith.negf %601 : vector<2x128xf32>
    %603 = math.exp %602 : vector<2x128xf32>
    %cst_221 = arith.constant 1.000000e+00 : f32
    %604 = vector.broadcast %cst_221 : f32 to vector<2x128xf32>
    %605 = arith.addf %604, %603 : vector<2x128xf32>
    %606 = arith.divf %604, %605 : vector<2x128xf32>
    %607 = math.tanh %601 : vector<2x128xf32>
    %608 = vector.extract_strided_slice %606 {offsets = [0, 0], sizes = [2, 32], strides = [1, 1]} : vector<2x128xf32> to vector<2x32xf32>
    %609 = vector.extract_strided_slice %606 {offsets = [0, 32], sizes = [2, 32], strides = [1, 1]} : vector<2x128xf32> to vector<2x32xf32>
    %610 = vector.extract_strided_slice %607 {offsets = [0, 64], sizes = [2, 32], strides = [1, 1]} : vector<2x128xf32> to vector<2x32xf32>
    %611 = vector.extract_strided_slice %606 {offsets = [0, 96], sizes = [2, 32], strides = [1, 1]} : vector<2x128xf32> to vector<2x32xf32>
    %612 = arith.mulf %609, %485 : vector<2x32xf32>
    %613 = arith.mulf %608, %610 : vector<2x32xf32>
    %614 = arith.addf %612, %613 : vector<2x32xf32>
    %615 = math.tanh %614 : vector<2x32xf32>
    %616 = arith.mulf %611, %615 : vector<2x32xf32>
    %617 = tpu.concatenate %536, %447, %487, %507 in 1 : vector<2x6xf32>, vector<2x32xf32>, vector<2x32xf32>, vector<2x32xf32> -> vector<2x102xf32>
    %c0_222 = arith.constant 0 : index
    %c0_223 = arith.constant 0 : index
    %618 = vector.load %arg11[%c0_222, %c0_223] : memref<102x128xf32, #tpu.memory_space<vmem>>, vector<102x128xf32>
    %cst_224 = arith.constant dense<0.000000e+00> : vector<2x128xf32>
    %619 = tpu.matmul %617, %618, %cst_224 {dimension_numbers = #tpu.dot_dimension_numbers<[1], [0], [0], [1], [0, 0, 1, 1], [], []>} : vector<2x102xf32>, vector<102x128xf32>, vector<2x128xf32> -> vector<2x128xf32>
    %c0_225 = arith.constant 0 : index
    %c0_226 = arith.constant 0 : index
    %620 = vector.load %arg12[%c0_225, %c0_226] : memref<2x128xf32, #tpu.memory_space<vmem>>, vector<2x128xf32>
    %621 = arith.addf %619, %620 : vector<2x128xf32>
    %622 = arith.negf %621 : vector<2x128xf32>
    %623 = math.exp %622 : vector<2x128xf32>
    %cst_227 = arith.constant 1.000000e+00 : f32
    %624 = vector.broadcast %cst_227 : f32 to vector<2x128xf32>
    %625 = arith.addf %624, %623 : vector<2x128xf32>
    %626 = arith.divf %624, %625 : vector<2x128xf32>
    %627 = math.tanh %621 : vector<2x128xf32>
    %628 = vector.extract_strided_slice %626 {offsets = [0, 0], sizes = [2, 32], strides = [1, 1]} : vector<2x128xf32> to vector<2x32xf32>
    %629 = vector.extract_strided_slice %626 {offsets = [0, 32], sizes = [2, 32], strides = [1, 1]} : vector<2x128xf32> to vector<2x32xf32>
    %630 = vector.extract_strided_slice %627 {offsets = [0, 64], sizes = [2, 32], strides = [1, 1]} : vector<2x128xf32> to vector<2x32xf32>
    %631 = vector.extract_strided_slice %626 {offsets = [0, 96], sizes = [2, 32], strides = [1, 1]} : vector<2x128xf32> to vector<2x32xf32>
    %632 = arith.mulf %629, %505 : vector<2x32xf32>
    %633 = arith.mulf %628, %630 : vector<2x32xf32>
    %634 = arith.addf %632, %633 : vector<2x32xf32>
    %635 = math.tanh %634 : vector<2x32xf32>
    %636 = arith.mulf %631, %635 : vector<2x32xf32>
    %637 = tpu.concatenate %636, %527 in 1 : vector<2x32xf32>, vector<2x32xf32> -> vector<2x64xf32>
    %c0_228 = arith.constant 0 : index
    %c0_229 = arith.constant 0 : index
    %638 = vector.load %arg13[%c0_228, %c0_229] : memref<64x128xf32, #tpu.memory_space<vmem>>, vector<64x128xf32>
    %cst_230 = arith.constant dense<0.000000e+00> : vector<2x128xf32>
    %639 = tpu.matmul %637, %638, %cst_230 {dimension_numbers = #tpu.dot_dimension_numbers<[1], [0], [0], [1], [0, 0, 1, 1], [], []>} : vector<2x64xf32>, vector<64x128xf32>, vector<2x128xf32> -> vector<2x128xf32>
    %c0_231 = arith.constant 0 : index
    %c0_232 = arith.constant 0 : index
    %640 = vector.load %arg14[%c0_231, %c0_232] : memref<2x128xf32, #tpu.memory_space<vmem>>, vector<2x128xf32>
    %641 = arith.addf %639, %640 : vector<2x128xf32>
    %642 = arith.negf %641 : vector<2x128xf32>
    %643 = math.exp %642 : vector<2x128xf32>
    %cst_233 = arith.constant 1.000000e+00 : f32
    %644 = vector.broadcast %cst_233 : f32 to vector<2x128xf32>
    %645 = arith.addf %644, %643 : vector<2x128xf32>
    %646 = arith.divf %644, %645 : vector<2x128xf32>
    %647 = math.tanh %641 : vector<2x128xf32>
    %648 = vector.extract_strided_slice %646 {offsets = [0, 0], sizes = [2, 32], strides = [1, 1]} : vector<2x128xf32> to vector<2x32xf32>
    %649 = vector.extract_strided_slice %646 {offsets = [0, 32], sizes = [2, 32], strides = [1, 1]} : vector<2x128xf32> to vector<2x32xf32>
    %650 = vector.extract_strided_slice %647 {offsets = [0, 64], sizes = [2, 32], strides = [1, 1]} : vector<2x128xf32> to vector<2x32xf32>
    %651 = vector.extract_strided_slice %646 {offsets = [0, 96], sizes = [2, 32], strides = [1, 1]} : vector<2x128xf32> to vector<2x32xf32>
    %652 = arith.mulf %649, %525 : vector<2x32xf32>
    %653 = arith.mulf %648, %650 : vector<2x32xf32>
    %654 = arith.addf %652, %653 : vector<2x32xf32>
    %655 = math.tanh %654 : vector<2x32xf32>
    %656 = arith.mulf %651, %655 : vector<2x32xf32>
    %657 = arith.addf %528, %576 : vector<2x32xf32>
    %658 = arith.addf %529, %616 : vector<2x32xf32>
    %659 = arith.addf %530, %656 : vector<2x32xf32>
    %c5 = arith.constant 5 : index
    %c0_234 = arith.constant 0 : index
    %c0_235 = arith.constant 0 : index
    %660 = vector.load %arg0[%c5, %c0_234, %c0_235] : memref<8x2x10xf32, #tpu.memory_space<vmem>>, vector<1x2x10xf32>
    %661 = vector.shape_cast %660 : vector<1x2x10xf32> to vector<2x10xf32>
    %c5_236 = arith.constant 5 : index
    %c0_237 = arith.constant 0 : index
    %c0_238 = arith.constant 0 : index
    %662 = vector.load %arg1[%c5_236, %c0_237, %c0_238] : memref<8x2x12xf32, #tpu.memory_space<vmem>>, vector<1x2x12xf32>
    %663 = vector.shape_cast %662 : vector<1x2x12xf32> to vector<2x12xf32>
    %c5_239 = arith.constant 5 : index
    %c0_240 = arith.constant 0 : index
    %c0_241 = arith.constant 0 : index
    %664 = vector.load %arg2[%c5_239, %c0_240, %c0_241] : memref<8x2x6xf32, #tpu.memory_space<vmem>>, vector<1x2x6xf32>
    %665 = vector.shape_cast %664 : vector<1x2x6xf32> to vector<2x6xf32>
    %666 = tpu.concatenate %661, %616, %656, %556 in 1 : vector<2x10xf32>, vector<2x32xf32>, vector<2x32xf32>, vector<2x32xf32> -> vector<2x106xf32>
    %c0_242 = arith.constant 0 : index
    %c0_243 = arith.constant 0 : index
    %667 = vector.load %arg3[%c0_242, %c0_243] : memref<106x128xf32, #tpu.memory_space<vmem>>, vector<106x128xf32>
    %cst_244 = arith.constant dense<0.000000e+00> : vector<2x128xf32>
    %668 = tpu.matmul %666, %667, %cst_244 {dimension_numbers = #tpu.dot_dimension_numbers<[1], [0], [0], [1], [0, 0, 1, 1], [], []>} : vector<2x106xf32>, vector<106x128xf32>, vector<2x128xf32> -> vector<2x128xf32>
    %c0_245 = arith.constant 0 : index
    %c0_246 = arith.constant 0 : index
    %669 = vector.load %arg4[%c0_245, %c0_246] : memref<2x128xf32, #tpu.memory_space<vmem>>, vector<2x128xf32>
    %670 = arith.addf %668, %669 : vector<2x128xf32>
    %671 = arith.negf %670 : vector<2x128xf32>
    %672 = math.exp %671 : vector<2x128xf32>
    %cst_247 = arith.constant 1.000000e+00 : f32
    %673 = vector.broadcast %cst_247 : f32 to vector<2x128xf32>
    %674 = arith.addf %673, %672 : vector<2x128xf32>
    %675 = arith.divf %673, %674 : vector<2x128xf32>
    %676 = math.tanh %670 : vector<2x128xf32>
    %677 = vector.extract_strided_slice %675 {offsets = [0, 0], sizes = [2, 32], strides = [1, 1]} : vector<2x128xf32> to vector<2x32xf32>
    %678 = vector.extract_strided_slice %675 {offsets = [0, 32], sizes = [2, 32], strides = [1, 1]} : vector<2x128xf32> to vector<2x32xf32>
    %679 = vector.extract_strided_slice %676 {offsets = [0, 64], sizes = [2, 32], strides = [1, 1]} : vector<2x128xf32> to vector<2x32xf32>
    %680 = vector.extract_strided_slice %675 {offsets = [0, 96], sizes = [2, 32], strides = [1, 1]} : vector<2x128xf32> to vector<2x32xf32>
    %681 = arith.mulf %678, %554 : vector<2x32xf32>
    %682 = arith.mulf %677, %679 : vector<2x32xf32>
    %683 = arith.addf %681, %682 : vector<2x32xf32>
    %684 = math.tanh %683 : vector<2x32xf32>
    %685 = arith.mulf %680, %684 : vector<2x32xf32>
    %686 = tpu.concatenate %685, %576 in 1 : vector<2x32xf32>, vector<2x32xf32> -> vector<2x64xf32>
    %c0_248 = arith.constant 0 : index
    %c0_249 = arith.constant 0 : index
    %687 = vector.load %arg5[%c0_248, %c0_249] : memref<64x128xf32, #tpu.memory_space<vmem>>, vector<64x128xf32>
    %cst_250 = arith.constant dense<0.000000e+00> : vector<2x128xf32>
    %688 = tpu.matmul %686, %687, %cst_250 {dimension_numbers = #tpu.dot_dimension_numbers<[1], [0], [0], [1], [0, 0, 1, 1], [], []>} : vector<2x64xf32>, vector<64x128xf32>, vector<2x128xf32> -> vector<2x128xf32>
    %c0_251 = arith.constant 0 : index
    %c0_252 = arith.constant 0 : index
    %689 = vector.load %arg6[%c0_251, %c0_252] : memref<2x128xf32, #tpu.memory_space<vmem>>, vector<2x128xf32>
    %690 = arith.addf %688, %689 : vector<2x128xf32>
    %691 = arith.negf %690 : vector<2x128xf32>
    %692 = math.exp %691 : vector<2x128xf32>
    %cst_253 = arith.constant 1.000000e+00 : f32
    %693 = vector.broadcast %cst_253 : f32 to vector<2x128xf32>
    %694 = arith.addf %693, %692 : vector<2x128xf32>
    %695 = arith.divf %693, %694 : vector<2x128xf32>
    %696 = math.tanh %690 : vector<2x128xf32>
    %697 = vector.extract_strided_slice %695 {offsets = [0, 0], sizes = [2, 32], strides = [1, 1]} : vector<2x128xf32> to vector<2x32xf32>
    %698 = vector.extract_strided_slice %695 {offsets = [0, 32], sizes = [2, 32], strides = [1, 1]} : vector<2x128xf32> to vector<2x32xf32>
    %699 = vector.extract_strided_slice %696 {offsets = [0, 64], sizes = [2, 32], strides = [1, 1]} : vector<2x128xf32> to vector<2x32xf32>
    %700 = vector.extract_strided_slice %695 {offsets = [0, 96], sizes = [2, 32], strides = [1, 1]} : vector<2x128xf32> to vector<2x32xf32>
    %701 = arith.mulf %698, %574 : vector<2x32xf32>
    %702 = arith.mulf %697, %699 : vector<2x32xf32>
    %703 = arith.addf %701, %702 : vector<2x32xf32>
    %704 = math.tanh %703 : vector<2x32xf32>
    %705 = arith.mulf %700, %704 : vector<2x32xf32>
    %706 = tpu.concatenate %663, %576, %656, %596 in 1 : vector<2x12xf32>, vector<2x32xf32>, vector<2x32xf32>, vector<2x32xf32> -> vector<2x108xf32>
    %c0_254 = arith.constant 0 : index
    %c0_255 = arith.constant 0 : index
    %707 = vector.load %arg7[%c0_254, %c0_255] : memref<108x128xf32, #tpu.memory_space<vmem>>, vector<108x128xf32>
    %cst_256 = arith.constant dense<0.000000e+00> : vector<2x128xf32>
    %708 = tpu.matmul %706, %707, %cst_256 {dimension_numbers = #tpu.dot_dimension_numbers<[1], [0], [0], [1], [0, 0, 1, 1], [], []>} : vector<2x108xf32>, vector<108x128xf32>, vector<2x128xf32> -> vector<2x128xf32>
    %c0_257 = arith.constant 0 : index
    %c0_258 = arith.constant 0 : index
    %709 = vector.load %arg8[%c0_257, %c0_258] : memref<2x128xf32, #tpu.memory_space<vmem>>, vector<2x128xf32>
    %710 = arith.addf %708, %709 : vector<2x128xf32>
    %711 = arith.negf %710 : vector<2x128xf32>
    %712 = math.exp %711 : vector<2x128xf32>
    %cst_259 = arith.constant 1.000000e+00 : f32
    %713 = vector.broadcast %cst_259 : f32 to vector<2x128xf32>
    %714 = arith.addf %713, %712 : vector<2x128xf32>
    %715 = arith.divf %713, %714 : vector<2x128xf32>
    %716 = math.tanh %710 : vector<2x128xf32>
    %717 = vector.extract_strided_slice %715 {offsets = [0, 0], sizes = [2, 32], strides = [1, 1]} : vector<2x128xf32> to vector<2x32xf32>
    %718 = vector.extract_strided_slice %715 {offsets = [0, 32], sizes = [2, 32], strides = [1, 1]} : vector<2x128xf32> to vector<2x32xf32>
    %719 = vector.extract_strided_slice %716 {offsets = [0, 64], sizes = [2, 32], strides = [1, 1]} : vector<2x128xf32> to vector<2x32xf32>
    %720 = vector.extract_strided_slice %715 {offsets = [0, 96], sizes = [2, 32], strides = [1, 1]} : vector<2x128xf32> to vector<2x32xf32>
    %721 = arith.mulf %718, %594 : vector<2x32xf32>
    %722 = arith.mulf %717, %719 : vector<2x32xf32>
    %723 = arith.addf %721, %722 : vector<2x32xf32>
    %724 = math.tanh %723 : vector<2x32xf32>
    %725 = arith.mulf %720, %724 : vector<2x32xf32>
    %726 = tpu.concatenate %725, %616 in 1 : vector<2x32xf32>, vector<2x32xf32> -> vector<2x64xf32>
    %c0_260 = arith.constant 0 : index
    %c0_261 = arith.constant 0 : index
    %727 = vector.load %arg9[%c0_260, %c0_261] : memref<64x128xf32, #tpu.memory_space<vmem>>, vector<64x128xf32>
    %cst_262 = arith.constant dense<0.000000e+00> : vector<2x128xf32>
    %728 = tpu.matmul %726, %727, %cst_262 {dimension_numbers = #tpu.dot_dimension_numbers<[1], [0], [0], [1], [0, 0, 1, 1], [], []>} : vector<2x64xf32>, vector<64x128xf32>, vector<2x128xf32> -> vector<2x128xf32>
    %c0_263 = arith.constant 0 : index
    %c0_264 = arith.constant 0 : index
    %729 = vector.load %arg10[%c0_263, %c0_264] : memref<2x128xf32, #tpu.memory_space<vmem>>, vector<2x128xf32>
    %730 = arith.addf %728, %729 : vector<2x128xf32>
    %731 = arith.negf %730 : vector<2x128xf32>
    %732 = math.exp %731 : vector<2x128xf32>
    %cst_265 = arith.constant 1.000000e+00 : f32
    %733 = vector.broadcast %cst_265 : f32 to vector<2x128xf32>
    %734 = arith.addf %733, %732 : vector<2x128xf32>
    %735 = arith.divf %733, %734 : vector<2x128xf32>
    %736 = math.tanh %730 : vector<2x128xf32>
    %737 = vector.extract_strided_slice %735 {offsets = [0, 0], sizes = [2, 32], strides = [1, 1]} : vector<2x128xf32> to vector<2x32xf32>
    %738 = vector.extract_strided_slice %735 {offsets = [0, 32], sizes = [2, 32], strides = [1, 1]} : vector<2x128xf32> to vector<2x32xf32>
    %739 = vector.extract_strided_slice %736 {offsets = [0, 64], sizes = [2, 32], strides = [1, 1]} : vector<2x128xf32> to vector<2x32xf32>
    %740 = vector.extract_strided_slice %735 {offsets = [0, 96], sizes = [2, 32], strides = [1, 1]} : vector<2x128xf32> to vector<2x32xf32>
    %741 = arith.mulf %738, %614 : vector<2x32xf32>
    %742 = arith.mulf %737, %739 : vector<2x32xf32>
    %743 = arith.addf %741, %742 : vector<2x32xf32>
    %744 = math.tanh %743 : vector<2x32xf32>
    %745 = arith.mulf %740, %744 : vector<2x32xf32>
    %746 = tpu.concatenate %665, %576, %616, %636 in 1 : vector<2x6xf32>, vector<2x32xf32>, vector<2x32xf32>, vector<2x32xf32> -> vector<2x102xf32>
    %c0_266 = arith.constant 0 : index
    %c0_267 = arith.constant 0 : index
    %747 = vector.load %arg11[%c0_266, %c0_267] : memref<102x128xf32, #tpu.memory_space<vmem>>, vector<102x128xf32>
    %cst_268 = arith.constant dense<0.000000e+00> : vector<2x128xf32>
    %748 = tpu.matmul %746, %747, %cst_268 {dimension_numbers = #tpu.dot_dimension_numbers<[1], [0], [0], [1], [0, 0, 1, 1], [], []>} : vector<2x102xf32>, vector<102x128xf32>, vector<2x128xf32> -> vector<2x128xf32>
    %c0_269 = arith.constant 0 : index
    %c0_270 = arith.constant 0 : index
    %749 = vector.load %arg12[%c0_269, %c0_270] : memref<2x128xf32, #tpu.memory_space<vmem>>, vector<2x128xf32>
    %750 = arith.addf %748, %749 : vector<2x128xf32>
    %751 = arith.negf %750 : vector<2x128xf32>
    %752 = math.exp %751 : vector<2x128xf32>
    %cst_271 = arith.constant 1.000000e+00 : f32
    %753 = vector.broadcast %cst_271 : f32 to vector<2x128xf32>
    %754 = arith.addf %753, %752 : vector<2x128xf32>
    %755 = arith.divf %753, %754 : vector<2x128xf32>
    %756 = math.tanh %750 : vector<2x128xf32>
    %757 = vector.extract_strided_slice %755 {offsets = [0, 0], sizes = [2, 32], strides = [1, 1]} : vector<2x128xf32> to vector<2x32xf32>
    %758 = vector.extract_strided_slice %755 {offsets = [0, 32], sizes = [2, 32], strides = [1, 1]} : vector<2x128xf32> to vector<2x32xf32>
    %759 = vector.extract_strided_slice %756 {offsets = [0, 64], sizes = [2, 32], strides = [1, 1]} : vector<2x128xf32> to vector<2x32xf32>
    %760 = vector.extract_strided_slice %755 {offsets = [0, 96], sizes = [2, 32], strides = [1, 1]} : vector<2x128xf32> to vector<2x32xf32>
    %761 = arith.mulf %758, %634 : vector<2x32xf32>
    %762 = arith.mulf %757, %759 : vector<2x32xf32>
    %763 = arith.addf %761, %762 : vector<2x32xf32>
    %764 = math.tanh %763 : vector<2x32xf32>
    %765 = arith.mulf %760, %764 : vector<2x32xf32>
    %766 = tpu.concatenate %765, %656 in 1 : vector<2x32xf32>, vector<2x32xf32> -> vector<2x64xf32>
    %c0_272 = arith.constant 0 : index
    %c0_273 = arith.constant 0 : index
    %767 = vector.load %arg13[%c0_272, %c0_273] : memref<64x128xf32, #tpu.memory_space<vmem>>, vector<64x128xf32>
    %cst_274 = arith.constant dense<0.000000e+00> : vector<2x128xf32>
    %768 = tpu.matmul %766, %767, %cst_274 {dimension_numbers = #tpu.dot_dimension_numbers<[1], [0], [0], [1], [0, 0, 1, 1], [], []>} : vector<2x64xf32>, vector<64x128xf32>, vector<2x128xf32> -> vector<2x128xf32>
    %c0_275 = arith.constant 0 : index
    %c0_276 = arith.constant 0 : index
    %769 = vector.load %arg14[%c0_275, %c0_276] : memref<2x128xf32, #tpu.memory_space<vmem>>, vector<2x128xf32>
    %770 = arith.addf %768, %769 : vector<2x128xf32>
    %771 = arith.negf %770 : vector<2x128xf32>
    %772 = math.exp %771 : vector<2x128xf32>
    %cst_277 = arith.constant 1.000000e+00 : f32
    %773 = vector.broadcast %cst_277 : f32 to vector<2x128xf32>
    %774 = arith.addf %773, %772 : vector<2x128xf32>
    %775 = arith.divf %773, %774 : vector<2x128xf32>
    %776 = math.tanh %770 : vector<2x128xf32>
    %777 = vector.extract_strided_slice %775 {offsets = [0, 0], sizes = [2, 32], strides = [1, 1]} : vector<2x128xf32> to vector<2x32xf32>
    %778 = vector.extract_strided_slice %775 {offsets = [0, 32], sizes = [2, 32], strides = [1, 1]} : vector<2x128xf32> to vector<2x32xf32>
    %779 = vector.extract_strided_slice %776 {offsets = [0, 64], sizes = [2, 32], strides = [1, 1]} : vector<2x128xf32> to vector<2x32xf32>
    %780 = vector.extract_strided_slice %775 {offsets = [0, 96], sizes = [2, 32], strides = [1, 1]} : vector<2x128xf32> to vector<2x32xf32>
    %781 = arith.mulf %778, %654 : vector<2x32xf32>
    %782 = arith.mulf %777, %779 : vector<2x32xf32>
    %783 = arith.addf %781, %782 : vector<2x32xf32>
    %784 = math.tanh %783 : vector<2x32xf32>
    %785 = arith.mulf %780, %784 : vector<2x32xf32>
    %786 = arith.addf %657, %705 : vector<2x32xf32>
    %787 = arith.addf %658, %745 : vector<2x32xf32>
    %788 = arith.addf %659, %785 : vector<2x32xf32>
    %c6 = arith.constant 6 : index
    %c0_278 = arith.constant 0 : index
    %c0_279 = arith.constant 0 : index
    %789 = vector.load %arg0[%c6, %c0_278, %c0_279] : memref<8x2x10xf32, #tpu.memory_space<vmem>>, vector<1x2x10xf32>
    %790 = vector.shape_cast %789 : vector<1x2x10xf32> to vector<2x10xf32>
    %c6_280 = arith.constant 6 : index
    %c0_281 = arith.constant 0 : index
    %c0_282 = arith.constant 0 : index
    %791 = vector.load %arg1[%c6_280, %c0_281, %c0_282] : memref<8x2x12xf32, #tpu.memory_space<vmem>>, vector<1x2x12xf32>
    %792 = vector.shape_cast %791 : vector<1x2x12xf32> to vector<2x12xf32>
    %c6_283 = arith.constant 6 : index
    %c0_284 = arith.constant 0 : index
    %c0_285 = arith.constant 0 : index
    %793 = vector.load %arg2[%c6_283, %c0_284, %c0_285] : memref<8x2x6xf32, #tpu.memory_space<vmem>>, vector<1x2x6xf32>
    %794 = vector.shape_cast %793 : vector<1x2x6xf32> to vector<2x6xf32>
    %795 = tpu.concatenate %790, %745, %785, %685 in 1 : vector<2x10xf32>, vector<2x32xf32>, vector<2x32xf32>, vector<2x32xf32> -> vector<2x106xf32>
    %c0_286 = arith.constant 0 : index
    %c0_287 = arith.constant 0 : index
    %796 = vector.load %arg3[%c0_286, %c0_287] : memref<106x128xf32, #tpu.memory_space<vmem>>, vector<106x128xf32>
    %cst_288 = arith.constant dense<0.000000e+00> : vector<2x128xf32>
    %797 = tpu.matmul %795, %796, %cst_288 {dimension_numbers = #tpu.dot_dimension_numbers<[1], [0], [0], [1], [0, 0, 1, 1], [], []>} : vector<2x106xf32>, vector<106x128xf32>, vector<2x128xf32> -> vector<2x128xf32>
    %c0_289 = arith.constant 0 : index
    %c0_290 = arith.constant 0 : index
    %798 = vector.load %arg4[%c0_289, %c0_290] : memref<2x128xf32, #tpu.memory_space<vmem>>, vector<2x128xf32>
    %799 = arith.addf %797, %798 : vector<2x128xf32>
    %800 = arith.negf %799 : vector<2x128xf32>
    %801 = math.exp %800 : vector<2x128xf32>
    %cst_291 = arith.constant 1.000000e+00 : f32
    %802 = vector.broadcast %cst_291 : f32 to vector<2x128xf32>
    %803 = arith.addf %802, %801 : vector<2x128xf32>
    %804 = arith.divf %802, %803 : vector<2x128xf32>
    %805 = math.tanh %799 : vector<2x128xf32>
    %806 = vector.extract_strided_slice %804 {offsets = [0, 0], sizes = [2, 32], strides = [1, 1]} : vector<2x128xf32> to vector<2x32xf32>
    %807 = vector.extract_strided_slice %804 {offsets = [0, 32], sizes = [2, 32], strides = [1, 1]} : vector<2x128xf32> to vector<2x32xf32>
    %808 = vector.extract_strided_slice %805 {offsets = [0, 64], sizes = [2, 32], strides = [1, 1]} : vector<2x128xf32> to vector<2x32xf32>
    %809 = vector.extract_strided_slice %804 {offsets = [0, 96], sizes = [2, 32], strides = [1, 1]} : vector<2x128xf32> to vector<2x32xf32>
    %810 = arith.mulf %807, %683 : vector<2x32xf32>
    %811 = arith.mulf %806, %808 : vector<2x32xf32>
    %812 = arith.addf %810, %811 : vector<2x32xf32>
    %813 = math.tanh %812 : vector<2x32xf32>
    %814 = arith.mulf %809, %813 : vector<2x32xf32>
    %815 = tpu.concatenate %814, %705 in 1 : vector<2x32xf32>, vector<2x32xf32> -> vector<2x64xf32>
    %c0_292 = arith.constant 0 : index
    %c0_293 = arith.constant 0 : index
    %816 = vector.load %arg5[%c0_292, %c0_293] : memref<64x128xf32, #tpu.memory_space<vmem>>, vector<64x128xf32>
    %cst_294 = arith.constant dense<0.000000e+00> : vector<2x128xf32>
    %817 = tpu.matmul %815, %816, %cst_294 {dimension_numbers = #tpu.dot_dimension_numbers<[1], [0], [0], [1], [0, 0, 1, 1], [], []>} : vector<2x64xf32>, vector<64x128xf32>, vector<2x128xf32> -> vector<2x128xf32>
    %c0_295 = arith.constant 0 : index
    %c0_296 = arith.constant 0 : index
    %818 = vector.load %arg6[%c0_295, %c0_296] : memref<2x128xf32, #tpu.memory_space<vmem>>, vector<2x128xf32>
    %819 = arith.addf %817, %818 : vector<2x128xf32>
    %820 = arith.negf %819 : vector<2x128xf32>
    %821 = math.exp %820 : vector<2x128xf32>
    %cst_297 = arith.constant 1.000000e+00 : f32
    %822 = vector.broadcast %cst_297 : f32 to vector<2x128xf32>
    %823 = arith.addf %822, %821 : vector<2x128xf32>
    %824 = arith.divf %822, %823 : vector<2x128xf32>
    %825 = math.tanh %819 : vector<2x128xf32>
    %826 = vector.extract_strided_slice %824 {offsets = [0, 0], sizes = [2, 32], strides = [1, 1]} : vector<2x128xf32> to vector<2x32xf32>
    %827 = vector.extract_strided_slice %824 {offsets = [0, 32], sizes = [2, 32], strides = [1, 1]} : vector<2x128xf32> to vector<2x32xf32>
    %828 = vector.extract_strided_slice %825 {offsets = [0, 64], sizes = [2, 32], strides = [1, 1]} : vector<2x128xf32> to vector<2x32xf32>
    %829 = vector.extract_strided_slice %824 {offsets = [0, 96], sizes = [2, 32], strides = [1, 1]} : vector<2x128xf32> to vector<2x32xf32>
    %830 = arith.mulf %827, %703 : vector<2x32xf32>
    %831 = arith.mulf %826, %828 : vector<2x32xf32>
    %832 = arith.addf %830, %831 : vector<2x32xf32>
    %833 = math.tanh %832 : vector<2x32xf32>
    %834 = arith.mulf %829, %833 : vector<2x32xf32>
    %835 = tpu.concatenate %792, %705, %785, %725 in 1 : vector<2x12xf32>, vector<2x32xf32>, vector<2x32xf32>, vector<2x32xf32> -> vector<2x108xf32>
    %c0_298 = arith.constant 0 : index
    %c0_299 = arith.constant 0 : index
    %836 = vector.load %arg7[%c0_298, %c0_299] : memref<108x128xf32, #tpu.memory_space<vmem>>, vector<108x128xf32>
    %cst_300 = arith.constant dense<0.000000e+00> : vector<2x128xf32>
    %837 = tpu.matmul %835, %836, %cst_300 {dimension_numbers = #tpu.dot_dimension_numbers<[1], [0], [0], [1], [0, 0, 1, 1], [], []>} : vector<2x108xf32>, vector<108x128xf32>, vector<2x128xf32> -> vector<2x128xf32>
    %c0_301 = arith.constant 0 : index
    %c0_302 = arith.constant 0 : index
    %838 = vector.load %arg8[%c0_301, %c0_302] : memref<2x128xf32, #tpu.memory_space<vmem>>, vector<2x128xf32>
    %839 = arith.addf %837, %838 : vector<2x128xf32>
    %840 = arith.negf %839 : vector<2x128xf32>
    %841 = math.exp %840 : vector<2x128xf32>
    %cst_303 = arith.constant 1.000000e+00 : f32
    %842 = vector.broadcast %cst_303 : f32 to vector<2x128xf32>
    %843 = arith.addf %842, %841 : vector<2x128xf32>
    %844 = arith.divf %842, %843 : vector<2x128xf32>
    %845 = math.tanh %839 : vector<2x128xf32>
    %846 = vector.extract_strided_slice %844 {offsets = [0, 0], sizes = [2, 32], strides = [1, 1]} : vector<2x128xf32> to vector<2x32xf32>
    %847 = vector.extract_strided_slice %844 {offsets = [0, 32], sizes = [2, 32], strides = [1, 1]} : vector<2x128xf32> to vector<2x32xf32>
    %848 = vector.extract_strided_slice %845 {offsets = [0, 64], sizes = [2, 32], strides = [1, 1]} : vector<2x128xf32> to vector<2x32xf32>
    %849 = vector.extract_strided_slice %844 {offsets = [0, 96], sizes = [2, 32], strides = [1, 1]} : vector<2x128xf32> to vector<2x32xf32>
    %850 = arith.mulf %847, %723 : vector<2x32xf32>
    %851 = arith.mulf %846, %848 : vector<2x32xf32>
    %852 = arith.addf %850, %851 : vector<2x32xf32>
    %853 = math.tanh %852 : vector<2x32xf32>
    %854 = arith.mulf %849, %853 : vector<2x32xf32>
    %855 = tpu.concatenate %854, %745 in 1 : vector<2x32xf32>, vector<2x32xf32> -> vector<2x64xf32>
    %c0_304 = arith.constant 0 : index
    %c0_305 = arith.constant 0 : index
    %856 = vector.load %arg9[%c0_304, %c0_305] : memref<64x128xf32, #tpu.memory_space<vmem>>, vector<64x128xf32>
    %cst_306 = arith.constant dense<0.000000e+00> : vector<2x128xf32>
    %857 = tpu.matmul %855, %856, %cst_306 {dimension_numbers = #tpu.dot_dimension_numbers<[1], [0], [0], [1], [0, 0, 1, 1], [], []>} : vector<2x64xf32>, vector<64x128xf32>, vector<2x128xf32> -> vector<2x128xf32>
    %c0_307 = arith.constant 0 : index
    %c0_308 = arith.constant 0 : index
    %858 = vector.load %arg10[%c0_307, %c0_308] : memref<2x128xf32, #tpu.memory_space<vmem>>, vector<2x128xf32>
    %859 = arith.addf %857, %858 : vector<2x128xf32>
    %860 = arith.negf %859 : vector<2x128xf32>
    %861 = math.exp %860 : vector<2x128xf32>
    %cst_309 = arith.constant 1.000000e+00 : f32
    %862 = vector.broadcast %cst_309 : f32 to vector<2x128xf32>
    %863 = arith.addf %862, %861 : vector<2x128xf32>
    %864 = arith.divf %862, %863 : vector<2x128xf32>
    %865 = math.tanh %859 : vector<2x128xf32>
    %866 = vector.extract_strided_slice %864 {offsets = [0, 0], sizes = [2, 32], strides = [1, 1]} : vector<2x128xf32> to vector<2x32xf32>
    %867 = vector.extract_strided_slice %864 {offsets = [0, 32], sizes = [2, 32], strides = [1, 1]} : vector<2x128xf32> to vector<2x32xf32>
    %868 = vector.extract_strided_slice %865 {offsets = [0, 64], sizes = [2, 32], strides = [1, 1]} : vector<2x128xf32> to vector<2x32xf32>
    %869 = vector.extract_strided_slice %864 {offsets = [0, 96], sizes = [2, 32], strides = [1, 1]} : vector<2x128xf32> to vector<2x32xf32>
    %870 = arith.mulf %867, %743 : vector<2x32xf32>
    %871 = arith.mulf %866, %868 : vector<2x32xf32>
    %872 = arith.addf %870, %871 : vector<2x32xf32>
    %873 = math.tanh %872 : vector<2x32xf32>
    %874 = arith.mulf %869, %873 : vector<2x32xf32>
    %875 = tpu.concatenate %794, %705, %745, %765 in 1 : vector<2x6xf32>, vector<2x32xf32>, vector<2x32xf32>, vector<2x32xf32> -> vector<2x102xf32>
    %c0_310 = arith.constant 0 : index
    %c0_311 = arith.constant 0 : index
    %876 = vector.load %arg11[%c0_310, %c0_311] : memref<102x128xf32, #tpu.memory_space<vmem>>, vector<102x128xf32>
    %cst_312 = arith.constant dense<0.000000e+00> : vector<2x128xf32>
    %877 = tpu.matmul %875, %876, %cst_312 {dimension_numbers = #tpu.dot_dimension_numbers<[1], [0], [0], [1], [0, 0, 1, 1], [], []>} : vector<2x102xf32>, vector<102x128xf32>, vector<2x128xf32> -> vector<2x128xf32>
    %c0_313 = arith.constant 0 : index
    %c0_314 = arith.constant 0 : index
    %878 = vector.load %arg12[%c0_313, %c0_314] : memref<2x128xf32, #tpu.memory_space<vmem>>, vector<2x128xf32>
    %879 = arith.addf %877, %878 : vector<2x128xf32>
    %880 = arith.negf %879 : vector<2x128xf32>
    %881 = math.exp %880 : vector<2x128xf32>
    %cst_315 = arith.constant 1.000000e+00 : f32
    %882 = vector.broadcast %cst_315 : f32 to vector<2x128xf32>
    %883 = arith.addf %882, %881 : vector<2x128xf32>
    %884 = arith.divf %882, %883 : vector<2x128xf32>
    %885 = math.tanh %879 : vector<2x128xf32>
    %886 = vector.extract_strided_slice %884 {offsets = [0, 0], sizes = [2, 32], strides = [1, 1]} : vector<2x128xf32> to vector<2x32xf32>
    %887 = vector.extract_strided_slice %884 {offsets = [0, 32], sizes = [2, 32], strides = [1, 1]} : vector<2x128xf32> to vector<2x32xf32>
    %888 = vector.extract_strided_slice %885 {offsets = [0, 64], sizes = [2, 32], strides = [1, 1]} : vector<2x128xf32> to vector<2x32xf32>
    %889 = vector.extract_strided_slice %884 {offsets = [0, 96], sizes = [2, 32], strides = [1, 1]} : vector<2x128xf32> to vector<2x32xf32>
    %890 = arith.mulf %887, %763 : vector<2x32xf32>
    %891 = arith.mulf %886, %888 : vector<2x32xf32>
    %892 = arith.addf %890, %891 : vector<2x32xf32>
    %893 = math.tanh %892 : vector<2x32xf32>
    %894 = arith.mulf %889, %893 : vector<2x32xf32>
    %895 = tpu.concatenate %894, %785 in 1 : vector<2x32xf32>, vector<2x32xf32> -> vector<2x64xf32>
    %c0_316 = arith.constant 0 : index
    %c0_317 = arith.constant 0 : index
    %896 = vector.load %arg13[%c0_316, %c0_317] : memref<64x128xf32, #tpu.memory_space<vmem>>, vector<64x128xf32>
    %cst_318 = arith.constant dense<0.000000e+00> : vector<2x128xf32>
    %897 = tpu.matmul %895, %896, %cst_318 {dimension_numbers = #tpu.dot_dimension_numbers<[1], [0], [0], [1], [0, 0, 1, 1], [], []>} : vector<2x64xf32>, vector<64x128xf32>, vector<2x128xf32> -> vector<2x128xf32>
    %c0_319 = arith.constant 0 : index
    %c0_320 = arith.constant 0 : index
    %898 = vector.load %arg14[%c0_319, %c0_320] : memref<2x128xf32, #tpu.memory_space<vmem>>, vector<2x128xf32>
    %899 = arith.addf %897, %898 : vector<2x128xf32>
    %900 = arith.negf %899 : vector<2x128xf32>
    %901 = math.exp %900 : vector<2x128xf32>
    %cst_321 = arith.constant 1.000000e+00 : f32
    %902 = vector.broadcast %cst_321 : f32 to vector<2x128xf32>
    %903 = arith.addf %902, %901 : vector<2x128xf32>
    %904 = arith.divf %902, %903 : vector<2x128xf32>
    %905 = math.tanh %899 : vector<2x128xf32>
    %906 = vector.extract_strided_slice %904 {offsets = [0, 0], sizes = [2, 32], strides = [1, 1]} : vector<2x128xf32> to vector<2x32xf32>
    %907 = vector.extract_strided_slice %904 {offsets = [0, 32], sizes = [2, 32], strides = [1, 1]} : vector<2x128xf32> to vector<2x32xf32>
    %908 = vector.extract_strided_slice %905 {offsets = [0, 64], sizes = [2, 32], strides = [1, 1]} : vector<2x128xf32> to vector<2x32xf32>
    %909 = vector.extract_strided_slice %904 {offsets = [0, 96], sizes = [2, 32], strides = [1, 1]} : vector<2x128xf32> to vector<2x32xf32>
    %910 = arith.mulf %907, %783 : vector<2x32xf32>
    %911 = arith.mulf %906, %908 : vector<2x32xf32>
    %912 = arith.addf %910, %911 : vector<2x32xf32>
    %913 = math.tanh %912 : vector<2x32xf32>
    %914 = arith.mulf %909, %913 : vector<2x32xf32>
    %915 = arith.addf %786, %834 : vector<2x32xf32>
    %916 = arith.addf %787, %874 : vector<2x32xf32>
    %917 = arith.addf %788, %914 : vector<2x32xf32>
    %c7 = arith.constant 7 : index
    %c0_322 = arith.constant 0 : index
    %c0_323 = arith.constant 0 : index
    %918 = vector.load %arg0[%c7, %c0_322, %c0_323] : memref<8x2x10xf32, #tpu.memory_space<vmem>>, vector<1x2x10xf32>
    %919 = vector.shape_cast %918 : vector<1x2x10xf32> to vector<2x10xf32>
    %c7_324 = arith.constant 7 : index
    %c0_325 = arith.constant 0 : index
    %c0_326 = arith.constant 0 : index
    %920 = vector.load %arg1[%c7_324, %c0_325, %c0_326] : memref<8x2x12xf32, #tpu.memory_space<vmem>>, vector<1x2x12xf32>
    %921 = vector.shape_cast %920 : vector<1x2x12xf32> to vector<2x12xf32>
    %c7_327 = arith.constant 7 : index
    %c0_328 = arith.constant 0 : index
    %c0_329 = arith.constant 0 : index
    %922 = vector.load %arg2[%c7_327, %c0_328, %c0_329] : memref<8x2x6xf32, #tpu.memory_space<vmem>>, vector<1x2x6xf32>
    %923 = vector.shape_cast %922 : vector<1x2x6xf32> to vector<2x6xf32>
    %924 = tpu.concatenate %919, %874, %914, %814 in 1 : vector<2x10xf32>, vector<2x32xf32>, vector<2x32xf32>, vector<2x32xf32> -> vector<2x106xf32>
    %c0_330 = arith.constant 0 : index
    %c0_331 = arith.constant 0 : index
    %925 = vector.load %arg3[%c0_330, %c0_331] : memref<106x128xf32, #tpu.memory_space<vmem>>, vector<106x128xf32>
    %cst_332 = arith.constant dense<0.000000e+00> : vector<2x128xf32>
    %926 = tpu.matmul %924, %925, %cst_332 {dimension_numbers = #tpu.dot_dimension_numbers<[1], [0], [0], [1], [0, 0, 1, 1], [], []>} : vector<2x106xf32>, vector<106x128xf32>, vector<2x128xf32> -> vector<2x128xf32>
    %c0_333 = arith.constant 0 : index
    %c0_334 = arith.constant 0 : index
    %927 = vector.load %arg4[%c0_333, %c0_334] : memref<2x128xf32, #tpu.memory_space<vmem>>, vector<2x128xf32>
    %928 = arith.addf %926, %927 : vector<2x128xf32>
    %929 = arith.negf %928 : vector<2x128xf32>
    %930 = math.exp %929 : vector<2x128xf32>
    %cst_335 = arith.constant 1.000000e+00 : f32
    %931 = vector.broadcast %cst_335 : f32 to vector<2x128xf32>
    %932 = arith.addf %931, %930 : vector<2x128xf32>
    %933 = arith.divf %931, %932 : vector<2x128xf32>
    %934 = math.tanh %928 : vector<2x128xf32>
    %935 = vector.extract_strided_slice %933 {offsets = [0, 0], sizes = [2, 32], strides = [1, 1]} : vector<2x128xf32> to vector<2x32xf32>
    %936 = vector.extract_strided_slice %933 {offsets = [0, 32], sizes = [2, 32], strides = [1, 1]} : vector<2x128xf32> to vector<2x32xf32>
    %937 = vector.extract_strided_slice %934 {offsets = [0, 64], sizes = [2, 32], strides = [1, 1]} : vector<2x128xf32> to vector<2x32xf32>
    %938 = vector.extract_strided_slice %933 {offsets = [0, 96], sizes = [2, 32], strides = [1, 1]} : vector<2x128xf32> to vector<2x32xf32>
    %939 = arith.mulf %936, %812 : vector<2x32xf32>
    %940 = arith.mulf %935, %937 : vector<2x32xf32>
    %941 = arith.addf %939, %940 : vector<2x32xf32>
    %942 = math.tanh %941 : vector<2x32xf32>
    %943 = arith.mulf %938, %942 : vector<2x32xf32>
    %944 = tpu.concatenate %943, %834 in 1 : vector<2x32xf32>, vector<2x32xf32> -> vector<2x64xf32>
    %c0_336 = arith.constant 0 : index
    %c0_337 = arith.constant 0 : index
    %945 = vector.load %arg5[%c0_336, %c0_337] : memref<64x128xf32, #tpu.memory_space<vmem>>, vector<64x128xf32>
    %cst_338 = arith.constant dense<0.000000e+00> : vector<2x128xf32>
    %946 = tpu.matmul %944, %945, %cst_338 {dimension_numbers = #tpu.dot_dimension_numbers<[1], [0], [0], [1], [0, 0, 1, 1], [], []>} : vector<2x64xf32>, vector<64x128xf32>, vector<2x128xf32> -> vector<2x128xf32>
    %c0_339 = arith.constant 0 : index
    %c0_340 = arith.constant 0 : index
    %947 = vector.load %arg6[%c0_339, %c0_340] : memref<2x128xf32, #tpu.memory_space<vmem>>, vector<2x128xf32>
    %948 = arith.addf %946, %947 : vector<2x128xf32>
    %949 = arith.negf %948 : vector<2x128xf32>
    %950 = math.exp %949 : vector<2x128xf32>
    %cst_341 = arith.constant 1.000000e+00 : f32
    %951 = vector.broadcast %cst_341 : f32 to vector<2x128xf32>
    %952 = arith.addf %951, %950 : vector<2x128xf32>
    %953 = arith.divf %951, %952 : vector<2x128xf32>
    %954 = math.tanh %948 : vector<2x128xf32>
    %955 = vector.extract_strided_slice %953 {offsets = [0, 0], sizes = [2, 32], strides = [1, 1]} : vector<2x128xf32> to vector<2x32xf32>
    %956 = vector.extract_strided_slice %953 {offsets = [0, 32], sizes = [2, 32], strides = [1, 1]} : vector<2x128xf32> to vector<2x32xf32>
    %957 = vector.extract_strided_slice %954 {offsets = [0, 64], sizes = [2, 32], strides = [1, 1]} : vector<2x128xf32> to vector<2x32xf32>
    %958 = vector.extract_strided_slice %953 {offsets = [0, 96], sizes = [2, 32], strides = [1, 1]} : vector<2x128xf32> to vector<2x32xf32>
    %959 = arith.mulf %956, %832 : vector<2x32xf32>
    %960 = arith.mulf %955, %957 : vector<2x32xf32>
    %961 = arith.addf %959, %960 : vector<2x32xf32>
    %962 = math.tanh %961 : vector<2x32xf32>
    %963 = arith.mulf %958, %962 : vector<2x32xf32>
    %964 = tpu.concatenate %921, %834, %914, %854 in 1 : vector<2x12xf32>, vector<2x32xf32>, vector<2x32xf32>, vector<2x32xf32> -> vector<2x108xf32>
    %c0_342 = arith.constant 0 : index
    %c0_343 = arith.constant 0 : index
    %965 = vector.load %arg7[%c0_342, %c0_343] : memref<108x128xf32, #tpu.memory_space<vmem>>, vector<108x128xf32>
    %cst_344 = arith.constant dense<0.000000e+00> : vector<2x128xf32>
    %966 = tpu.matmul %964, %965, %cst_344 {dimension_numbers = #tpu.dot_dimension_numbers<[1], [0], [0], [1], [0, 0, 1, 1], [], []>} : vector<2x108xf32>, vector<108x128xf32>, vector<2x128xf32> -> vector<2x128xf32>
    %c0_345 = arith.constant 0 : index
    %c0_346 = arith.constant 0 : index
    %967 = vector.load %arg8[%c0_345, %c0_346] : memref<2x128xf32, #tpu.memory_space<vmem>>, vector<2x128xf32>
    %968 = arith.addf %966, %967 : vector<2x128xf32>
    %969 = arith.negf %968 : vector<2x128xf32>
    %970 = math.exp %969 : vector<2x128xf32>
    %cst_347 = arith.constant 1.000000e+00 : f32
    %971 = vector.broadcast %cst_347 : f32 to vector<2x128xf32>
    %972 = arith.addf %971, %970 : vector<2x128xf32>
    %973 = arith.divf %971, %972 : vector<2x128xf32>
    %974 = math.tanh %968 : vector<2x128xf32>
    %975 = vector.extract_strided_slice %973 {offsets = [0, 0], sizes = [2, 32], strides = [1, 1]} : vector<2x128xf32> to vector<2x32xf32>
    %976 = vector.extract_strided_slice %973 {offsets = [0, 32], sizes = [2, 32], strides = [1, 1]} : vector<2x128xf32> to vector<2x32xf32>
    %977 = vector.extract_strided_slice %974 {offsets = [0, 64], sizes = [2, 32], strides = [1, 1]} : vector<2x128xf32> to vector<2x32xf32>
    %978 = vector.extract_strided_slice %973 {offsets = [0, 96], sizes = [2, 32], strides = [1, 1]} : vector<2x128xf32> to vector<2x32xf32>
    %979 = arith.mulf %976, %852 : vector<2x32xf32>
    %980 = arith.mulf %975, %977 : vector<2x32xf32>
    %981 = arith.addf %979, %980 : vector<2x32xf32>
    %982 = math.tanh %981 : vector<2x32xf32>
    %983 = arith.mulf %978, %982 : vector<2x32xf32>
    %984 = tpu.concatenate %983, %874 in 1 : vector<2x32xf32>, vector<2x32xf32> -> vector<2x64xf32>
    %c0_348 = arith.constant 0 : index
    %c0_349 = arith.constant 0 : index
    %985 = vector.load %arg9[%c0_348, %c0_349] : memref<64x128xf32, #tpu.memory_space<vmem>>, vector<64x128xf32>
    %cst_350 = arith.constant dense<0.000000e+00> : vector<2x128xf32>
    %986 = tpu.matmul %984, %985, %cst_350 {dimension_numbers = #tpu.dot_dimension_numbers<[1], [0], [0], [1], [0, 0, 1, 1], [], []>} : vector<2x64xf32>, vector<64x128xf32>, vector<2x128xf32> -> vector<2x128xf32>
    %c0_351 = arith.constant 0 : index
    %c0_352 = arith.constant 0 : index
    %987 = vector.load %arg10[%c0_351, %c0_352] : memref<2x128xf32, #tpu.memory_space<vmem>>, vector<2x128xf32>
    %988 = arith.addf %986, %987 : vector<2x128xf32>
    %989 = arith.negf %988 : vector<2x128xf32>
    %990 = math.exp %989 : vector<2x128xf32>
    %cst_353 = arith.constant 1.000000e+00 : f32
    %991 = vector.broadcast %cst_353 : f32 to vector<2x128xf32>
    %992 = arith.addf %991, %990 : vector<2x128xf32>
    %993 = arith.divf %991, %992 : vector<2x128xf32>
    %994 = math.tanh %988 : vector<2x128xf32>
    %995 = vector.extract_strided_slice %993 {offsets = [0, 0], sizes = [2, 32], strides = [1, 1]} : vector<2x128xf32> to vector<2x32xf32>
    %996 = vector.extract_strided_slice %993 {offsets = [0, 32], sizes = [2, 32], strides = [1, 1]} : vector<2x128xf32> to vector<2x32xf32>
    %997 = vector.extract_strided_slice %994 {offsets = [0, 64], sizes = [2, 32], strides = [1, 1]} : vector<2x128xf32> to vector<2x32xf32>
    %998 = vector.extract_strided_slice %993 {offsets = [0, 96], sizes = [2, 32], strides = [1, 1]} : vector<2x128xf32> to vector<2x32xf32>
    %999 = arith.mulf %996, %872 : vector<2x32xf32>
    %1000 = arith.mulf %995, %997 : vector<2x32xf32>
    %1001 = arith.addf %999, %1000 : vector<2x32xf32>
    %1002 = math.tanh %1001 : vector<2x32xf32>
    %1003 = arith.mulf %998, %1002 : vector<2x32xf32>
    %1004 = tpu.concatenate %923, %834, %874, %894 in 1 : vector<2x6xf32>, vector<2x32xf32>, vector<2x32xf32>, vector<2x32xf32> -> vector<2x102xf32>
    %c0_354 = arith.constant 0 : index
    %c0_355 = arith.constant 0 : index
    %1005 = vector.load %arg11[%c0_354, %c0_355] : memref<102x128xf32, #tpu.memory_space<vmem>>, vector<102x128xf32>
    %cst_356 = arith.constant dense<0.000000e+00> : vector<2x128xf32>
    %1006 = tpu.matmul %1004, %1005, %cst_356 {dimension_numbers = #tpu.dot_dimension_numbers<[1], [0], [0], [1], [0, 0, 1, 1], [], []>} : vector<2x102xf32>, vector<102x128xf32>, vector<2x128xf32> -> vector<2x128xf32>
    %c0_357 = arith.constant 0 : index
    %c0_358 = arith.constant 0 : index
    %1007 = vector.load %arg12[%c0_357, %c0_358] : memref<2x128xf32, #tpu.memory_space<vmem>>, vector<2x128xf32>
    %1008 = arith.addf %1006, %1007 : vector<2x128xf32>
    %1009 = arith.negf %1008 : vector<2x128xf32>
    %1010 = math.exp %1009 : vector<2x128xf32>
    %cst_359 = arith.constant 1.000000e+00 : f32
    %1011 = vector.broadcast %cst_359 : f32 to vector<2x128xf32>
    %1012 = arith.addf %1011, %1010 : vector<2x128xf32>
    %1013 = arith.divf %1011, %1012 : vector<2x128xf32>
    %1014 = math.tanh %1008 : vector<2x128xf32>
    %1015 = vector.extract_strided_slice %1013 {offsets = [0, 0], sizes = [2, 32], strides = [1, 1]} : vector<2x128xf32> to vector<2x32xf32>
    %1016 = vector.extract_strided_slice %1013 {offsets = [0, 32], sizes = [2, 32], strides = [1, 1]} : vector<2x128xf32> to vector<2x32xf32>
    %1017 = vector.extract_strided_slice %1014 {offsets = [0, 64], sizes = [2, 32], strides = [1, 1]} : vector<2x128xf32> to vector<2x32xf32>
    %1018 = vector.extract_strided_slice %1013 {offsets = [0, 96], sizes = [2, 32], strides = [1, 1]} : vector<2x128xf32> to vector<2x32xf32>
    %1019 = arith.mulf %1016, %892 : vector<2x32xf32>
    %1020 = arith.mulf %1015, %1017 : vector<2x32xf32>
    %1021 = arith.addf %1019, %1020 : vector<2x32xf32>
    %1022 = math.tanh %1021 : vector<2x32xf32>
    %1023 = arith.mulf %1018, %1022 : vector<2x32xf32>
    %1024 = tpu.concatenate %1023, %914 in 1 : vector<2x32xf32>, vector<2x32xf32> -> vector<2x64xf32>
    %c0_360 = arith.constant 0 : index
    %c0_361 = arith.constant 0 : index
    %1025 = vector.load %arg13[%c0_360, %c0_361] : memref<64x128xf32, #tpu.memory_space<vmem>>, vector<64x128xf32>
    %cst_362 = arith.constant dense<0.000000e+00> : vector<2x128xf32>
    %1026 = tpu.matmul %1024, %1025, %cst_362 {dimension_numbers = #tpu.dot_dimension_numbers<[1], [0], [0], [1], [0, 0, 1, 1], [], []>} : vector<2x64xf32>, vector<64x128xf32>, vector<2x128xf32> -> vector<2x128xf32>
    %c0_363 = arith.constant 0 : index
    %c0_364 = arith.constant 0 : index
    %1027 = vector.load %arg14[%c0_363, %c0_364] : memref<2x128xf32, #tpu.memory_space<vmem>>, vector<2x128xf32>
    %1028 = arith.addf %1026, %1027 : vector<2x128xf32>
    %1029 = arith.negf %1028 : vector<2x128xf32>
    %1030 = math.exp %1029 : vector<2x128xf32>
    %cst_365 = arith.constant 1.000000e+00 : f32
    %1031 = vector.broadcast %cst_365 : f32 to vector<2x128xf32>
    %1032 = arith.addf %1031, %1030 : vector<2x128xf32>
    %1033 = arith.divf %1031, %1032 : vector<2x128xf32>
    %1034 = math.tanh %1028 : vector<2x128xf32>
    %1035 = vector.extract_strided_slice %1033 {offsets = [0, 0], sizes = [2, 32], strides = [1, 1]} : vector<2x128xf32> to vector<2x32xf32>
    %1036 = vector.extract_strided_slice %1033 {offsets = [0, 32], sizes = [2, 32], strides = [1, 1]} : vector<2x128xf32> to vector<2x32xf32>
    %1037 = vector.extract_strided_slice %1034 {offsets = [0, 64], sizes = [2, 32], strides = [1, 1]} : vector<2x128xf32> to vector<2x32xf32>
    %1038 = vector.extract_strided_slice %1033 {offsets = [0, 96], sizes = [2, 32], strides = [1, 1]} : vector<2x128xf32> to vector<2x32xf32>
    %1039 = arith.mulf %1036, %912 : vector<2x32xf32>
    %1040 = arith.mulf %1035, %1037 : vector<2x32xf32>
    %1041 = arith.addf %1039, %1040 : vector<2x32xf32>
    %1042 = math.tanh %1041 : vector<2x32xf32>
    %1043 = arith.mulf %1038, %1042 : vector<2x32xf32>
    %1044 = arith.addf %915, %963 : vector<2x32xf32>
    %1045 = arith.addf %916, %1003 : vector<2x32xf32>
    %1046 = arith.addf %917, %1043 : vector<2x32xf32>
    %1047 = tpu.concatenate %1044, %1045, %1046 in 1 : vector<2x32xf32>, vector<2x32xf32>, vector<2x32xf32> -> vector<2x96xf32>
    %c0_366 = arith.constant 0 : index
    %c0_367 = arith.constant 0 : index
    %1048 = vector.load %arg15[%c0_366, %c0_367] : memref<2x96xf32, #tpu.memory_space<vmem>>, vector<2x96xf32>
    %1049 = arith.mulf %1047, %1048 : vector<2x96xf32>
    %cst_368 = arith.constant dense<0.000000e+00> : vector<2xf32>
    %1050 = vector.multi_reduction <add>, %1049, %cst_368 [1] : vector<2x96xf32> to vector<2xf32>
    %1051 = vector.shape_cast %1050 : vector<2xf32> to vector<2x1xf32>
    %c0_369 = arith.constant 0 : index
    %c0_370 = arith.constant 0 : index
    %1052 = vector.load %arg16[%c0_369, %c0_370] : memref<2x1xf32, #tpu.memory_space<vmem>>, vector<2x1xf32>
    %1053 = arith.addf %1051, %1052 : vector<2x1xf32>
    %c0_371 = arith.constant 0 : index
    %c0_372 = arith.constant 0 : index
    %1054 = vector.load %arg17[%c0_371, %c0_372] : memref<2x1xf32, #tpu.memory_space<vmem>>, vector<2x1xf32>
    tpu.vector_store %arg17[%c0_371, %c0_372], %1053 {strides = array<i32>} : memref<2x1xf32, #tpu.memory_space<vmem>>, vector<2x1xf32>,
    return
  }
}

</mosaic_0001>

<llo_original>
// kernel: _lambda_.1
$region0: #{_lambda_.1}
  #allocation0 [shape = 'u32[]', space=smem, size = 0x4, offset = 0x4, fixed_abs, tag = 'smem constant byte address 0x4 - core index']
  #allocation1 [shape = 'u32[144,128]{1,0:T(1,128)}', space=vmem, size = 0x12000, scoped, tag = 'internal scratch']
  %s0 = inlined_call_operand.vmem [shape: f32[8,2,10], index: 0, kind: input, shape index: {}]
  %s1 = inlined_call_operand.vmem [shape: f32[8,2,12], index: 1, kind: input, shape index: {}]
  %s2 = inlined_call_operand.vmem [shape: f32[8,2,6], index: 2, kind: input, shape index: {}]
  %s3 = inlined_call_operand.hbm [shape: f32[106,128], index: 3, kind: input, shape index: {}]
  %s4 = inlined_call_operand.vmem [shape: f32[2,128], index: 4, kind: input, shape index: {}]
  %s5 = inlined_call_operand.hbm [shape: f32[64,128], index: 5, kind: input, shape index: {}]
  %s6 = inlined_call_operand.vmem [shape: f32[2,128], index: 6, kind: input, shape index: {}]
  %s7 = inlined_call_operand.vmem [shape: f32[108,128], index: 7, kind: input, shape index: {}]
  %s8 = inlined_call_operand.vmem [shape: f32[2,128], index: 8, kind: input, shape index: {}]
  %s9 = inlined_call_operand.hbm [shape: f32[64,128], index: 9, kind: input, shape index: {}]
  %s10 = inlined_call_operand.vmem [shape: f32[2,128], index: 10, kind: input, shape index: {}]
  %s11 = inlined_call_operand.hbm [shape: f32[102,128], index: 11, kind: input, shape index: {}]
  %s12 = inlined_call_operand.vmem [shape: f32[2,128], index: 12, kind: input, shape index: {}]
  %s13 = inlined_call_operand.hbm [shape: f32[64,128], index: 13, kind: input, shape index: {}]
  %s14 = inlined_call_operand.vmem [shape: f32[2,128], index: 14, kind: input, shape index: {}]
  %s15 = inlined_call_operand.vmem [shape: f32[2,96], index: 15, kind: input, shape index: {}]
  %s16 = inlined_call_operand.vmem [shape: f32[2,1], index: 16, kind: input, shape index: {}]
  %s17 = inlined_call_operand.vmem [shape: f32[2,1], index: 17, kind: output, shape index: {}]
  %s18 = sld [smem:[#allocation0]]
  $region98: #{_lambda_.1} parent=0
    _
  %s20 = ssub.s32 1, %s18
  %s21 = scalar_select 0, %s20, %s18
  $region1: #{_lambda_.1} parent=0
    #allocation2 [shape = 'u8[57344]{0}', space=vmem, size = 0xe000, scoped, tag = 'input window, operand 3, single buffered']
    #allocation3 [shape = 's32[1]{0}', space=sflag, size = 0x4, scoped, tag = 'scoped memory for _lambda_.1']
    #allocation4 [shape = 'u8[32768]{0}', space=vmem, size = 0x8000, scoped, tag = 'input window, operand 5, single buffered']
    #allocation5 [shape = 's32[1]{0}', space=sflag, size = 0x4, scoped, tag = 'scoped memory for _lambda_.1']
    #allocation6 [shape = 'u8[32768]{0}', space=vmem, size = 0x8000, scoped, tag = 'input window, operand 9, single buffered']
    #allocation7 [shape = 'u8[53248]{0}', space=vmem, size = 0xd000, scoped, tag = 'input window, operand 11, single buffered']
    #allocation8 [shape = 's32[1]{0}', space=sflag, size = 0x4, scoped, tag = 'scoped memory for _lambda_.1']
    #allocation9 [shape = 'u8[32768]{0}', space=vmem, size = 0x8000, scoped, tag = 'input window, operand 13, single buffered']
    %22 = vsyncpa [#allocation3], 0
    %23 = vsyncpa [#allocation5], 0
    %24 = vsyncpa [#allocation8], 0
    // Predicated region
    $region2: #{_lambda_.1} parent=1 // pred_check
      _
    $region3: #{_lambda_.1} parent=1 // pred_check_branch
      %26 = sbr.rel (0) target = $region5
    $region4: #{_lambda_.1} parent=1 // pred_region
      _
    $region5: #{_lambda_.1} parent=1 // pred_fallthru
      _
    // Predicated region
    $region6: #{_lambda_.1} parent=1 // pred_check
      _
    $region7: #{_lambda_.1} parent=1 // pred_check_branch
      %28 = sbr.rel (0) target = $region9
    $region8: #{_lambda_.1} parent=1 // pred_region
      _
    $region9: #{_lambda_.1} parent=1 // pred_fallthru
      _
    // Predicated region
    $region10: #{_lambda_.1} parent=1 // pred_check
      _
    $region11: #{_lambda_.1} parent=1 // pred_check_branch
      %30 = sbr.rel (0) target = $region13
    $region12: #{_lambda_.1} parent=1 // pred_region
      _
    $region13: #{_lambda_.1} parent=1 // pred_fallthru
      _
    // Predicated region
    $region14: #{_lambda_.1} parent=1 // pred_check
      _
    $region15: #{_lambda_.1} parent=1 // pred_check_branch
      %32 = sbr.rel (0) target = $region17
    $region16: #{_lambda_.1} parent=1 // pred_region
      %s34 = ssub.s32 1792, 1792
      %35 = vsyncadd [#allocation3], %s34
      %s36 = sshll.u32 [#allocation2], 4
      %s37 = int_to_ptr.vmem [resolvable:$true] %s36
      %42 = dma.hbm_to_vmem [thread:$0]  %s3, 1792, %s37, [#allocation3], 128, 128, 8
    $region17: #{_lambda_.1} parent=1 // pred_fallthru
      _
    // Predicated region
    $region18: #{_lambda_.1} parent=1 // pred_check
      _
    $region19: #{_lambda_.1} parent=1 // pred_check_branch
      %44 = sbr.rel (0) target = $region21
    $region20: #{_lambda_.1} parent=1 // pred_region
      _
    $region21: #{_lambda_.1} parent=1 // pred_fallthru
      _
    // Predicated region
    $region22: #{_lambda_.1} parent=1 // pred_check
      _
    $region23: #{_lambda_.1} parent=1 // pred_check_branch
      %46 = sbr.rel (0) target = $region25
    $region24: #{_lambda_.1} parent=1 // pred_region
      %s48 = ssub.s32 1024, 1024
      %49 = vsyncadd [#allocation5], %s48
      %s50 = sshll.u32 [#allocation4], 4
      %s51 = int_to_ptr.vmem [resolvable:$true] %s50
      %56 = dma.hbm_to_vmem [thread:$0]  %s5, 1024, %s51, [#allocation5], 128, 128, 8
    $region25: #{_lambda_.1} parent=1 // pred_fallthru
      _
    // Predicated region
    $region26: #{_lambda_.1} parent=1 // pred_check
      _
    $region27: #{_lambda_.1} parent=1 // pred_check_branch
      %58 = sbr.rel (0) target = $region29
    $region28: #{_lambda_.1} parent=1 // pred_region
      _
    $region29: #{_lambda_.1} parent=1 // pred_fallthru
      _
    // Predicated region
    $region30: #{_lambda_.1} parent=1 // pred_check
      _
    $region31: #{_lambda_.1} parent=1 // pred_check_branch
      %60 = sbr.rel (0) target = $region33
    $region32: #{_lambda_.1} parent=1 // pred_region
      _
    $region33: #{_lambda_.1} parent=1 // pred_fallthru
      _
    // Predicated region
    $region34: #{_lambda_.1} parent=1 // pred_check
      _
    $region35: #{_lambda_.1} parent=1 // pred_check_branch
      %62 = sbr.rel (0) target = $region37
    $region36: #{_lambda_.1} parent=1 // pred_region
      _
    $region37: #{_lambda_.1} parent=1 // pred_fallthru
      _
    // Predicated region
    $region38: #{_lambda_.1} parent=1 // pred_check
      _
    $region39: #{_lambda_.1} parent=1 // pred_check_branch
      %64 = sbr.rel (0) target = $region41
    $region40: #{_lambda_.1} parent=1 // pred_region
      %s66 = ssub.s32 1024, 1024
      %67 = vsyncadd [#allocation5], %s66
      %s68 = sshll.u32 [#allocation6], 4
      %s69 = int_to_ptr.vmem [resolvable:$true] %s68
      %74 = dma.hbm_to_vmem [thread:$0]  %s9, 1024, %s69, [#allocation5], 128, 128, 8
    $region41: #{_lambda_.1} parent=1 // pred_fallthru
      _
    // Predicated region
    $region42: #{_lambda_.1} parent=1 // pred_check
      _
    $region43: #{_lambda_.1} parent=1 // pred_check_branch
      %76 = sbr.rel (0) target = $region45
    $region44: #{_lambda_.1} parent=1 // pred_region
      _
    $region45: #{_lambda_.1} parent=1 // pred_fallthru
      _
    // Predicated region
    $region46: #{_lambda_.1} parent=1 // pred_check
      _
    $region47: #{_lambda_.1} parent=1 // pred_check_branch
      %78 = sbr.rel (0) target = $region49
    $region48: #{_lambda_.1} parent=1 // pred_region
      %s80 = ssub.s32 1664, 1664
      %81 = vsyncadd [#allocation8], %s80
      %s82 = sshll.u32 [#allocation7], 4
      %s83 = int_to_ptr.vmem [resolvable:$true] %s82
      %88 = dma.hbm_to_vmem [thread:$0]  %s11, 1664, %s83, [#allocation8], 128, 128, 8
    $region49: #{_lambda_.1} parent=1 // pred_fallthru
      _
    // Predicated region
    $region50: #{_lambda_.1} parent=1 // pred_check
      _
    $region51: #{_lambda_.1} parent=1 // pred_check_branch
      %90 = sbr.rel (0) target = $region53
    $region52: #{_lambda_.1} parent=1 // pred_region
      _
    $region53: #{_lambda_.1} parent=1 // pred_fallthru
      _
    // Predicated region
    $region54: #{_lambda_.1} parent=1 // pred_check
      _
    $region55: #{_lambda_.1} parent=1 // pred_check_branch
      %92 = sbr.rel (0) target = $region57
    $region56: #{_lambda_.1} parent=1 // pred_region
      %s94 = ssub.s32 1024, 1024
      %95 = vsyncadd [#allocation8], %s94
      %s96 = sshll.u32 [#allocation9], 4
      %s97 = int_to_ptr.vmem [resolvable:$true] %s96
      %102 = dma.hbm_to_vmem [thread:$0]  %s13, 1024, %s97, [#allocation8], 128, 128, 8
    $region57: #{_lambda_.1} parent=1 // pred_fallthru
      _
    // Predicated region
    $region58: #{_lambda_.1} parent=1 // pred_check
      _
    $region59: #{_lambda_.1} parent=1 // pred_check_branch
      %104 = sbr.rel (0) target = $region61
    $region60: #{_lambda_.1} parent=1 // pred_region
      _
    $region61: #{_lambda_.1} parent=1 // pred_fallthru
      _
    // Predicated region
    $region62: #{_lambda_.1} parent=1 // pred_check
      _
    $region63: #{_lambda_.1} parent=1 // pred_check_branch
      %106 = sbr.rel (0) target = $region65
    $region64: #{_lambda_.1} parent=1 // pred_region
      _
    $region65: #{_lambda_.1} parent=1 // pred_fallthru
      _
    // Predicated region
    $region66: #{_lambda_.1} parent=1 // pred_check
      _
    $region67: #{_lambda_.1} parent=1 // pred_check_branch
      %108 = sbr.rel (0) target = $region69
    $region68: #{_lambda_.1} parent=1 // pred_region
      _
    $region69: #{_lambda_.1} parent=1 // pred_fallthru
      _
    // Predicated region
    $region70: #{_lambda_.1} parent=1 // pred_check
      _
    $region71: #{_lambda_.1} parent=1 // pred_check_branch
      %110 = sbr.rel (0) target = $region73
    $region72: #{_lambda_.1} parent=1 // pred_region
      %111 = dma.done [#allocation3], 1792
    $region73: #{_lambda_.1} parent=1 // pred_fallthru
      _
    // Predicated region
    $region74: #{_lambda_.1} parent=1 // pred_check
      _
    $region75: #{_lambda_.1} parent=1 // pred_check_branch
      %113 = sbr.rel (0) target = $region77
    $region76: #{_lambda_.1} parent=1 // pred_region
      %114 = dma.done [#allocation5], 1024
    $region77: #{_lambda_.1} parent=1 // pred_fallthru
      _
    // Predicated region
    $region78: #{_lambda_.1} parent=1 // pred_check
      _
    $region79: #{_lambda_.1} parent=1 // pred_check_branch
      %116 = sbr.rel (0) target = $region81
    $region80: #{_lambda_.1} parent=1 // pred_region
      %117 = dma.done [#allocation5], 1024
    $region81: #{_lambda_.1} parent=1 // pred_fallthru
      _
    // Predicated region
    $region82: #{_lambda_.1} parent=1 // pred_check
      _
    $region83: #{_lambda_.1} parent=1 // pred_check_branch
      %119 = sbr.rel (0) target = $region85
    $region84: #{_lambda_.1} parent=1 // pred_region
      %120 = dma.done [#allocation8], 1664
    $region85: #{_lambda_.1} parent=1 // pred_fallthru
      _
    // Predicated region
    $region86: #{_lambda_.1} parent=1 // pred_check
      _
    $region87: #{_lambda_.1} parent=1 // pred_check_branch
      %122 = sbr.rel (0) target = $region89
    $region88: #{_lambda_.1} parent=1 // pred_region
      %123 = dma.done [#allocation8], 1024
    $region89: #{_lambda_.1} parent=1 // pred_fallthru
      _
    %v124 = vld [vmem:[%s0] sm:$0x3]
    %v125 = vld [vmem:[%s1] sm:$0x3]
    %v126 = vld [vmem:[%s2] sm:$0x3]
    %vm127 = vcmask 80896
    %v128 = vsel %vm127, %v124, 0.0
    %vm129 = vcmask 343040
    %v130 = vsel %vm129, %v128, 0.0
    %vm131 = vcmask 605184
    %v132 = vsel %vm131, %v130, 0.0
    %v133 = vld [vmem:[#allocation2] sm:$0xff]
    %v134 = vld [vmem:[#allocation2 + $0x8] sm:$0xff]
    %v135 = vld [vmem:[#allocation2 + $0x10] sm:$0xff]
    %v136 = vld [vmem:[#allocation2 + $0x18] sm:$0xff]
    %v137 = vld [vmem:[#allocation2 + $0x20] sm:$0xff]
    %v138 = vld [vmem:[#allocation2 + $0x28] sm:$0xff]
    %v139 = vld [vmem:[#allocation2 + $0x30] sm:$0xff]
    %v140 = vld [vmem:[#allocation2 + $0x38] sm:$0xff]
    %v141 = vld [vmem:[#allocation2 + $0x40] sm:$0xff]
    %v142 = vld [vmem:[#allocation2 + $0x48] sm:$0xff]
    %v143 = vld [vmem:[#allocation2 + $0x50] sm:$0xff]
    %v144 = vld [vmem:[#allocation2 + $0x58] sm:$0xff]
    %v145 = vld [vmem:[#allocation2 + $0x60] sm:$0xff]
    %v146 = vld [vmem:[#allocation2 + $0x68] sm:$0x3]
    %v147 = vld [vmem:[%s4] sm:$0x3]
    %vm148 = vcmask 867328
    %v150 = vsel %vm148, %v132, 0
    %vm152 = vcmask 1041408
    %v154 = vsel %vm152, %v146, 0
    %156 = vmatprep.subr.mxu0 0.0
    %157 = vmatpush1.msra.mxu0 %v133
    %158 = vmatprep.subr.mxu0 0.0
    %159 = vmatpush1.msra.mxu0 %v134
    %160 = vmatprep.subr.mxu0 0.0
    %161 = vmatpush1.msra.mxu0 %v135
    %162 = vmatprep.subr.mxu0 0.0
    %163 = vmatpush1.msra.mxu0 %v136
    %164 = vmatprep.subr.mxu0 0.0
    %165 = vmatpush1.msra.mxu0 %v137
    %166 = vmatprep.subr.mxu0 0.0
    %167 = vmatpush1.msra.mxu0 %v138
    %168 = vmatprep.subr.mxu0 0.0
    %169 = vmatpush1.msra.mxu0 %v139
    %170 = vmatprep.subr.mxu0 0.0
    %171 = vmatpush1.msra.mxu0 %v140
    %172 = vmatprep.subr.mxu0 0.0
    %173 = vmatpush1.msra.mxu0 %v141
    %174 = vmatprep.subr.mxu0 0.0
    %175 = vmatpush1.msra.mxu0 %v142
    %176 = vmatprep.subr.mxu0 0.0
    %177 = vmatpush1.msra.mxu0 %v143
    %178 = vmatprep.subr.mxu0 0.0
    %179 = vmatpush1.msra.mxu0 %v144
    %180 = vmatprep.subr.mxu0 0.0
    %181 = vmatpush1.msra.mxu0 %v145
    %182 = vmatprep.subr.mxu0 0.0
    %183 = vmatpush1.msra.mxu0 %v154
    %184 = vmatprep.subr.mxu0 0.0
    %185 = vmatpush1.msra.mxu0 0.0
    %186 = vmatprep.subr.mxu0 0.0
    %187 = vmatpush1.msra.mxu0 0.0
    %188 = vmatprep.subr.mxu0 0.0
    %189 = vmatpush1.msra.mxu0 0.0
    %190 = vmatprep.subr.mxu0 0.0
    %191 = vmatpush1.msra.mxu0 0.0
    %192 = vmatprep.subr.mxu0 0.0
    %193 = vmatpush1.msra.mxu0 0.0
    %194 = vmatprep.subr.mxu0 0.0
    %195 = vmatpush1.msra.mxu0 0.0
    %196 = vmatprep.subr.mxu0 0.0
    %197 = vmatpush1.msra.mxu0 0.0
    %198 = vmatprep.subr.mxu0 0.0
    %199 = vmatpush1.msra.mxu0 0.0
    %200 = vmatprep.subr.mxu0 0.0
    %201 = vmatpush1.msra.mxu0 0.0
    %202 = vmatprep.subr.mxu0 0.0
    %203 = vmatpush1.msra.mxu0 0.0
    %204 = vmatprep.subr.mxu0 0.0
    %205 = vmatpush1.msra.mxu0 0.0
    %206 = vmatprep.subr.mxu0 0.0
    %207 = vmatpush1.msra.mxu0 0.0
    %208 = vmatprep.subr.mxu0 0.0
    %209 = vmatpush1.msra.mxu0 0.0
    %210 = vmatprep.subr.mxu0 0.0
    %211 = vmatpush1.msra.mxu0 0.0
    %212 = vmatprep.subr.mxu0 0.0
    %213 = vmatpush1.msra.mxu0 0.0
    %214 = vmatprep.subr.mxu0 0.0
    %215 = vmatpush1.msra.mxu0 0.0
    %216 = vmatprep.subr.mxu0 0.0
    %217 = vmatpush1.msra.mxu0 0.0
    %218 = vmatprep.subr.mxu0 0.0
    %219 = vmatpush1.msra.mxu0 0.0
    %220 = vmatprep.mubr.f32.mxu0 0.0
    %221 = vmatmul.mubr.f32.gmra.mrb[0].mxu0 %v150
    %v222 = vpop.f32.mrb[0].mxu0
    %v223 = vadd.f32 %v147, %v222
    %v224 = vpop.f32.mrb[0].mxu0
    %225 = vdwg.mxu0
    %v226 = vxor.u32 %v223, 2147483648
    %v227 = vmul.f32 %v226, 1.442695
    %v228 = vpow.pop %v227
    %v229 = vadd.f32 %v228, 1.0
    %v230 = vrcp.pop %v229
    %v231 = vmul.f32 1.0, %v230
    %v232 = vtanh.pop %v223
    %v233 = vmul.f32 %v231, 0.0
    %235 = vrot.lane.b32.xlu0 %v232, 64
    %v236 = vpop.permute.xlu0 %235
    %v238 = vmul.f32 %v231, %v236
    %240 = vrot.lane.b32.xlu0 %v238, 32
    %v241 = vpop.permute.xlu0 %240
    %v243 = vadd.f32 %v233, %v241
    %v244 = vtanh.pop %v243
    %246 = vrot.lane.b32.xlu0 %v244, 64
    %v247 = vpop.permute.xlu0 %246
    %v249 = vmul.f32 %v231, %v247
    %251 = vrot.lane.b32.xlu0 %v249, 32
    %v252 = vpop.permute.xlu0 %251
    %vm254 = vcmask 261120
    %v255 = vsel %vm254, %v252, 0.0
    %v256 = vld [vmem:[#allocation4] sm:$0xff]
    %v257 = vld [vmem:[#allocation4 + $0x8] sm:$0xff]
    %v258 = vld [vmem:[#allocation4 + $0x10] sm:$0xff]
    %v259 = vld [vmem:[#allocation4 + $0x18] sm:$0xff]
    %v260 = vld [vmem:[#allocation4 + $0x20] sm:$0xff]
    %v261 = vld [vmem:[#allocation4 + $0x28] sm:$0xff]
    %v262 = vld [vmem:[#allocation4 + $0x30] sm:$0xff]
    %v263 = vld [vmem:[#allocation4 + $0x38] sm:$0xff]
    %v264 = vld [vmem:[%s6] sm:$0x3]
    %vm265 = vcmask 523264
    %v267 = vsel %vm265, %v255, 0
    %269 = vmatprep.subr.mxu0 0.0
    %270 = vmatpush1.msra.mxu0 %v256
    %271 = vmatprep.subr.mxu0 0.0
    %272 = vmatpush1.msra.mxu0 %v257
    %273 = vmatprep.subr.mxu0 0.0
    %274 = vmatpush1.msra.mxu0 %v258
    %275 = vmatprep.subr.mxu0 0.0
    %276 = vmatpush1.msra.mxu0 %v259
    %277 = vmatprep.subr.mxu0 0.0
    %278 = vmatpush1.msra.mxu0 %v260
    %279 = vmatprep.subr.mxu0 0.0
    %280 = vmatpush1.msra.mxu0 %v261
    %281 = vmatprep.subr.mxu0 0.0
    %282 = vmatpush1.msra.mxu0 %v262
    %283 = vmatprep.subr.mxu0 0.0
    %284 = vmatpush1.msra.mxu0 %v263
    %285 = vmatprep.subr.mxu0 0.0
    %286 = vmatpush1.msra.mxu0 0.0
    %287 = vmatprep.subr.mxu0 0.0
    %288 = vmatpush1.msra.mxu0 0.0
    %289 = vmatprep.subr.mxu0 0.0
    %290 = vmatpush1.msra.mxu0 0.0
    %291 = vmatprep.subr.mxu0 0.0
    %292 = vmatpush1.msra.mxu0 0.0
    %293 = vmatprep.subr.mxu0 0.0
    %294 = vmatpush1.msra.mxu0 0.0
    %295 = vmatprep.subr.mxu0 0.0
    %296 = vmatpush1.msra.mxu0 0.0
    %297 = vmatprep.subr.mxu0 0.0
    %298 = vmatpush1.msra.mxu0 0.0
    %299 = vmatprep.subr.mxu0 0.0
    %300 = vmatpush1.msra.mxu0 0.0
    %301 = vmatprep.subr.mxu0 0.0
    %302 = vmatpush1.msra.mxu0 0.0
    %303 = vmatprep.subr.mxu0 0.0
    %304 = vmatpush1.msra.mxu0 0.0
    %305 = vmatprep.subr.mxu0 0.0
    %306 = vmatpush1.msra.mxu0 0.0
    %307 = vmatprep.subr.mxu0 0.0
    %308 = vmatpush1.msra.mxu0 0.0
    %309 = vmatprep.subr.mxu0 0.0
    %310 = vmatpush1.msra.mxu0 0.0
    %311 = vmatprep.subr.mxu0 0.0
    %312 = vmatpush1.msra.mxu0 0.0
    %313 = vmatprep.subr.mxu0 0.0
    %314 = vmatpush1.msra.mxu0 0.0
    %315 = vmatprep.subr.mxu0 0.0
    %316 = vmatpush1.msra.mxu0 0.0
    %317 = vmatprep.subr.mxu0 0.0
    %318 = vmatpush1.msra.mxu0 0.0
    %319 = vmatprep.subr.mxu0 0.0
    %320 = vmatpush1.msra.mxu0 0.0
    %321 = vmatprep.subr.mxu0 0.0
    %322 = vmatpush1.msra.mxu0 0.0
    %323 = vmatprep.subr.mxu0 0.0
    %324 = vmatpush1.msra.mxu0 0.0
    %325 = vmatprep.subr.mxu0 0.0
    %326 = vmatpush1.msra.mxu0 0.0
    %327 = vmatprep.subr.mxu0 0.0
    %328 = vmatpush1.msra.mxu0 0.0
    %329 = vmatprep.subr.mxu0 0.0
    %330 = vmatpush1.msra.mxu0 0.0
    %331 = vmatprep.subr.mxu0 0.0
    %332 = vmatpush1.msra.mxu0 0.0
    %333 = vmatprep.mubr.f32.mxu0 0.0
    %334 = vmatmul.mubr.f32.gmra.mrb[0].mxu0 %v267
    %v335 = vpop.f32.mrb[0].mxu0
    %v336 = vadd.f32 %v264, %v335
    %v337 = vpop.f32.mrb[0].mxu0
    %338 = vdwg.mxu0
    %v339 = vxor.u32 %v336, 2147483648
    %v340 = vmul.f32 %v339, 1.442695
    %v341 = vpow.pop %v340
    %v342 = vadd.f32 %v341, 1.0
    %v343 = vrcp.pop %v342
    %v344 = vmul.f32 1.0, %v343
    %v345 = vtanh.pop %v336
    %v346 = vmul.f32 %v344, 0.0
    %348 = vrot.lane.b32.xlu0 %v345, 64
    %v349 = vpop.permute.xlu0 %348
    %v351 = vmul.f32 %v344, %v349
    %353 = vrot.lane.b32.xlu0 %v351, 32
    %v354 = vpop.permute.xlu0 %353
    %v356 = vadd.f32 %v346, %v354
    %v357 = vtanh.pop %v356
    %359 = vrot.lane.b32.xlu0 %v357, 64
    %v360 = vpop.permute.xlu0 %359
    %v362 = vmul.f32 %v344, %v360
    %vm363 = vcmask 97280
    %v364 = vsel %vm363, %v125, 0.0
    %vm365 = vcmask 359424
    %v366 = vsel %vm365, %v364, 0.0
    %vm367 = vcmask 621568
    %v368 = vsel %vm367, %v366, 0.0
    %v369 = vld [vmem:[%s7] sm:$0xff]
    %v370 = vld [vmem:[%s7 + $0x8] sm:$0xff]
    %v371 = vld [vmem:[%s7 + $0x10] sm:$0xff]
    %v372 = vld [vmem:[%s7 + $0x18] sm:$0xff]
    %v373 = vld [vmem:[%s7 + $0x20] sm:$0xff]
    %v374 = vld [vmem:[%s7 + $0x28] sm:$0xff]
    %v375 = vld [vmem:[%s7 + $0x30] sm:$0xff]
    %v376 = vld [vmem:[%s7 + $0x38] sm:$0xff]
    %v377 = vld [vmem:[%s7 + $0x40] sm:$0xff]
    %v378 = vld [vmem:[%s7 + $0x48] sm:$0xff]
    %v379 = vld [vmem:[%s7 + $0x50] sm:$0xff]
    %v380 = vld [vmem:[%s7 + $0x58] sm:$0xff]
    %v381 = vld [vmem:[%s7 + $0x60] sm:$0xff]
    %v382 = vld [vmem:[%s7 + $0x68] sm:$0xf]
    %v383 = vld [vmem:[%s8] sm:$0x3]
    %vm384 = vcmask 883712
    %v386 = vsel %vm384, %v368, 0
    %vm388 = vcmask 1043456
    %v390 = vsel %vm388, %v382, 0
    %392 = vmatprep.subr.mxu0 0.0
    %393 = vmatpush1.msra.mxu0 %v369
    %394 = vmatprep.subr.mxu0 0.0
    %395 = vmatpush1.msra.mxu0 %v370
    %396 = vmatprep.subr.mxu0 0.0
    %397 = vmatpush1.msra.mxu0 %v371
    %398 = vmatprep.subr.mxu0 0.0
    %399 = vmatpush1.msra.mxu0 %v372
    %400 = vmatprep.subr.mxu0 0.0
    %401 = vmatpush1.msra.mxu0 %v373
    %402 = vmatprep.subr.mxu0 0.0
    %403 = vmatpush1.msra.mxu0 %v374
    %404 = vmatprep.subr.mxu0 0.0
    %405 = vmatpush1.msra.mxu0 %v375
    %406 = vmatprep.subr.mxu0 0.0
    %407 = vmatpush1.msra.mxu0 %v376
    %408 = vmatprep.subr.mxu0 0.0
    %409 = vmatpush1.msra.mxu0 %v377
    %410 = vmatprep.subr.mxu0 0.0
    %411 = vmatpush1.msra.mxu0 %v378
    %412 = vmatprep.subr.mxu0 0.0
    %413 = vmatpush1.msra.mxu0 %v379
    %414 = vmatprep.subr.mxu0 0.0
    %415 = vmatpush1.msra.mxu0 %v380
    %416 = vmatprep.subr.mxu0 0.0
    %417 = vmatpush1.msra.mxu0 %v381
    %418 = vmatprep.subr.mxu0 0.0
    %419 = vmatpush1.msra.mxu0 %v390
    %420 = vmatprep.subr.mxu0 0.0
    %421 = vmatpush1.msra.mxu0 0.0
    %422 = vmatprep.subr.mxu0 0.0
    %423 = vmatpush1.msra.mxu0 0.0
    %424 = vmatprep.subr.mxu0 0.0
    %425 = vmatpush1.msra.mxu0 0.0
    %426 = vmatprep.subr.mxu0 0.0
    %427 = vmatpush1.msra.mxu0 0.0
    %428 = vmatprep.subr.mxu0 0.0
    %429 = vmatpush1.msra.mxu0 0.0
    %430 = vmatprep.subr.mxu0 0.0
    %431 = vmatpush1.msra.mxu0 0.0
    %432 = vmatprep.subr.mxu0 0.0
    %433 = vmatpush1.msra.mxu0 0.0
    %434 = vmatprep.subr.mxu0 0.0
    %435 = vmatpush1.msra.mxu0 0.0
    %436 = vmatprep.subr.mxu0 0.0
    %437 = vmatpush1.msra.mxu0 0.0
    %438 = vmatprep.subr.mxu0 0.0
    %439 = vmatpush1.msra.mxu0 0.0
    %440 = vmatprep.subr.mxu0 0.0
    %441 = vmatpush1.msra.mxu0 0.0
    %442 = vmatprep.subr.mxu0 0.0
    %443 = vmatpush1.msra.mxu0 0.0
    %444 = vmatprep.subr.mxu0 0.0
    %445 = vmatpush1.msra.mxu0 0.0
    %446 = vmatprep.subr.mxu0 0.0
    %447 = vmatpush1.msra.mxu0 0.0
    %448 = vmatprep.subr.mxu0 0.0
    %449 = vmatpush1.msra.mxu0 0.0
    %450 = vmatprep.subr.mxu0 0.0
    %451 = vmatpush1.msra.mxu0 0.0
    %452 = vmatprep.subr.mxu0 0.0
    %453 = vmatpush1.msra.mxu0 0.0
    %454 = vmatprep.subr.mxu0 0.0
    %455 = vmatpush1.msra.mxu0 0.0
    %456 = vmatprep.mubr.f32.mxu0 0.0
    %457 = vmatmul.mubr.f32.gmra.mrb[0].mxu0 %v386
    %v458 = vpop.f32.mrb[0].mxu0
    %v459 = vadd.f32 %v383, %v458
    %v460 = vpop.f32.mrb[0].mxu0
    %461 = vdwg.mxu0
    %v462 = vxor.u32 %v459, 2147483648
    %v463 = vmul.f32 %v462, 1.442695
    %v464 = vpow.pop %v463
    %v465 = vadd.f32 %v464, 1.0
    %v466 = vrcp.pop %v465
    %v467 = vmul.f32 1.0, %v466
    %v468 = vtanh.pop %v459
    %v469 = vmul.f32 %v467, 0.0
    %471 = vrot.lane.b32.xlu0 %v468, 64
    %v472 = vpop.permute.xlu0 %471
    %v474 = vmul.f32 %v467, %v472
    %476 = vrot.lane.b32.xlu0 %v474, 32
    %v477 = vpop.permute.xlu0 %476
    %v479 = vadd.f32 %v469, %v477
    %v480 = vtanh.pop %v479
    %482 = vrot.lane.b32.xlu0 %v480, 64
    %v483 = vpop.permute.xlu0 %482
    %v485 = vmul.f32 %v467, %v483
    %487 = vrot.lane.b32.xlu0 %v485, 32
    %v488 = vpop.permute.xlu0 %487
    %v490 = vsel %vm254, %v488, 0.0
    %v491 = vld [vmem:[#allocation6] sm:$0xff]
    %v492 = vld [vmem:[#allocation6 + $0x8] sm:$0xff]
    %v493 = vld [vmem:[#allocation6 + $0x10] sm:$0xff]
    %v494 = vld [vmem:[#allocation6 + $0x18] sm:$0xff]
    %v495 = vld [vmem:[#allocation6 + $0x20] sm:$0xff]
    %v496 = vld [vmem:[#allocation6 + $0x28] sm:$0xff]
    %v497 = vld [vmem:[#allocation6 + $0x30] sm:$0xff]
    %v498 = vld [vmem:[#allocation6 + $0x38] sm:$0xff]
    %v499 = vld [vmem:[%s10] sm:$0x3]
    %v501 = vsel %vm265, %v490, 0
    %503 = vmatprep.subr.mxu0 0.0
    %504 = vmatpush1.msra.mxu0 %v491
    %505 = vmatprep.subr.mxu0 0.0
    %506 = vmatpush1.msra.mxu0 %v492
    %507 = vmatprep.subr.mxu0 0.0
    %508 = vmatpush1.msra.mxu0 %v493
    %509 = vmatprep.subr.mxu0 0.0
    %510 = vmatpush1.msra.mxu0 %v494
    %511 = vmatprep.subr.mxu0 0.0
    %512 = vmatpush1.msra.mxu0 %v495
    %513 = vmatprep.subr.mxu0 0.0
    %514 = vmatpush1.msra.mxu0 %v496
    %515 = vmatprep.subr.mxu0 0.0
    %516 = vmatpush1.msra.mxu0 %v497
    %517 = vmatprep.subr.mxu0 0.0
    %518 = vmatpush1.msra.mxu0 %v498
    %519 = vmatprep.subr.mxu0 0.0
    %520 = vmatpush1.msra.mxu0 0.0
    %521 = vmatprep.subr.mxu0 0.0
    %522 = vmatpush1.msra.mxu0 0.0
    %523 = vmatprep.subr.mxu0 0.0
    %524 = vmatpush1.msra.mxu0 0.0
    %525 = vmatprep.subr.mxu0 0.0
    %526 = vmatpush1.msra.mxu0 0.0
    %527 = vmatprep.subr.mxu0 0.0
    %528 = vmatpush1.msra.mxu0 0.0
    %529 = vmatprep.subr.mxu0 0.0
    %530 = vmatpush1.msra.mxu0 0.0
    %531 = vmatprep.subr.mxu0 0.0
    %532 = vmatpush1.msra.mxu0 0.0
    %533 = vmatprep.subr.mxu0 0.0
    %534 = vmatpush1.msra.mxu0 0.0
    %535 = vmatprep.subr.mxu0 0.0
    %536 = vmatpush1.msra.mxu0 0.0
    %537 = vmatprep.subr.mxu0 0.0
    %538 = vmatpush1.msra.mxu0 0.0
    %539 = vmatprep.subr.mxu0 0.0
    %540 = vmatpush1.msra.mxu0 0.0
    %541 = vmatprep.subr.mxu0 0.0
    %542 = vmatpush1.msra.mxu0 0.0
    %543 = vmatprep.subr.mxu0 0.0
    %544 = vmatpush1.msra.mxu0 0.0
    %545 = vmatprep.subr.mxu0 0.0
    %546 = vmatpush1.msra.mxu0 0.0
    %547 = vmatprep.subr.mxu0 0.0
    %548 = vmatpush1.msra.mxu0 0.0
    %549 = vmatprep.subr.mxu0 0.0
    %550 = vmatpush1.msra.mxu0 0.0
    %551 = vmatprep.subr.mxu0 0.0
    %552 = vmatpush1.msra.mxu0 0.0
    %553 = vmatprep.subr.mxu0 0.0
    %554 = vmatpush1.msra.mxu0 0.0
    %555 = vmatprep.subr.mxu0 0.0
    %556 = vmatpush1.msra.mxu0 0.0
    %557 = vmatprep.subr.mxu0 0.0
    %558 = vmatpush1.msra.mxu0 0.0
    %559 = vmatprep.subr.mxu0 0.0
    %560 = vmatpush1.msra.mxu0 0.0
    %561 = vmatprep.subr.mxu0 0.0
    %562 = vmatpush1.msra.mxu0 0.0
    %563 = vmatprep.subr.mxu0 0.0
    %564 = vmatpush1.msra.mxu0 0.0
    %565 = vmatprep.subr.mxu0 0.0
    %566 = vmatpush1.msra.mxu0 0.0
    %567 = vmatprep.mubr.f32.mxu0 0.0
    %568 = vmatmul.mubr.f32.gmra.mrb[0].mxu0 %v501
    %v569 = vpop.f32.mrb[0].mxu0
    %v570 = vadd.f32 %v499, %v569
    %v571 = vpop.f32.mrb[0].mxu0
    %572 = vdwg.mxu0
    %v573 = vxor.u32 %v570, 2147483648
    %v574 = vmul.f32 %v573, 1.442695
    %v575 = vpow.pop %v574
    %v576 = vadd.f32 %v575, 1.0
    %v577 = vrcp.pop %v576
    %v578 = vmul.f32 1.0, %v577
    %v579 = vtanh.pop %v570
    %v580 = vmul.f32 %v578, 0.0
    %582 = vrot.lane.b32.xlu0 %v579, 64
    %v583 = vpop.permute.xlu0 %582
    %v585 = vmul.f32 %v578, %v583
    %587 = vrot.lane.b32.xlu0 %v585, 32
    %v588 = vpop.permute.xlu0 %587
    %v590 = vadd.f32 %v580, %v588
    %v591 = vtanh.pop %v590
    %593 = vrot.lane.b32.xlu0 %v591, 64
    %v594 = vpop.permute.xlu0 %593
    %v596 = vmul.f32 %v578, %v594
    %vm597 = vcmask 48128
    %v598 = vsel %vm597, %v126, 0.0
    %vm599 = vcmask 310272
    %v600 = vsel %vm599, %v598, 0.0
    %vm601 = vcmask 572416
    %v602 = vsel %vm601, %v600, 0.0
    %v603 = vld [vmem:[#allocation7] sm:$0xff]
    %v604 = vld [vmem:[#allocation7 + $0x8] sm:$0xff]
    %v605 = vld [vmem:[#allocation7 + $0x10] sm:$0xff]
    %v606 = vld [vmem:[#allocation7 + $0x18] sm:$0xff]
    %v607 = vld [vmem:[#allocation7 + $0x20] sm:$0xff]
    %v608 = vld [vmem:[#allocation7 + $0x28] sm:$0xff]
    %v609 = vld [vmem:[#allocation7 + $0x30] sm:$0xff]
    %v610 = vld [vmem:[#allocation7 + $0x38] sm:$0xff]
    %v611 = vld [vmem:[#allocation7 + $0x40] sm:$0xff]
    %v612 = vld [vmem:[#allocation7 + $0x48] sm:$0xff]
    %v613 = vld [vmem:[#allocation7 + $0x50] sm:$0xff]
    %v614 = vld [vmem:[#allocation7 + $0x58] sm:$0xff]
    %v615 = vld [vmem:[#allocation7 + $0x60] sm:$0x3f]
    %v616 = vld [vmem:[%s12] sm:$0x3]
    %vm617 = vcmask 834560
    %v619 = vsel %vm617, %v602, 0
    %vm621 = vcmask 1045504
    %v623 = vsel %vm621, %v615, 0
    %625 = vmatprep.subr.mxu0 0.0
    %626 = vmatpush1.msra.mxu0 %v603
    %627 = vmatprep.subr.mxu0 0.0
    %628 = vmatpush1.msra.mxu0 %v604
    %629 = vmatprep.subr.mxu0 0.0
    %630 = vmatpush1.msra.mxu0 %v605
    %631 = vmatprep.subr.mxu0 0.0
    %632 = vmatpush1.msra.mxu0 %v606
    %633 = vmatprep.subr.mxu0 0.0
    %634 = vmatpush1.msra.mxu0 %v607
    %635 = vmatprep.subr.mxu0 0.0
    %636 = vmatpush1.msra.mxu0 %v608
    %637 = vmatprep.subr.mxu0 0.0
    %638 = vmatpush1.msra.mxu0 %v609
    %639 = vmatprep.subr.mxu0 0.0
    %640 = vmatpush1.msra.mxu0 %v610
    %641 = vmatprep.subr.mxu0 0.0
    %642 = vmatpush1.msra.mxu0 %v611
    %643 = vmatprep.subr.mxu0 0.0
    %644 = vmatpush1.msra.mxu0 %v612
    %645 = vmatprep.subr.mxu0 0.0
    %646 = vmatpush1.msra.mxu0 %v613
    %647 = vmatprep.subr.mxu0 0.0
    %648 = vmatpush1.msra.mxu0 %v614
    %649 = vmatprep.subr.mxu0 0.0
    %650 = vmatpush1.msra.mxu0 %v623
    %651 = vmatprep.subr.mxu0 0.0
    %652 = vmatpush1.msra.mxu0 0.0
    %653 = vmatprep.subr.mxu0 0.0
    %654 = vmatpush1.msra.mxu0 0.0
    %655 = vmatprep.subr.mxu0 0.0
    %656 = vmatpush1.msra.mxu0 0.0
    %657 = vmatprep.subr.mxu0 0.0
    %658 = vmatpush1.msra.mxu0 0.0
    %659 = vmatprep.subr.mxu0 0.0
    %660 = vmatpush1.msra.mxu0 0.0
    %661 = vmatprep.subr.mxu0 0.0
    %662 = vmatpush1.msra.mxu0 0.0
    %663 = vmatprep.subr.mxu0 0.0
    %664 = vmatpush1.msra.mxu0 0.0
    %665 = vmatprep.subr.mxu0 0.0
    %666 = vmatpush1.msra.mxu0 0.0
    %667 = vmatprep.subr.mxu0 0.0
    %668 = vmatpush1.msra.mxu0 0.0
    %669 = vmatprep.subr.mxu0 0.0
    %670 = vmatpush1.msra.mxu0 0.0
    %671 = vmatprep.subr.mxu0 0.0
    %672 = vmatpush1.msra.mxu0 0.0
    %673 = vmatprep.subr.mxu0 0.0
    %674 = vmatpush1.msra.mxu0 0.0
    %675 = vmatprep.subr.mxu0 0.0
    %676 = vmatpush1.msra.mxu0 0.0
    %677 = vmatprep.subr.mxu0 0.0
    %678 = vmatpush1.msra.mxu0 0.0
    %679 = vmatprep.subr.mxu0 0.0
    %680 = vmatpush1.msra.mxu0 0.0
    %681 = vmatprep.subr.mxu0 0.0
    %682 = vmatpush1.msra.mxu0 0.0
    %683 = vmatprep.subr.mxu0 0.0
    %684 = vmatpush1.msra.mxu0 0.0
    %685 = vmatprep.subr.mxu0 0.0
    %686 = vmatpush1.msra.mxu0 0.0
    %687 = vmatprep.subr.mxu0 0.0
    %688 = vmatpush1.msra.mxu0 0.0
    %689 = vmatprep.mubr.f32.mxu0 0.0
    %690 = vmatmul.mubr.f32.gmra.mrb[0].mxu0 %v619
    %v691 = vpop.f32.mrb[0].mxu0
    %v692 = vadd.f32 %v616, %v691
    %v693 = vpop.f32.mrb[0].mxu0
    %694 = vdwg.mxu0
    %v695 = vxor.u32 %v692, 2147483648
    %v696 = vmul.f32 %v695, 1.442695
    %v697 = vpow.pop %v696
    %v698 = vadd.f32 %v697, 1.0
    %v699 = vrcp.pop %v698
    %v700 = vmul.f32 1.0, %v699
    %v701 = vtanh.pop %v692
    %v702 = vmul.f32 %v700, 0.0
    %704 = vrot.lane.b32.xlu0 %v701, 64
    %v705 = vpop.permute.xlu0 %704
    %v707 = vmul.f32 %v700, %v705
    %709 = vrot.lane.b32.xlu0 %v707, 32
    %v710 = vpop.permute.xlu0 %709
    %v712 = vadd.f32 %v702, %v710
    %v713 = vtanh.pop %v712
    %715 = vrot.lane.b32.xlu0 %v713, 64
    %v716 = vpop.permute.xlu0 %715
    %v718 = vmul.f32 %v700, %v716
    %720 = vrot.lane.b32.xlu0 %v718, 32
    %v721 = vpop.permute.xlu0 %720
    %v723 = vsel %vm254, %v721, 0.0
    %v724 = vld [vmem:[#allocation9] sm:$0xff]
    %v725 = vld [vmem:[#allocation9 + $0x8] sm:$0xff]
    %v726 = vld [vmem:[#allocation9 + $0x10] sm:$0xff]
    %v727 = vld [vmem:[#allocation9 + $0x18] sm:$0xff]
    %v728 = vld [vmem:[#allocation9 + $0x20] sm:$0xff]
    %v729 = vld [vmem:[#allocation9 + $0x28] sm:$0xff]
    %v730 = vld [vmem:[#allocation9 + $0x30] sm:$0xff]
    %v731 = vld [vmem:[#allocation9 + $0x38] sm:$0xff]
    %v732 = vld [vmem:[%s14] sm:$0x3]
    %v734 = vsel %vm265, %v723, 0
    %736 = vmatprep.subr.mxu0 0.0
    %737 = vmatpush1.msra.mxu0 %v724
    %738 = vmatprep.subr.mxu0 0.0
    %739 = vmatpush1.msra.mxu0 %v725
    %740 = vmatprep.subr.mxu0 0.0
    %741 = vmatpush1.msra.mxu0 %v726
    %742 = vmatprep.subr.mxu0 0.0
    %743 = vmatpush1.msra.mxu0 %v727
    %744 = vmatprep.subr.mxu0 0.0
    %745 = vmatpush1.msra.mxu0 %v728
    %746 = vmatprep.subr.mxu0 0.0
    %747 = vmatpush1.msra.mxu0 %v729
    %748 = vmatprep.subr.mxu0 0.0
    %749 = vmatpush1.msra.mxu0 %v730
    %750 = vmatprep.subr.mxu0 0.0
    %751 = vmatpush1.msra.mxu0 %v731
    %752 = vmatprep.subr.mxu0 0.0
    %753 = vmatpush1.msra.mxu0 0.0
    %754 = vmatprep.subr.mxu0 0.0
    %755 = vmatpush1.msra.mxu0 0.0
    %756 = vmatprep.subr.mxu0 0.0
    %757 = vmatpush1.msra.mxu0 0.0
    %758 = vmatprep.subr.mxu0 0.0
    %759 = vmatpush1.msra.mxu0 0.0
    %760 = vmatprep.subr.mxu0 0.0
    %761 = vmatpush1.msra.mxu0 0.0
    %762 = vmatprep.subr.mxu0 0.0
    %763 = vmatpush1.msra.mxu0 0.0
    %764 = vmatprep.subr.mxu0 0.0
    %765 = vmatpush1.msra.mxu0 0.0
    %766 = vmatprep.subr.mxu0 0.0
    %767 = vmatpush1.msra.mxu0 0.0
    %768 = vmatprep.subr.mxu0 0.0
    %769 = vmatpush1.msra.mxu0 0.0
    %770 = vmatprep.subr.mxu0 0.0
    %771 = vmatpush1.msra.mxu0 0.0
    %772 = vmatprep.subr.mxu0 0.0
    %773 = vmatpush1.msra.mxu0 0.0
    %774 = vmatprep.subr.mxu0 0.0
    %775 = vmatpush1.msra.mxu0 0.0
    %776 = vmatprep.subr.mxu0 0.0
    %777 = vmatpush1.msra.mxu0 0.0
    %778 = vmatprep.subr.mxu0 0.0
    %779 = vmatpush1.msra.mxu0 0.0
    %780 = vmatprep.subr.mxu0 0.0
    %781 = vmatpush1.msra.mxu0 0.0
    %782 = vmatprep.subr.mxu0 0.0
    %783 = vmatpush1.msra.mxu0 0.0
    %784 = vmatprep.subr.mxu0 0.0
    %785 = vmatpush1.msra.mxu0 0.0
    %786 = vmatprep.subr.mxu0 0.0
    %787 = vmatpush1.msra.mxu0 0.0
    %788 = vmatprep.subr.mxu0 0.0
    %789 = vmatpush1.msra.mxu0 0.0
    %790 = vmatprep.subr.mxu0 0.0
    %791 = vmatpush1.msra.mxu0 0.0
    %792 = vmatprep.subr.mxu0 0.0
    %793 = vmatpush1.msra.mxu0 0.0
    %794 = vmatprep.subr.mxu0 0.0
    %795 = vmatpush1.msra.mxu0 0.0
    %796 = vmatprep.subr.mxu0 0.0
    %797 = vmatpush1.msra.mxu0 0.0
    %798 = vmatprep.subr.mxu0 0.0
    %799 = vmatpush1.msra.mxu0 0.0
    %800 = vmatprep.mubr.f32.mxu0 0.0
    %801 = vmatmul.mubr.f32.gmra.mrb[0].mxu0 %v734
    %v802 = vpop.f32.mrb[0].mxu0
    %v803 = vadd.f32 %v732, %v802
    %v804 = vpop.f32.mrb[0].mxu0
    %805 = vdwg.mxu0
    %v806 = vxor.u32 %v803, 2147483648
    %v807 = vmul.f32 %v806, 1.442695
    %v808 = vpow.pop %v807
    %v809 = vadd.f32 %v808, 1.0
    %v810 = vrcp.pop %v809
    %v811 = vmul.f32 1.0, %v810
    %v812 = vtanh.pop %v803
    %v813 = vmul.f32 %v811, 0.0
    %815 = vrot.lane.b32.xlu0 %v812, 64
    %v816 = vpop.permute.xlu0 %815
    %v818 = vmul.f32 %v811, %v816
    %820 = vrot.lane.b32.xlu0 %v818, 32
    %v821 = vpop.permute.xlu0 %820
    %v823 = vadd.f32 %v813, %v821
    %v824 = vtanh.pop %v823
    %826 = vrot.lane.b32.xlu0 %v824, 64
    %v827 = vpop.permute.xlu0 %826
    %v829 = vmul.f32 %v811, %v827
    %v830 = vadd.f32 %v362, 0.0
    %v831 = vadd.f32 %v596, 0.0
    %v832 = vadd.f32 %v829, 0.0
    %s833 = scalar_lea.vmem %s0, 2
    %v834 = vld [vmem:[%s833] sm:$0x3]
    %s835 = scalar_lea.vmem %s1, 2
    %v836 = vld [vmem:[%s835] sm:$0x3]
    %s837 = scalar_lea.vmem %s2, 2
    %v838 = vld [vmem:[%s837] sm:$0x3]
    %840 = vrot.lane.b32.xlu0 %v596, 42
    %v841 = vpop.permute.xlu0 %840
    %844 = vrot.lane.b32.xlu0 %v829, 74
    %v845 = vpop.permute.xlu0 %844
    %847 = vrot.lane.b32.xlu0 %v249, 106
    %v848 = vpop.permute.xlu0 %847
    %v850 = vsel %vm127, %v834, %v841
    %v851 = vsel %vm129, %v850, %v845
    %v852 = vsel %vm131, %v851, %v848
    %v854 = vsel %vm148, %v852, 0
    %856 = vmatprep.subr.mxu0 0.0
    %857 = vmatpush1.msra.mxu0 %v133
    %858 = vmatprep.subr.mxu0 0.0
    %859 = vmatpush1.msra.mxu0 %v134
    %860 = vmatprep.subr.mxu0 0.0
    %861 = vmatpush1.msra.mxu0 %v135
    %862 = vmatprep.subr.mxu0 0.0
    %863 = vmatpush1.msra.mxu0 %v136
    %864 = vmatprep.subr.mxu0 0.0
    %865 = vmatpush1.msra.mxu0 %v137
    %866 = vmatprep.subr.mxu0 0.0
    %867 = vmatpush1.msra.mxu0 %v138
    %868 = vmatprep.subr.mxu0 0.0
    %869 = vmatpush1.msra.mxu0 %v139
    %870 = vmatprep.subr.mxu0 0.0
    %871 = vmatpush1.msra.mxu0 %v140
    %872 = vmatprep.subr.mxu0 0.0
    %873 = vmatpush1.msra.mxu0 %v141
    %874 = vmatprep.subr.mxu0 0.0
    %875 = vmatpush1.msra.mxu0 %v142
    %876 = vmatprep.subr.mxu0 0.0
    %877 = vmatpush1.msra.mxu0 %v143
    %878 = vmatprep.subr.mxu0 0.0
    %879 = vmatpush1.msra.mxu0 %v144
    %880 = vmatprep.subr.mxu0 0.0
    %881 = vmatpush1.msra.mxu0 %v145
    %882 = vmatprep.subr.mxu0 0.0
    %883 = vmatpush1.msra.mxu0 %v154
    %884 = vmatprep.subr.mxu0 0.0
    %885 = vmatpush1.msra.mxu0 0.0
    %886 = vmatprep.subr.mxu0 0.0
    %887 = vmatpush1.msra.mxu0 0.0
    %888 = vmatprep.subr.mxu0 0.0
    %889 = vmatpush1.msra.mxu0 0.0
    %890 = vmatprep.subr.mxu0 0.0
    %891 = vmatpush1.msra.mxu0 0.0
    %892 = vmatprep.subr.mxu0 0.0
    %893 = vmatpush1.msra.mxu0 0.0
    %894 = vmatprep.subr.mxu0 0.0
    %895 = vmatpush1.msra.mxu0 0.0
    %896 = vmatprep.subr.mxu0 0.0
    %897 = vmatpush1.msra.mxu0 0.0
    %898 = vmatprep.subr.mxu0 0.0
    %899 = vmatpush1.msra.mxu0 0.0
    %900 = vmatprep.subr.mxu0 0.0
    %901 = vmatpush1.msra.mxu0 0.0
    %902 = vmatprep.subr.mxu0 0.0
    %903 = vmatpush1.msra.mxu0 0.0
    %904 = vmatprep.subr.mxu0 0.0
    %905 = vmatpush1.msra.mxu0 0.0
    %906 = vmatprep.subr.mxu0 0.0
    %907 = vmatpush1.msra.mxu0 0.0
    %908 = vmatprep.subr.mxu0 0.0
    %909 = vmatpush1.msra.mxu0 0.0
    %910 = vmatprep.subr.mxu0 0.0
    %911 = vmatpush1.msra.mxu0 0.0
    %912 = vmatprep.subr.mxu0 0.0
    %913 = vmatpush1.msra.mxu0 0.0
    %914 = vmatprep.subr.mxu0 0.0
    %915 = vmatpush1.msra.mxu0 0.0
    %916 = vmatprep.subr.mxu0 0.0
    %917 = vmatpush1.msra.mxu0 0.0
    %918 = vmatprep.subr.mxu0 0.0
    %919 = vmatpush1.msra.mxu0 0.0
    %920 = vmatprep.mubr.f32.mxu0 0.0
    %921 = vmatmul.mubr.f32.gmra.mrb[0].mxu0 %v854
    %v922 = vpop.f32.mrb[0].mxu0
    %v923 = vadd.f32 %v147, %v922
    %v924 = vpop.f32.mrb[0].mxu0
    %925 = vdwg.mxu0
    %v926 = vxor.u32 %v923, 2147483648
    %v927 = vmul.f32 %v926, 1.442695
    %v928 = vpow.pop %v927
    %v929 = vadd.f32 %v928, 1.0
    %v930 = vrcp.pop %v929
    %v931 = vmul.f32 1.0, %v930
    %v932 = vtanh.pop %v923
    %v933 = vmul.f32 %v931, %v243
    %935 = vrot.lane.b32.xlu0 %v932, 64
    %v936 = vpop.permute.xlu0 %935
    %v938 = vmul.f32 %v931, %v936
    %940 = vrot.lane.b32.xlu0 %v938, 32
    %v941 = vpop.permute.xlu0 %940
    %v943 = vadd.f32 %v933, %v941
    %v944 = vtanh.pop %v943
    %946 = vrot.lane.b32.xlu0 %v944, 64
    %v947 = vpop.permute.xlu0 %946
    %v949 = vmul.f32 %v931, %v947
    %951 = vrot.lane.b32.xlu0 %v949, 32
    %v952 = vpop.permute.xlu0 %951
    %955 = vrot.lane.b32.xlu0 %v362, 64
    %v956 = vpop.permute.xlu0 %955
    %v958 = vsel %vm254, %v952, %v956
    %v960 = vsel %vm265, %v958, 0
    %962 = vmatprep.subr.mxu0 0.0
    %963 = vmatpush1.msra.mxu0 %v256
    %964 = vmatprep.subr.mxu0 0.0
    %965 = vmatpush1.msra.mxu0 %v257
    %966 = vmatprep.subr.mxu0 0.0
    %967 = vmatpush1.msra.mxu0 %v258
    %968 = vmatprep.subr.mxu0 0.0
    %969 = vmatpush1.msra.mxu0 %v259
    %970 = vmatprep.subr.mxu0 0.0
    %971 = vmatpush1.msra.mxu0 %v260
    %972 = vmatprep.subr.mxu0 0.0
    %973 = vmatpush1.msra.mxu0 %v261
    %974 = vmatprep.subr.mxu0 0.0
    %975 = vmatpush1.msra.mxu0 %v262
    %976 = vmatprep.subr.mxu0 0.0
    %977 = vmatpush1.msra.mxu0 %v263
    %978 = vmatprep.subr.mxu0 0.0
    %979 = vmatpush1.msra.mxu0 0.0
    %980 = vmatprep.subr.mxu0 0.0
    %981 = vmatpush1.msra.mxu0 0.0
    %982 = vmatprep.subr.mxu0 0.0
    %983 = vmatpush1.msra.mxu0 0.0
    %984 = vmatprep.subr.mxu0 0.0
    %985 = vmatpush1.msra.mxu0 0.0
    %986 = vmatprep.subr.mxu0 0.0
    %987 = vmatpush1.msra.mxu0 0.0
    %988 = vmatprep.subr.mxu0 0.0
    %989 = vmatpush1.msra.mxu0 0.0
    %990 = vmatprep.subr.mxu0 0.0
    %991 = vmatpush1.msra.mxu0 0.0
    %992 = vmatprep.subr.mxu0 0.0
    %993 = vmatpush1.msra.mxu0 0.0
    %994 = vmatprep.subr.mxu0 0.0
    %995 = vmatpush1.msra.mxu0 0.0
    %996 = vmatprep.subr.mxu0 0.0
    %997 = vmatpush1.msra.mxu0 0.0
    %998 = vmatprep.subr.mxu0 0.0
    %999 = vmatpush1.msra.mxu0 0.0
    %1000 = vmatprep.subr.mxu0 0.0
    %1001 = vmatpush1.msra.mxu0 0.0
    %1002 = vmatprep.subr.mxu0 0.0
    %1003 = vmatpush1.msra.mxu0 0.0
    %1004 = vmatprep.subr.mxu0 0.0
    %1005 = vmatpush1.msra.mxu0 0.0
    %1006 = vmatprep.subr.mxu0 0.0
    %1007 = vmatpush1.msra.mxu0 0.0
    %1008 = vmatprep.subr.mxu0 0.0
    %1009 = vmatpush1.msra.mxu0 0.0
    %1010 = vmatprep.subr.mxu0 0.0
    %1011 = vmatpush1.msra.mxu0 0.0
    %1012 = vmatprep.subr.mxu0 0.0
    %1013 = vmatpush1.msra.mxu0 0.0
    %1014 = vmatprep.subr.mxu0 0.0
    %1015 = vmatpush1.msra.mxu0 0.0
    %1016 = vmatprep.subr.mxu0 0.0
    %1017 = vmatpush1.msra.mxu0 0.0
    %1018 = vmatprep.subr.mxu0 0.0
    %1019 = vmatpush1.msra.mxu0 0.0
    %1020 = vmatprep.subr.mxu0 0.0
    %1021 = vmatpush1.msra.mxu0 0.0
    %1022 = vmatprep.subr.mxu0 0.0
    %1023 = vmatpush1.msra.mxu0 0.0
    %1024 = vmatprep.subr.mxu0 0.0
    %1025 = vmatpush1.msra.mxu0 0.0
    %1026 = vmatprep.mubr.f32.mxu0 0.0
    %1027 = vmatmul.mubr.f32.gmra.mrb[0].mxu0 %v960
    %v1028 = vpop.f32.mrb[0].mxu0
    %v1029 = vadd.f32 %v264, %v1028
    %v1030 = vpop.f32.mrb[0].mxu0
    %1031 = vdwg.mxu0
    %v1032 = vxor.u32 %v1029, 2147483648
    %v1033 = vmul.f32 %v1032, 1.442695
    %v1034 = vpow.pop %v1033
    %v1035 = vadd.f32 %v1034, 1.0
    %v1036 = vrcp.pop %v1035
    %v1037 = vmul.f32 1.0, %v1036
    %v1038 = vtanh.pop %v1029
    %v1039 = vmul.f32 %v1037, %v356
    %1041 = vrot.lane.b32.xlu0 %v1038, 64
    %v1042 = vpop.permute.xlu0 %1041
    %v1044 = vmul.f32 %v1037, %v1042
    %1046 = vrot.lane.b32.xlu0 %v1044, 32
    %v1047 = vpop.permute.xlu0 %1046
    %v1049 = vadd.f32 %v1039, %v1047
    %v1050 = vtanh.pop %v1049
    %1052 = vrot.lane.b32.xlu0 %v1050, 64
    %v1053 = vpop.permute.xlu0 %1052
    %v1055 = vmul.f32 %v1037, %v1053
    %1056 = vrot.lane.b32.xlu0 %v362, 44
    %v1057 = vpop.permute.xlu0 %1056
    %1059 = vrot.lane.b32.xlu0 %v829, 76
    %v1060 = vpop.permute.xlu0 %1059
    %1062 = vrot.lane.b32.xlu0 %v485, 108
    %v1063 = vpop.permute.xlu0 %1062
    %v1065 = vsel %vm363, %v836, %v1057
    %v1066 = vsel %vm365, %v1065, %v1060
    %v1067 = vsel %vm367, %v1066, %v1063
    %v1069 = vsel %vm384, %v1067, 0
    %1071 = vmatprep.subr.mxu0 0.0
    %1072 = vmatpush1.msra.mxu0 %v369
    %1073 = vmatprep.subr.mxu0 0.0
    %1074 = vmatpush1.msra.mxu0 %v370
    %1075 = vmatprep.subr.mxu0 0.0
    %1076 = vmatpush1.msra.mxu0 %v371
    %1077 = vmatprep.subr.mxu0 0.0
    %1078 = vmatpush1.msra.mxu0 %v372
    %1079 = vmatprep.subr.mxu0 0.0
    %1080 = vmatpush1.msra.mxu0 %v373
    %1081 = vmatprep.subr.mxu0 0.0
    %1082 = vmatpush1.msra.mxu0 %v374
    %1083 = vmatprep.subr.mxu0 0.0
    %1084 = vmatpush1.msra.mxu0 %v375
    %1085 = vmatprep.subr.mxu0 0.0
    %1086 = vmatpush1.msra.mxu0 %v376
    %1087 = vmatprep.subr.mxu0 0.0
    %1088 = vmatpush1.msra.mxu0 %v377
    %1089 = vmatprep.subr.mxu0 0.0
    %1090 = vmatpush1.msra.mxu0 %v378
    %1091 = vmatprep.subr.mxu0 0.0
    %1092 = vmatpush1.msra.mxu0 %v379
    %1093 = vmatprep.subr.mxu0 0.0
    %1094 = vmatpush1.msra.mxu0 %v380
    %1095 = vmatprep.subr.mxu0 0.0
    %1096 = vmatpush1.msra.mxu0 %v381
    %1097 = vmatprep.subr.mxu0 0.0
    %1098 = vmatpush1.msra.mxu0 %v390
    %1099 = vmatprep.subr.mxu0 0.0
    %1100 = vmatpush1.msra.mxu0 0.0
    %1101 = vmatprep.subr.mxu0 0.0
    %1102 = vmatpush1.msra.mxu0 0.0
    %1103 = vmatprep.subr.mxu0 0.0
    %1104 = vmatpush1.msra.mxu0 0.0
    %1105 = vmatprep.subr.mxu0 0.0
    %1106 = vmatpush1.msra.mxu0 0.0
    %1107 = vmatprep.subr.mxu0 0.0
    %1108 = vmatpush1.msra.mxu0 0.0
    %1109 = vmatprep.subr.mxu0 0.0
    %1110 = vmatpush1.msra.mxu0 0.0
    %1111 = vmatprep.subr.mxu0 0.0
    %1112 = vmatpush1.msra.mxu0 0.0
    %1113 = vmatprep.subr.mxu0 0.0
    %1114 = vmatpush1.msra.mxu0 0.0
    %1115 = vmatprep.subr.mxu0 0.0
    %1116 = vmatpush1.msra.mxu0 0.0
    %1117 = vmatprep.subr.mxu0 0.0
    %1118 = vmatpush1.msra.mxu0 0.0
    %1119 = vmatprep.subr.mxu0 0.0
    %1120 = vmatpush1.msra.mxu0 0.0
    %1121 = vmatprep.subr.mxu0 0.0
    %1122 = vmatpush1.msra.mxu0 0.0
    %1123 = vmatprep.subr.mxu0 0.0
    %1124 = vmatpush1.msra.mxu0 0.0
    %1125 = vmatprep.subr.mxu0 0.0
    %1126 = vmatpush1.msra.mxu0 0.0
    %1127 = vmatprep.subr.mxu0 0.0
    %1128 = vmatpush1.msra.mxu0 0.0
    %1129 = vmatprep.subr.mxu0 0.0
    %1130 = vmatpush1.msra.mxu0 0.0
    %1131 = vmatprep.subr.mxu0 0.0
    %1132 = vmatpush1.msra.mxu0 0.0
    %1133 = vmatprep.subr.mxu0 0.0
    %1134 = vmatpush1.msra.mxu0 0.0
    %1135 = vmatprep.mubr.f32.mxu0 0.0
    %1136 = vmatmul.mubr.f32.gmra.mrb[0].mxu0 %v1069
    %v1137 = vpop.f32.mrb[0].mxu0
    %v1138 = vadd.f32 %v383, %v1137
    %v1139 = vpop.f32.mrb[0].mxu0
    %1140 = vdwg.mxu0
    %v1141 = vxor.u32 %v1138, 2147483648
    %v1142 = vmul.f32 %v1141, 1.442695
    %v1143 = vpow.pop %v1142
    %v1144 = vadd.f32 %v1143, 1.0
    %v1145 = vrcp.pop %v1144
    %v1146 = vmul.f32 1.0, %v1145
    %v1147 = vtanh.pop %v1138
    %v1148 = vmul.f32 %v1146, %v479
    %1150 = vrot.lane.b32.xlu0 %v1147, 64
    %v1151 = vpop.permute.xlu0 %1150
    %v1153 = vmul.f32 %v1146, %v1151
    %1155 = vrot.lane.b32.xlu0 %v1153, 32
    %v1156 = vpop.permute.xlu0 %1155
    %v1158 = vadd.f32 %v1148, %v1156
    %v1159 = vtanh.pop %v1158
    %1161 = vrot.lane.b32.xlu0 %v1159, 64
    %v1162 = vpop.permute.xlu0 %1161
    %v1164 = vmul.f32 %v1146, %v1162
    %1166 = vrot.lane.b32.xlu0 %v1164, 32
    %v1167 = vpop.permute.xlu0 %1166
    %1169 = vrot.lane.b32.xlu0 %v596, 64
    %v1170 = vpop.permute.xlu0 %1169
    %v1172 = vsel %vm254, %v1167, %v1170
    %v1174 = vsel %vm265, %v1172, 0
    %1176 = vmatprep.subr.mxu0 0.0
    %1177 = vmatpush1.msra.mxu0 %v491
    %1178 = vmatprep.subr.mxu0 0.0
    %1179 = vmatpush1.msra.mxu0 %v492
    %1180 = vmatprep.subr.mxu0 0.0
    %1181 = vmatpush1.msra.mxu0 %v493
    %1182 = vmatprep.subr.mxu0 0.0
    %1183 = vmatpush1.msra.mxu0 %v494
    %1184 = vmatprep.subr.mxu0 0.0
    %1185 = vmatpush1.msra.mxu0 %v495
    %1186 = vmatprep.subr.mxu0 0.0
    %1187 = vmatpush1.msra.mxu0 %v496
    %1188 = vmatprep.subr.mxu0 0.0
    %1189 = vmatpush1.msra.mxu0 %v497
    %1190 = vmatprep.subr.mxu0 0.0
    %1191 = vmatpush1.msra.mxu0 %v498
    %1192 = vmatprep.subr.mxu0 0.0
    %1193 = vmatpush1.msra.mxu0 0.0
    %1194 = vmatprep.subr.mxu0 0.0
    %1195 = vmatpush1.msra.mxu0 0.0
    %1196 = vmatprep.subr.mxu0 0.0
    %1197 = vmatpush1.msra.mxu0 0.0
    %1198 = vmatprep.subr.mxu0 0.0
    %1199 = vmatpush1.msra.mxu0 0.0
    %1200 = vmatprep.subr.mxu0 0.0
    %1201 = vmatpush1.msra.mxu0 0.0
    %1202 = vmatprep.subr.mxu0 0.0
    %1203 = vmatpush1.msra.mxu0 0.0
    %1204 = vmatprep.subr.mxu0 0.0
    %1205 = vmatpush1.msra.mxu0 0.0
    %1206 = vmatprep.subr.mxu0 0.0
    %1207 = vmatpush1.msra.mxu0 0.0
    %1208 = vmatprep.subr.mxu0 0.0
    %1209 = vmatpush1.msra.mxu0 0.0
    %1210 = vmatprep.subr.mxu0 0.0
    %1211 = vmatpush1.msra.mxu0 0.0
    %1212 = vmatprep.subr.mxu0 0.0
    %1213 = vmatpush1.msra.mxu0 0.0
    %1214 = vmatprep.subr.mxu0 0.0
    %1215 = vmatpush1.msra.mxu0 0.0
    %1216 = vmatprep.subr.mxu0 0.0
    %1217 = vmatpush1.msra.mxu0 0.0
    %1218 = vmatprep.subr.mxu0 0.0
    %1219 = vmatpush1.msra.mxu0 0.0
    %1220 = vmatprep.subr.mxu0 0.0
    %1221 = vmatpush1.msra.mxu0 0.0
    %1222 = vmatprep.subr.mxu0 0.0
    %1223 = vmatpush1.msra.mxu0 0.0
    %1224 = vmatprep.subr.mxu0 0.0
    %1225 = vmatpush1.msra.mxu0 0.0
    %1226 = vmatprep.subr.mxu0 0.0
    %1227 = vmatpush1.msra.mxu0 0.0
    %1228 = vmatprep.subr.mxu0 0.0
    %1229 = vmatpush1.msra.mxu0 0.0
    %1230 = vmatprep.subr.mxu0 0.0
    %1231 = vmatpush1.msra.mxu0 0.0
    %1232 = vmatprep.subr.mxu0 0.0
    %1233 = vmatpush1.msra.mxu0 0.0
    %1234 = vmatprep.subr.mxu0 0.0
    %1235 = vmatpush1.msra.mxu0 0.0
    %1236 = vmatprep.subr.mxu0 0.0
    %1237 = vmatpush1.msra.mxu0 0.0
    %1238 = vmatprep.subr.mxu0 0.0
    %1239 = vmatpush1.msra.mxu0 0.0
    %1240 = vmatprep.mubr.f32.mxu0 0.0
    %1241 = vmatmul.mubr.f32.gmra.mrb[0].mxu0 %v1174
    %v1242 = vpop.f32.mrb[0].mxu0
    %v1243 = vadd.f32 %v499, %v1242
    %v1244 = vpop.f32.mrb[0].mxu0
    %1245 = vdwg.mxu0
    %v1246 = vxor.u32 %v1243, 2147483648
    %v1247 = vmul.f32 %v1246, 1.442695
    %v1248 = vpow.pop %v1247
    %v1249 = vadd.f32 %v1248, 1.0
    %v1250 = vrcp.pop %v1249
    %v1251 = vmul.f32 1.0, %v1250
    %v1252 = vtanh.pop %v1243
    %v1253 = vmul.f32 %v1251, %v590
    %1255 = vrot.lane.b32.xlu0 %v1252, 64
    %v1256 = vpop.permute.xlu0 %1255
    %v1258 = vmul.f32 %v1251, %v1256
    %1260 = vrot.lane.b32.xlu0 %v1258, 32
    %v1261 = vpop.permute.xlu0 %1260
    %v1263 = vadd.f32 %v1253, %v1261
    %v1264 = vtanh.pop %v1263
    %1266 = vrot.lane.b32.xlu0 %v1264, 64
    %v1267 = vpop.permute.xlu0 %1266
    %v1269 = vmul.f32 %v1251, %v1267
    %1270 = vrot.lane.b32.xlu0 %v362, 38
    %v1271 = vpop.permute.xlu0 %1270
    %1273 = vrot.lane.b32.xlu0 %v596, 70
    %v1274 = vpop.permute.xlu0 %1273
    %1276 = vrot.lane.b32.xlu0 %v718, 102
    %v1277 = vpop.permute.xlu0 %1276
    %v1279 = vsel %vm597, %v838, %v1271
    %v1280 = vsel %vm599, %v1279, %v1274
    %v1281 = vsel %vm601, %v1280, %v1277
    %v1283 = vsel %vm617, %v1281, 0
    %1285 = vmatprep.subr.mxu0 0.0
    %1286 = vmatpush1.msra.mxu0 %v603
    %1287 = vmatprep.subr.mxu0 0.0
    %1288 = vmatpush1.msra.mxu0 %v604
    %1289 = vmatprep.subr.mxu0 0.0
    %1290 = vmatpush1.msra.mxu0 %v605
    %1291 = vmatprep.subr.mxu0 0.0
    %1292 = vmatpush1.msra.mxu0 %v606
    %1293 = vmatprep.subr.mxu0 0.0
    %1294 = vmatpush1.msra.mxu0 %v607
    %1295 = vmatprep.subr.mxu0 0.0
    %1296 = vmatpush1.msra.mxu0 %v608
    %1297 = vmatprep.subr.mxu0 0.0
    %1298 = vmatpush1.msra.mxu0 %v609
    %1299 = vmatprep.subr.mxu0 0.0
    %1300 = vmatpush1.msra.mxu0 %v610
    %1301 = vmatprep.subr.mxu0 0.0
    %1302 = vmatpush1.msra.mxu0 %v611
    %1303 = vmatprep.subr.mxu0 0.0
    %1304 = vmatpush1.msra.mxu0 %v612
    %1305 = vmatprep.subr.mxu0 0.0
    %1306 = vmatpush1.msra.mxu0 %v613
    %1307 = vmatprep.subr.mxu0 0.0
    %1308 = vmatpush1.msra.mxu0 %v614
    %1309 = vmatprep.subr.mxu0 0.0
    %1310 = vmatpush1.msra.mxu0 %v623
    %1311 = vmatprep.subr.mxu0 0.0
    %1312 = vmatpush1.msra.mxu0 0.0
    %1313 = vmatprep.subr.mxu0 0.0
    %1314 = vmatpush1.msra.mxu0 0.0
    %1315 = vmatprep.subr.mxu0 0.0
    %1316 = vmatpush1.msra.mxu0 0.0
    %1317 = vmatprep.subr.mxu0 0.0
    %1318 = vmatpush1.msra.mxu0 0.0
    %1319 = vmatprep.subr.mxu0 0.0
    %1320 = vmatpush1.msra.mxu0 0.0
    %1321 = vmatprep.subr.mxu0 0.0
    %1322 = vmatpush1.msra.mxu0 0.0
    %1323 = vmatprep.subr.mxu0 0.0
    %1324 = vmatpush1.msra.mxu0 0.0
    %1325 = vmatprep.subr.mxu0 0.0
    %1326 = vmatpush1.msra.mxu0 0.0
    %1327 = vmatprep.subr.mxu0 0.0
    %1328 = vmatpush1.msra.mxu0 0.0
    %1329 = vmatprep.subr.mxu0 0.0
    %1330 = vmatpush1.msra.mxu0 0.0
    %1331 = vmatprep.subr.mxu0 0.0
    %1332 = vmatpush1.msra.mxu0 0.0
    %1333 = vmatprep.subr.mxu0 0.0
    %1334 = vmatpush1.msra.mxu0 0.0
    %1335 = vmatprep.subr.mxu0 0.0
    %1336 = vmatpush1.msra.mxu0 0.0
    %1337 = vmatprep.subr.mxu0 0.0
    %1338 = vmatpush1.msra.mxu0 0.0
    %1339 = vmatprep.subr.mxu0 0.0
    %1340 = vmatpush1.msra.mxu0 0.0
    %1341 = vmatprep.subr.mxu0 0.0
    %1342 = vmatpush1.msra.mxu0 0.0
    %1343 = vmatprep.subr.mxu0 0.0
    %1344 = vmatpush1.msra.mxu0 0.0
    %1345 = vmatprep.subr.mxu0 0.0
    %1346 = vmatpush1.msra.mxu0 0.0
    %1347 = vmatprep.subr.mxu0 0.0
    %1348 = vmatpush1.msra.mxu0 0.0
    %1349 = vmatprep.mubr.f32.mxu0 0.0
    %1350 = vmatmul.mubr.f32.gmra.mrb[0].mxu0 %v1283
    %v1351 = vpop.f32.mrb[0].mxu0
    %v1352 = vadd.f32 %v616, %v1351
    %v1353 = vpop.f32.mrb[0].mxu0
    %1354 = vdwg.mxu0
    %v1355 = vxor.u32 %v1352, 2147483648
    %v1356 = vmul.f32 %v1355, 1.442695
    %v1357 = vpow.pop %v1356
    %v1358 = vadd.f32 %v1357, 1.0
    %v1359 = vrcp.pop %v1358
    %v1360 = vmul.f32 1.0, %v1359
    %v1361 = vtanh.pop %v1352
    %v1362 = vmul.f32 %v1360, %v712
    %1364 = vrot.lane.b32.xlu0 %v1361, 64
    %v1365 = vpop.permute.xlu0 %1364
    %v1367 = vmul.f32 %v1360, %v1365
    %1369 = vrot.lane.b32.xlu0 %v1367, 32
    %v1370 = vpop.permute.xlu0 %1369
    %v1372 = vadd.f32 %v1362, %v1370
    %v1373 = vtanh.pop %v1372
    %1375 = vrot.lane.b32.xlu0 %v1373, 64
    %v1376 = vpop.permute.xlu0 %1375
    %v1378 = vmul.f32 %v1360, %v1376
    %1380 = vrot.lane.b32.xlu0 %v1378, 32
    %v1381 = vpop.permute.xlu0 %1380
    %1383 = vrot.lane.b32.xlu0 %v829, 64
    %v1384 = vpop.permute.xlu0 %1383
    %v1386 = vsel %vm254, %v1381, %v1384
    %v1388 = vsel %vm265, %v1386, 0
    %1390 = vmatprep.subr.mxu0 0.0
    %1391 = vmatpush1.msra.mxu0 %v724
    %1392 = vmatprep.subr.mxu0 0.0
    %1393 = vmatpush1.msra.mxu0 %v725
    %1394 = vmatprep.subr.mxu0 0.0
    %1395 = vmatpush1.msra.mxu0 %v726
    %1396 = vmatprep.subr.mxu0 0.0
    %1397 = vmatpush1.msra.mxu0 %v727
    %1398 = vmatprep.subr.mxu0 0.0
    %1399 = vmatpush1.msra.mxu0 %v728
    %1400 = vmatprep.subr.mxu0 0.0
    %1401 = vmatpush1.msra.mxu0 %v729
    %1402 = vmatprep.subr.mxu0 0.0
    %1403 = vmatpush1.msra.mxu0 %v730
    %1404 = vmatprep.subr.mxu0 0.0
    %1405 = vmatpush1.msra.mxu0 %v731
    %1406 = vmatprep.subr.mxu0 0.0
    %1407 = vmatpush1.msra.mxu0 0.0
    %1408 = vmatprep.subr.mxu0 0.0
    %1409 = vmatpush1.msra.mxu0 0.0
    %1410 = vmatprep.subr.mxu0 0.0
    %1411 = vmatpush1.msra.mxu0 0.0
    %1412 = vmatprep.subr.mxu0 0.0
    %1413 = vmatpush1.msra.mxu0 0.0
    %1414 = vmatprep.subr.mxu0 0.0
    %1415 = vmatpush1.msra.mxu0 0.0
    %1416 = vmatprep.subr.mxu0 0.0
    %1417 = vmatpush1.msra.mxu0 0.0
    %1418 = vmatprep.subr.mxu0 0.0
    %1419 = vmatpush1.msra.mxu0 0.0
    %1420 = vmatprep.subr.mxu0 0.0
    %1421 = vmatpush1.msra.mxu0 0.0
    %1422 = vmatprep.subr.mxu0 0.0
    %1423 = vmatpush1.msra.mxu0 0.0
    %1424 = vmatprep.subr.mxu0 0.0
    %1425 = vmatpush1.msra.mxu0 0.0
    %1426 = vmatprep.subr.mxu0 0.0
    %1427 = vmatpush1.msra.mxu0 0.0
    %1428 = vmatprep.subr.mxu0 0.0
    %1429 = vmatpush1.msra.mxu0 0.0
    %1430 = vmatprep.subr.mxu0 0.0
    %1431 = vmatpush1.msra.mxu0 0.0
    %1432 = vmatprep.subr.mxu0 0.0
    %1433 = vmatpush1.msra.mxu0 0.0
    %1434 = vmatprep.subr.mxu0 0.0
    %1435 = vmatpush1.msra.mxu0 0.0
    %1436 = vmatprep.subr.mxu0 0.0
    %1437 = vmatpush1.msra.mxu0 0.0
    %1438 = vmatprep.subr.mxu0 0.0
    %1439 = vmatpush1.msra.mxu0 0.0
    %1440 = vmatprep.subr.mxu0 0.0
    %1441 = vmatpush1.msra.mxu0 0.0
    %1442 = vmatprep.subr.mxu0 0.0
    %1443 = vmatpush1.msra.mxu0 0.0
    %1444 = vmatprep.subr.mxu0 0.0
    %1445 = vmatpush1.msra.mxu0 0.0
    %1446 = vmatprep.subr.mxu0 0.0
    %1447 = vmatpush1.msra.mxu0 0.0
    %1448 = vmatprep.subr.mxu0 0.0
    %1449 = vmatpush1.msra.mxu0 0.0
    %1450 = vmatprep.subr.mxu0 0.0
    %1451 = vmatpush1.msra.mxu0 0.0
    %1452 = vmatprep.subr.mxu0 0.0
    %1453 = vmatpush1.msra.mxu0 0.0
    %1454 = vmatprep.mubr.f32.mxu0 0.0
    %1455 = vmatmul.mubr.f32.gmra.mrb[0].mxu0 %v1388
    %v1456 = vpop.f32.mrb[0].mxu0
    %v1457 = vadd.f32 %v732, %v1456
    %v1458 = vpop.f32.mrb[0].mxu0
    %1459 = vdwg.mxu0
    %v1460 = vxor.u32 %v1457, 2147483648
    %v1461 = vmul.f32 %v1460, 1.442695
    %v1462 = vpow.pop %v1461
    %v1463 = vadd.f32 %v1462, 1.0
    %v1464 = vrcp.pop %v1463
    %v1465 = vmul.f32 1.0, %v1464
    %v1466 = vtanh.pop %v1457
    %v1467 = vmul.f32 %v1465, %v823
    %1469 = vrot.lane.b32.xlu0 %v1466, 64
    %v1470 = vpop.permute.xlu0 %1469
    %v1472 = vmul.f32 %v1465, %v1470
    %1474 = vrot.lane.b32.xlu0 %v1472, 32
    %v1475 = vpop.permute.xlu0 %1474
    %v1477 = vadd.f32 %v1467, %v1475
    %v1478 = vtanh.pop %v1477
    %1480 = vrot.lane.b32.xlu0 %v1478, 64
    %v1481 = vpop.permute.xlu0 %1480
    %v1483 = vmul.f32 %v1465, %v1481
    %v1484 = vadd.f32 %v830, %v1055
    %v1485 = vadd.f32 %v831, %v1269
    %v1486 = vadd.f32 %v832, %v1483
    %s1487 = scalar_lea.vmem %s0, 4
    %v1488 = vld [vmem:[%s1487] sm:$0x3]
    %s1489 = scalar_lea.vmem %s1, 4
    %v1490 = vld [vmem:[%s1489] sm:$0x3]
    %s1491 = scalar_lea.vmem %s2, 4
    %v1492 = vld [vmem:[%s1491] sm:$0x3]
    %1494 = vrot.lane.b32.xlu0 %v1269, 42
    %v1495 = vpop.permute.xlu0 %1494
    %1498 = vrot.lane.b32.xlu0 %v1483, 74
    %v1499 = vpop.permute.xlu0 %1498
    %1501 = vrot.lane.b32.xlu0 %v949, 106
    %v1502 = vpop.permute.xlu0 %1501
    %v1504 = vsel %vm127, %v1488, %v1495
    %v1505 = vsel %vm129, %v1504, %v1499
    %v1506 = vsel %vm131, %v1505, %v1502
    %v1508 = vsel %vm148, %v1506, 0
    %1510 = vmatprep.subr.mxu0 0.0
    %1511 = vmatpush1.msra.mxu0 %v133
    %1512 = vmatprep.subr.mxu0 0.0
    %1513 = vmatpush1.msra.mxu0 %v134
    %1514 = vmatprep.subr.mxu0 0.0
    %1515 = vmatpush1.msra.mxu0 %v135
    %1516 = vmatprep.subr.mxu0 0.0
    %1517 = vmatpush1.msra.mxu0 %v136
    %1518 = vmatprep.subr.mxu0 0.0
    %1519 = vmatpush1.msra.mxu0 %v137
    %1520 = vmatprep.subr.mxu0 0.0
    %1521 = vmatpush1.msra.mxu0 %v138
    %1522 = vmatprep.subr.mxu0 0.0
    %1523 = vmatpush1.msra.mxu0 %v139
    %1524 = vmatprep.subr.mxu0 0.0
    %1525 = vmatpush1.msra.mxu0 %v140
    %1526 = vmatprep.subr.mxu0 0.0
    %1527 = vmatpush1.msra.mxu0 %v141
    %1528 = vmatprep.subr.mxu0 0.0
    %1529 = vmatpush1.msra.mxu0 %v142
    %1530 = vmatprep.subr.mxu0 0.0
    %1531 = vmatpush1.msra.mxu0 %v143
    %1532 = vmatprep.subr.mxu0 0.0
    %1533 = vmatpush1.msra.mxu0 %v144
    %1534 = vmatprep.subr.mxu0 0.0
    %1535 = vmatpush1.msra.mxu0 %v145
    %1536 = vmatprep.subr.mxu0 0.0
    %1537 = vmatpush1.msra.mxu0 %v154
    %1538 = vmatprep.subr.mxu0 0.0
    %1539 = vmatpush1.msra.mxu0 0.0
    %1540 = vmatprep.subr.mxu0 0.0
    %1541 = vmatpush1.msra.mxu0 0.0
    %1542 = vmatprep.subr.mxu0 0.0
    %1543 = vmatpush1.msra.mxu0 0.0
    %1544 = vmatprep.subr.mxu0 0.0
    %1545 = vmatpush1.msra.mxu0 0.0
    %1546 = vmatprep.subr.mxu0 0.0
    %1547 = vmatpush1.msra.mxu0 0.0
    %1548 = vmatprep.subr.mxu0 0.0
    %1549 = vmatpush1.msra.mxu0 0.0
    %1550 = vmatprep.subr.mxu0 0.0
    %1551 = vmatpush1.msra.mxu0 0.0
    %1552 = vmatprep.subr.mxu0 0.0
    %1553 = vmatpush1.msra.mxu0 0.0
    %1554 = vmatprep.subr.mxu0 0.0
    %1555 = vmatpush1.msra.mxu0 0.0
    %1556 = vmatprep.subr.mxu0 0.0
    %1557 = vmatpush1.msra.mxu0 0.0
    %1558 = vmatprep.subr.mxu0 0.0
    %1559 = vmatpush1.msra.mxu0 0.0
    %1560 = vmatprep.subr.mxu0 0.0
    %1561 = vmatpush1.msra.mxu0 0.0
    %1562 = vmatprep.subr.mxu0 0.0
    %1563 = vmatpush1.msra.mxu0 0.0
    %1564 = vmatprep.subr.mxu0 0.0
    %1565 = vmatpush1.msra.mxu0 0.0
    %1566 = vmatprep.subr.mxu0 0.0
    %1567 = vmatpush1.msra.mxu0 0.0
    %1568 = vmatprep.subr.mxu0 0.0
    %1569 = vmatpush1.msra.mxu0 0.0
    %1570 = vmatprep.subr.mxu0 0.0
    %1571 = vmatpush1.msra.mxu0 0.0
    %1572 = vmatprep.subr.mxu0 0.0
    %1573 = vmatpush1.msra.mxu0 0.0
    %1574 = vmatprep.mubr.f32.mxu0 0.0
    %1575 = vmatmul.mubr.f32.gmra.mrb[0].mxu0 %v1508
    %v1576 = vpop.f32.mrb[0].mxu0
    %v1577 = vadd.f32 %v147, %v1576
    %v1578 = vpop.f32.mrb[0].mxu0
    %1579 = vdwg.mxu0
    %v1580 = vxor.u32 %v1577, 2147483648
    %v1581 = vmul.f32 %v1580, 1.442695
    %v1582 = vpow.pop %v1581
    %v1583 = vadd.f32 %v1582, 1.0
    %v1584 = vrcp.pop %v1583
    %v1585 = vmul.f32 1.0, %v1584
    %v1586 = vtanh.pop %v1577
    %v1587 = vmul.f32 %v1585, %v943
    %1589 = vrot.lane.b32.xlu0 %v1586, 64
    %v1590 = vpop.permute.xlu0 %1589
    %v1592 = vmul.f32 %v1585, %v1590
    %1594 = vrot.lane.b32.xlu0 %v1592, 32
    %v1595 = vpop.permute.xlu0 %1594
    %v1597 = vadd.f32 %v1587, %v1595
    %v1598 = vtanh.pop %v1597
    %1600 = vrot.lane.b32.xlu0 %v1598, 64
    %v1601 = vpop.permute.xlu0 %1600
    %v1603 = vmul.f32 %v1585, %v1601
    %1605 = vrot.lane.b32.xlu0 %v1603, 32
    %v1606 = vpop.permute.xlu0 %1605
    %1609 = vrot.lane.b32.xlu0 %v1055, 64
    %v1610 = vpop.permute.xlu0 %1609
    %v1612 = vsel %vm254, %v1606, %v1610
    %v1614 = vsel %vm265, %v1612, 0
    %1616 = vmatprep.subr.mxu0 0.0
    %1617 = vmatpush1.msra.mxu0 %v256
    %1618 = vmatprep.subr.mxu0 0.0
    %1619 = vmatpush1.msra.mxu0 %v257
    %1620 = vmatprep.subr.mxu0 0.0
    %1621 = vmatpush1.msra.mxu0 %v258
    %1622 = vmatprep.subr.mxu0 0.0
    %1623 = vmatpush1.msra.mxu0 %v259
    %1624 = vmatprep.subr.mxu0 0.0
    %1625 = vmatpush1.msra.mxu0 %v260
    %1626 = vmatprep.subr.mxu0 0.0
    %1627 = vmatpush1.msra.mxu0 %v261
    %1628 = vmatprep.subr.mxu0 0.0
    %1629 = vmatpush1.msra.mxu0 %v262
    %1630 = vmatprep.subr.mxu0 0.0
    %1631 = vmatpush1.msra.mxu0 %v263
    %1632 = vmatprep.subr.mxu0 0.0
    %1633 = vmatpush1.msra.mxu0 0.0
    %1634 = vmatprep.subr.mxu0 0.0
    %1635 = vmatpush1.msra.mxu0 0.0
    %1636 = vmatprep.subr.mxu0 0.0
    %1637 = vmatpush1.msra.mxu0 0.0
    %1638 = vmatprep.subr.mxu0 0.0
    %1639 = vmatpush1.msra.mxu0 0.0
    %1640 = vmatprep.subr.mxu0 0.0
    %1641 = vmatpush1.msra.mxu0 0.0
    %1642 = vmatprep.subr.mxu0 0.0
    %1643 = vmatpush1.msra.mxu0 0.0
    %1644 = vmatprep.subr.mxu0 0.0
    %1645 = vmatpush1.msra.mxu0 0.0
    %1646 = vmatprep.subr.mxu0 0.0
    %1647 = vmatpush1.msra.mxu0 0.0
    %1648 = vmatprep.subr.mxu0 0.0
    %1649 = vmatpush1.msra.mxu0 0.0
    %1650 = vmatprep.subr.mxu0 0.0
    %1651 = vmatpush1.msra.mxu0 0.0
    %1652 = vmatprep.subr.mxu0 0.0
    %1653 = vmatpush1.msra.mxu0 0.0
    %1654 = vmatprep.subr.mxu0 0.0
    %1655 = vmatpush1.msra.mxu0 0.0
    %1656 = vmatprep.subr.mxu0 0.0
    %1657 = vmatpush1.msra.mxu0 0.0
    %1658 = vmatprep.subr.mxu0 0.0
    %1659 = vmatpush1.msra.mxu0 0.0
    %1660 = vmatprep.subr.mxu0 0.0
    %1661 = vmatpush1.msra.mxu0 0.0
    %1662 = vmatprep.subr.mxu0 0.0
    %1663 = vmatpush1.msra.mxu0 0.0
    %1664 = vmatprep.subr.mxu0 0.0
    %1665 = vmatpush1.msra.mxu0 0.0
    %1666 = vmatprep.subr.mxu0 0.0
    %1667 = vmatpush1.msra.mxu0 0.0
    %1668 = vmatprep.subr.mxu0 0.0
    %1669 = vmatpush1.msra.mxu0 0.0
    %1670 = vmatprep.subr.mxu0 0.0
    %1671 = vmatpush1.msra.mxu0 0.0
    %1672 = vmatprep.subr.mxu0 0.0
    %1673 = vmatpush1.msra.mxu0 0.0
    %1674 = vmatprep.subr.mxu0 0.0
    %1675 = vmatpush1.msra.mxu0 0.0
    %1676 = vmatprep.subr.mxu0 0.0
    %1677 = vmatpush1.msra.mxu0 0.0
    %1678 = vmatprep.subr.mxu0 0.0
    %1679 = vmatpush1.msra.mxu0 0.0
    %1680 = vmatprep.mubr.f32.mxu0 0.0
    %1681 = vmatmul.mubr.f32.gmra.mrb[0].mxu0 %v1614
    %v1682 = vpop.f32.mrb[0].mxu0
    %v1683 = vadd.f32 %v264, %v1682
    %v1684 = vpop.f32.mrb[0].mxu0
    %1685 = vdwg.mxu0
    %v1686 = vxor.u32 %v1683, 2147483648
    %v1687 = vmul.f32 %v1686, 1.442695
    %v1688 = vpow.pop %v1687
    %v1689 = vadd.f32 %v1688, 1.0
    %v1690 = vrcp.pop %v1689
    %v1691 = vmul.f32 1.0, %v1690
    %v1692 = vtanh.pop %v1683
    %v1693 = vmul.f32 %v1691, %v1049
    %1695 = vrot.lane.b32.xlu0 %v1692, 64
    %v1696 = vpop.permute.xlu0 %1695
    %v1698 = vmul.f32 %v1691, %v1696
    %1700 = vrot.lane.b32.xlu0 %v1698, 32
    %v1701 = vpop.permute.xlu0 %1700
    %v1703 = vadd.f32 %v1693, %v1701
    %v1704 = vtanh.pop %v1703
    %1706 = vrot.lane.b32.xlu0 %v1704, 64
    %v1707 = vpop.permute.xlu0 %1706
    %v1709 = vmul.f32 %v1691, %v1707
    %1710 = vrot.lane.b32.xlu0 %v1055, 44
    %v1711 = vpop.permute.xlu0 %1710
    %1713 = vrot.lane.b32.xlu0 %v1483, 76
    %v1714 = vpop.permute.xlu0 %1713
    %1716 = vrot.lane.b32.xlu0 %v1164, 108
    %v1717 = vpop.permute.xlu0 %1716
    %v1719 = vsel %vm363, %v1490, %v1711
    %v1720 = vsel %vm365, %v1719, %v1714
    %v1721 = vsel %vm367, %v1720, %v1717
    %v1723 = vsel %vm384, %v1721, 0
    %1725 = vmatprep.subr.mxu0 0.0
    %1726 = vmatpush1.msra.mxu0 %v369
    %1727 = vmatprep.subr.mxu0 0.0
    %1728 = vmatpush1.msra.mxu0 %v370
    %1729 = vmatprep.subr.mxu0 0.0
    %1730 = vmatpush1.msra.mxu0 %v371
    %1731 = vmatprep.subr.mxu0 0.0
    %1732 = vmatpush1.msra.mxu0 %v372
    %1733 = vmatprep.subr.mxu0 0.0
    %1734 = vmatpush1.msra.mxu0 %v373
    %1735 = vmatprep.subr.mxu0 0.0
    %1736 = vmatpush1.msra.mxu0 %v374
    %1737 = vmatprep.subr.mxu0 0.0
    %1738 = vmatpush1.msra.mxu0 %v375
    %1739 = vmatprep.subr.mxu0 0.0
    %1740 = vmatpush1.msra.mxu0 %v376
    %1741 = vmatprep.subr.mxu0 0.0
    %1742 = vmatpush1.msra.mxu0 %v377
    %1743 = vmatprep.subr.mxu0 0.0
    %1744 = vmatpush1.msra.mxu0 %v378
    %1745 = vmatprep.subr.mxu0 0.0
    %1746 = vmatpush1.msra.mxu0 %v379
    %1747 = vmatprep.subr.mxu0 0.0
    %1748 = vmatpush1.msra.mxu0 %v380
    %1749 = vmatprep.subr.mxu0 0.0
    %1750 = vmatpush1.msra.mxu0 %v381
    %1751 = vmatprep.subr.mxu0 0.0
    %1752 = vmatpush1.msra.mxu0 %v390
    %1753 = vmatprep.subr.mxu0 0.0
    %1754 = vmatpush1.msra.mxu0 0.0
    %1755 = vmatprep.subr.mxu0 0.0
    %1756 = vmatpush1.msra.mxu0 0.0
    %1757 = vmatprep.subr.mxu0 0.0
    %1758 = vmatpush1.msra.mxu0 0.0
    %1759 = vmatprep.subr.mxu0 0.0
    %1760 = vmatpush1.msra.mxu0 0.0
    %1761 = vmatprep.subr.mxu0 0.0
    %1762 = vmatpush1.msra.mxu0 0.0
    %1763 = vmatprep.subr.mxu0 0.0
    %1764 = vmatpush1.msra.mxu0 0.0
    %1765 = vmatprep.subr.mxu0 0.0
    %1766 = vmatpush1.msra.mxu0 0.0
    %1767 = vmatprep.subr.mxu0 0.0
    %1768 = vmatpush1.msra.mxu0 0.0
    %1769 = vmatprep.subr.mxu0 0.0
    %1770 = vmatpush1.msra.mxu0 0.0
    %1771 = vmatprep.subr.mxu0 0.0
    %1772 = vmatpush1.msra.mxu0 0.0
    %1773 = vmatprep.subr.mxu0 0.0
    %1774 = vmatpush1.msra.mxu0 0.0
    %1775 = vmatprep.subr.mxu0 0.0
    %1776 = vmatpush1.msra.mxu0 0.0
    %1777 = vmatprep.subr.mxu0 0.0
    %1778 = vmatpush1.msra.mxu0 0.0
    %1779 = vmatprep.subr.mxu0 0.0
    %1780 = vmatpush1.msra.mxu0 0.0
    %1781 = vmatprep.subr.mxu0 0.0
    %1782 = vmatpush1.msra.mxu0 0.0
    %1783 = vmatprep.subr.mxu0 0.0
    %1784 = vmatpush1.msra.mxu0 0.0
    %1785 = vmatprep.subr.mxu0 0.0
    %1786 = vmatpush1.msra.mxu0 0.0
    %1787 = vmatprep.subr.mxu0 0.0
    %1788 = vmatpush1.msra.mxu0 0.0
    %1789 = vmatprep.mubr.f32.mxu0 0.0
    %1790 = vmatmul.mubr.f32.gmra.mrb[0].mxu0 %v1723
    %v1791 = vpop.f32.mrb[0].mxu0
    %v1792 = vadd.f32 %v383, %v1791
    %v1793 = vpop.f32.mrb[0].mxu0
    %1794 = vdwg.mxu0
    %v1795 = vxor.u32 %v1792, 2147483648
    %v1796 = vmul.f32 %v1795, 1.442695
    %v1797 = vpow.pop %v1796
    %v1798 = vadd.f32 %v1797, 1.0
    %v1799 = vrcp.pop %v1798
    %v1800 = vmul.f32 1.0, %v1799
    %v1801 = vtanh.pop %v1792
    %v1802 = vmul.f32 %v1800, %v1158
    %1804 = vrot.lane.b32.xlu0 %v1801, 64
    %v1805 = vpop.permute.xlu0 %1804
    %v1807 = vmul.f32 %v1800, %v1805
    %1809 = vrot.lane.b32.xlu0 %v1807, 32
    %v1810 = vpop.permute.xlu0 %1809
    %v1812 = vadd.f32 %v1802, %v1810
    %v1813 = vtanh.pop %v1812
    %1815 = vrot.lane.b32.xlu0 %v1813, 64
    %v1816 = vpop.permute.xlu0 %1815
    %v1818 = vmul.f32 %v1800, %v1816
    %1820 = vrot.lane.b32.xlu0 %v1818, 32
    %v1821 = vpop.permute.xlu0 %1820
    %1823 = vrot.lane.b32.xlu0 %v1269, 64
    %v1824 = vpop.permute.xlu0 %1823
    %v1826 = vsel %vm254, %v1821, %v1824
    %v1828 = vsel %vm265, %v1826, 0
    %1830 = vmatprep.subr.mxu0 0.0
    %1831 = vmatpush1.msra.mxu0 %v491
    %1832 = vmatprep.subr.mxu0 0.0
    %1833 = vmatpush1.msra.mxu0 %v492
    %1834 = vmatprep.subr.mxu0 0.0
    %1835 = vmatpush1.msra.mxu0 %v493
    %1836 = vmatprep.subr.mxu0 0.0
    %1837 = vmatpush1.msra.mxu0 %v494
    %1838 = vmatprep.subr.mxu0 0.0
    %1839 = vmatpush1.msra.mxu0 %v495
    %1840 = vmatprep.subr.mxu0 0.0
    %1841 = vmatpush1.msra.mxu0 %v496
    %1842 = vmatprep.subr.mxu0 0.0
    %1843 = vmatpush1.msra.mxu0 %v497
    %1844 = vmatprep.subr.mxu0 0.0
    %1845 = vmatpush1.msra.mxu0 %v498
    %1846 = vmatprep.subr.mxu0 0.0
    %1847 = vmatpush1.msra.mxu0 0.0
    %1848 = vmatprep.subr.mxu0 0.0
    %1849 = vmatpush1.msra.mxu0 0.0
    %1850 = vmatprep.subr.mxu0 0.0
    %1851 = vmatpush1.msra.mxu0 0.0
    %1852 = vmatprep.subr.mxu0 0.0
    %1853 = vmatpush1.msra.mxu0 0.0
    %1854 = vmatprep.subr.mxu0 0.0
    %1855 = vmatpush1.msra.mxu0 0.0
    %1856 = vmatprep.subr.mxu0 0.0
    %1857 = vmatpush1.msra.mxu0 0.0
    %1858 = vmatprep.subr.mxu0 0.0
    %1859 = vmatpush1.msra.mxu0 0.0
    %1860 = vmatprep.subr.mxu0 0.0
    %1861 = vmatpush1.msra.mxu0 0.0
    %1862 = vmatprep.subr.mxu0 0.0
    %1863 = vmatpush1.msra.mxu0 0.0
    %1864 = vmatprep.subr.mxu0 0.0
    %1865 = vmatpush1.msra.mxu0 0.0
    %1866 = vmatprep.subr.mxu0 0.0
    %1867 = vmatpush1.msra.mxu0 0.0
    %1868 = vmatprep.subr.mxu0 0.0
    %1869 = vmatpush1.msra.mxu0 0.0
    %1870 = vmatprep.subr.mxu0 0.0
    %1871 = vmatpush1.msra.mxu0 0.0
    %1872 = vmatprep.subr.mxu0 0.0
    %1873 = vmatpush1.msra.mxu0 0.0
    %1874 = vmatprep.subr.mxu0 0.0
    %1875 = vmatpush1.msra.mxu0 0.0
    %1876 = vmatprep.subr.mxu0 0.0
    %1877 = vmatpush1.msra.mxu0 0.0
    %1878 = vmatprep.subr.mxu0 0.0
    %1879 = vmatpush1.msra.mxu0 0.0
    %1880 = vmatprep.subr.mxu0 0.0
    %1881 = vmatpush1.msra.mxu0 0.0
    %1882 = vmatprep.subr.mxu0 0.0
    %1883 = vmatpush1.msra.mxu0 0.0
    %1884 = vmatprep.subr.mxu0 0.0
    %1885 = vmatpush1.msra.mxu0 0.0
    %1886 = vmatprep.subr.mxu0 0.0
    %1887 = vmatpush1.msra.mxu0 0.0
    %1888 = vmatprep.subr.mxu0 0.0
    %1889 = vmatpush1.msra.mxu0 0.0
    %1890 = vmatprep.subr.mxu0 0.0
    %1891 = vmatpush1.msra.mxu0 0.0
    %1892 = vmatprep.subr.mxu0 0.0
    %1893 = vmatpush1.msra.mxu0 0.0
    %1894 = vmatprep.mubr.f32.mxu0 0.0
    %1895 = vmatmul.mubr.f32.gmra.mrb[0].mxu0 %v1828
    %v1896 = vpop.f32.mrb[0].mxu0
    %v1897 = vadd.f32 %v499, %v1896
    %v1898 = vpop.f32.mrb[0].mxu0
    %1899 = vdwg.mxu0
    %v1900 = vxor.u32 %v1897, 2147483648
    %v1901 = vmul.f32 %v1900, 1.442695
    %v1902 = vpow.pop %v1901
    %v1903 = vadd.f32 %v1902, 1.0
    %v1904 = vrcp.pop %v1903
    %v1905 = vmul.f32 1.0, %v1904
    %v1906 = vtanh.pop %v1897
    %v1907 = vmul.f32 %v1905, %v1263
    %1909 = vrot.lane.b32.xlu0 %v1906, 64
    %v1910 = vpop.permute.xlu0 %1909
    %v1912 = vmul.f32 %v1905, %v1910
    %1914 = vrot.lane.b32.xlu0 %v1912, 32
    %v1915 = vpop.permute.xlu0 %1914
    %v1917 = vadd.f32 %v1907, %v1915
    %v1918 = vtanh.pop %v1917
    %1920 = vrot.lane.b32.xlu0 %v1918, 64
    %v1921 = vpop.permute.xlu0 %1920
    %v1923 = vmul.f32 %v1905, %v1921
    %1924 = vrot.lane.b32.xlu0 %v1055, 38
    %v1925 = vpop.permute.xlu0 %1924
    %1927 = vrot.lane.b32.xlu0 %v1269, 70
    %v1928 = vpop.permute.xlu0 %1927
    %1930 = vrot.lane.b32.xlu0 %v1378, 102
    %v1931 = vpop.permute.xlu0 %1930
    %v1933 = vsel %vm597, %v1492, %v1925
    %v1934 = vsel %vm599, %v1933, %v1928
    %v1935 = vsel %vm601, %v1934, %v1931
    %v1937 = vsel %vm617, %v1935, 0
    %1939 = vmatprep.subr.mxu0 0.0
    %1940 = vmatpush1.msra.mxu0 %v603
    %1941 = vmatprep.subr.mxu0 0.0
    %1942 = vmatpush1.msra.mxu0 %v604
    %1943 = vmatprep.subr.mxu0 0.0
    %1944 = vmatpush1.msra.mxu0 %v605
    %1945 = vmatprep.subr.mxu0 0.0
    %1946 = vmatpush1.msra.mxu0 %v606
    %1947 = vmatprep.subr.mxu0 0.0
    %1948 = vmatpush1.msra.mxu0 %v607
    %1949 = vmatprep.subr.mxu0 0.0
    %1950 = vmatpush1.msra.mxu0 %v608
    %1951 = vmatprep.subr.mxu0 0.0
    %1952 = vmatpush1.msra.mxu0 %v609
    %1953 = vmatprep.subr.mxu0 0.0
    %1954 = vmatpush1.msra.mxu0 %v610
    %1955 = vmatprep.subr.mxu0 0.0
    %1956 = vmatpush1.msra.mxu0 %v611
    %1957 = vmatprep.subr.mxu0 0.0
    %1958 = vmatpush1.msra.mxu0 %v612
    %1959 = vmatprep.subr.mxu0 0.0
    %1960 = vmatpush1.msra.mxu0 %v613
    %1961 = vmatprep.subr.mxu0 0.0
    %1962 = vmatpush1.msra.mxu0 %v614
    %1963 = vmatprep.subr.mxu0 0.0
    %1964 = vmatpush1.msra.mxu0 %v623
    %1965 = vmatprep.subr.mxu0 0.0
    %1966 = vmatpush1.msra.mxu0 0.0
    %1967 = vmatprep.subr.mxu0 0.0
    %1968 = vmatpush1.msra.mxu0 0.0
    %1969 = vmatprep.subr.mxu0 0.0
    %1970 = vmatpush1.msra.mxu0 0.0
    %1971 = vmatprep.subr.mxu0 0.0
    %1972 = vmatpush1.msra.mxu0 0.0
    %1973 = vmatprep.subr.mxu0 0.0
    %1974 = vmatpush1.msra.mxu0 0.0
    %1975 = vmatprep.subr.mxu0 0.0
    %1976 = vmatpush1.msra.mxu0 0.0
    %1977 = vmatprep.subr.mxu0 0.0
    %1978 = vmatpush1.msra.mxu0 0.0
    %1979 = vmatprep.subr.mxu0 0.0
    %1980 = vmatpush1.msra.mxu0 0.0
    %1981 = vmatprep.subr.mxu0 0.0
    %1982 = vmatpush1.msra.mxu0 0.0
    %1983 = vmatprep.subr.mxu0 0.0
    %1984 = vmatpush1.msra.mxu0 0.0
    %1985 = vmatprep.subr.mxu0 0.0
    %1986 = vmatpush1.msra.mxu0 0.0
    %1987 = vmatprep.subr.mxu0 0.0
    %1988 = vmatpush1.msra.mxu0 0.0
    %1989 = vmatprep.subr.mxu0 0.0
    %1990 = vmatpush1.msra.mxu0 0.0
    %1991 = vmatprep.subr.mxu0 0.0
    %1992 = vmatpush1.msra.mxu0 0.0
    %1993 = vmatprep.subr.mxu0 0.0
    %1994 = vmatpush1.msra.mxu0 0.0
    %1995 = vmatprep.subr.mxu0 0.0
    %1996 = vmatpush1.msra.mxu0 0.0
    %1997 = vmatprep.subr.mxu0 0.0
    %1998 = vmatpush1.msra.mxu0 0.0
    %1999 = vmatprep.subr.mxu0 0.0
    %2000 = vmatpush1.msra.mxu0 0.0
    %2001 = vmatprep.subr.mxu0 0.0
    %2002 = vmatpush1.msra.mxu0 0.0
    %2003 = vmatprep.mubr.f32.mxu0 0.0
    %2004 = vmatmul.mubr.f32.gmra.mrb[0].mxu0 %v1937
    %v2005 = vpop.f32.mrb[0].mxu0
    %v2006 = vadd.f32 %v616, %v2005
    %v2007 = vpop.f32.mrb[0].mxu0
    %2008 = vdwg.mxu0
    %v2009 = vxor.u32 %v2006, 2147483648
    %v2010 = vmul.f32 %v2009, 1.442695
    %v2011 = vpow.pop %v2010
    %v2012 = vadd.f32 %v2011, 1.0
    %v2013 = vrcp.pop %v2012
    %v2014 = vmul.f32 1.0, %v2013
    %v2015 = vtanh.pop %v2006
    %v2016 = vmul.f32 %v2014, %v1372
    %2018 = vrot.lane.b32.xlu0 %v2015, 64
    %v2019 = vpop.permute.xlu0 %2018
    %v2021 = vmul.f32 %v2014, %v2019
    %2023 = vrot.lane.b32.xlu0 %v2021, 32
    %v2024 = vpop.permute.xlu0 %2023
    %v2026 = vadd.f32 %v2016, %v2024
    %v2027 = vtanh.pop %v2026
    %2029 = vrot.lane.b32.xlu0 %v2027, 64
    %v2030 = vpop.permute.xlu0 %2029
    %v2032 = vmul.f32 %v2014, %v2030
    %2034 = vrot.lane.b32.xlu0 %v2032, 32
    %v2035 = vpop.permute.xlu0 %2034
    %2037 = vrot.lane.b32.xlu0 %v1483, 64
    %v2038 = vpop.permute.xlu0 %2037
    %v2040 = vsel %vm254, %v2035, %v2038
    %v2042 = vsel %vm265, %v2040, 0
    %2044 = vmatprep.subr.mxu0 0.0
    %2045 = vmatpush1.msra.mxu0 %v724
    %2046 = vmatprep.subr.mxu0 0.0
    %2047 = vmatpush1.msra.mxu0 %v725
    %2048 = vmatprep.subr.mxu0 0.0
    %2049 = vmatpush1.msra.mxu0 %v726
    %2050 = vmatprep.subr.mxu0 0.0
    %2051 = vmatpush1.msra.mxu0 %v727
    %2052 = vmatprep.subr.mxu0 0.0
    %2053 = vmatpush1.msra.mxu0 %v728
    %2054 = vmatprep.subr.mxu0 0.0
    %2055 = vmatpush1.msra.mxu0 %v729
    %2056 = vmatprep.subr.mxu0 0.0
    %2057 = vmatpush1.msra.mxu0 %v730
    %2058 = vmatprep.subr.mxu0 0.0
    %2059 = vmatpush1.msra.mxu0 %v731
    %2060 = vmatprep.subr.mxu0 0.0
    %2061 = vmatpush1.msra.mxu0 0.0
    %2062 = vmatprep.subr.mxu0 0.0
    %2063 = vmatpush1.msra.mxu0 0.0
    %2064 = vmatprep.subr.mxu0 0.0
    %2065 = vmatpush1.msra.mxu0 0.0
    %2066 = vmatprep.subr.mxu0 0.0
    %2067 = vmatpush1.msra.mxu0 0.0
    %2068 = vmatprep.subr.mxu0 0.0
    %2069 = vmatpush1.msra.mxu0 0.0
    %2070 = vmatprep.subr.mxu0 0.0
    %2071 = vmatpush1.msra.mxu0 0.0
    %2072 = vmatprep.subr.mxu0 0.0
    %2073 = vmatpush1.msra.mxu0 0.0
    %2074 = vmatprep.subr.mxu0 0.0
    %2075 = vmatpush1.msra.mxu0 0.0
    %2076 = vmatprep.subr.mxu0 0.0
    %2077 = vmatpush1.msra.mxu0 0.0
    %2078 = vmatprep.subr.mxu0 0.0
    %2079 = vmatpush1.msra.mxu0 0.0
    %2080 = vmatprep.subr.mxu0 0.0
    %2081 = vmatpush1.msra.mxu0 0.0
    %2082 = vmatprep.subr.mxu0 0.0
    %2083 = vmatpush1.msra.mxu0 0.0
    %2084 = vmatprep.subr.mxu0 0.0
    %2085 = vmatpush1.msra.mxu0 0.0
    %2086 = vmatprep.subr.mxu0 0.0
    %2087 = vmatpush1.msra.mxu0 0.0
    %2088 = vmatprep.subr.mxu0 0.0
    %2089 = vmatpush1.msra.mxu0 0.0
    %2090 = vmatprep.subr.mxu0 0.0
    %2091 = vmatpush1.msra.mxu0 0.0
    %2092 = vmatprep.subr.mxu0 0.0
    %2093 = vmatpush1.msra.mxu0 0.0
    %2094 = vmatprep.subr.mxu0 0.0
    %2095 = vmatpush1.msra.mxu0 0.0
    %2096 = vmatprep.subr.mxu0 0.0
    %2097 = vmatpush1.msra.mxu0 0.0
    %2098 = vmatprep.subr.mxu0 0.0
    %2099 = vmatpush1.msra.mxu0 0.0
    %2100 = vmatprep.subr.mxu0 0.0
    %2101 = vmatpush1.msra.mxu0 0.0
    %2102 = vmatprep.subr.mxu0 0.0
    %2103 = vmatpush1.msra.mxu0 0.0
    %2104 = vmatprep.subr.mxu0 0.0
    %2105 = vmatpush1.msra.mxu0 0.0
    %2106 = vmatprep.subr.mxu0 0.0
    %2107 = vmatpush1.msra.mxu0 0.0
    %2108 = vmatprep.mubr.f32.mxu0 0.0
    %2109 = vmatmul.mubr.f32.gmra.mrb[0].mxu0 %v2042
    %v2110 = vpop.f32.mrb[0].mxu0
    %v2111 = vadd.f32 %v732, %v2110
    %v2112 = vpop.f32.mrb[0].mxu0
    %2113 = vdwg.mxu0
    %v2114 = vxor.u32 %v2111, 2147483648
    %v2115 = vmul.f32 %v2114, 1.442695
    %v2116 = vpow.pop %v2115
    %v2117 = vadd.f32 %v2116, 1.0
    %v2118 = vrcp.pop %v2117
    %v2119 = vmul.f32 1.0, %v2118
    %v2120 = vtanh.pop %v2111
    %v2121 = vmul.f32 %v2119, %v1477
    %2123 = vrot.lane.b32.xlu0 %v2120, 64
    %v2124 = vpop.permute.xlu0 %2123
    %v2126 = vmul.f32 %v2119, %v2124
    %2128 = vrot.lane.b32.xlu0 %v2126, 32
    %v2129 = vpop.permute.xlu0 %2128
    %v2131 = vadd.f32 %v2121, %v2129
    %v2132 = vtanh.pop %v2131
    %2134 = vrot.lane.b32.xlu0 %v2132, 64
    %v2135 = vpop.permute.xlu0 %2134
    %v2137 = vmul.f32 %v2119, %v2135
    %v2138 = vadd.f32 %v1484, %v1709
    %v2139 = vadd.f32 %v1485, %v1923
    %v2140 = vadd.f32 %v1486, %v2137
    %s2141 = scalar_lea.vmem %s0, 6
    %v2142 = vld [vmem:[%s2141] sm:$0x3]
    %s2143 = scalar_lea.vmem %s1, 6
    %v2144 = vld [vmem:[%s2143] sm:$0x3]
    %s2145 = scalar_lea.vmem %s2, 6
    %v2146 = vld [vmem:[%s2145] sm:$0x3]
    %2148 = vrot.lane.b32.xlu0 %v1923, 42
    %v2149 = vpop.permute.xlu0 %2148
    %2152 = vrot.lane.b32.xlu0 %v2137, 74
    %v2153 = vpop.permute.xlu0 %2152
    %2155 = vrot.lane.b32.xlu0 %v1603, 106
    %v2156 = vpop.permute.xlu0 %2155
    %v2158 = vsel %vm127, %v2142, %v2149
    %v2159 = vsel %vm129, %v2158, %v2153
    %v2160 = vsel %vm131, %v2159, %v2156
    %v2162 = vsel %vm148, %v2160, 0
    %2164 = vmatprep.subr.mxu0 0.0
    %2165 = vmatpush1.msra.mxu0 %v133
    %2166 = vmatprep.subr.mxu0 0.0
    %2167 = vmatpush1.msra.mxu0 %v134
    %2168 = vmatprep.subr.mxu0 0.0
    %2169 = vmatpush1.msra.mxu0 %v135
    %2170 = vmatprep.subr.mxu0 0.0
    %2171 = vmatpush1.msra.mxu0 %v136
    %2172 = vmatprep.subr.mxu0 0.0
    %2173 = vmatpush1.msra.mxu0 %v137
    %2174 = vmatprep.subr.mxu0 0.0
    %2175 = vmatpush1.msra.mxu0 %v138
    %2176 = vmatprep.subr.mxu0 0.0
    %2177 = vmatpush1.msra.mxu0 %v139
    %2178 = vmatprep.subr.mxu0 0.0
    %2179 = vmatpush1.msra.mxu0 %v140
    %2180 = vmatprep.subr.mxu0 0.0
    %2181 = vmatpush1.msra.mxu0 %v141
    %2182 = vmatprep.subr.mxu0 0.0
    %2183 = vmatpush1.msra.mxu0 %v142
    %2184 = vmatprep.subr.mxu0 0.0
    %2185 = vmatpush1.msra.mxu0 %v143
    %2186 = vmatprep.subr.mxu0 0.0
    %2187 = vmatpush1.msra.mxu0 %v144
    %2188 = vmatprep.subr.mxu0 0.0
    %2189 = vmatpush1.msra.mxu0 %v145
    %2190 = vmatprep.subr.mxu0 0.0
    %2191 = vmatpush1.msra.mxu0 %v154
    %2192 = vmatprep.subr.mxu0 0.0
    %2193 = vmatpush1.msra.mxu0 0.0
    %2194 = vmatprep.subr.mxu0 0.0
    %2195 = vmatpush1.msra.mxu0 0.0
    %2196 = vmatprep.subr.mxu0 0.0
    %2197 = vmatpush1.msra.mxu0 0.0
    %2198 = vmatprep.subr.mxu0 0.0
    %2199 = vmatpush1.msra.mxu0 0.0
    %2200 = vmatprep.subr.mxu0 0.0
    %2201 = vmatpush1.msra.mxu0 0.0
    %2202 = vmatprep.subr.mxu0 0.0
    %2203 = vmatpush1.msra.mxu0 0.0
    %2204 = vmatprep.subr.mxu0 0.0
    %2205 = vmatpush1.msra.mxu0 0.0
    %2206 = vmatprep.subr.mxu0 0.0
    %2207 = vmatpush1.msra.mxu0 0.0
    %2208 = vmatprep.subr.mxu0 0.0
    %2209 = vmatpush1.msra.mxu0 0.0
    %2210 = vmatprep.subr.mxu0 0.0
    %2211 = vmatpush1.msra.mxu0 0.0
    %2212 = vmatprep.subr.mxu0 0.0
    %2213 = vmatpush1.msra.mxu0 0.0
    %2214 = vmatprep.subr.mxu0 0.0
    %2215 = vmatpush1.msra.mxu0 0.0
    %2216 = vmatprep.subr.mxu0 0.0
    %2217 = vmatpush1.msra.mxu0 0.0
    %2218 = vmatprep.subr.mxu0 0.0
    %2219 = vmatpush1.msra.mxu0 0.0
    %2220 = vmatprep.subr.mxu0 0.0
    %2221 = vmatpush1.msra.mxu0 0.0
    %2222 = vmatprep.subr.mxu0 0.0
    %2223 = vmatpush1.msra.mxu0 0.0
    %2224 = vmatprep.subr.mxu0 0.0
    %2225 = vmatpush1.msra.mxu0 0.0
    %2226 = vmatprep.subr.mxu0 0.0
    %2227 = vmatpush1.msra.mxu0 0.0
    %2228 = vmatprep.mubr.f32.mxu0 0.0
    %2229 = vmatmul.mubr.f32.gmra.mrb[0].mxu0 %v2162
    %v2230 = vpop.f32.mrb[0].mxu0
    %v2231 = vadd.f32 %v147, %v2230
    %v2232 = vpop.f32.mrb[0].mxu0
    %2233 = vdwg.mxu0
    %v2234 = vxor.u32 %v2231, 2147483648
    %v2235 = vmul.f32 %v2234, 1.442695
    %v2236 = vpow.pop %v2235
    %v2237 = vadd.f32 %v2236, 1.0
    %v2238 = vrcp.pop %v2237
    %v2239 = vmul.f32 1.0, %v2238
    %v2240 = vtanh.pop %v2231
    %v2241 = vmul.f32 %v2239, %v1597
    %2243 = vrot.lane.b32.xlu0 %v2240, 64
    %v2244 = vpop.permute.xlu0 %2243
    %v2246 = vmul.f32 %v2239, %v2244
    %2248 = vrot.lane.b32.xlu0 %v2246, 32
    %v2249 = vpop.permute.xlu0 %2248
    %v2251 = vadd.f32 %v2241, %v2249
    %v2252 = vtanh.pop %v2251
    %2254 = vrot.lane.b32.xlu0 %v2252, 64
    %v2255 = vpop.permute.xlu0 %2254
    %v2257 = vmul.f32 %v2239, %v2255
    %2259 = vrot.lane.b32.xlu0 %v2257, 32
    %v2260 = vpop.permute.xlu0 %2259
    %2263 = vrot.lane.b32.xlu0 %v1709, 64
    %v2264 = vpop.permute.xlu0 %2263
    %v2266 = vsel %vm254, %v2260, %v2264
    %v2268 = vsel %vm265, %v2266, 0
    %2270 = vmatprep.subr.mxu0 0.0
    %2271 = vmatpush1.msra.mxu0 %v256
    %2272 = vmatprep.subr.mxu0 0.0
    %2273 = vmatpush1.msra.mxu0 %v257
    %2274 = vmatprep.subr.mxu0 0.0
    %2275 = vmatpush1.msra.mxu0 %v258
    %2276 = vmatprep.subr.mxu0 0.0
    %2277 = vmatpush1.msra.mxu0 %v259
    %2278 = vmatprep.subr.mxu0 0.0
    %2279 = vmatpush1.msra.mxu0 %v260
    %2280 = vmatprep.subr.mxu0 0.0
    %2281 = vmatpush1.msra.mxu0 %v261
    %2282 = vmatprep.subr.mxu0 0.0
    %2283 = vmatpush1.msra.mxu0 %v262
    %2284 = vmatprep.subr.mxu0 0.0
    %2285 = vmatpush1.msra.mxu0 %v263
    %2286 = vmatprep.subr.mxu0 0.0
    %2287 = vmatpush1.msra.mxu0 0.0
    %2288 = vmatprep.subr.mxu0 0.0
    %2289 = vmatpush1.msra.mxu0 0.0
    %2290 = vmatprep.subr.mxu0 0.0
    %2291 = vmatpush1.msra.mxu0 0.0
    %2292 = vmatprep.subr.mxu0 0.0
    %2293 = vmatpush1.msra.mxu0 0.0
    %2294 = vmatprep.subr.mxu0 0.0
    %2295 = vmatpush1.msra.mxu0 0.0
    %2296 = vmatprep.subr.mxu0 0.0
    %2297 = vmatpush1.msra.mxu0 0.0
    %2298 = vmatprep.subr.mxu0 0.0
    %2299 = vmatpush1.msra.mxu0 0.0
    %2300 = vmatprep.subr.mxu0 0.0
    %2301 = vmatpush1.msra.mxu0 0.0
    %2302 = vmatprep.subr.mxu0 0.0
    %2303 = vmatpush1.msra.mxu0 0.0
    %2304 = vmatprep.subr.mxu0 0.0
    %2305 = vmatpush1.msra.mxu0 0.0
    %2306 = vmatprep.subr.mxu0 0.0
    %2307 = vmatpush1.msra.mxu0 0.0
    %2308 = vmatprep.subr.mxu0 0.0
    %2309 = vmatpush1.msra.mxu0 0.0
    %2310 = vmatprep.subr.mxu0 0.0
    %2311 = vmatpush1.msra.mxu0 0.0
    %2312 = vmatprep.subr.mxu0 0.0
    %2313 = vmatpush1.msra.mxu0 0.0
    %2314 = vmatprep.subr.mxu0 0.0
    %2315 = vmatpush1.msra.mxu0 0.0
    %2316 = vmatprep.subr.mxu0 0.0
    %2317 = vmatpush1.msra.mxu0 0.0
    %2318 = vmatprep.subr.mxu0 0.0
    %2319 = vmatpush1.msra.mxu0 0.0
    %2320 = vmatprep.subr.mxu0 0.0
    %2321 = vmatpush1.msra.mxu0 0.0
    %2322 = vmatprep.subr.mxu0 0.0
    %2323 = vmatpush1.msra.mxu0 0.0
    %2324 = vmatprep.subr.mxu0 0.0
    %2325 = vmatpush1.msra.mxu0 0.0
    %2326 = vmatprep.subr.mxu0 0.0
    %2327 = vmatpush1.msra.mxu0 0.0
    %2328 = vmatprep.subr.mxu0 0.0
    %2329 = vmatpush1.msra.mxu0 0.0
    %2330 = vmatprep.subr.mxu0 0.0
    %2331 = vmatpush1.msra.mxu0 0.0
    %2332 = vmatprep.subr.mxu0 0.0
    %2333 = vmatpush1.msra.mxu0 0.0
    %2334 = vmatprep.mubr.f32.mxu0 0.0
    %2335 = vmatmul.mubr.f32.gmra.mrb[0].mxu0 %v2268
    %v2336 = vpop.f32.mrb[0].mxu0
    %v2337 = vadd.f32 %v264, %v2336
    %v2338 = vpop.f32.mrb[0].mxu0
    %2339 = vdwg.mxu0
    %v2340 = vxor.u32 %v2337, 2147483648
    %v2341 = vmul.f32 %v2340, 1.442695
    %v2342 = vpow.pop %v2341
    %v2343 = vadd.f32 %v2342, 1.0
    %v2344 = vrcp.pop %v2343
    %v2345 = vmul.f32 1.0, %v2344
    %v2346 = vtanh.pop %v2337
    %v2347 = vmul.f32 %v2345, %v1703
    %2349 = vrot.lane.b32.xlu0 %v2346, 64
    %v2350 = vpop.permute.xlu0 %2349
    %v2352 = vmul.f32 %v2345, %v2350
    %2354 = vrot.lane.b32.xlu0 %v2352, 32
    %v2355 = vpop.permute.xlu0 %2354
    %v2357 = vadd.f32 %v2347, %v2355
    %v2358 = vtanh.pop %v2357
    %2360 = vrot.lane.b32.xlu0 %v2358, 64
    %v2361 = vpop.permute.xlu0 %2360
    %v2363 = vmul.f32 %v2345, %v2361
    %2364 = vrot.lane.b32.xlu0 %v1709, 44
    %v2365 = vpop.permute.xlu0 %2364
    %2367 = vrot.lane.b32.xlu0 %v2137, 76
    %v2368 = vpop.permute.xlu0 %2367
    %2370 = vrot.lane.b32.xlu0 %v1818, 108
    %v2371 = vpop.permute.xlu0 %2370
    %v2373 = vsel %vm363, %v2144, %v2365
    %v2374 = vsel %vm365, %v2373, %v2368
    %v2375 = vsel %vm367, %v2374, %v2371
    %v2377 = vsel %vm384, %v2375, 0
    %2379 = vmatprep.subr.mxu0 0.0
    %2380 = vmatpush1.msra.mxu0 %v369
    %2381 = vmatprep.subr.mxu0 0.0
    %2382 = vmatpush1.msra.mxu0 %v370
    %2383 = vmatprep.subr.mxu0 0.0
    %2384 = vmatpush1.msra.mxu0 %v371
    %2385 = vmatprep.subr.mxu0 0.0
    %2386 = vmatpush1.msra.mxu0 %v372
    %2387 = vmatprep.subr.mxu0 0.0
    %2388 = vmatpush1.msra.mxu0 %v373
    %2389 = vmatprep.subr.mxu0 0.0
    %2390 = vmatpush1.msra.mxu0 %v374
    %2391 = vmatprep.subr.mxu0 0.0
    %2392 = vmatpush1.msra.mxu0 %v375
    %2393 = vmatprep.subr.mxu0 0.0
    %2394 = vmatpush1.msra.mxu0 %v376
    %2395 = vmatprep.subr.mxu0 0.0
    %2396 = vmatpush1.msra.mxu0 %v377
    %2397 = vmatprep.subr.mxu0 0.0
    %2398 = vmatpush1.msra.mxu0 %v378
    %2399 = vmatprep.subr.mxu0 0.0
    %2400 = vmatpush1.msra.mxu0 %v379
    %2401 = vmatprep.subr.mxu0 0.0
    %2402 = vmatpush1.msra.mxu0 %v380
    %2403 = vmatprep.subr.mxu0 0.0
    %2404 = vmatpush1.msra.mxu0 %v381
    %2405 = vmatprep.subr.mxu0 0.0
    %2406 = vmatpush1.msra.mxu0 %v390
    %2407 = vmatprep.subr.mxu0 0.0
    %2408 = vmatpush1.msra.mxu0 0.0
    %2409 = vmatprep.subr.mxu0 0.0
    %2410 = vmatpush1.msra.mxu0 0.0
    %2411 = vmatprep.subr.mxu0 0.0
    %2412 = vmatpush1.msra.mxu0 0.0
    %2413 = vmatprep.subr.mxu0 0.0
    %2414 = vmatpush1.msra.mxu0 0.0
    %2415 = vmatprep.subr.mxu0 0.0
    %2416 = vmatpush1.msra.mxu0 0.0
    %2417 = vmatprep.subr.mxu0 0.0
    %2418 = vmatpush1.msra.mxu0 0.0
    %2419 = vmatprep.subr.mxu0 0.0
    %2420 = vmatpush1.msra.mxu0 0.0
    %2421 = vmatprep.subr.mxu0 0.0
    %2422 = vmatpush1.msra.mxu0 0.0
    %2423 = vmatprep.subr.mxu0 0.0
    %2424 = vmatpush1.msra.mxu0 0.0
    %2425 = vmatprep.subr.mxu0 0.0
    %2426 = vmatpush1.msra.mxu0 0.0
    %2427 = vmatprep.subr.mxu0 0.0
    %2428 = vmatpush1.msra.mxu0 0.0
    %2429 = vmatprep.subr.mxu0 0.0
    %2430 = vmatpush1.msra.mxu0 0.0
    %2431 = vmatprep.subr.mxu0 0.0
    %2432 = vmatpush1.msra.mxu0 0.0
    %2433 = vmatprep.subr.mxu0 0.0
    %2434 = vmatpush1.msra.mxu0 0.0
    %2435 = vmatprep.subr.mxu0 0.0
    %2436 = vmatpush1.msra.mxu0 0.0
    %2437 = vmatprep.subr.mxu0 0.0
    %2438 = vmatpush1.msra.mxu0 0.0
    %2439 = vmatprep.subr.mxu0 0.0
    %2440 = vmatpush1.msra.mxu0 0.0
    %2441 = vmatprep.subr.mxu0 0.0
    %2442 = vmatpush1.msra.mxu0 0.0
    %2443 = vmatprep.mubr.f32.mxu0 0.0
    %2444 = vmatmul.mubr.f32.gmra.mrb[0].mxu0 %v2377
    %v2445 = vpop.f32.mrb[0].mxu0
    %v2446 = vadd.f32 %v383, %v2445
    %v2447 = vpop.f32.mrb[0].mxu0
    %2448 = vdwg.mxu0
    %v2449 = vxor.u32 %v2446, 2147483648
    %v2450 = vmul.f32 %v2449, 1.442695
    %v2451 = vpow.pop %v2450
    %v2452 = vadd.f32 %v2451, 1.0
    %v2453 = vrcp.pop %v2452
    %v2454 = vmul.f32 1.0, %v2453
    %v2455 = vtanh.pop %v2446
    %v2456 = vmul.f32 %v2454, %v1812
    %2458 = vrot.lane.b32.xlu0 %v2455, 64
    %v2459 = vpop.permute.xlu0 %2458
    %v2461 = vmul.f32 %v2454, %v2459
    %2463 = vrot.lane.b32.xlu0 %v2461, 32
    %v2464 = vpop.permute.xlu0 %2463
    %v2466 = vadd.f32 %v2456, %v2464
    %v2467 = vtanh.pop %v2466
    %2469 = vrot.lane.b32.xlu0 %v2467, 64
    %v2470 = vpop.permute.xlu0 %2469
    %v2472 = vmul.f32 %v2454, %v2470
    %2474 = vrot.lane.b32.xlu0 %v2472, 32
    %v2475 = vpop.permute.xlu0 %2474
    %2477 = vrot.lane.b32.xlu0 %v1923, 64
    %v2478 = vpop.permute.xlu0 %2477
    %v2480 = vsel %vm254, %v2475, %v2478
    %v2482 = vsel %vm265, %v2480, 0
    %2484 = vmatprep.subr.mxu0 0.0
    %2485 = vmatpush1.msra.mxu0 %v491
    %2486 = vmatprep.subr.mxu0 0.0
    %2487 = vmatpush1.msra.mxu0 %v492
    %2488 = vmatprep.subr.mxu0 0.0
    %2489 = vmatpush1.msra.mxu0 %v493
    %2490 = vmatprep.subr.mxu0 0.0
    %2491 = vmatpush1.msra.mxu0 %v494
    %2492 = vmatprep.subr.mxu0 0.0
    %2493 = vmatpush1.msra.mxu0 %v495
    %2494 = vmatprep.subr.mxu0 0.0
    %2495 = vmatpush1.msra.mxu0 %v496
    %2496 = vmatprep.subr.mxu0 0.0
    %2497 = vmatpush1.msra.mxu0 %v497
    %2498 = vmatprep.subr.mxu0 0.0
    %2499 = vmatpush1.msra.mxu0 %v498
    %2500 = vmatprep.subr.mxu0 0.0
    %2501 = vmatpush1.msra.mxu0 0.0
    %2502 = vmatprep.subr.mxu0 0.0
    %2503 = vmatpush1.msra.mxu0 0.0
    %2504 = vmatprep.subr.mxu0 0.0
    %2505 = vmatpush1.msra.mxu0 0.0
    %2506 = vmatprep.subr.mxu0 0.0
    %2507 = vmatpush1.msra.mxu0 0.0
    %2508 = vmatprep.subr.mxu0 0.0
    %2509 = vmatpush1.msra.mxu0 0.0
    %2510 = vmatprep.subr.mxu0 0.0
    %2511 = vmatpush1.msra.mxu0 0.0
    %2512 = vmatprep.subr.mxu0 0.0
    %2513 = vmatpush1.msra.mxu0 0.0
    %2514 = vmatprep.subr.mxu0 0.0
    %2515 = vmatpush1.msra.mxu0 0.0
    %2516 = vmatprep.subr.mxu0 0.0
    %2517 = vmatpush1.msra.mxu0 0.0
    %2518 = vmatprep.subr.mxu0 0.0
    %2519 = vmatpush1.msra.mxu0 0.0
    %2520 = vmatprep.subr.mxu0 0.0
    %2521 = vmatpush1.msra.mxu0 0.0
    %2522 = vmatprep.subr.mxu0 0.0
    %2523 = vmatpush1.msra.mxu0 0.0
    %2524 = vmatprep.subr.mxu0 0.0
    %2525 = vmatpush1.msra.mxu0 0.0
    %2526 = vmatprep.subr.mxu0 0.0
    %2527 = vmatpush1.msra.mxu0 0.0
    %2528 = vmatprep.subr.mxu0 0.0
    %2529 = vmatpush1.msra.mxu0 0.0
    %2530 = vmatprep.subr.mxu0 0.0
    %2531 = vmatpush1.msra.mxu0 0.0
    %2532 = vmatprep.subr.mxu0 0.0
    %2533 = vmatpush1.msra.mxu0 0.0
    %2534 = vmatprep.subr.mxu0 0.0
    %2535 = vmatpush1.msra.mxu0 0.0
    %2536 = vmatprep.subr.mxu0 0.0
    %2537 = vmatpush1.msra.mxu0 0.0
    %2538 = vmatprep.subr.mxu0 0.0
    %2539 = vmatpush1.msra.mxu0 0.0
    %2540 = vmatprep.subr.mxu0 0.0
    %2541 = vmatpush1.msra.mxu0 0.0
    %2542 = vmatprep.subr.mxu0 0.0
    %2543 = vmatpush1.msra.mxu0 0.0
    %2544 = vmatprep.subr.mxu0 0.0
    %2545 = vmatpush1.msra.mxu0 0.0
    %2546 = vmatprep.subr.mxu0 0.0
    %2547 = vmatpush1.msra.mxu0 0.0
    %2548 = vmatprep.mubr.f32.mxu0 0.0
    %2549 = vmatmul.mubr.f32.gmra.mrb[0].mxu0 %v2482
    %v2550 = vpop.f32.mrb[0].mxu0
    %v2551 = vadd.f32 %v499, %v2550
    %v2552 = vpop.f32.mrb[0].mxu0
    %2553 = vdwg.mxu0
    %v2554 = vxor.u32 %v2551, 2147483648
    %v2555 = vmul.f32 %v2554, 1.442695
    %v2556 = vpow.pop %v2555
    %v2557 = vadd.f32 %v2556, 1.0
    %v2558 = vrcp.pop %v2557
    %v2559 = vmul.f32 1.0, %v2558
    %v2560 = vtanh.pop %v2551
    %v2561 = vmul.f32 %v2559, %v1917
    %2563 = vrot.lane.b32.xlu0 %v2560, 64
    %v2564 = vpop.permute.xlu0 %2563
    %v2566 = vmul.f32 %v2559, %v2564
    %2568 = vrot.lane.b32.xlu0 %v2566, 32
    %v2569 = vpop.permute.xlu0 %2568
    %v2571 = vadd.f32 %v2561, %v2569
    %v2572 = vtanh.pop %v2571
    %2574 = vrot.lane.b32.xlu0 %v2572, 64
    %v2575 = vpop.permute.xlu0 %2574
    %v2577 = vmul.f32 %v2559, %v2575
    %2578 = vrot.lane.b32.xlu0 %v1709, 38
    %v2579 = vpop.permute.xlu0 %2578
    %2581 = vrot.lane.b32.xlu0 %v1923, 70
    %v2582 = vpop.permute.xlu0 %2581
    %2584 = vrot.lane.b32.xlu0 %v2032, 102
    %v2585 = vpop.permute.xlu0 %2584
    %v2587 = vsel %vm597, %v2146, %v2579
    %v2588 = vsel %vm599, %v2587, %v2582
    %v2589 = vsel %vm601, %v2588, %v2585
    %v2591 = vsel %vm617, %v2589, 0
    %2593 = vmatprep.subr.mxu0 0.0
    %2594 = vmatpush1.msra.mxu0 %v603
    %2595 = vmatprep.subr.mxu0 0.0
    %2596 = vmatpush1.msra.mxu0 %v604
    %2597 = vmatprep.subr.mxu0 0.0
    %2598 = vmatpush1.msra.mxu0 %v605
    %2599 = vmatprep.subr.mxu0 0.0
    %2600 = vmatpush1.msra.mxu0 %v606
    %2601 = vmatprep.subr.mxu0 0.0
    %2602 = vmatpush1.msra.mxu0 %v607
    %2603 = vmatprep.subr.mxu0 0.0
    %2604 = vmatpush1.msra.mxu0 %v608
    %2605 = vmatprep.subr.mxu0 0.0
    %2606 = vmatpush1.msra.mxu0 %v609
    %2607 = vmatprep.subr.mxu0 0.0
    %2608 = vmatpush1.msra.mxu0 %v610
    %2609 = vmatprep.subr.mxu0 0.0
    %2610 = vmatpush1.msra.mxu0 %v611
    %2611 = vmatprep.subr.mxu0 0.0
    %2612 = vmatpush1.msra.mxu0 %v612
    %2613 = vmatprep.subr.mxu0 0.0
    %2614 = vmatpush1.msra.mxu0 %v613
    %2615 = vmatprep.subr.mxu0 0.0
    %2616 = vmatpush1.msra.mxu0 %v614
    %2617 = vmatprep.subr.mxu0 0.0
    %2618 = vmatpush1.msra.mxu0 %v623
    %2619 = vmatprep.subr.mxu0 0.0
    %2620 = vmatpush1.msra.mxu0 0.0
    %2621 = vmatprep.subr.mxu0 0.0
    %2622 = vmatpush1.msra.mxu0 0.0
    %2623 = vmatprep.subr.mxu0 0.0
    %2624 = vmatpush1.msra.mxu0 0.0
    %2625 = vmatprep.subr.mxu0 0.0
    %2626 = vmatpush1.msra.mxu0 0.0
    %2627 = vmatprep.subr.mxu0 0.0
    %2628 = vmatpush1.msra.mxu0 0.0
    %2629 = vmatprep.subr.mxu0 0.0
    %2630 = vmatpush1.msra.mxu0 0.0
    %2631 = vmatprep.subr.mxu0 0.0
    %2632 = vmatpush1.msra.mxu0 0.0
    %2633 = vmatprep.subr.mxu0 0.0
    %2634 = vmatpush1.msra.mxu0 0.0
    %2635 = vmatprep.subr.mxu0 0.0
    %2636 = vmatpush1.msra.mxu0 0.0
    %2637 = vmatprep.subr.mxu0 0.0
    %2638 = vmatpush1.msra.mxu0 0.0
    %2639 = vmatprep.subr.mxu0 0.0
    %2640 = vmatpush1.msra.mxu0 0.0
    %2641 = vmatprep.subr.mxu0 0.0
    %2642 = vmatpush1.msra.mxu0 0.0
    %2643 = vmatprep.subr.mxu0 0.0
    %2644 = vmatpush1.msra.mxu0 0.0
    %2645 = vmatprep.subr.mxu0 0.0
    %2646 = vmatpush1.msra.mxu0 0.0
    %2647 = vmatprep.subr.mxu0 0.0
    %2648 = vmatpush1.msra.mxu0 0.0
    %2649 = vmatprep.subr.mxu0 0.0
    %2650 = vmatpush1.msra.mxu0 0.0
    %2651 = vmatprep.subr.mxu0 0.0
    %2652 = vmatpush1.msra.mxu0 0.0
    %2653 = vmatprep.subr.mxu0 0.0
    %2654 = vmatpush1.msra.mxu0 0.0
    %2655 = vmatprep.subr.mxu0 0.0
    %2656 = vmatpush1.msra.mxu0 0.0
    %2657 = vmatprep.mubr.f32.mxu0 0.0
    %2658 = vmatmul.mubr.f32.gmra.mrb[0].mxu0 %v2591
    %v2659 = vpop.f32.mrb[0].mxu0
    %v2660 = vadd.f32 %v616, %v2659
    %v2661 = vpop.f32.mrb[0].mxu0
    %2662 = vdwg.mxu0
    %v2663 = vxor.u32 %v2660, 2147483648
    %v2664 = vmul.f32 %v2663, 1.442695
    %v2665 = vpow.pop %v2664
    %v2666 = vadd.f32 %v2665, 1.0
    %v2667 = vrcp.pop %v2666
    %v2668 = vmul.f32 1.0, %v2667
    %v2669 = vtanh.pop %v2660
    %v2670 = vmul.f32 %v2668, %v2026
    %2672 = vrot.lane.b32.xlu0 %v2669, 64
    %v2673 = vpop.permute.xlu0 %2672
    %v2675 = vmul.f32 %v2668, %v2673
    %2677 = vrot.lane.b32.xlu0 %v2675, 32
    %v2678 = vpop.permute.xlu0 %2677
    %v2680 = vadd.f32 %v2670, %v2678
    %v2681 = vtanh.pop %v2680
    %2683 = vrot.lane.b32.xlu0 %v2681, 64
    %v2684 = vpop.permute.xlu0 %2683
    %v2686 = vmul.f32 %v2668, %v2684
    %2688 = vrot.lane.b32.xlu0 %v2686, 32
    %v2689 = vpop.permute.xlu0 %2688
    %2691 = vrot.lane.b32.xlu0 %v2137, 64
    %v2692 = vpop.permute.xlu0 %2691
    %v2694 = vsel %vm254, %v2689, %v2692
    %v2696 = vsel %vm265, %v2694, 0
    %2698 = vmatprep.subr.mxu0 0.0
    %2699 = vmatpush1.msra.mxu0 %v724
    %2700 = vmatprep.subr.mxu0 0.0
    %2701 = vmatpush1.msra.mxu0 %v725
    %2702 = vmatprep.subr.mxu0 0.0
    %2703 = vmatpush1.msra.mxu0 %v726
    %2704 = vmatprep.subr.mxu0 0.0
    %2705 = vmatpush1.msra.mxu0 %v727
    %2706 = vmatprep.subr.mxu0 0.0
    %2707 = vmatpush1.msra.mxu0 %v728
    %2708 = vmatprep.subr.mxu0 0.0
    %2709 = vmatpush1.msra.mxu0 %v729
    %2710 = vmatprep.subr.mxu0 0.0
    %2711 = vmatpush1.msra.mxu0 %v730
    %2712 = vmatprep.subr.mxu0 0.0
    %2713 = vmatpush1.msra.mxu0 %v731
    %2714 = vmatprep.subr.mxu0 0.0
    %2715 = vmatpush1.msra.mxu0 0.0
    %2716 = vmatprep.subr.mxu0 0.0
    %2717 = vmatpush1.msra.mxu0 0.0
    %2718 = vmatprep.subr.mxu0 0.0
    %2719 = vmatpush1.msra.mxu0 0.0
    %2720 = vmatprep.subr.mxu0 0.0
    %2721 = vmatpush1.msra.mxu0 0.0
    %2722 = vmatprep.subr.mxu0 0.0
    %2723 = vmatpush1.msra.mxu0 0.0
    %2724 = vmatprep.subr.mxu0 0.0
    %2725 = vmatpush1.msra.mxu0 0.0
    %2726 = vmatprep.subr.mxu0 0.0
    %2727 = vmatpush1.msra.mxu0 0.0
    %2728 = vmatprep.subr.mxu0 0.0
    %2729 = vmatpush1.msra.mxu0 0.0
    %2730 = vmatprep.subr.mxu0 0.0
    %2731 = vmatpush1.msra.mxu0 0.0
    %2732 = vmatprep.subr.mxu0 0.0
    %2733 = vmatpush1.msra.mxu0 0.0
    %2734 = vmatprep.subr.mxu0 0.0
    %2735 = vmatpush1.msra.mxu0 0.0
    %2736 = vmatprep.subr.mxu0 0.0
    %2737 = vmatpush1.msra.mxu0 0.0
    %2738 = vmatprep.subr.mxu0 0.0
    %2739 = vmatpush1.msra.mxu0 0.0
    %2740 = vmatprep.subr.mxu0 0.0
    %2741 = vmatpush1.msra.mxu0 0.0
    %2742 = vmatprep.subr.mxu0 0.0
    %2743 = vmatpush1.msra.mxu0 0.0
    %2744 = vmatprep.subr.mxu0 0.0
    %2745 = vmatpush1.msra.mxu0 0.0
    %2746 = vmatprep.subr.mxu0 0.0
    %2747 = vmatpush1.msra.mxu0 0.0
    %2748 = vmatprep.subr.mxu0 0.0
    %2749 = vmatpush1.msra.mxu0 0.0
    %2750 = vmatprep.subr.mxu0 0.0
    %2751 = vmatpush1.msra.mxu0 0.0
    %2752 = vmatprep.subr.mxu0 0.0
    %2753 = vmatpush1.msra.mxu0 0.0
    %2754 = vmatprep.subr.mxu0 0.0
    %2755 = vmatpush1.msra.mxu0 0.0
    %2756 = vmatprep.subr.mxu0 0.0
    %2757 = vmatpush1.msra.mxu0 0.0
    %2758 = vmatprep.subr.mxu0 0.0
    %2759 = vmatpush1.msra.mxu0 0.0
    %2760 = vmatprep.subr.mxu0 0.0
    %2761 = vmatpush1.msra.mxu0 0.0
    %2762 = vmatprep.mubr.f32.mxu0 0.0
    %2763 = vmatmul.mubr.f32.gmra.mrb[0].mxu0 %v2696
    %v2764 = vpop.f32.mrb[0].mxu0
    %v2765 = vadd.f32 %v732, %v2764
    %v2766 = vpop.f32.mrb[0].mxu0
    %2767 = vdwg.mxu0
    %v2768 = vxor.u32 %v2765, 2147483648
    %v2769 = vmul.f32 %v2768, 1.442695
    %v2770 = vpow.pop %v2769
    %v2771 = vadd.f32 %v2770, 1.0
    %v2772 = vrcp.pop %v2771
    %v2773 = vmul.f32 1.0, %v2772
    %v2774 = vtanh.pop %v2765
    %v2775 = vmul.f32 %v2773, %v2131
    %2777 = vrot.lane.b32.xlu0 %v2774, 64
    %v2778 = vpop.permute.xlu0 %2777
    %v2780 = vmul.f32 %v2773, %v2778
    %2782 = vrot.lane.b32.xlu0 %v2780, 32
    %v2783 = vpop.permute.xlu0 %2782
    %v2785 = vadd.f32 %v2775, %v2783
    %v2786 = vtanh.pop %v2785
    %2788 = vrot.lane.b32.xlu0 %v2786, 64
    %v2789 = vpop.permute.xlu0 %2788
    %v2791 = vmul.f32 %v2773, %v2789
    %v2792 = vadd.f32 %v2138, %v2363
    %v2793 = vadd.f32 %v2139, %v2577
    %v2794 = vadd.f32 %v2140, %v2791
    %s2795 = scalar_lea.vmem %s0, 8
    %v2796 = vld [vmem:[%s2795] sm:$0x3]
    %s2797 = scalar_lea.vmem %s1, 8
    %v2798 = vld [vmem:[%s2797] sm:$0x3]
    %s2799 = scalar_lea.vmem %s2, 8
    %v2800 = vld [vmem:[%s2799] sm:$0x3]
    %2802 = vrot.lane.b32.xlu0 %v2577, 42
    %v2803 = vpop.permute.xlu0 %2802
    %2806 = vrot.lane.b32.xlu0 %v2791, 74
    %v2807 = vpop.permute.xlu0 %2806
    %2809 = vrot.lane.b32.xlu0 %v2257, 106
    %v2810 = vpop.permute.xlu0 %2809
    %v2812 = vsel %vm127, %v2796, %v2803
    %v2813 = vsel %vm129, %v2812, %v2807
    %v2814 = vsel %vm131, %v2813, %v2810
    %v2816 = vsel %vm148, %v2814, 0
    %2818 = vmatprep.subr.mxu0 0.0
    %2819 = vmatpush1.msra.mxu0 %v133
    %2820 = vmatprep.subr.mxu0 0.0
    %2821 = vmatpush1.msra.mxu0 %v134
    %2822 = vmatprep.subr.mxu0 0.0
    %2823 = vmatpush1.msra.mxu0 %v135
    %2824 = vmatprep.subr.mxu0 0.0
    %2825 = vmatpush1.msra.mxu0 %v136
    %2826 = vmatprep.subr.mxu0 0.0
    %2827 = vmatpush1.msra.mxu0 %v137
    %2828 = vmatprep.subr.mxu0 0.0
    %2829 = vmatpush1.msra.mxu0 %v138
    %2830 = vmatprep.subr.mxu0 0.0
    %2831 = vmatpush1.msra.mxu0 %v139
    %2832 = vmatprep.subr.mxu0 0.0
    %2833 = vmatpush1.msra.mxu0 %v140
    %2834 = vmatprep.subr.mxu0 0.0
    %2835 = vmatpush1.msra.mxu0 %v141
    %2836 = vmatprep.subr.mxu0 0.0
    %2837 = vmatpush1.msra.mxu0 %v142
    %2838 = vmatprep.subr.mxu0 0.0
    %2839 = vmatpush1.msra.mxu0 %v143
    %2840 = vmatprep.subr.mxu0 0.0
    %2841 = vmatpush1.msra.mxu0 %v144
    %2842 = vmatprep.subr.mxu0 0.0
    %2843 = vmatpush1.msra.mxu0 %v145
    %2844 = vmatprep.subr.mxu0 0.0
    %2845 = vmatpush1.msra.mxu0 %v154
    %2846 = vmatprep.subr.mxu0 0.0
    %2847 = vmatpush1.msra.mxu0 0.0
    %2848 = vmatprep.subr.mxu0 0.0
    %2849 = vmatpush1.msra.mxu0 0.0
    %2850 = vmatprep.subr.mxu0 0.0
    %2851 = vmatpush1.msra.mxu0 0.0
    %2852 = vmatprep.subr.mxu0 0.0
    %2853 = vmatpush1.msra.mxu0 0.0
    %2854 = vmatprep.subr.mxu0 0.0
    %2855 = vmatpush1.msra.mxu0 0.0
    %2856 = vmatprep.subr.mxu0 0.0
    %2857 = vmatpush1.msra.mxu0 0.0
    %2858 = vmatprep.subr.mxu0 0.0
    %2859 = vmatpush1.msra.mxu0 0.0
    %2860 = vmatprep.subr.mxu0 0.0
    %2861 = vmatpush1.msra.mxu0 0.0
    %2862 = vmatprep.subr.mxu0 0.0
    %2863 = vmatpush1.msra.mxu0 0.0
    %2864 = vmatprep.subr.mxu0 0.0
    %2865 = vmatpush1.msra.mxu0 0.0
    %2866 = vmatprep.subr.mxu0 0.0
    %2867 = vmatpush1.msra.mxu0 0.0
    %2868 = vmatprep.subr.mxu0 0.0
    %2869 = vmatpush1.msra.mxu0 0.0
    %2870 = vmatprep.subr.mxu0 0.0
    %2871 = vmatpush1.msra.mxu0 0.0
    %2872 = vmatprep.subr.mxu0 0.0
    %2873 = vmatpush1.msra.mxu0 0.0
    %2874 = vmatprep.subr.mxu0 0.0
    %2875 = vmatpush1.msra.mxu0 0.0
    %2876 = vmatprep.subr.mxu0 0.0
    %2877 = vmatpush1.msra.mxu0 0.0
    %2878 = vmatprep.subr.mxu0 0.0
    %2879 = vmatpush1.msra.mxu0 0.0
    %2880 = vmatprep.subr.mxu0 0.0
    %2881 = vmatpush1.msra.mxu0 0.0
    %2882 = vmatprep.mubr.f32.mxu0 0.0
    %2883 = vmatmul.mubr.f32.gmra.mrb[0].mxu0 %v2816
    %v2884 = vpop.f32.mrb[0].mxu0
    %v2885 = vadd.f32 %v147, %v2884
    %v2886 = vpop.f32.mrb[0].mxu0
    %2887 = vdwg.mxu0
    %v2888 = vxor.u32 %v2885, 2147483648
    %v2889 = vmul.f32 %v2888, 1.442695
    %v2890 = vpow.pop %v2889
    %v2891 = vadd.f32 %v2890, 1.0
    %v2892 = vrcp.pop %v2891
    %v2893 = vmul.f32 1.0, %v2892
    %v2894 = vtanh.pop %v2885
    %v2895 = vmul.f32 %v2893, %v2251
    %2897 = vrot.lane.b32.xlu0 %v2894, 64
    %v2898 = vpop.permute.xlu0 %2897
    %v2900 = vmul.f32 %v2893, %v2898
    %2902 = vrot.lane.b32.xlu0 %v2900, 32
    %v2903 = vpop.permute.xlu0 %2902
    %v2905 = vadd.f32 %v2895, %v2903
    %v2906 = vtanh.pop %v2905
    %2908 = vrot.lane.b32.xlu0 %v2906, 64
    %v2909 = vpop.permute.xlu0 %2908
    %v2911 = vmul.f32 %v2893, %v2909
    %2913 = vrot.lane.b32.xlu0 %v2911, 32
    %v2914 = vpop.permute.xlu0 %2913
    %2917 = vrot.lane.b32.xlu0 %v2363, 64
    %v2918 = vpop.permute.xlu0 %2917
    %v2920 = vsel %vm254, %v2914, %v2918
    %v2922 = vsel %vm265, %v2920, 0
    %2924 = vmatprep.subr.mxu0 0.0
    %2925 = vmatpush1.msra.mxu0 %v256
    %2926 = vmatprep.subr.mxu0 0.0
    %2927 = vmatpush1.msra.mxu0 %v257
    %2928 = vmatprep.subr.mxu0 0.0
    %2929 = vmatpush1.msra.mxu0 %v258
    %2930 = vmatprep.subr.mxu0 0.0
    %2931 = vmatpush1.msra.mxu0 %v259
    %2932 = vmatprep.subr.mxu0 0.0
    %2933 = vmatpush1.msra.mxu0 %v260
    %2934 = vmatprep.subr.mxu0 0.0
    %2935 = vmatpush1.msra.mxu0 %v261
    %2936 = vmatprep.subr.mxu0 0.0
    %2937 = vmatpush1.msra.mxu0 %v262
    %2938 = vmatprep.subr.mxu0 0.0
    %2939 = vmatpush1.msra.mxu0 %v263
    %2940 = vmatprep.subr.mxu0 0.0
    %2941 = vmatpush1.msra.mxu0 0.0
    %2942 = vmatprep.subr.mxu0 0.0
    %2943 = vmatpush1.msra.mxu0 0.0
    %2944 = vmatprep.subr.mxu0 0.0
    %2945 = vmatpush1.msra.mxu0 0.0
    %2946 = vmatprep.subr.mxu0 0.0
    %2947 = vmatpush1.msra.mxu0 0.0
    %2948 = vmatprep.subr.mxu0 0.0
    %2949 = vmatpush1.msra.mxu0 0.0
    %2950 = vmatprep.subr.mxu0 0.0
    %2951 = vmatpush1.msra.mxu0 0.0
    %2952 = vmatprep.subr.mxu0 0.0
    %2953 = vmatpush1.msra.mxu0 0.0
    %2954 = vmatprep.subr.mxu0 0.0
    %2955 = vmatpush1.msra.mxu0 0.0
    %2956 = vmatprep.subr.mxu0 0.0
    %2957 = vmatpush1.msra.mxu0 0.0
    %2958 = vmatprep.subr.mxu0 0.0
    %2959 = vmatpush1.msra.mxu0 0.0
    %2960 = vmatprep.subr.mxu0 0.0
    %2961 = vmatpush1.msra.mxu0 0.0
    %2962 = vmatprep.subr.mxu0 0.0
    %2963 = vmatpush1.msra.mxu0 0.0
    %2964 = vmatprep.subr.mxu0 0.0
    %2965 = vmatpush1.msra.mxu0 0.0
    %2966 = vmatprep.subr.mxu0 0.0
    %2967 = vmatpush1.msra.mxu0 0.0
    %2968 = vmatprep.subr.mxu0 0.0
    %2969 = vmatpush1.msra.mxu0 0.0
    %2970 = vmatprep.subr.mxu0 0.0
    %2971 = vmatpush1.msra.mxu0 0.0
    %2972 = vmatprep.subr.mxu0 0.0
    %2973 = vmatpush1.msra.mxu0 0.0
    %2974 = vmatprep.subr.mxu0 0.0
    %2975 = vmatpush1.msra.mxu0 0.0
    %2976 = vmatprep.subr.mxu0 0.0
    %2977 = vmatpush1.msra.mxu0 0.0
    %2978 = vmatprep.subr.mxu0 0.0
    %2979 = vmatpush1.msra.mxu0 0.0
    %2980 = vmatprep.subr.mxu0 0.0
    %2981 = vmatpush1.msra.mxu0 0.0
    %2982 = vmatprep.subr.mxu0 0.0
    %2983 = vmatpush1.msra.mxu0 0.0
    %2984 = vmatprep.subr.mxu0 0.0
    %2985 = vmatpush1.msra.mxu0 0.0
    %2986 = vmatprep.subr.mxu0 0.0
    %2987 = vmatpush1.msra.mxu0 0.0
    %2988 = vmatprep.mubr.f32.mxu0 0.0
    %2989 = vmatmul.mubr.f32.gmra.mrb[0].mxu0 %v2922
    %v2990 = vpop.f32.mrb[0].mxu0
    %v2991 = vadd.f32 %v264, %v2990
    %v2992 = vpop.f32.mrb[0].mxu0
    %2993 = vdwg.mxu0
    %v2994 = vxor.u32 %v2991, 2147483648
    %v2995 = vmul.f32 %v2994, 1.442695
    %v2996 = vpow.pop %v2995
    %v2997 = vadd.f32 %v2996, 1.0
    %v2998 = vrcp.pop %v2997
    %v2999 = vmul.f32 1.0, %v2998
    %v3000 = vtanh.pop %v2991
    %v3001 = vmul.f32 %v2999, %v2357
    %3003 = vrot.lane.b32.xlu0 %v3000, 64
    %v3004 = vpop.permute.xlu0 %3003
    %v3006 = vmul.f32 %v2999, %v3004
    %3008 = vrot.lane.b32.xlu0 %v3006, 32
    %v3009 = vpop.permute.xlu0 %3008
    %v3011 = vadd.f32 %v3001, %v3009
    %v3012 = vtanh.pop %v3011
    %3014 = vrot.lane.b32.xlu0 %v3012, 64
    %v3015 = vpop.permute.xlu0 %3014
    %v3017 = vmul.f32 %v2999, %v3015
    %3018 = vrot.lane.b32.xlu0 %v2363, 44
    %v3019 = vpop.permute.xlu0 %3018
    %3021 = vrot.lane.b32.xlu0 %v2791, 76
    %v3022 = vpop.permute.xlu0 %3021
    %3024 = vrot.lane.b32.xlu0 %v2472, 108
    %v3025 = vpop.permute.xlu0 %3024
    %v3027 = vsel %vm363, %v2798, %v3019
    %v3028 = vsel %vm365, %v3027, %v3022
    %v3029 = vsel %vm367, %v3028, %v3025
    %v3031 = vsel %vm384, %v3029, 0
    %3033 = vmatprep.subr.mxu0 0.0
    %3034 = vmatpush1.msra.mxu0 %v369
    %3035 = vmatprep.subr.mxu0 0.0
    %3036 = vmatpush1.msra.mxu0 %v370
    %3037 = vmatprep.subr.mxu0 0.0
    %3038 = vmatpush1.msra.mxu0 %v371
    %3039 = vmatprep.subr.mxu0 0.0
    %3040 = vmatpush1.msra.mxu0 %v372
    %3041 = vmatprep.subr.mxu0 0.0
    %3042 = vmatpush1.msra.mxu0 %v373
    %3043 = vmatprep.subr.mxu0 0.0
    %3044 = vmatpush1.msra.mxu0 %v374
    %3045 = vmatprep.subr.mxu0 0.0
    %3046 = vmatpush1.msra.mxu0 %v375
    %3047 = vmatprep.subr.mxu0 0.0
    %3048 = vmatpush1.msra.mxu0 %v376
    %3049 = vmatprep.subr.mxu0 0.0
    %3050 = vmatpush1.msra.mxu0 %v377
    %3051 = vmatprep.subr.mxu0 0.0
    %3052 = vmatpush1.msra.mxu0 %v378
    %3053 = vmatprep.subr.mxu0 0.0
    %3054 = vmatpush1.msra.mxu0 %v379
    %3055 = vmatprep.subr.mxu0 0.0
    %3056 = vmatpush1.msra.mxu0 %v380
    %3057 = vmatprep.subr.mxu0 0.0
    %3058 = vmatpush1.msra.mxu0 %v381
    %3059 = vmatprep.subr.mxu0 0.0
    %3060 = vmatpush1.msra.mxu0 %v390
    %3061 = vmatprep.subr.mxu0 0.0
    %3062 = vmatpush1.msra.mxu0 0.0
    %3063 = vmatprep.subr.mxu0 0.0
    %3064 = vmatpush1.msra.mxu0 0.0
    %3065 = vmatprep.subr.mxu0 0.0
    %3066 = vmatpush1.msra.mxu0 0.0
    %3067 = vmatprep.subr.mxu0 0.0
    %3068 = vmatpush1.msra.mxu0 0.0
    %3069 = vmatprep.subr.mxu0 0.0
    %3070 = vmatpush1.msra.mxu0 0.0
    %3071 = vmatprep.subr.mxu0 0.0
    %3072 = vmatpush1.msra.mxu0 0.0
    %3073 = vmatprep.subr.mxu0 0.0
    %3074 = vmatpush1.msra.mxu0 0.0
    %3075 = vmatprep.subr.mxu0 0.0
    %3076 = vmatpush1.msra.mxu0 0.0
    %3077 = vmatprep.subr.mxu0 0.0
    %3078 = vmatpush1.msra.mxu0 0.0
    %3079 = vmatprep.subr.mxu0 0.0
    %3080 = vmatpush1.msra.mxu0 0.0
    %3081 = vmatprep.subr.mxu0 0.0
    %3082 = vmatpush1.msra.mxu0 0.0
    %3083 = vmatprep.subr.mxu0 0.0
    %3084 = vmatpush1.msra.mxu0 0.0
    %3085 = vmatprep.subr.mxu0 0.0
    %3086 = vmatpush1.msra.mxu0 0.0
    %3087 = vmatprep.subr.mxu0 0.0
    %3088 = vmatpush1.msra.mxu0 0.0
    %3089 = vmatprep.subr.mxu0 0.0
    %3090 = vmatpush1.msra.mxu0 0.0
    %3091 = vmatprep.subr.mxu0 0.0
    %3092 = vmatpush1.msra.mxu0 0.0
    %3093 = vmatprep.subr.mxu0 0.0
    %3094 = vmatpush1.msra.mxu0 0.0
    %3095 = vmatprep.subr.mxu0 0.0
    %3096 = vmatpush1.msra.mxu0 0.0
    %3097 = vmatprep.mubr.f32.mxu0 0.0
    %3098 = vmatmul.mubr.f32.gmra.mrb[0].mxu0 %v3031
    %v3099 = vpop.f32.mrb[0].mxu0
    %v3100 = vadd.f32 %v383, %v3099
    %v3101 = vpop.f32.mrb[0].mxu0
    %3102 = vdwg.mxu0
    %v3103 = vxor.u32 %v3100, 2147483648
    %v3104 = vmul.f32 %v3103, 1.442695
    %v3105 = vpow.pop %v3104
    %v3106 = vadd.f32 %v3105, 1.0
    %v3107 = vrcp.pop %v3106
    %v3108 = vmul.f32 1.0, %v3107
    %v3109 = vtanh.pop %v3100
    %v3110 = vmul.f32 %v3108, %v2466
    %3112 = vrot.lane.b32.xlu0 %v3109, 64
    %v3113 = vpop.permute.xlu0 %3112
    %v3115 = vmul.f32 %v3108, %v3113
    %3117 = vrot.lane.b32.xlu0 %v3115, 32
    %v3118 = vpop.permute.xlu0 %3117
    %v3120 = vadd.f32 %v3110, %v3118
    %v3121 = vtanh.pop %v3120
    %3123 = vrot.lane.b32.xlu0 %v3121, 64
    %v3124 = vpop.permute.xlu0 %3123
    %v3126 = vmul.f32 %v3108, %v3124
    %3128 = vrot.lane.b32.xlu0 %v3126, 32
    %v3129 = vpop.permute.xlu0 %3128
    %3131 = vrot.lane.b32.xlu0 %v2577, 64
    %v3132 = vpop.permute.xlu0 %3131
    %v3134 = vsel %vm254, %v3129, %v3132
    %v3136 = vsel %vm265, %v3134, 0
    %3138 = vmatprep.subr.mxu0 0.0
    %3139 = vmatpush1.msra.mxu0 %v491
    %3140 = vmatprep.subr.mxu0 0.0
    %3141 = vmatpush1.msra.mxu0 %v492
    %3142 = vmatprep.subr.mxu0 0.0
    %3143 = vmatpush1.msra.mxu0 %v493
    %3144 = vmatprep.subr.mxu0 0.0
    %3145 = vmatpush1.msra.mxu0 %v494
    %3146 = vmatprep.subr.mxu0 0.0
    %3147 = vmatpush1.msra.mxu0 %v495
    %3148 = vmatprep.subr.mxu0 0.0
    %3149 = vmatpush1.msra.mxu0 %v496
    %3150 = vmatprep.subr.mxu0 0.0
    %3151 = vmatpush1.msra.mxu0 %v497
    %3152 = vmatprep.subr.mxu0 0.0
    %3153 = vmatpush1.msra.mxu0 %v498
    %3154 = vmatprep.subr.mxu0 0.0
    %3155 = vmatpush1.msra.mxu0 0.0
    %3156 = vmatprep.subr.mxu0 0.0
    %3157 = vmatpush1.msra.mxu0 0.0
    %3158 = vmatprep.subr.mxu0 0.0
    %3159 = vmatpush1.msra.mxu0 0.0
    %3160 = vmatprep.subr.mxu0 0.0
    %3161 = vmatpush1.msra.mxu0 0.0
    %3162 = vmatprep.subr.mxu0 0.0
    %3163 = vmatpush1.msra.mxu0 0.0
    %3164 = vmatprep.subr.mxu0 0.0
    %3165 = vmatpush1.msra.mxu0 0.0
    %3166 = vmatprep.subr.mxu0 0.0
    %3167 = vmatpush1.msra.mxu0 0.0
    %3168 = vmatprep.subr.mxu0 0.0
    %3169 = vmatpush1.msra.mxu0 0.0
    %3170 = vmatprep.subr.mxu0 0.0
    %3171 = vmatpush1.msra.mxu0 0.0
    %3172 = vmatprep.subr.mxu0 0.0
    %3173 = vmatpush1.msra.mxu0 0.0
    %3174 = vmatprep.subr.mxu0 0.0
    %3175 = vmatpush1.msra.mxu0 0.0
    %3176 = vmatprep.subr.mxu0 0.0
    %3177 = vmatpush1.msra.mxu0 0.0
    %3178 = vmatprep.subr.mxu0 0.0
    %3179 = vmatpush1.msra.mxu0 0.0
    %3180 = vmatprep.subr.mxu0 0.0
    %3181 = vmatpush1.msra.mxu0 0.0
    %3182 = vmatprep.subr.mxu0 0.0
    %3183 = vmatpush1.msra.mxu0 0.0
    %3184 = vmatprep.subr.mxu0 0.0
    %3185 = vmatpush1.msra.mxu0 0.0
    %3186 = vmatprep.subr.mxu0 0.0
    %3187 = vmatpush1.msra.mxu0 0.0
    %3188 = vmatprep.subr.mxu0 0.0
    %3189 = vmatpush1.msra.mxu0 0.0
    %3190 = vmatprep.subr.mxu0 0.0
    %3191 = vmatpush1.msra.mxu0 0.0
    %3192 = vmatprep.subr.mxu0 0.0
    %3193 = vmatpush1.msra.mxu0 0.0
    %3194 = vmatprep.subr.mxu0 0.0
    %3195 = vmatpush1.msra.mxu0 0.0
    %3196 = vmatprep.subr.mxu0 0.0
    %3197 = vmatpush1.msra.mxu0 0.0
    %3198 = vmatprep.subr.mxu0 0.0
    %3199 = vmatpush1.msra.mxu0 0.0
    %3200 = vmatprep.subr.mxu0 0.0
    %3201 = vmatpush1.msra.mxu0 0.0
    %3202 = vmatprep.mubr.f32.mxu0 0.0
    %3203 = vmatmul.mubr.f32.gmra.mrb[0].mxu0 %v3136
    %v3204 = vpop.f32.mrb[0].mxu0
    %v3205 = vadd.f32 %v499, %v3204
    %v3206 = vpop.f32.mrb[0].mxu0
    %3207 = vdwg.mxu0
    %v3208 = vxor.u32 %v3205, 2147483648
    %v3209 = vmul.f32 %v3208, 1.442695
    %v3210 = vpow.pop %v3209
    %v3211 = vadd.f32 %v3210, 1.0
    %v3212 = vrcp.pop %v3211
    %v3213 = vmul.f32 1.0, %v3212
    %v3214 = vtanh.pop %v3205
    %v3215 = vmul.f32 %v3213, %v2571
    %3217 = vrot.lane.b32.xlu0 %v3214, 64
    %v3218 = vpop.permute.xlu0 %3217
    %v3220 = vmul.f32 %v3213, %v3218
    %3222 = vrot.lane.b32.xlu0 %v3220, 32
    %v3223 = vpop.permute.xlu0 %3222
    %v3225 = vadd.f32 %v3215, %v3223
    %v3226 = vtanh.pop %v3225
    %3228 = vrot.lane.b32.xlu0 %v3226, 64
    %v3229 = vpop.permute.xlu0 %3228
    %v3231 = vmul.f32 %v3213, %v3229
    %3232 = vrot.lane.b32.xlu0 %v2363, 38
    %v3233 = vpop.permute.xlu0 %3232
    %3235 = vrot.lane.b32.xlu0 %v2577, 70
    %v3236 = vpop.permute.xlu0 %3235
    %3238 = vrot.lane.b32.xlu0 %v2686, 102
    %v3239 = vpop.permute.xlu0 %3238
    %v3241 = vsel %vm597, %v2800, %v3233
    %v3242 = vsel %vm599, %v3241, %v3236
    %v3243 = vsel %vm601, %v3242, %v3239
    %v3245 = vsel %vm617, %v3243, 0
    %3247 = vmatprep.subr.mxu0 0.0
    %3248 = vmatpush1.msra.mxu0 %v603
    %3249 = vmatprep.subr.mxu0 0.0
    %3250 = vmatpush1.msra.mxu0 %v604
    %3251 = vmatprep.subr.mxu0 0.0
    %3252 = vmatpush1.msra.mxu0 %v605
    %3253 = vmatprep.subr.mxu0 0.0
    %3254 = vmatpush1.msra.mxu0 %v606
    %3255 = vmatprep.subr.mxu0 0.0
    %3256 = vmatpush1.msra.mxu0 %v607
    %3257 = vmatprep.subr.mxu0 0.0
    %3258 = vmatpush1.msra.mxu0 %v608
    %3259 = vmatprep.subr.mxu0 0.0
    %3260 = vmatpush1.msra.mxu0 %v609
    %3261 = vmatprep.subr.mxu0 0.0
    %3262 = vmatpush1.msra.mxu0 %v610
    %3263 = vmatprep.subr.mxu0 0.0
    %3264 = vmatpush1.msra.mxu0 %v611
    %3265 = vmatprep.subr.mxu0 0.0
    %3266 = vmatpush1.msra.mxu0 %v612
    %3267 = vmatprep.subr.mxu0 0.0
    %3268 = vmatpush1.msra.mxu0 %v613
    %3269 = vmatprep.subr.mxu0 0.0
    %3270 = vmatpush1.msra.mxu0 %v614
    %3271 = vmatprep.subr.mxu0 0.0
    %3272 = vmatpush1.msra.mxu0 %v623
    %3273 = vmatprep.subr.mxu0 0.0
    %3274 = vmatpush1.msra.mxu0 0.0
    %3275 = vmatprep.subr.mxu0 0.0
    %3276 = vmatpush1.msra.mxu0 0.0
    %3277 = vmatprep.subr.mxu0 0.0
    %3278 = vmatpush1.msra.mxu0 0.0
    %3279 = vmatprep.subr.mxu0 0.0
    %3280 = vmatpush1.msra.mxu0 0.0
    %3281 = vmatprep.subr.mxu0 0.0
    %3282 = vmatpush1.msra.mxu0 0.0
    %3283 = vmatprep.subr.mxu0 0.0
    %3284 = vmatpush1.msra.mxu0 0.0
    %3285 = vmatprep.subr.mxu0 0.0
    %3286 = vmatpush1.msra.mxu0 0.0
    %3287 = vmatprep.subr.mxu0 0.0
    %3288 = vmatpush1.msra.mxu0 0.0
    %3289 = vmatprep.subr.mxu0 0.0
    %3290 = vmatpush1.msra.mxu0 0.0
    %3291 = vmatprep.subr.mxu0 0.0
    %3292 = vmatpush1.msra.mxu0 0.0
    %3293 = vmatprep.subr.mxu0 0.0
    %3294 = vmatpush1.msra.mxu0 0.0
    %3295 = vmatprep.subr.mxu0 0.0
    %3296 = vmatpush1.msra.mxu0 0.0
    %3297 = vmatprep.subr.mxu0 0.0
    %3298 = vmatpush1.msra.mxu0 0.0
    %3299 = vmatprep.subr.mxu0 0.0
    %3300 = vmatpush1.msra.mxu0 0.0
    %3301 = vmatprep.subr.mxu0 0.0
    %3302 = vmatpush1.msra.mxu0 0.0
    %3303 = vmatprep.subr.mxu0 0.0
    %3304 = vmatpush1.msra.mxu0 0.0
    %3305 = vmatprep.subr.mxu0 0.0
    %3306 = vmatpush1.msra.mxu0 0.0
    %3307 = vmatprep.subr.mxu0 0.0
    %3308 = vmatpush1.msra.mxu0 0.0
    %3309 = vmatprep.subr.mxu0 0.0
    %3310 = vmatpush1.msra.mxu0 0.0
    %3311 = vmatprep.mubr.f32.mxu0 0.0
    %3312 = vmatmul.mubr.f32.gmra.mrb[0].mxu0 %v3245
    %v3313 = vpop.f32.mrb[0].mxu0
    %v3314 = vadd.f32 %v616, %v3313
    %v3315 = vpop.f32.mrb[0].mxu0
    %3316 = vdwg.mxu0
    %v3317 = vxor.u32 %v3314, 2147483648
    %v3318 = vmul.f32 %v3317, 1.442695
    %v3319 = vpow.pop %v3318
    %v3320 = vadd.f32 %v3319, 1.0
    %v3321 = vrcp.pop %v3320
    %v3322 = vmul.f32 1.0, %v3321
    %v3323 = vtanh.pop %v3314
    %v3324 = vmul.f32 %v3322, %v2680
    %3326 = vrot.lane.b32.xlu0 %v3323, 64
    %v3327 = vpop.permute.xlu0 %3326
    %v3329 = vmul.f32 %v3322, %v3327
    %3331 = vrot.lane.b32.xlu0 %v3329, 32
    %v3332 = vpop.permute.xlu0 %3331
    %v3334 = vadd.f32 %v3324, %v3332
    %v3335 = vtanh.pop %v3334
    %3337 = vrot.lane.b32.xlu0 %v3335, 64
    %v3338 = vpop.permute.xlu0 %3337
    %v3340 = vmul.f32 %v3322, %v3338
    %3342 = vrot.lane.b32.xlu0 %v3340, 32
    %v3343 = vpop.permute.xlu0 %3342
    %3345 = vrot.lane.b32.xlu0 %v2791, 64
    %v3346 = vpop.permute.xlu0 %3345
    %v3348 = vsel %vm254, %v3343, %v3346
    %v3350 = vsel %vm265, %v3348, 0
    %3352 = vmatprep.subr.mxu0 0.0
    %3353 = vmatpush1.msra.mxu0 %v724
    %3354 = vmatprep.subr.mxu0 0.0
    %3355 = vmatpush1.msra.mxu0 %v725
    %3356 = vmatprep.subr.mxu0 0.0
    %3357 = vmatpush1.msra.mxu0 %v726
    %3358 = vmatprep.subr.mxu0 0.0
    %3359 = vmatpush1.msra.mxu0 %v727
    %3360 = vmatprep.subr.mxu0 0.0
    %3361 = vmatpush1.msra.mxu0 %v728
    %3362 = vmatprep.subr.mxu0 0.0
    %3363 = vmatpush1.msra.mxu0 %v729
    %3364 = vmatprep.subr.mxu0 0.0
    %3365 = vmatpush1.msra.mxu0 %v730
    %3366 = vmatprep.subr.mxu0 0.0
    %3367 = vmatpush1.msra.mxu0 %v731
    %3368 = vmatprep.subr.mxu0 0.0
    %3369 = vmatpush1.msra.mxu0 0.0
    %3370 = vmatprep.subr.mxu0 0.0
    %3371 = vmatpush1.msra.mxu0 0.0
    %3372 = vmatprep.subr.mxu0 0.0
    %3373 = vmatpush1.msra.mxu0 0.0
    %3374 = vmatprep.subr.mxu0 0.0
    %3375 = vmatpush1.msra.mxu0 0.0
    %3376 = vmatprep.subr.mxu0 0.0
    %3377 = vmatpush1.msra.mxu0 0.0
    %3378 = vmatprep.subr.mxu0 0.0
    %3379 = vmatpush1.msra.mxu0 0.0
    %3380 = vmatprep.subr.mxu0 0.0
    %3381 = vmatpush1.msra.mxu0 0.0
    %3382 = vmatprep.subr.mxu0 0.0
    %3383 = vmatpush1.msra.mxu0 0.0
    %3384 = vmatprep.subr.mxu0 0.0
    %3385 = vmatpush1.msra.mxu0 0.0
    %3386 = vmatprep.subr.mxu0 0.0
    %3387 = vmatpush1.msra.mxu0 0.0
    %3388 = vmatprep.subr.mxu0 0.0
    %3389 = vmatpush1.msra.mxu0 0.0
    %3390 = vmatprep.subr.mxu0 0.0
    %3391 = vmatpush1.msra.mxu0 0.0
    %3392 = vmatprep.subr.mxu0 0.0
    %3393 = vmatpush1.msra.mxu0 0.0
    %3394 = vmatprep.subr.mxu0 0.0
    %3395 = vmatpush1.msra.mxu0 0.0
    %3396 = vmatprep.subr.mxu0 0.0
    %3397 = vmatpush1.msra.mxu0 0.0
    %3398 = vmatprep.subr.mxu0 0.0
    %3399 = vmatpush1.msra.mxu0 0.0
    %3400 = vmatprep.subr.mxu0 0.0
    %3401 = vmatpush1.msra.mxu0 0.0
    %3402 = vmatprep.subr.mxu0 0.0
    %3403 = vmatpush1.msra.mxu0 0.0
    %3404 = vmatprep.subr.mxu0 0.0
    %3405 = vmatpush1.msra.mxu0 0.0
    %3406 = vmatprep.subr.mxu0 0.0
    %3407 = vmatpush1.msra.mxu0 0.0
    %3408 = vmatprep.subr.mxu0 0.0
    %3409 = vmatpush1.msra.mxu0 0.0
    %3410 = vmatprep.subr.mxu0 0.0
    %3411 = vmatpush1.msra.mxu0 0.0
    %3412 = vmatprep.subr.mxu0 0.0
    %3413 = vmatpush1.msra.mxu0 0.0
    %3414 = vmatprep.subr.mxu0 0.0
    %3415 = vmatpush1.msra.mxu0 0.0
    %3416 = vmatprep.mubr.f32.mxu0 0.0
    %3417 = vmatmul.mubr.f32.gmra.mrb[0].mxu0 %v3350
    %v3418 = vpop.f32.mrb[0].mxu0
    %v3419 = vadd.f32 %v732, %v3418
    %v3420 = vpop.f32.mrb[0].mxu0
    %3421 = vdwg.mxu0
    %v3422 = vxor.u32 %v3419, 2147483648
    %v3423 = vmul.f32 %v3422, 1.442695
    %v3424 = vpow.pop %v3423
    %v3425 = vadd.f32 %v3424, 1.0
    %v3426 = vrcp.pop %v3425
    %v3427 = vmul.f32 1.0, %v3426
    %v3428 = vtanh.pop %v3419
    %v3429 = vmul.f32 %v3427, %v2785
    %3431 = vrot.lane.b32.xlu0 %v3428, 64
    %v3432 = vpop.permute.xlu0 %3431
    %v3434 = vmul.f32 %v3427, %v3432
    %3436 = vrot.lane.b32.xlu0 %v3434, 32
    %v3437 = vpop.permute.xlu0 %3436
    %v3439 = vadd.f32 %v3429, %v3437
    %v3440 = vtanh.pop %v3439
    %3442 = vrot.lane.b32.xlu0 %v3440, 64
    %v3443 = vpop.permute.xlu0 %3442
    %v3445 = vmul.f32 %v3427, %v3443
    %v3446 = vadd.f32 %v2792, %v3017
    %v3447 = vadd.f32 %v2793, %v3231
    %v3448 = vadd.f32 %v2794, %v3445
    %s3449 = scalar_lea.vmem %s0, 10
    %v3450 = vld [vmem:[%s3449] sm:$0x3]
    %s3451 = scalar_lea.vmem %s1, 10
    %v3452 = vld [vmem:[%s3451] sm:$0x3]
    %s3453 = scalar_lea.vmem %s2, 10
    %v3454 = vld [vmem:[%s3453] sm:$0x3]
    %3456 = vrot.lane.b32.xlu0 %v3231, 42
    %v3457 = vpop.permute.xlu0 %3456
    %3460 = vrot.lane.b32.xlu0 %v3445, 74
    %v3461 = vpop.permute.xlu0 %3460
    %3463 = vrot.lane.b32.xlu0 %v2911, 106
    %v3464 = vpop.permute.xlu0 %3463
    %v3466 = vsel %vm127, %v3450, %v3457
    %v3467 = vsel %vm129, %v3466, %v3461
    %v3468 = vsel %vm131, %v3467, %v3464
    %v3470 = vsel %vm148, %v3468, 0
    %3472 = vmatprep.subr.mxu0 0.0
    %3473 = vmatpush1.msra.mxu0 %v133
    %3474 = vmatprep.subr.mxu0 0.0
    %3475 = vmatpush1.msra.mxu0 %v134
    %3476 = vmatprep.subr.mxu0 0.0
    %3477 = vmatpush1.msra.mxu0 %v135
    %3478 = vmatprep.subr.mxu0 0.0
    %3479 = vmatpush1.msra.mxu0 %v136
    %3480 = vmatprep.subr.mxu0 0.0
    %3481 = vmatpush1.msra.mxu0 %v137
    %3482 = vmatprep.subr.mxu0 0.0
    %3483 = vmatpush1.msra.mxu0 %v138
    %3484 = vmatprep.subr.mxu0 0.0
    %3485 = vmatpush1.msra.mxu0 %v139
    %3486 = vmatprep.subr.mxu0 0.0
    %3487 = vmatpush1.msra.mxu0 %v140
    %3488 = vmatprep.subr.mxu0 0.0
    %3489 = vmatpush1.msra.mxu0 %v141
    %3490 = vmatprep.subr.mxu0 0.0
    %3491 = vmatpush1.msra.mxu0 %v142
    %3492 = vmatprep.subr.mxu0 0.0
    %3493 = vmatpush1.msra.mxu0 %v143
    %3494 = vmatprep.subr.mxu0 0.0
    %3495 = vmatpush1.msra.mxu0 %v144
    %3496 = vmatprep.subr.mxu0 0.0
    %3497 = vmatpush1.msra.mxu0 %v145
    %3498 = vmatprep.subr.mxu0 0.0
    %3499 = vmatpush1.msra.mxu0 %v154
    %3500 = vmatprep.subr.mxu0 0.0
    %3501 = vmatpush1.msra.mxu0 0.0
    %3502 = vmatprep.subr.mxu0 0.0
    %3503 = vmatpush1.msra.mxu0 0.0
    %3504 = vmatprep.subr.mxu0 0.0
    %3505 = vmatpush1.msra.mxu0 0.0
    %3506 = vmatprep.subr.mxu0 0.0
    %3507 = vmatpush1.msra.mxu0 0.0
    %3508 = vmatprep.subr.mxu0 0.0
    %3509 = vmatpush1.msra.mxu0 0.0
    %3510 = vmatprep.subr.mxu0 0.0
    %3511 = vmatpush1.msra.mxu0 0.0
    %3512 = vmatprep.subr.mxu0 0.0
    %3513 = vmatpush1.msra.mxu0 0.0
    %3514 = vmatprep.subr.mxu0 0.0
    %3515 = vmatpush1.msra.mxu0 0.0
    %3516 = vmatprep.subr.mxu0 0.0
    %3517 = vmatpush1.msra.mxu0 0.0
    %3518 = vmatprep.subr.mxu0 0.0
    %3519 = vmatpush1.msra.mxu0 0.0
    %3520 = vmatprep.subr.mxu0 0.0
    %3521 = vmatpush1.msra.mxu0 0.0
    %3522 = vmatprep.subr.mxu0 0.0
    %3523 = vmatpush1.msra.mxu0 0.0
    %3524 = vmatprep.subr.mxu0 0.0
    %3525 = vmatpush1.msra.mxu0 0.0
    %3526 = vmatprep.subr.mxu0 0.0
    %3527 = vmatpush1.msra.mxu0 0.0
    %3528 = vmatprep.subr.mxu0 0.0
    %3529 = vmatpush1.msra.mxu0 0.0
    %3530 = vmatprep.subr.mxu0 0.0
    %3531 = vmatpush1.msra.mxu0 0.0
    %3532 = vmatprep.subr.mxu0 0.0
    %3533 = vmatpush1.msra.mxu0 0.0
    %3534 = vmatprep.subr.mxu0 0.0
    %3535 = vmatpush1.msra.mxu0 0.0
    %3536 = vmatprep.mubr.f32.mxu0 0.0
    %3537 = vmatmul.mubr.f32.gmra.mrb[0].mxu0 %v3470
    %v3538 = vpop.f32.mrb[0].mxu0
    %v3539 = vadd.f32 %v147, %v3538
    %v3540 = vpop.f32.mrb[0].mxu0
    %3541 = vdwg.mxu0
    %v3542 = vxor.u32 %v3539, 2147483648
    %v3543 = vmul.f32 %v3542, 1.442695
    %v3544 = vpow.pop %v3543
    %v3545 = vadd.f32 %v3544, 1.0
    %v3546 = vrcp.pop %v3545
    %v3547 = vmul.f32 1.0, %v3546
    %v3548 = vtanh.pop %v3539
    %v3549 = vmul.f32 %v3547, %v2905
    %3551 = vrot.lane.b32.xlu0 %v3548, 64
    %v3552 = vpop.permute.xlu0 %3551
    %v3554 = vmul.f32 %v3547, %v3552
    %3556 = vrot.lane.b32.xlu0 %v3554, 32
    %v3557 = vpop.permute.xlu0 %3556
    %v3559 = vadd.f32 %v3549, %v3557
    %v3560 = vtanh.pop %v3559
    %3562 = vrot.lane.b32.xlu0 %v3560, 64
    %v3563 = vpop.permute.xlu0 %3562
    %v3565 = vmul.f32 %v3547, %v3563
    %3567 = vrot.lane.b32.xlu0 %v3565, 32
    %v3568 = vpop.permute.xlu0 %3567
    %3571 = vrot.lane.b32.xlu0 %v3017, 64
    %v3572 = vpop.permute.xlu0 %3571
    %v3574 = vsel %vm254, %v3568, %v3572
    %v3576 = vsel %vm265, %v3574, 0
    %3578 = vmatprep.subr.mxu0 0.0
    %3579 = vmatpush1.msra.mxu0 %v256
    %3580 = vmatprep.subr.mxu0 0.0
    %3581 = vmatpush1.msra.mxu0 %v257
    %3582 = vmatprep.subr.mxu0 0.0
    %3583 = vmatpush1.msra.mxu0 %v258
    %3584 = vmatprep.subr.mxu0 0.0
    %3585 = vmatpush1.msra.mxu0 %v259
    %3586 = vmatprep.subr.mxu0 0.0
    %3587 = vmatpush1.msra.mxu0 %v260
    %3588 = vmatprep.subr.mxu0 0.0
    %3589 = vmatpush1.msra.mxu0 %v261
    %3590 = vmatprep.subr.mxu0 0.0
    %3591 = vmatpush1.msra.mxu0 %v262
    %3592 = vmatprep.subr.mxu0 0.0
    %3593 = vmatpush1.msra.mxu0 %v263
    %3594 = vmatprep.subr.mxu0 0.0
    %3595 = vmatpush1.msra.mxu0 0.0
    %3596 = vmatprep.subr.mxu0 0.0
    %3597 = vmatpush1.msra.mxu0 0.0
    %3598 = vmatprep.subr.mxu0 0.0
    %3599 = vmatpush1.msra.mxu0 0.0
    %3600 = vmatprep.subr.mxu0 0.0
    %3601 = vmatpush1.msra.mxu0 0.0
    %3602 = vmatprep.subr.mxu0 0.0
    %3603 = vmatpush1.msra.mxu0 0.0
    %3604 = vmatprep.subr.mxu0 0.0
    %3605 = vmatpush1.msra.mxu0 0.0
    %3606 = vmatprep.subr.mxu0 0.0
    %3607 = vmatpush1.msra.mxu0 0.0
    %3608 = vmatprep.subr.mxu0 0.0
    %3609 = vmatpush1.msra.mxu0 0.0
    %3610 = vmatprep.subr.mxu0 0.0
    %3611 = vmatpush1.msra.mxu0 0.0
    %3612 = vmatprep.subr.mxu0 0.0
    %3613 = vmatpush1.msra.mxu0 0.0
    %3614 = vmatprep.subr.mxu0 0.0
    %3615 = vmatpush1.msra.mxu0 0.0
    %3616 = vmatprep.subr.mxu0 0.0
    %3617 = vmatpush1.msra.mxu0 0.0
    %3618 = vmatprep.subr.mxu0 0.0
    %3619 = vmatpush1.msra.mxu0 0.0
    %3620 = vmatprep.subr.mxu0 0.0
    %3621 = vmatpush1.msra.mxu0 0.0
    %3622 = vmatprep.subr.mxu0 0.0
    %3623 = vmatpush1.msra.mxu0 0.0
    %3624 = vmatprep.subr.mxu0 0.0
    %3625 = vmatpush1.msra.mxu0 0.0
    %3626 = vmatprep.subr.mxu0 0.0
    %3627 = vmatpush1.msra.mxu0 0.0
    %3628 = vmatprep.subr.mxu0 0.0
    %3629 = vmatpush1.msra.mxu0 0.0
    %3630 = vmatprep.subr.mxu0 0.0
    %3631 = vmatpush1.msra.mxu0 0.0
    %3632 = vmatprep.subr.mxu0 0.0
    %3633 = vmatpush1.msra.mxu0 0.0
    %3634 = vmatprep.subr.mxu0 0.0
    %3635 = vmatpush1.msra.mxu0 0.0
    %3636 = vmatprep.subr.mxu0 0.0
    %3637 = vmatpush1.msra.mxu0 0.0
    %3638 = vmatprep.subr.mxu0 0.0
    %3639 = vmatpush1.msra.mxu0 0.0
    %3640 = vmatprep.subr.mxu0 0.0
    %3641 = vmatpush1.msra.mxu0 0.0
    %3642 = vmatprep.mubr.f32.mxu0 0.0
    %3643 = vmatmul.mubr.f32.gmra.mrb[0].mxu0 %v3576
    %v3644 = vpop.f32.mrb[0].mxu0
    %v3645 = vadd.f32 %v264, %v3644
    %v3646 = vpop.f32.mrb[0].mxu0
    %3647 = vdwg.mxu0
    %v3648 = vxor.u32 %v3645, 2147483648
    %v3649 = vmul.f32 %v3648, 1.442695
    %v3650 = vpow.pop %v3649
    %v3651 = vadd.f32 %v3650, 1.0
    %v3652 = vrcp.pop %v3651
    %v3653 = vmul.f32 1.0, %v3652
    %v3654 = vtanh.pop %v3645
    %v3655 = vmul.f32 %v3653, %v3011
    %3657 = vrot.lane.b32.xlu0 %v3654, 64
    %v3658 = vpop.permute.xlu0 %3657
    %v3660 = vmul.f32 %v3653, %v3658
    %3662 = vrot.lane.b32.xlu0 %v3660, 32
    %v3663 = vpop.permute.xlu0 %3662
    %v3665 = vadd.f32 %v3655, %v3663
    %v3666 = vtanh.pop %v3665
    %3668 = vrot.lane.b32.xlu0 %v3666, 64
    %v3669 = vpop.permute.xlu0 %3668
    %v3671 = vmul.f32 %v3653, %v3669
    %3672 = vrot.lane.b32.xlu0 %v3017, 44
    %v3673 = vpop.permute.xlu0 %3672
    %3675 = vrot.lane.b32.xlu0 %v3445, 76
    %v3676 = vpop.permute.xlu0 %3675
    %3678 = vrot.lane.b32.xlu0 %v3126, 108
    %v3679 = vpop.permute.xlu0 %3678
    %v3681 = vsel %vm363, %v3452, %v3673
    %v3682 = vsel %vm365, %v3681, %v3676
    %v3683 = vsel %vm367, %v3682, %v3679
    %v3685 = vsel %vm384, %v3683, 0
    %3687 = vmatprep.subr.mxu0 0.0
    %3688 = vmatpush1.msra.mxu0 %v369
    %3689 = vmatprep.subr.mxu0 0.0
    %3690 = vmatpush1.msra.mxu0 %v370
    %3691 = vmatprep.subr.mxu0 0.0
    %3692 = vmatpush1.msra.mxu0 %v371
    %3693 = vmatprep.subr.mxu0 0.0
    %3694 = vmatpush1.msra.mxu0 %v372
    %3695 = vmatprep.subr.mxu0 0.0
    %3696 = vmatpush1.msra.mxu0 %v373
    %3697 = vmatprep.subr.mxu0 0.0
    %3698 = vmatpush1.msra.mxu0 %v374
    %3699 = vmatprep.subr.mxu0 0.0
    %3700 = vmatpush1.msra.mxu0 %v375
    %3701 = vmatprep.subr.mxu0 0.0
    %3702 = vmatpush1.msra.mxu0 %v376
    %3703 = vmatprep.subr.mxu0 0.0
    %3704 = vmatpush1.msra.mxu0 %v377
    %3705 = vmatprep.subr.mxu0 0.0
    %3706 = vmatpush1.msra.mxu0 %v378
    %3707 = vmatprep.subr.mxu0 0.0
    %3708 = vmatpush1.msra.mxu0 %v379
    %3709 = vmatprep.subr.mxu0 0.0
    %3710 = vmatpush1.msra.mxu0 %v380
    %3711 = vmatprep.subr.mxu0 0.0
    %3712 = vmatpush1.msra.mxu0 %v381
    %3713 = vmatprep.subr.mxu0 0.0
    %3714 = vmatpush1.msra.mxu0 %v390
    %3715 = vmatprep.subr.mxu0 0.0
    %3716 = vmatpush1.msra.mxu0 0.0
    %3717 = vmatprep.subr.mxu0 0.0
    %3718 = vmatpush1.msra.mxu0 0.0
    %3719 = vmatprep.subr.mxu0 0.0
    %3720 = vmatpush1.msra.mxu0 0.0
    %3721 = vmatprep.subr.mxu0 0.0
    %3722 = vmatpush1.msra.mxu0 0.0
    %3723 = vmatprep.subr.mxu0 0.0
    %3724 = vmatpush1.msra.mxu0 0.0
    %3725 = vmatprep.subr.mxu0 0.0
    %3726 = vmatpush1.msra.mxu0 0.0
    %3727 = vmatprep.subr.mxu0 0.0
    %3728 = vmatpush1.msra.mxu0 0.0
    %3729 = vmatprep.subr.mxu0 0.0
    %3730 = vmatpush1.msra.mxu0 0.0
    %3731 = vmatprep.subr.mxu0 0.0
    %3732 = vmatpush1.msra.mxu0 0.0
    %3733 = vmatprep.subr.mxu0 0.0
    %3734 = vmatpush1.msra.mxu0 0.0
    %3735 = vmatprep.subr.mxu0 0.0
    %3736 = vmatpush1.msra.mxu0 0.0
    %3737 = vmatprep.subr.mxu0 0.0
    %3738 = vmatpush1.msra.mxu0 0.0
    %3739 = vmatprep.subr.mxu0 0.0
    %3740 = vmatpush1.msra.mxu0 0.0
    %3741 = vmatprep.subr.mxu0 0.0
    %3742 = vmatpush1.msra.mxu0 0.0
    %3743 = vmatprep.subr.mxu0 0.0
    %3744 = vmatpush1.msra.mxu0 0.0
    %3745 = vmatprep.subr.mxu0 0.0
    %3746 = vmatpush1.msra.mxu0 0.0
    %3747 = vmatprep.subr.mxu0 0.0
    %3748 = vmatpush1.msra.mxu0 0.0
    %3749 = vmatprep.subr.mxu0 0.0
    %3750 = vmatpush1.msra.mxu0 0.0
    %3751 = vmatprep.mubr.f32.mxu0 0.0
    %3752 = vmatmul.mubr.f32.gmra.mrb[0].mxu0 %v3685
    %v3753 = vpop.f32.mrb[0].mxu0
    %v3754 = vadd.f32 %v383, %v3753
    %v3755 = vpop.f32.mrb[0].mxu0
    %3756 = vdwg.mxu0
    %v3757 = vxor.u32 %v3754, 2147483648
    %v3758 = vmul.f32 %v3757, 1.442695
    %v3759 = vpow.pop %v3758
    %v3760 = vadd.f32 %v3759, 1.0
    %v3761 = vrcp.pop %v3760
    %v3762 = vmul.f32 1.0, %v3761
    %v3763 = vtanh.pop %v3754
    %v3764 = vmul.f32 %v3762, %v3120
    %3766 = vrot.lane.b32.xlu0 %v3763, 64
    %v3767 = vpop.permute.xlu0 %3766
    %v3769 = vmul.f32 %v3762, %v3767
    %3771 = vrot.lane.b32.xlu0 %v3769, 32
    %v3772 = vpop.permute.xlu0 %3771
    %v3774 = vadd.f32 %v3764, %v3772
    %v3775 = vtanh.pop %v3774
    %3777 = vrot.lane.b32.xlu0 %v3775, 64
    %v3778 = vpop.permute.xlu0 %3777
    %v3780 = vmul.f32 %v3762, %v3778
    %3782 = vrot.lane.b32.xlu0 %v3780, 32
    %v3783 = vpop.permute.xlu0 %3782
    %3785 = vrot.lane.b32.xlu0 %v3231, 64
    %v3786 = vpop.permute.xlu0 %3785
    %v3788 = vsel %vm254, %v3783, %v3786
    %v3790 = vsel %vm265, %v3788, 0
    %3792 = vmatprep.subr.mxu0 0.0
    %3793 = vmatpush1.msra.mxu0 %v491
    %3794 = vmatprep.subr.mxu0 0.0
    %3795 = vmatpush1.msra.mxu0 %v492
    %3796 = vmatprep.subr.mxu0 0.0
    %3797 = vmatpush1.msra.mxu0 %v493
    %3798 = vmatprep.subr.mxu0 0.0
    %3799 = vmatpush1.msra.mxu0 %v494
    %3800 = vmatprep.subr.mxu0 0.0
    %3801 = vmatpush1.msra.mxu0 %v495
    %3802 = vmatprep.subr.mxu0 0.0
    %3803 = vmatpush1.msra.mxu0 %v496
    %3804 = vmatprep.subr.mxu0 0.0
    %3805 = vmatpush1.msra.mxu0 %v497
    %3806 = vmatprep.subr.mxu0 0.0
    %3807 = vmatpush1.msra.mxu0 %v498
    %3808 = vmatprep.subr.mxu0 0.0
    %3809 = vmatpush1.msra.mxu0 0.0
    %3810 = vmatprep.subr.mxu0 0.0
    %3811 = vmatpush1.msra.mxu0 0.0
    %3812 = vmatprep.subr.mxu0 0.0
    %3813 = vmatpush1.msra.mxu0 0.0
    %3814 = vmatprep.subr.mxu0 0.0
    %3815 = vmatpush1.msra.mxu0 0.0
    %3816 = vmatprep.subr.mxu0 0.0
    %3817 = vmatpush1.msra.mxu0 0.0
    %3818 = vmatprep.subr.mxu0 0.0
    %3819 = vmatpush1.msra.mxu0 0.0
    %3820 = vmatprep.subr.mxu0 0.0
    %3821 = vmatpush1.msra.mxu0 0.0
    %3822 = vmatprep.subr.mxu0 0.0
    %3823 = vmatpush1.msra.mxu0 0.0
    %3824 = vmatprep.subr.mxu0 0.0
    %3825 = vmatpush1.msra.mxu0 0.0
    %3826 = vmatprep.subr.mxu0 0.0
    %3827 = vmatpush1.msra.mxu0 0.0
    %3828 = vmatprep.subr.mxu0 0.0
    %3829 = vmatpush1.msra.mxu0 0.0
    %3830 = vmatprep.subr.mxu0 0.0
    %3831 = vmatpush1.msra.mxu0 0.0
    %3832 = vmatprep.subr.mxu0 0.0
    %3833 = vmatpush1.msra.mxu0 0.0
    %3834 = vmatprep.subr.mxu0 0.0
    %3835 = vmatpush1.msra.mxu0 0.0
    %3836 = vmatprep.subr.mxu0 0.0
    %3837 = vmatpush1.msra.mxu0 0.0
    %3838 = vmatprep.subr.mxu0 0.0
    %3839 = vmatpush1.msra.mxu0 0.0
    %3840 = vmatprep.subr.mxu0 0.0
    %3841 = vmatpush1.msra.mxu0 0.0
    %3842 = vmatprep.subr.mxu0 0.0
    %3843 = vmatpush1.msra.mxu0 0.0
    %3844 = vmatprep.subr.mxu0 0.0
    %3845 = vmatpush1.msra.mxu0 0.0
    %3846 = vmatprep.subr.mxu0 0.0
    %3847 = vmatpush1.msra.mxu0 0.0
    %3848 = vmatprep.subr.mxu0 0.0
    %3849 = vmatpush1.msra.mxu0 0.0
    %3850 = vmatprep.subr.mxu0 0.0
    %3851 = vmatpush1.msra.mxu0 0.0
    %3852 = vmatprep.subr.mxu0 0.0
    %3853 = vmatpush1.msra.mxu0 0.0
    %3854 = vmatprep.subr.mxu0 0.0
    %3855 = vmatpush1.msra.mxu0 0.0
    %3856 = vmatprep.mubr.f32.mxu0 0.0
    %3857 = vmatmul.mubr.f32.gmra.mrb[0].mxu0 %v3790
    %v3858 = vpop.f32.mrb[0].mxu0
    %v3859 = vadd.f32 %v499, %v3858
    %v3860 = vpop.f32.mrb[0].mxu0
    %3861 = vdwg.mxu0
    %v3862 = vxor.u32 %v3859, 2147483648
    %v3863 = vmul.f32 %v3862, 1.442695
    %v3864 = vpow.pop %v3863
    %v3865 = vadd.f32 %v3864, 1.0
    %v3866 = vrcp.pop %v3865
    %v3867 = vmul.f32 1.0, %v3866
    %v3868 = vtanh.pop %v3859
    %v3869 = vmul.f32 %v3867, %v3225
    %3871 = vrot.lane.b32.xlu0 %v3868, 64
    %v3872 = vpop.permute.xlu0 %3871
    %v3874 = vmul.f32 %v3867, %v3872
    %3876 = vrot.lane.b32.xlu0 %v3874, 32
    %v3877 = vpop.permute.xlu0 %3876
    %v3879 = vadd.f32 %v3869, %v3877
    %v3880 = vtanh.pop %v3879
    %3882 = vrot.lane.b32.xlu0 %v3880, 64
    %v3883 = vpop.permute.xlu0 %3882
    %v3885 = vmul.f32 %v3867, %v3883
    %3886 = vrot.lane.b32.xlu0 %v3017, 38
    %v3887 = vpop.permute.xlu0 %3886
    %3889 = vrot.lane.b32.xlu0 %v3231, 70
    %v3890 = vpop.permute.xlu0 %3889
    %3892 = vrot.lane.b32.xlu0 %v3340, 102
    %v3893 = vpop.permute.xlu0 %3892
    %v3895 = vsel %vm597, %v3454, %v3887
    %v3896 = vsel %vm599, %v3895, %v3890
    %v3897 = vsel %vm601, %v3896, %v3893
    %v3899 = vsel %vm617, %v3897, 0
    %3901 = vmatprep.subr.mxu0 0.0
    %3902 = vmatpush1.msra.mxu0 %v603
    %3903 = vmatprep.subr.mxu0 0.0
    %3904 = vmatpush1.msra.mxu0 %v604
    %3905 = vmatprep.subr.mxu0 0.0
    %3906 = vmatpush1.msra.mxu0 %v605
    %3907 = vmatprep.subr.mxu0 0.0
    %3908 = vmatpush1.msra.mxu0 %v606
    %3909 = vmatprep.subr.mxu0 0.0
    %3910 = vmatpush1.msra.mxu0 %v607
    %3911 = vmatprep.subr.mxu0 0.0
    %3912 = vmatpush1.msra.mxu0 %v608
    %3913 = vmatprep.subr.mxu0 0.0
    %3914 = vmatpush1.msra.mxu0 %v609
    %3915 = vmatprep.subr.mxu0 0.0
    %3916 = vmatpush1.msra.mxu0 %v610
    %3917 = vmatprep.subr.mxu0 0.0
    %3918 = vmatpush1.msra.mxu0 %v611
    %3919 = vmatprep.subr.mxu0 0.0
    %3920 = vmatpush1.msra.mxu0 %v612
    %3921 = vmatprep.subr.mxu0 0.0
    %3922 = vmatpush1.msra.mxu0 %v613
    %3923 = vmatprep.subr.mxu0 0.0
    %3924 = vmatpush1.msra.mxu0 %v614
    %3925 = vmatprep.subr.mxu0 0.0
    %3926 = vmatpush1.msra.mxu0 %v623
    %3927 = vmatprep.subr.mxu0 0.0
    %3928 = vmatpush1.msra.mxu0 0.0
    %3929 = vmatprep.subr.mxu0 0.0
    %3930 = vmatpush1.msra.mxu0 0.0
    %3931 = vmatprep.subr.mxu0 0.0
    %3932 = vmatpush1.msra.mxu0 0.0
    %3933 = vmatprep.subr.mxu0 0.0
    %3934 = vmatpush1.msra.mxu0 0.0
    %3935 = vmatprep.subr.mxu0 0.0
    %3936 = vmatpush1.msra.mxu0 0.0
    %3937 = vmatprep.subr.mxu0 0.0
    %3938 = vmatpush1.msra.mxu0 0.0
    %3939 = vmatprep.subr.mxu0 0.0
    %3940 = vmatpush1.msra.mxu0 0.0
    %3941 = vmatprep.subr.mxu0 0.0
    %3942 = vmatpush1.msra.mxu0 0.0
    %3943 = vmatprep.subr.mxu0 0.0
    %3944 = vmatpush1.msra.mxu0 0.0
    %3945 = vmatprep.subr.mxu0 0.0
    %3946 = vmatpush1.msra.mxu0 0.0
    %3947 = vmatprep.subr.mxu0 0.0
    %3948 = vmatpush1.msra.mxu0 0.0
    %3949 = vmatprep.subr.mxu0 0.0
    %3950 = vmatpush1.msra.mxu0 0.0
    %3951 = vmatprep.subr.mxu0 0.0
    %3952 = vmatpush1.msra.mxu0 0.0
    %3953 = vmatprep.subr.mxu0 0.0
    %3954 = vmatpush1.msra.mxu0 0.0
    %3955 = vmatprep.subr.mxu0 0.0
    %3956 = vmatpush1.msra.mxu0 0.0
    %3957 = vmatprep.subr.mxu0 0.0
    %3958 = vmatpush1.msra.mxu0 0.0
    %3959 = vmatprep.subr.mxu0 0.0
    %3960 = vmatpush1.msra.mxu0 0.0
    %3961 = vmatprep.subr.mxu0 0.0
    %3962 = vmatpush1.msra.mxu0 0.0
    %3963 = vmatprep.subr.mxu0 0.0
    %3964 = vmatpush1.msra.mxu0 0.0
    %3965 = vmatprep.mubr.f32.mxu0 0.0
    %3966 = vmatmul.mubr.f32.gmra.mrb[0].mxu0 %v3899
    %v3967 = vpop.f32.mrb[0].mxu0
    %v3968 = vadd.f32 %v616, %v3967
    %v3969 = vpop.f32.mrb[0].mxu0
    %3970 = vdwg.mxu0
    %v3971 = vxor.u32 %v3968, 2147483648
    %v3972 = vmul.f32 %v3971, 1.442695
    %v3973 = vpow.pop %v3972
    %v3974 = vadd.f32 %v3973, 1.0
    %v3975 = vrcp.pop %v3974
    %v3976 = vmul.f32 1.0, %v3975
    %v3977 = vtanh.pop %v3968
    %v3978 = vmul.f32 %v3976, %v3334
    %3980 = vrot.lane.b32.xlu0 %v3977, 64
    %v3981 = vpop.permute.xlu0 %3980
    %v3983 = vmul.f32 %v3976, %v3981
    %3985 = vrot.lane.b32.xlu0 %v3983, 32
    %v3986 = vpop.permute.xlu0 %3985
    %v3988 = vadd.f32 %v3978, %v3986
    %v3989 = vtanh.pop %v3988
    %3991 = vrot.lane.b32.xlu0 %v3989, 64
    %v3992 = vpop.permute.xlu0 %3991
    %v3994 = vmul.f32 %v3976, %v3992
    %3996 = vrot.lane.b32.xlu0 %v3994, 32
    %v3997 = vpop.permute.xlu0 %3996
    %3999 = vrot.lane.b32.xlu0 %v3445, 64
    %v4000 = vpop.permute.xlu0 %3999
    %v4002 = vsel %vm254, %v3997, %v4000
    %v4004 = vsel %vm265, %v4002, 0
    %4006 = vmatprep.subr.mxu0 0.0
    %4007 = vmatpush1.msra.mxu0 %v724
    %4008 = vmatprep.subr.mxu0 0.0
    %4009 = vmatpush1.msra.mxu0 %v725
    %4010 = vmatprep.subr.mxu0 0.0
    %4011 = vmatpush1.msra.mxu0 %v726
    %4012 = vmatprep.subr.mxu0 0.0
    %4013 = vmatpush1.msra.mxu0 %v727
    %4014 = vmatprep.subr.mxu0 0.0
    %4015 = vmatpush1.msra.mxu0 %v728
    %4016 = vmatprep.subr.mxu0 0.0
    %4017 = vmatpush1.msra.mxu0 %v729
    %4018 = vmatprep.subr.mxu0 0.0
    %4019 = vmatpush1.msra.mxu0 %v730
    %4020 = vmatprep.subr.mxu0 0.0
    %4021 = vmatpush1.msra.mxu0 %v731
    %4022 = vmatprep.subr.mxu0 0.0
    %4023 = vmatpush1.msra.mxu0 0.0
    %4024 = vmatprep.subr.mxu0 0.0
    %4025 = vmatpush1.msra.mxu0 0.0
    %4026 = vmatprep.subr.mxu0 0.0
    %4027 = vmatpush1.msra.mxu0 0.0
    %4028 = vmatprep.subr.mxu0 0.0
    %4029 = vmatpush1.msra.mxu0 0.0
    %4030 = vmatprep.subr.mxu0 0.0
    %4031 = vmatpush1.msra.mxu0 0.0
    %4032 = vmatprep.subr.mxu0 0.0
    %4033 = vmatpush1.msra.mxu0 0.0
    %4034 = vmatprep.subr.mxu0 0.0
    %4035 = vmatpush1.msra.mxu0 0.0
    %4036 = vmatprep.subr.mxu0 0.0
    %4037 = vmatpush1.msra.mxu0 0.0
    %4038 = vmatprep.subr.mxu0 0.0
    %4039 = vmatpush1.msra.mxu0 0.0
    %4040 = vmatprep.subr.mxu0 0.0
    %4041 = vmatpush1.msra.mxu0 0.0
    %4042 = vmatprep.subr.mxu0 0.0
    %4043 = vmatpush1.msra.mxu0 0.0
    %4044 = vmatprep.subr.mxu0 0.0
    %4045 = vmatpush1.msra.mxu0 0.0
    %4046 = vmatprep.subr.mxu0 0.0
    %4047 = vmatpush1.msra.mxu0 0.0
    %4048 = vmatprep.subr.mxu0 0.0
    %4049 = vmatpush1.msra.mxu0 0.0
    %4050 = vmatprep.subr.mxu0 0.0
    %4051 = vmatpush1.msra.mxu0 0.0
    %4052 = vmatprep.subr.mxu0 0.0
    %4053 = vmatpush1.msra.mxu0 0.0
    %4054 = vmatprep.subr.mxu0 0.0
    %4055 = vmatpush1.msra.mxu0 0.0
    %4056 = vmatprep.subr.mxu0 0.0
    %4057 = vmatpush1.msra.mxu0 0.0
    %4058 = vmatprep.subr.mxu0 0.0
    %4059 = vmatpush1.msra.mxu0 0.0
    %4060 = vmatprep.subr.mxu0 0.0
    %4061 = vmatpush1.msra.mxu0 0.0
    %4062 = vmatprep.subr.mxu0 0.0
    %4063 = vmatpush1.msra.mxu0 0.0
    %4064 = vmatprep.subr.mxu0 0.0
    %4065 = vmatpush1.msra.mxu0 0.0
    %4066 = vmatprep.subr.mxu0 0.0
    %4067 = vmatpush1.msra.mxu0 0.0
    %4068 = vmatprep.subr.mxu0 0.0
    %4069 = vmatpush1.msra.mxu0 0.0
    %4070 = vmatprep.mubr.f32.mxu0 0.0
    %4071 = vmatmul.mubr.f32.gmra.mrb[0].mxu0 %v4004
    %v4072 = vpop.f32.mrb[0].mxu0
    %v4073 = vadd.f32 %v732, %v4072
    %v4074 = vpop.f32.mrb[0].mxu0
    %4075 = vdwg.mxu0
    %v4076 = vxor.u32 %v4073, 2147483648
    %v4077 = vmul.f32 %v4076, 1.442695
    %v4078 = vpow.pop %v4077
    %v4079 = vadd.f32 %v4078, 1.0
    %v4080 = vrcp.pop %v4079
    %v4081 = vmul.f32 1.0, %v4080
    %v4082 = vtanh.pop %v4073
    %v4083 = vmul.f32 %v4081, %v3439
    %4085 = vrot.lane.b32.xlu0 %v4082, 64
    %v4086 = vpop.permute.xlu0 %4085
    %v4088 = vmul.f32 %v4081, %v4086
    %4090 = vrot.lane.b32.xlu0 %v4088, 32
    %v4091 = vpop.permute.xlu0 %4090
    %v4093 = vadd.f32 %v4083, %v4091
    %v4094 = vtanh.pop %v4093
    %4096 = vrot.lane.b32.xlu0 %v4094, 64
    %v4097 = vpop.permute.xlu0 %4096
    %v4099 = vmul.f32 %v4081, %v4097
    %v4100 = vadd.f32 %v3446, %v3671
    %v4101 = vadd.f32 %v3447, %v3885
    %v4102 = vadd.f32 %v3448, %v4099
    %s4103 = scalar_lea.vmem %s0, 12
    %v4104 = vld [vmem:[%s4103] sm:$0x3]
    %s4105 = scalar_lea.vmem %s1, 12
    %v4106 = vld [vmem:[%s4105] sm:$0x3]
    %s4107 = scalar_lea.vmem %s2, 12
    %v4108 = vld [vmem:[%s4107] sm:$0x3]
    %4110 = vrot.lane.b32.xlu0 %v3885, 42
    %v4111 = vpop.permute.xlu0 %4110
    %4114 = vrot.lane.b32.xlu0 %v4099, 74
    %v4115 = vpop.permute.xlu0 %4114
    %4117 = vrot.lane.b32.xlu0 %v3565, 106
    %v4118 = vpop.permute.xlu0 %4117
    %v4120 = vsel %vm127, %v4104, %v4111
    %v4121 = vsel %vm129, %v4120, %v4115
    %v4122 = vsel %vm131, %v4121, %v4118
    %v4124 = vsel %vm148, %v4122, 0
    %4126 = vmatprep.subr.mxu0 0.0
    %4127 = vmatpush1.msra.mxu0 %v133
    %4128 = vmatprep.subr.mxu0 0.0
    %4129 = vmatpush1.msra.mxu0 %v134
    %4130 = vmatprep.subr.mxu0 0.0
    %4131 = vmatpush1.msra.mxu0 %v135
    %4132 = vmatprep.subr.mxu0 0.0
    %4133 = vmatpush1.msra.mxu0 %v136
    %4134 = vmatprep.subr.mxu0 0.0
    %4135 = vmatpush1.msra.mxu0 %v137
    %4136 = vmatprep.subr.mxu0 0.0
    %4137 = vmatpush1.msra.mxu0 %v138
    %4138 = vmatprep.subr.mxu0 0.0
    %4139 = vmatpush1.msra.mxu0 %v139
    %4140 = vmatprep.subr.mxu0 0.0
    %4141 = vmatpush1.msra.mxu0 %v140
    %4142 = vmatprep.subr.mxu0 0.0
    %4143 = vmatpush1.msra.mxu0 %v141
    %4144 = vmatprep.subr.mxu0 0.0
    %4145 = vmatpush1.msra.mxu0 %v142
    %4146 = vmatprep.subr.mxu0 0.0
    %4147 = vmatpush1.msra.mxu0 %v143
    %4148 = vmatprep.subr.mxu0 0.0
    %4149 = vmatpush1.msra.mxu0 %v144
    %4150 = vmatprep.subr.mxu0 0.0
    %4151 = vmatpush1.msra.mxu0 %v145
    %4152 = vmatprep.subr.mxu0 0.0
    %4153 = vmatpush1.msra.mxu0 %v154
    %4154 = vmatprep.subr.mxu0 0.0
    %4155 = vmatpush1.msra.mxu0 0.0
    %4156 = vmatprep.subr.mxu0 0.0
    %4157 = vmatpush1.msra.mxu0 0.0
    %4158 = vmatprep.subr.mxu0 0.0
    %4159 = vmatpush1.msra.mxu0 0.0
    %4160 = vmatprep.subr.mxu0 0.0
    %4161 = vmatpush1.msra.mxu0 0.0
    %4162 = vmatprep.subr.mxu0 0.0
    %4163 = vmatpush1.msra.mxu0 0.0
    %4164 = vmatprep.subr.mxu0 0.0
    %4165 = vmatpush1.msra.mxu0 0.0
    %4166 = vmatprep.subr.mxu0 0.0
    %4167 = vmatpush1.msra.mxu0 0.0
    %4168 = vmatprep.subr.mxu0 0.0
    %4169 = vmatpush1.msra.mxu0 0.0
    %4170 = vmatprep.subr.mxu0 0.0
    %4171 = vmatpush1.msra.mxu0 0.0
    %4172 = vmatprep.subr.mxu0 0.0
    %4173 = vmatpush1.msra.mxu0 0.0
    %4174 = vmatprep.subr.mxu0 0.0
    %4175 = vmatpush1.msra.mxu0 0.0
    %4176 = vmatprep.subr.mxu0 0.0
    %4177 = vmatpush1.msra.mxu0 0.0
    %4178 = vmatprep.subr.mxu0 0.0
    %4179 = vmatpush1.msra.mxu0 0.0
    %4180 = vmatprep.subr.mxu0 0.0
    %4181 = vmatpush1.msra.mxu0 0.0
    %4182 = vmatprep.subr.mxu0 0.0
    %4183 = vmatpush1.msra.mxu0 0.0
    %4184 = vmatprep.subr.mxu0 0.0
    %4185 = vmatpush1.msra.mxu0 0.0
    %4186 = vmatprep.subr.mxu0 0.0
    %4187 = vmatpush1.msra.mxu0 0.0
    %4188 = vmatprep.subr.mxu0 0.0
    %4189 = vmatpush1.msra.mxu0 0.0
    %4190 = vmatprep.mubr.f32.mxu0 0.0
    %4191 = vmatmul.mubr.f32.gmra.mrb[0].mxu0 %v4124
    %v4192 = vpop.f32.mrb[0].mxu0
    %v4193 = vadd.f32 %v147, %v4192
    %v4194 = vpop.f32.mrb[0].mxu0
    %4195 = vdwg.mxu0
    %v4196 = vxor.u32 %v4193, 2147483648
    %v4197 = vmul.f32 %v4196, 1.442695
    %v4198 = vpow.pop %v4197
    %v4199 = vadd.f32 %v4198, 1.0
    %v4200 = vrcp.pop %v4199
    %v4201 = vmul.f32 1.0, %v4200
    %v4202 = vtanh.pop %v4193
    %v4203 = vmul.f32 %v4201, %v3559
    %4205 = vrot.lane.b32.xlu0 %v4202, 64
    %v4206 = vpop.permute.xlu0 %4205
    %v4208 = vmul.f32 %v4201, %v4206
    %4210 = vrot.lane.b32.xlu0 %v4208, 32
    %v4211 = vpop.permute.xlu0 %4210
    %v4213 = vadd.f32 %v4203, %v4211
    %v4214 = vtanh.pop %v4213
    %4216 = vrot.lane.b32.xlu0 %v4214, 64
    %v4217 = vpop.permute.xlu0 %4216
    %v4219 = vmul.f32 %v4201, %v4217
    %4221 = vrot.lane.b32.xlu0 %v4219, 32
    %v4222 = vpop.permute.xlu0 %4221
    %4225 = vrot.lane.b32.xlu0 %v3671, 64
    %v4226 = vpop.permute.xlu0 %4225
    %v4228 = vsel %vm254, %v4222, %v4226
    %v4230 = vsel %vm265, %v4228, 0
    %4232 = vmatprep.subr.mxu0 0.0
    %4233 = vmatpush1.msra.mxu0 %v256
    %4234 = vmatprep.subr.mxu0 0.0
    %4235 = vmatpush1.msra.mxu0 %v257
    %4236 = vmatprep.subr.mxu0 0.0
    %4237 = vmatpush1.msra.mxu0 %v258
    %4238 = vmatprep.subr.mxu0 0.0
    %4239 = vmatpush1.msra.mxu0 %v259
    %4240 = vmatprep.subr.mxu0 0.0
    %4241 = vmatpush1.msra.mxu0 %v260
    %4242 = vmatprep.subr.mxu0 0.0
    %4243 = vmatpush1.msra.mxu0 %v261
    %4244 = vmatprep.subr.mxu0 0.0
    %4245 = vmatpush1.msra.mxu0 %v262
    %4246 = vmatprep.subr.mxu0 0.0
    %4247 = vmatpush1.msra.mxu0 %v263
    %4248 = vmatprep.subr.mxu0 0.0
    %4249 = vmatpush1.msra.mxu0 0.0
    %4250 = vmatprep.subr.mxu0 0.0
    %4251 = vmatpush1.msra.mxu0 0.0
    %4252 = vmatprep.subr.mxu0 0.0
    %4253 = vmatpush1.msra.mxu0 0.0
    %4254 = vmatprep.subr.mxu0 0.0
    %4255 = vmatpush1.msra.mxu0 0.0
    %4256 = vmatprep.subr.mxu0 0.0
    %4257 = vmatpush1.msra.mxu0 0.0
    %4258 = vmatprep.subr.mxu0 0.0
    %4259 = vmatpush1.msra.mxu0 0.0
    %4260 = vmatprep.subr.mxu0 0.0
    %4261 = vmatpush1.msra.mxu0 0.0
    %4262 = vmatprep.subr.mxu0 0.0
    %4263 = vmatpush1.msra.mxu0 0.0
    %4264 = vmatprep.subr.mxu0 0.0
    %4265 = vmatpush1.msra.mxu0 0.0
    %4266 = vmatprep.subr.mxu0 0.0
    %4267 = vmatpush1.msra.mxu0 0.0
    %4268 = vmatprep.subr.mxu0 0.0
    %4269 = vmatpush1.msra.mxu0 0.0
    %4270 = vmatprep.subr.mxu0 0.0
    %4271 = vmatpush1.msra.mxu0 0.0
    %4272 = vmatprep.subr.mxu0 0.0
    %4273 = vmatpush1.msra.mxu0 0.0
    %4274 = vmatprep.subr.mxu0 0.0
    %4275 = vmatpush1.msra.mxu0 0.0
    %4276 = vmatprep.subr.mxu0 0.0
    %4277 = vmatpush1.msra.mxu0 0.0
    %4278 = vmatprep.subr.mxu0 0.0
    %4279 = vmatpush1.msra.mxu0 0.0
    %4280 = vmatprep.subr.mxu0 0.0
    %4281 = vmatpush1.msra.mxu0 0.0
    %4282 = vmatprep.subr.mxu0 0.0
    %4283 = vmatpush1.msra.mxu0 0.0
    %4284 = vmatprep.subr.mxu0 0.0
    %4285 = vmatpush1.msra.mxu0 0.0
    %4286 = vmatprep.subr.mxu0 0.0
    %4287 = vmatpush1.msra.mxu0 0.0
    %4288 = vmatprep.subr.mxu0 0.0
    %4289 = vmatpush1.msra.mxu0 0.0
    %4290 = vmatprep.subr.mxu0 0.0
    %4291 = vmatpush1.msra.mxu0 0.0
    %4292 = vmatprep.subr.mxu0 0.0
    %4293 = vmatpush1.msra.mxu0 0.0
    %4294 = vmatprep.subr.mxu0 0.0
    %4295 = vmatpush1.msra.mxu0 0.0
    %4296 = vmatprep.mubr.f32.mxu0 0.0
    %4297 = vmatmul.mubr.f32.gmra.mrb[0].mxu0 %v4230
    %v4298 = vpop.f32.mrb[0].mxu0
    %v4299 = vadd.f32 %v264, %v4298
    %v4300 = vpop.f32.mrb[0].mxu0
    %4301 = vdwg.mxu0
    %v4302 = vxor.u32 %v4299, 2147483648
    %v4303 = vmul.f32 %v4302, 1.442695
    %v4304 = vpow.pop %v4303
    %v4305 = vadd.f32 %v4304, 1.0
    %v4306 = vrcp.pop %v4305
    %v4307 = vmul.f32 1.0, %v4306
    %v4308 = vtanh.pop %v4299
    %v4309 = vmul.f32 %v4307, %v3665
    %4311 = vrot.lane.b32.xlu0 %v4308, 64
    %v4312 = vpop.permute.xlu0 %4311
    %v4314 = vmul.f32 %v4307, %v4312
    %4316 = vrot.lane.b32.xlu0 %v4314, 32
    %v4317 = vpop.permute.xlu0 %4316
    %v4319 = vadd.f32 %v4309, %v4317
    %v4320 = vtanh.pop %v4319
    %4322 = vrot.lane.b32.xlu0 %v4320, 64
    %v4323 = vpop.permute.xlu0 %4322
    %v4325 = vmul.f32 %v4307, %v4323
    %4326 = vrot.lane.b32.xlu0 %v3671, 44
    %v4327 = vpop.permute.xlu0 %4326
    %4329 = vrot.lane.b32.xlu0 %v4099, 76
    %v4330 = vpop.permute.xlu0 %4329
    %4332 = vrot.lane.b32.xlu0 %v3780, 108
    %v4333 = vpop.permute.xlu0 %4332
    %v4335 = vsel %vm363, %v4106, %v4327
    %v4336 = vsel %vm365, %v4335, %v4330
    %v4337 = vsel %vm367, %v4336, %v4333
    %v4339 = vsel %vm384, %v4337, 0
    %4341 = vmatprep.subr.mxu0 0.0
    %4342 = vmatpush1.msra.mxu0 %v369
    %4343 = vmatprep.subr.mxu0 0.0
    %4344 = vmatpush1.msra.mxu0 %v370
    %4345 = vmatprep.subr.mxu0 0.0
    %4346 = vmatpush1.msra.mxu0 %v371
    %4347 = vmatprep.subr.mxu0 0.0
    %4348 = vmatpush1.msra.mxu0 %v372
    %4349 = vmatprep.subr.mxu0 0.0
    %4350 = vmatpush1.msra.mxu0 %v373
    %4351 = vmatprep.subr.mxu0 0.0
    %4352 = vmatpush1.msra.mxu0 %v374
    %4353 = vmatprep.subr.mxu0 0.0
    %4354 = vmatpush1.msra.mxu0 %v375
    %4355 = vmatprep.subr.mxu0 0.0
    %4356 = vmatpush1.msra.mxu0 %v376
    %4357 = vmatprep.subr.mxu0 0.0
    %4358 = vmatpush1.msra.mxu0 %v377
    %4359 = vmatprep.subr.mxu0 0.0
    %4360 = vmatpush1.msra.mxu0 %v378
    %4361 = vmatprep.subr.mxu0 0.0
    %4362 = vmatpush1.msra.mxu0 %v379
    %4363 = vmatprep.subr.mxu0 0.0
    %4364 = vmatpush1.msra.mxu0 %v380
    %4365 = vmatprep.subr.mxu0 0.0
    %4366 = vmatpush1.msra.mxu0 %v381
    %4367 = vmatprep.subr.mxu0 0.0
    %4368 = vmatpush1.msra.mxu0 %v390
    %4369 = vmatprep.subr.mxu0 0.0
    %4370 = vmatpush1.msra.mxu0 0.0
    %4371 = vmatprep.subr.mxu0 0.0
    %4372 = vmatpush1.msra.mxu0 0.0
    %4373 = vmatprep.subr.mxu0 0.0
    %4374 = vmatpush1.msra.mxu0 0.0
    %4375 = vmatprep.subr.mxu0 0.0
    %4376 = vmatpush1.msra.mxu0 0.0
    %4377 = vmatprep.subr.mxu0 0.0
    %4378 = vmatpush1.msra.mxu0 0.0
    %4379 = vmatprep.subr.mxu0 0.0
    %4380 = vmatpush1.msra.mxu0 0.0
    %4381 = vmatprep.subr.mxu0 0.0
    %4382 = vmatpush1.msra.mxu0 0.0
    %4383 = vmatprep.subr.mxu0 0.0
    %4384 = vmatpush1.msra.mxu0 0.0
    %4385 = vmatprep.subr.mxu0 0.0
    %4386 = vmatpush1.msra.mxu0 0.0
    %4387 = vmatprep.subr.mxu0 0.0
    %4388 = vmatpush1.msra.mxu0 0.0
    %4389 = vmatprep.subr.mxu0 0.0
    %4390 = vmatpush1.msra.mxu0 0.0
    %4391 = vmatprep.subr.mxu0 0.0
    %4392 = vmatpush1.msra.mxu0 0.0
    %4393 = vmatprep.subr.mxu0 0.0
    %4394 = vmatpush1.msra.mxu0 0.0
    %4395 = vmatprep.subr.mxu0 0.0
    %4396 = vmatpush1.msra.mxu0 0.0
    %4397 = vmatprep.subr.mxu0 0.0
    %4398 = vmatpush1.msra.mxu0 0.0
    %4399 = vmatprep.subr.mxu0 0.0
    %4400 = vmatpush1.msra.mxu0 0.0
    %4401 = vmatprep.subr.mxu0 0.0
    %4402 = vmatpush1.msra.mxu0 0.0
    %4403 = vmatprep.subr.mxu0 0.0
    %4404 = vmatpush1.msra.mxu0 0.0
    %4405 = vmatprep.mubr.f32.mxu0 0.0
    %4406 = vmatmul.mubr.f32.gmra.mrb[0].mxu0 %v4339
    %v4407 = vpop.f32.mrb[0].mxu0
    %v4408 = vadd.f32 %v383, %v4407
    %v4409 = vpop.f32.mrb[0].mxu0
    %4410 = vdwg.mxu0
    %v4411 = vxor.u32 %v4408, 2147483648
    %v4412 = vmul.f32 %v4411, 1.442695
    %v4413 = vpow.pop %v4412
    %v4414 = vadd.f32 %v4413, 1.0
    %v4415 = vrcp.pop %v4414
    %v4416 = vmul.f32 1.0, %v4415
    %v4417 = vtanh.pop %v4408
    %v4418 = vmul.f32 %v4416, %v3774
    %4420 = vrot.lane.b32.xlu0 %v4417, 64
    %v4421 = vpop.permute.xlu0 %4420
    %v4423 = vmul.f32 %v4416, %v4421
    %4425 = vrot.lane.b32.xlu0 %v4423, 32
    %v4426 = vpop.permute.xlu0 %4425
    %v4428 = vadd.f32 %v4418, %v4426
    %v4429 = vtanh.pop %v4428
    %4431 = vrot.lane.b32.xlu0 %v4429, 64
    %v4432 = vpop.permute.xlu0 %4431
    %v4434 = vmul.f32 %v4416, %v4432
    %4436 = vrot.lane.b32.xlu0 %v4434, 32
    %v4437 = vpop.permute.xlu0 %4436
    %4439 = vrot.lane.b32.xlu0 %v3885, 64
    %v4440 = vpop.permute.xlu0 %4439
    %v4442 = vsel %vm254, %v4437, %v4440
    %v4444 = vsel %vm265, %v4442, 0
    %4446 = vmatprep.subr.mxu0 0.0
    %4447 = vmatpush1.msra.mxu0 %v491
    %4448 = vmatprep.subr.mxu0 0.0
    %4449 = vmatpush1.msra.mxu0 %v492
    %4450 = vmatprep.subr.mxu0 0.0
    %4451 = vmatpush1.msra.mxu0 %v493
    %4452 = vmatprep.subr.mxu0 0.0
    %4453 = vmatpush1.msra.mxu0 %v494
    %4454 = vmatprep.subr.mxu0 0.0
    %4455 = vmatpush1.msra.mxu0 %v495
    %4456 = vmatprep.subr.mxu0 0.0
    %4457 = vmatpush1.msra.mxu0 %v496
    %4458 = vmatprep.subr.mxu0 0.0
    %4459 = vmatpush1.msra.mxu0 %v497
    %4460 = vmatprep.subr.mxu0 0.0
    %4461 = vmatpush1.msra.mxu0 %v498
    %4462 = vmatprep.subr.mxu0 0.0
    %4463 = vmatpush1.msra.mxu0 0.0
    %4464 = vmatprep.subr.mxu0 0.0
    %4465 = vmatpush1.msra.mxu0 0.0
    %4466 = vmatprep.subr.mxu0 0.0
    %4467 = vmatpush1.msra.mxu0 0.0
    %4468 = vmatprep.subr.mxu0 0.0
    %4469 = vmatpush1.msra.mxu0 0.0
    %4470 = vmatprep.subr.mxu0 0.0
    %4471 = vmatpush1.msra.mxu0 0.0
    %4472 = vmatprep.subr.mxu0 0.0
    %4473 = vmatpush1.msra.mxu0 0.0
    %4474 = vmatprep.subr.mxu0 0.0
    %4475 = vmatpush1.msra.mxu0 0.0
    %4476 = vmatprep.subr.mxu0 0.0
    %4477 = vmatpush1.msra.mxu0 0.0
    %4478 = vmatprep.subr.mxu0 0.0
    %4479 = vmatpush1.msra.mxu0 0.0
    %4480 = vmatprep.subr.mxu0 0.0
    %4481 = vmatpush1.msra.mxu0 0.0
    %4482 = vmatprep.subr.mxu0 0.0
    %4483 = vmatpush1.msra.mxu0 0.0
    %4484 = vmatprep.subr.mxu0 0.0
    %4485 = vmatpush1.msra.mxu0 0.0
    %4486 = vmatprep.subr.mxu0 0.0
    %4487 = vmatpush1.msra.mxu0 0.0
    %4488 = vmatprep.subr.mxu0 0.0
    %4489 = vmatpush1.msra.mxu0 0.0
    %4490 = vmatprep.subr.mxu0 0.0
    %4491 = vmatpush1.msra.mxu0 0.0
    %4492 = vmatprep.subr.mxu0 0.0
    %4493 = vmatpush1.msra.mxu0 0.0
    %4494 = vmatprep.subr.mxu0 0.0
    %4495 = vmatpush1.msra.mxu0 0.0
    %4496 = vmatprep.subr.mxu0 0.0
    %4497 = vmatpush1.msra.mxu0 0.0
    %4498 = vmatprep.subr.mxu0 0.0
    %4499 = vmatpush1.msra.mxu0 0.0
    %4500 = vmatprep.subr.mxu0 0.0
    %4501 = vmatpush1.msra.mxu0 0.0
    %4502 = vmatprep.subr.mxu0 0.0
    %4503 = vmatpush1.msra.mxu0 0.0
    %4504 = vmatprep.subr.mxu0 0.0
    %4505 = vmatpush1.msra.mxu0 0.0
    %4506 = vmatprep.subr.mxu0 0.0
    %4507 = vmatpush1.msra.mxu0 0.0
    %4508 = vmatprep.subr.mxu0 0.0
    %4509 = vmatpush1.msra.mxu0 0.0
    %4510 = vmatprep.mubr.f32.mxu0 0.0
    %4511 = vmatmul.mubr.f32.gmra.mrb[0].mxu0 %v4444
    %v4512 = vpop.f32.mrb[0].mxu0
    %v4513 = vadd.f32 %v499, %v4512
    %v4514 = vpop.f32.mrb[0].mxu0
    %4515 = vdwg.mxu0
    %v4516 = vxor.u32 %v4513, 2147483648
    %v4517 = vmul.f32 %v4516, 1.442695
    %v4518 = vpow.pop %v4517
    %v4519 = vadd.f32 %v4518, 1.0
    %v4520 = vrcp.pop %v4519
    %v4521 = vmul.f32 1.0, %v4520
    %v4522 = vtanh.pop %v4513
    %v4523 = vmul.f32 %v4521, %v3879
    %4525 = vrot.lane.b32.xlu0 %v4522, 64
    %v4526 = vpop.permute.xlu0 %4525
    %v4528 = vmul.f32 %v4521, %v4526
    %4530 = vrot.lane.b32.xlu0 %v4528, 32
    %v4531 = vpop.permute.xlu0 %4530
    %v4533 = vadd.f32 %v4523, %v4531
    %v4534 = vtanh.pop %v4533
    %4536 = vrot.lane.b32.xlu0 %v4534, 64
    %v4537 = vpop.permute.xlu0 %4536
    %v4539 = vmul.f32 %v4521, %v4537
    %4540 = vrot.lane.b32.xlu0 %v3671, 38
    %v4541 = vpop.permute.xlu0 %4540
    %4543 = vrot.lane.b32.xlu0 %v3885, 70
    %v4544 = vpop.permute.xlu0 %4543
    %4546 = vrot.lane.b32.xlu0 %v3994, 102
    %v4547 = vpop.permute.xlu0 %4546
    %v4549 = vsel %vm597, %v4108, %v4541
    %v4550 = vsel %vm599, %v4549, %v4544
    %v4551 = vsel %vm601, %v4550, %v4547
    %v4553 = vsel %vm617, %v4551, 0
    %4555 = vmatprep.subr.mxu0 0.0
    %4556 = vmatpush1.msra.mxu0 %v603
    %4557 = vmatprep.subr.mxu0 0.0
    %4558 = vmatpush1.msra.mxu0 %v604
    %4559 = vmatprep.subr.mxu0 0.0
    %4560 = vmatpush1.msra.mxu0 %v605
    %4561 = vmatprep.subr.mxu0 0.0
    %4562 = vmatpush1.msra.mxu0 %v606
    %4563 = vmatprep.subr.mxu0 0.0
    %4564 = vmatpush1.msra.mxu0 %v607
    %4565 = vmatprep.subr.mxu0 0.0
    %4566 = vmatpush1.msra.mxu0 %v608
    %4567 = vmatprep.subr.mxu0 0.0
    %4568 = vmatpush1.msra.mxu0 %v609
    %4569 = vmatprep.subr.mxu0 0.0
    %4570 = vmatpush1.msra.mxu0 %v610
    %4571 = vmatprep.subr.mxu0 0.0
    %4572 = vmatpush1.msra.mxu0 %v611
    %4573 = vmatprep.subr.mxu0 0.0
    %4574 = vmatpush1.msra.mxu0 %v612
    %4575 = vmatprep.subr.mxu0 0.0
    %4576 = vmatpush1.msra.mxu0 %v613
    %4577 = vmatprep.subr.mxu0 0.0
    %4578 = vmatpush1.msra.mxu0 %v614
    %4579 = vmatprep.subr.mxu0 0.0
    %4580 = vmatpush1.msra.mxu0 %v623
    %4581 = vmatprep.subr.mxu0 0.0
    %4582 = vmatpush1.msra.mxu0 0.0
    %4583 = vmatprep.subr.mxu0 0.0
    %4584 = vmatpush1.msra.mxu0 0.0
    %4585 = vmatprep.subr.mxu0 0.0
    %4586 = vmatpush1.msra.mxu0 0.0
    %4587 = vmatprep.subr.mxu0 0.0
    %4588 = vmatpush1.msra.mxu0 0.0
    %4589 = vmatprep.subr.mxu0 0.0
    %4590 = vmatpush1.msra.mxu0 0.0
    %4591 = vmatprep.subr.mxu0 0.0
    %4592 = vmatpush1.msra.mxu0 0.0
    %4593 = vmatprep.subr.mxu0 0.0
    %4594 = vmatpush1.msra.mxu0 0.0
    %4595 = vmatprep.subr.mxu0 0.0
    %4596 = vmatpush1.msra.mxu0 0.0
    %4597 = vmatprep.subr.mxu0 0.0
    %4598 = vmatpush1.msra.mxu0 0.0
    %4599 = vmatprep.subr.mxu0 0.0
    %4600 = vmatpush1.msra.mxu0 0.0
    %4601 = vmatprep.subr.mxu0 0.0
    %4602 = vmatpush1.msra.mxu0 0.0
    %4603 = vmatprep.subr.mxu0 0.0
    %4604 = vmatpush1.msra.mxu0 0.0
    %4605 = vmatprep.subr.mxu0 0.0
    %4606 = vmatpush1.msra.mxu0 0.0
    %4607 = vmatprep.subr.mxu0 0.0
    %4608 = vmatpush1.msra.mxu0 0.0
    %4609 = vmatprep.subr.mxu0 0.0
    %4610 = vmatpush1.msra.mxu0 0.0
    %4611 = vmatprep.subr.mxu0 0.0
    %4612 = vmatpush1.msra.mxu0 0.0
    %4613 = vmatprep.subr.mxu0 0.0
    %4614 = vmatpush1.msra.mxu0 0.0
    %4615 = vmatprep.subr.mxu0 0.0
    %4616 = vmatpush1.msra.mxu0 0.0
    %4617 = vmatprep.subr.mxu0 0.0
    %4618 = vmatpush1.msra.mxu0 0.0
    %4619 = vmatprep.mubr.f32.mxu0 0.0
    %4620 = vmatmul.mubr.f32.gmra.mrb[0].mxu0 %v4553
    %v4621 = vpop.f32.mrb[0].mxu0
    %v4622 = vadd.f32 %v616, %v4621
    %v4623 = vpop.f32.mrb[0].mxu0
    %4624 = vdwg.mxu0
    %v4625 = vxor.u32 %v4622, 2147483648
    %v4626 = vmul.f32 %v4625, 1.442695
    %v4627 = vpow.pop %v4626
    %v4628 = vadd.f32 %v4627, 1.0
    %v4629 = vrcp.pop %v4628
    %v4630 = vmul.f32 1.0, %v4629
    %v4631 = vtanh.pop %v4622
    %v4632 = vmul.f32 %v4630, %v3988
    %4634 = vrot.lane.b32.xlu0 %v4631, 64
    %v4635 = vpop.permute.xlu0 %4634
    %v4637 = vmul.f32 %v4630, %v4635
    %4639 = vrot.lane.b32.xlu0 %v4637, 32
    %v4640 = vpop.permute.xlu0 %4639
    %v4642 = vadd.f32 %v4632, %v4640
    %v4643 = vtanh.pop %v4642
    %4645 = vrot.lane.b32.xlu0 %v4643, 64
    %v4646 = vpop.permute.xlu0 %4645
    %v4648 = vmul.f32 %v4630, %v4646
    %4650 = vrot.lane.b32.xlu0 %v4648, 32
    %v4651 = vpop.permute.xlu0 %4650
    %4653 = vrot.lane.b32.xlu0 %v4099, 64
    %v4654 = vpop.permute.xlu0 %4653
    %v4656 = vsel %vm254, %v4651, %v4654
    %v4658 = vsel %vm265, %v4656, 0
    %4660 = vmatprep.subr.mxu0 0.0
    %4661 = vmatpush1.msra.mxu0 %v724
    %4662 = vmatprep.subr.mxu0 0.0
    %4663 = vmatpush1.msra.mxu0 %v725
    %4664 = vmatprep.subr.mxu0 0.0
    %4665 = vmatpush1.msra.mxu0 %v726
    %4666 = vmatprep.subr.mxu0 0.0
    %4667 = vmatpush1.msra.mxu0 %v727
    %4668 = vmatprep.subr.mxu0 0.0
    %4669 = vmatpush1.msra.mxu0 %v728
    %4670 = vmatprep.subr.mxu0 0.0
    %4671 = vmatpush1.msra.mxu0 %v729
    %4672 = vmatprep.subr.mxu0 0.0
    %4673 = vmatpush1.msra.mxu0 %v730
    %4674 = vmatprep.subr.mxu0 0.0
    %4675 = vmatpush1.msra.mxu0 %v731
    %4676 = vmatprep.subr.mxu0 0.0
    %4677 = vmatpush1.msra.mxu0 0.0
    %4678 = vmatprep.subr.mxu0 0.0
    %4679 = vmatpush1.msra.mxu0 0.0
    %4680 = vmatprep.subr.mxu0 0.0
    %4681 = vmatpush1.msra.mxu0 0.0
    %4682 = vmatprep.subr.mxu0 0.0
    %4683 = vmatpush1.msra.mxu0 0.0
    %4684 = vmatprep.subr.mxu0 0.0
    %4685 = vmatpush1.msra.mxu0 0.0
    %4686 = vmatprep.subr.mxu0 0.0
    %4687 = vmatpush1.msra.mxu0 0.0
    %4688 = vmatprep.subr.mxu0 0.0
    %4689 = vmatpush1.msra.mxu0 0.0
    %4690 = vmatprep.subr.mxu0 0.0
    %4691 = vmatpush1.msra.mxu0 0.0
    %4692 = vmatprep.subr.mxu0 0.0
    %4693 = vmatpush1.msra.mxu0 0.0
    %4694 = vmatprep.subr.mxu0 0.0
    %4695 = vmatpush1.msra.mxu0 0.0
    %4696 = vmatprep.subr.mxu0 0.0
    %4697 = vmatpush1.msra.mxu0 0.0
    %4698 = vmatprep.subr.mxu0 0.0
    %4699 = vmatpush1.msra.mxu0 0.0
    %4700 = vmatprep.subr.mxu0 0.0
    %4701 = vmatpush1.msra.mxu0 0.0
    %4702 = vmatprep.subr.mxu0 0.0
    %4703 = vmatpush1.msra.mxu0 0.0
    %4704 = vmatprep.subr.mxu0 0.0
    %4705 = vmatpush1.msra.mxu0 0.0
    %4706 = vmatprep.subr.mxu0 0.0
    %4707 = vmatpush1.msra.mxu0 0.0
    %4708 = vmatprep.subr.mxu0 0.0
    %4709 = vmatpush1.msra.mxu0 0.0
    %4710 = vmatprep.subr.mxu0 0.0
    %4711 = vmatpush1.msra.mxu0 0.0
    %4712 = vmatprep.subr.mxu0 0.0
    %4713 = vmatpush1.msra.mxu0 0.0
    %4714 = vmatprep.subr.mxu0 0.0
    %4715 = vmatpush1.msra.mxu0 0.0
    %4716 = vmatprep.subr.mxu0 0.0
    %4717 = vmatpush1.msra.mxu0 0.0
    %4718 = vmatprep.subr.mxu0 0.0
    %4719 = vmatpush1.msra.mxu0 0.0
    %4720 = vmatprep.subr.mxu0 0.0
    %4721 = vmatpush1.msra.mxu0 0.0
    %4722 = vmatprep.subr.mxu0 0.0
    %4723 = vmatpush1.msra.mxu0 0.0
    %4724 = vmatprep.mubr.f32.mxu0 0.0
    %4725 = vmatmul.mubr.f32.gmra.mrb[0].mxu0 %v4658
    %v4726 = vpop.f32.mrb[0].mxu0
    %v4727 = vadd.f32 %v732, %v4726
    %v4728 = vpop.f32.mrb[0].mxu0
    %4729 = vdwg.mxu0
    %v4730 = vxor.u32 %v4727, 2147483648
    %v4731 = vmul.f32 %v4730, 1.442695
    %v4732 = vpow.pop %v4731
    %v4733 = vadd.f32 %v4732, 1.0
    %v4734 = vrcp.pop %v4733
    %v4735 = vmul.f32 1.0, %v4734
    %v4736 = vtanh.pop %v4727
    %v4737 = vmul.f32 %v4735, %v4093
    %4739 = vrot.lane.b32.xlu0 %v4736, 64
    %v4740 = vpop.permute.xlu0 %4739
    %v4742 = vmul.f32 %v4735, %v4740
    %4744 = vrot.lane.b32.xlu0 %v4742, 32
    %v4745 = vpop.permute.xlu0 %4744
    %v4747 = vadd.f32 %v4737, %v4745
    %v4748 = vtanh.pop %v4747
    %4750 = vrot.lane.b32.xlu0 %v4748, 64
    %v4751 = vpop.permute.xlu0 %4750
    %v4753 = vmul.f32 %v4735, %v4751
    %v4754 = vadd.f32 %v4100, %v4325
    %v4755 = vadd.f32 %v4101, %v4539
    %v4756 = vadd.f32 %v4102, %v4753
    %s4757 = scalar_lea.vmem %s0, 14
    %v4758 = vld [vmem:[%s4757] sm:$0x3]
    %s4759 = scalar_lea.vmem %s1, 14
    %v4760 = vld [vmem:[%s4759] sm:$0x3]
    %s4761 = scalar_lea.vmem %s2, 14
    %v4762 = vld [vmem:[%s4761] sm:$0x3]
    %4764 = vrot.lane.b32.xlu0 %v4539, 42
    %v4765 = vpop.permute.xlu0 %4764
    %4768 = vrot.lane.b32.xlu0 %v4753, 74
    %v4769 = vpop.permute.xlu0 %4768
    %4771 = vrot.lane.b32.xlu0 %v4219, 106
    %v4772 = vpop.permute.xlu0 %4771
    %v4774 = vsel %vm127, %v4758, %v4765
    %v4775 = vsel %vm129, %v4774, %v4769
    %v4776 = vsel %vm131, %v4775, %v4772
    %v4778 = vsel %vm148, %v4776, 0
    %4780 = vmatprep.subr.mxu0 0.0
    %4781 = vmatpush1.msra.mxu0 %v133
    %4782 = vmatprep.subr.mxu0 0.0
    %4783 = vmatpush1.msra.mxu0 %v134
    %4784 = vmatprep.subr.mxu0 0.0
    %4785 = vmatpush1.msra.mxu0 %v135
    %4786 = vmatprep.subr.mxu0 0.0
    %4787 = vmatpush1.msra.mxu0 %v136
    %4788 = vmatprep.subr.mxu0 0.0
    %4789 = vmatpush1.msra.mxu0 %v137
    %4790 = vmatprep.subr.mxu0 0.0
    %4791 = vmatpush1.msra.mxu0 %v138
    %4792 = vmatprep.subr.mxu0 0.0
    %4793 = vmatpush1.msra.mxu0 %v139
    %4794 = vmatprep.subr.mxu0 0.0
    %4795 = vmatpush1.msra.mxu0 %v140
    %4796 = vmatprep.subr.mxu0 0.0
    %4797 = vmatpush1.msra.mxu0 %v141
    %4798 = vmatprep.subr.mxu0 0.0
    %4799 = vmatpush1.msra.mxu0 %v142
    %4800 = vmatprep.subr.mxu0 0.0
    %4801 = vmatpush1.msra.mxu0 %v143
    %4802 = vmatprep.subr.mxu0 0.0
    %4803 = vmatpush1.msra.mxu0 %v144
    %4804 = vmatprep.subr.mxu0 0.0
    %4805 = vmatpush1.msra.mxu0 %v145
    %4806 = vmatprep.subr.mxu0 0.0
    %4807 = vmatpush1.msra.mxu0 %v154
    %4808 = vmatprep.subr.mxu0 0.0
    %4809 = vmatpush1.msra.mxu0 0.0
    %4810 = vmatprep.subr.mxu0 0.0
    %4811 = vmatpush1.msra.mxu0 0.0
    %4812 = vmatprep.subr.mxu0 0.0
    %4813 = vmatpush1.msra.mxu0 0.0
    %4814 = vmatprep.subr.mxu0 0.0
    %4815 = vmatpush1.msra.mxu0 0.0
    %4816 = vmatprep.subr.mxu0 0.0
    %4817 = vmatpush1.msra.mxu0 0.0
    %4818 = vmatprep.subr.mxu0 0.0
    %4819 = vmatpush1.msra.mxu0 0.0
    %4820 = vmatprep.subr.mxu0 0.0
    %4821 = vmatpush1.msra.mxu0 0.0
    %4822 = vmatprep.subr.mxu0 0.0
    %4823 = vmatpush1.msra.mxu0 0.0
    %4824 = vmatprep.subr.mxu0 0.0
    %4825 = vmatpush1.msra.mxu0 0.0
    %4826 = vmatprep.subr.mxu0 0.0
    %4827 = vmatpush1.msra.mxu0 0.0
    %4828 = vmatprep.subr.mxu0 0.0
    %4829 = vmatpush1.msra.mxu0 0.0
    %4830 = vmatprep.subr.mxu0 0.0
    %4831 = vmatpush1.msra.mxu0 0.0
    %4832 = vmatprep.subr.mxu0 0.0
    %4833 = vmatpush1.msra.mxu0 0.0
    %4834 = vmatprep.subr.mxu0 0.0
    %4835 = vmatpush1.msra.mxu0 0.0
    %4836 = vmatprep.subr.mxu0 0.0
    %4837 = vmatpush1.msra.mxu0 0.0
    %4838 = vmatprep.subr.mxu0 0.0
    %4839 = vmatpush1.msra.mxu0 0.0
    %4840 = vmatprep.subr.mxu0 0.0
    %4841 = vmatpush1.msra.mxu0 0.0
    %4842 = vmatprep.subr.mxu0 0.0
    %4843 = vmatpush1.msra.mxu0 0.0
    %4844 = vmatprep.mubr.f32.mxu0 0.0
    %4845 = vmatmul.mubr.f32.gmra.mrb[0].mxu0 %v4778
    %v4846 = vpop.f32.mrb[0].mxu0
    %v4847 = vadd.f32 %v147, %v4846
    %v4848 = vpop.f32.mrb[0].mxu0
    %4849 = vdwg.mxu0
    %v4850 = vxor.u32 %v4847, 2147483648
    %v4851 = vmul.f32 %v4850, 1.442695
    %v4852 = vpow.pop %v4851
    %v4853 = vadd.f32 %v4852, 1.0
    %v4854 = vrcp.pop %v4853
    %v4855 = vmul.f32 1.0, %v4854
    %v4856 = vtanh.pop %v4847
    %v4857 = vmul.f32 %v4855, %v4213
    %4859 = vrot.lane.b32.xlu0 %v4856, 64
    %v4860 = vpop.permute.xlu0 %4859
    %v4862 = vmul.f32 %v4855, %v4860
    %4864 = vrot.lane.b32.xlu0 %v4862, 32
    %v4865 = vpop.permute.xlu0 %4864
    %v4867 = vadd.f32 %v4857, %v4865
    %v4868 = vtanh.pop %v4867
    %4870 = vrot.lane.b32.xlu0 %v4868, 64
    %v4871 = vpop.permute.xlu0 %4870
    %v4873 = vmul.f32 %v4855, %v4871
    %4875 = vrot.lane.b32.xlu0 %v4873, 32
    %v4876 = vpop.permute.xlu0 %4875
    %4879 = vrot.lane.b32.xlu0 %v4325, 64
    %v4880 = vpop.permute.xlu0 %4879
    %v4882 = vsel %vm254, %v4876, %v4880
    %v4884 = vsel %vm265, %v4882, 0
    %4886 = vmatprep.subr.mxu0 0.0
    %4887 = vmatpush1.msra.mxu0 %v256
    %4888 = vmatprep.subr.mxu0 0.0
    %4889 = vmatpush1.msra.mxu0 %v257
    %4890 = vmatprep.subr.mxu0 0.0
    %4891 = vmatpush1.msra.mxu0 %v258
    %4892 = vmatprep.subr.mxu0 0.0
    %4893 = vmatpush1.msra.mxu0 %v259
    %4894 = vmatprep.subr.mxu0 0.0
    %4895 = vmatpush1.msra.mxu0 %v260
    %4896 = vmatprep.subr.mxu0 0.0
    %4897 = vmatpush1.msra.mxu0 %v261
    %4898 = vmatprep.subr.mxu0 0.0
    %4899 = vmatpush1.msra.mxu0 %v262
    %4900 = vmatprep.subr.mxu0 0.0
    %4901 = vmatpush1.msra.mxu0 %v263
    %4902 = vmatprep.subr.mxu0 0.0
    %4903 = vmatpush1.msra.mxu0 0.0
    %4904 = vmatprep.subr.mxu0 0.0
    %4905 = vmatpush1.msra.mxu0 0.0
    %4906 = vmatprep.subr.mxu0 0.0
    %4907 = vmatpush1.msra.mxu0 0.0
    %4908 = vmatprep.subr.mxu0 0.0
    %4909 = vmatpush1.msra.mxu0 0.0
    %4910 = vmatprep.subr.mxu0 0.0
    %4911 = vmatpush1.msra.mxu0 0.0
    %4912 = vmatprep.subr.mxu0 0.0
    %4913 = vmatpush1.msra.mxu0 0.0
    %4914 = vmatprep.subr.mxu0 0.0
    %4915 = vmatpush1.msra.mxu0 0.0
    %4916 = vmatprep.subr.mxu0 0.0
    %4917 = vmatpush1.msra.mxu0 0.0
    %4918 = vmatprep.subr.mxu0 0.0
    %4919 = vmatpush1.msra.mxu0 0.0
    %4920 = vmatprep.subr.mxu0 0.0
    %4921 = vmatpush1.msra.mxu0 0.0
    %4922 = vmatprep.subr.mxu0 0.0
    %4923 = vmatpush1.msra.mxu0 0.0
    %4924 = vmatprep.subr.mxu0 0.0
    %4925 = vmatpush1.msra.mxu0 0.0
    %4926 = vmatprep.subr.mxu0 0.0
    %4927 = vmatpush1.msra.mxu0 0.0
    %4928 = vmatprep.subr.mxu0 0.0
    %4929 = vmatpush1.msra.mxu0 0.0
    %4930 = vmatprep.subr.mxu0 0.0
    %4931 = vmatpush1.msra.mxu0 0.0
    %4932 = vmatprep.subr.mxu0 0.0
    %4933 = vmatpush1.msra.mxu0 0.0
    %4934 = vmatprep.subr.mxu0 0.0
    %4935 = vmatpush1.msra.mxu0 0.0
    %4936 = vmatprep.subr.mxu0 0.0
    %4937 = vmatpush1.msra.mxu0 0.0
    %4938 = vmatprep.subr.mxu0 0.0
    %4939 = vmatpush1.msra.mxu0 0.0
    %4940 = vmatprep.subr.mxu0 0.0
    %4941 = vmatpush1.msra.mxu0 0.0
    %4942 = vmatprep.subr.mxu0 0.0
    %4943 = vmatpush1.msra.mxu0 0.0
    %4944 = vmatprep.subr.mxu0 0.0
    %4945 = vmatpush1.msra.mxu0 0.0
    %4946 = vmatprep.subr.mxu0 0.0
    %4947 = vmatpush1.msra.mxu0 0.0
    %4948 = vmatprep.subr.mxu0 0.0
    %4949 = vmatpush1.msra.mxu0 0.0
    %4950 = vmatprep.mubr.f32.mxu0 0.0
    %4951 = vmatmul.mubr.f32.gmra.mrb[0].mxu0 %v4884
    %v4952 = vpop.f32.mrb[0].mxu0
    %v4953 = vadd.f32 %v264, %v4952
    %v4954 = vpop.f32.mrb[0].mxu0
    %4955 = vdwg.mxu0
    %v4956 = vxor.u32 %v4953, 2147483648
    %v4957 = vmul.f32 %v4956, 1.442695
    %v4958 = vpow.pop %v4957
    %v4959 = vadd.f32 %v4958, 1.0
    %v4960 = vrcp.pop %v4959
    %v4961 = vmul.f32 1.0, %v4960
    %v4962 = vtanh.pop %v4953
    %v4963 = vmul.f32 %v4961, %v4319
    %4965 = vrot.lane.b32.xlu0 %v4962, 64
    %v4966 = vpop.permute.xlu0 %4965
    %v4968 = vmul.f32 %v4961, %v4966
    %4970 = vrot.lane.b32.xlu0 %v4968, 32
    %v4971 = vpop.permute.xlu0 %4970
    %v4973 = vadd.f32 %v4963, %v4971
    %v4974 = vtanh.pop %v4973
    %4976 = vrot.lane.b32.xlu0 %v4974, 64
    %v4977 = vpop.permute.xlu0 %4976
    %v4979 = vmul.f32 %v4961, %v4977
    %4980 = vrot.lane.b32.xlu0 %v4325, 44
    %v4981 = vpop.permute.xlu0 %4980
    %4983 = vrot.lane.b32.xlu0 %v4753, 76
    %v4984 = vpop.permute.xlu0 %4983
    %4986 = vrot.lane.b32.xlu0 %v4434, 108
    %v4987 = vpop.permute.xlu0 %4986
    %v4989 = vsel %vm363, %v4760, %v4981
    %v4990 = vsel %vm365, %v4989, %v4984
    %v4991 = vsel %vm367, %v4990, %v4987
    %v4993 = vsel %vm384, %v4991, 0
    %4995 = vmatprep.subr.mxu0 0.0
    %4996 = vmatpush1.msra.mxu0 %v369
    %4997 = vmatprep.subr.mxu0 0.0
    %4998 = vmatpush1.msra.mxu0 %v370
    %4999 = vmatprep.subr.mxu0 0.0
    %5000 = vmatpush1.msra.mxu0 %v371
    %5001 = vmatprep.subr.mxu0 0.0
    %5002 = vmatpush1.msra.mxu0 %v372
    %5003 = vmatprep.subr.mxu0 0.0
    %5004 = vmatpush1.msra.mxu0 %v373
    %5005 = vmatprep.subr.mxu0 0.0
    %5006 = vmatpush1.msra.mxu0 %v374
    %5007 = vmatprep.subr.mxu0 0.0
    %5008 = vmatpush1.msra.mxu0 %v375
    %5009 = vmatprep.subr.mxu0 0.0
    %5010 = vmatpush1.msra.mxu0 %v376
    %5011 = vmatprep.subr.mxu0 0.0
    %5012 = vmatpush1.msra.mxu0 %v377
    %5013 = vmatprep.subr.mxu0 0.0
    %5014 = vmatpush1.msra.mxu0 %v378
    %5015 = vmatprep.subr.mxu0 0.0
    %5016 = vmatpush1.msra.mxu0 %v379
    %5017 = vmatprep.subr.mxu0 0.0
    %5018 = vmatpush1.msra.mxu0 %v380
    %5019 = vmatprep.subr.mxu0 0.0
    %5020 = vmatpush1.msra.mxu0 %v381
    %5021 = vmatprep.subr.mxu0 0.0
    %5022 = vmatpush1.msra.mxu0 %v390
    %5023 = vmatprep.subr.mxu0 0.0
    %5024 = vmatpush1.msra.mxu0 0.0
    %5025 = vmatprep.subr.mxu0 0.0
    %5026 = vmatpush1.msra.mxu0 0.0
    %5027 = vmatprep.subr.mxu0 0.0
    %5028 = vmatpush1.msra.mxu0 0.0
    %5029 = vmatprep.subr.mxu0 0.0
    %5030 = vmatpush1.msra.mxu0 0.0
    %5031 = vmatprep.subr.mxu0 0.0
    %5032 = vmatpush1.msra.mxu0 0.0
    %5033 = vmatprep.subr.mxu0 0.0
    %5034 = vmatpush1.msra.mxu0 0.0
    %5035 = vmatprep.subr.mxu0 0.0
    %5036 = vmatpush1.msra.mxu0 0.0
    %5037 = vmatprep.subr.mxu0 0.0
    %5038 = vmatpush1.msra.mxu0 0.0
    %5039 = vmatprep.subr.mxu0 0.0
    %5040 = vmatpush1.msra.mxu0 0.0
    %5041 = vmatprep.subr.mxu0 0.0
    %5042 = vmatpush1.msra.mxu0 0.0
    %5043 = vmatprep.subr.mxu0 0.0
    %5044 = vmatpush1.msra.mxu0 0.0
    %5045 = vmatprep.subr.mxu0 0.0
    %5046 = vmatpush1.msra.mxu0 0.0
    %5047 = vmatprep.subr.mxu0 0.0
    %5048 = vmatpush1.msra.mxu0 0.0
    %5049 = vmatprep.subr.mxu0 0.0
    %5050 = vmatpush1.msra.mxu0 0.0
    %5051 = vmatprep.subr.mxu0 0.0
    %5052 = vmatpush1.msra.mxu0 0.0
    %5053 = vmatprep.subr.mxu0 0.0
    %5054 = vmatpush1.msra.mxu0 0.0
    %5055 = vmatprep.subr.mxu0 0.0
    %5056 = vmatpush1.msra.mxu0 0.0
    %5057 = vmatprep.subr.mxu0 0.0
    %5058 = vmatpush1.msra.mxu0 0.0
    %5059 = vmatprep.mubr.f32.mxu0 0.0
    %5060 = vmatmul.mubr.f32.gmra.mrb[0].mxu0 %v4993
    %v5061 = vpop.f32.mrb[0].mxu0
    %v5062 = vadd.f32 %v383, %v5061
    %v5063 = vpop.f32.mrb[0].mxu0
    %5064 = vdwg.mxu0
    %v5065 = vxor.u32 %v5062, 2147483648
    %v5066 = vmul.f32 %v5065, 1.442695
    %v5067 = vpow.pop %v5066
    %v5068 = vadd.f32 %v5067, 1.0
    %v5069 = vrcp.pop %v5068
    %v5070 = vmul.f32 1.0, %v5069
    %v5071 = vtanh.pop %v5062
    %v5072 = vmul.f32 %v5070, %v4428
    %5074 = vrot.lane.b32.xlu0 %v5071, 64
    %v5075 = vpop.permute.xlu0 %5074
    %v5077 = vmul.f32 %v5070, %v5075
    %5079 = vrot.lane.b32.xlu0 %v5077, 32
    %v5080 = vpop.permute.xlu0 %5079
    %v5082 = vadd.f32 %v5072, %v5080
    %v5083 = vtanh.pop %v5082
    %5085 = vrot.lane.b32.xlu0 %v5083, 64
    %v5086 = vpop.permute.xlu0 %5085
    %v5088 = vmul.f32 %v5070, %v5086
    %5090 = vrot.lane.b32.xlu0 %v5088, 32
    %v5091 = vpop.permute.xlu0 %5090
    %5093 = vrot.lane.b32.xlu0 %v4539, 64
    %v5094 = vpop.permute.xlu0 %5093
    %v5096 = vsel %vm254, %v5091, %v5094
    %v5098 = vsel %vm265, %v5096, 0
    %5100 = vmatprep.subr.mxu0 0.0
    %5101 = vmatpush1.msra.mxu0 %v491
    %5102 = vmatprep.subr.mxu0 0.0
    %5103 = vmatpush1.msra.mxu0 %v492
    %5104 = vmatprep.subr.mxu0 0.0
    %5105 = vmatpush1.msra.mxu0 %v493
    %5106 = vmatprep.subr.mxu0 0.0
    %5107 = vmatpush1.msra.mxu0 %v494
    %5108 = vmatprep.subr.mxu0 0.0
    %5109 = vmatpush1.msra.mxu0 %v495
    %5110 = vmatprep.subr.mxu0 0.0
    %5111 = vmatpush1.msra.mxu0 %v496
    %5112 = vmatprep.subr.mxu0 0.0
    %5113 = vmatpush1.msra.mxu0 %v497
    %5114 = vmatprep.subr.mxu0 0.0
    %5115 = vmatpush1.msra.mxu0 %v498
    %5116 = vmatprep.subr.mxu0 0.0
    %5117 = vmatpush1.msra.mxu0 0.0
    %5118 = vmatprep.subr.mxu0 0.0
    %5119 = vmatpush1.msra.mxu0 0.0
    %5120 = vmatprep.subr.mxu0 0.0
    %5121 = vmatpush1.msra.mxu0 0.0
    %5122 = vmatprep.subr.mxu0 0.0
    %5123 = vmatpush1.msra.mxu0 0.0
    %5124 = vmatprep.subr.mxu0 0.0
    %5125 = vmatpush1.msra.mxu0 0.0
    %5126 = vmatprep.subr.mxu0 0.0
    %5127 = vmatpush1.msra.mxu0 0.0
    %5128 = vmatprep.subr.mxu0 0.0
    %5129 = vmatpush1.msra.mxu0 0.0
    %5130 = vmatprep.subr.mxu0 0.0
    %5131 = vmatpush1.msra.mxu0 0.0
    %5132 = vmatprep.subr.mxu0 0.0
    %5133 = vmatpush1.msra.mxu0 0.0
    %5134 = vmatprep.subr.mxu0 0.0
    %5135 = vmatpush1.msra.mxu0 0.0
    %5136 = vmatprep.subr.mxu0 0.0
    %5137 = vmatpush1.msra.mxu0 0.0
    %5138 = vmatprep.subr.mxu0 0.0
    %5139 = vmatpush1.msra.mxu0 0.0
    %5140 = vmatprep.subr.mxu0 0.0
    %5141 = vmatpush1.msra.mxu0 0.0
    %5142 = vmatprep.subr.mxu0 0.0
    %5143 = vmatpush1.msra.mxu0 0.0
    %5144 = vmatprep.subr.mxu0 0.0
    %5145 = vmatpush1.msra.mxu0 0.0
    %5146 = vmatprep.subr.mxu0 0.0
    %5147 = vmatpush1.msra.mxu0 0.0
    %5148 = vmatprep.subr.mxu0 0.0
    %5149 = vmatpush1.msra.mxu0 0.0
    %5150 = vmatprep.subr.mxu0 0.0
    %5151 = vmatpush1.msra.mxu0 0.0
    %5152 = vmatprep.subr.mxu0 0.0
    %5153 = vmatpush1.msra.mxu0 0.0
    %5154 = vmatprep.subr.mxu0 0.0
    %5155 = vmatpush1.msra.mxu0 0.0
    %5156 = vmatprep.subr.mxu0 0.0
    %5157 = vmatpush1.msra.mxu0 0.0
    %5158 = vmatprep.subr.mxu0 0.0
    %5159 = vmatpush1.msra.mxu0 0.0
    %5160 = vmatprep.subr.mxu0 0.0
    %5161 = vmatpush1.msra.mxu0 0.0
    %5162 = vmatprep.subr.mxu0 0.0
    %5163 = vmatpush1.msra.mxu0 0.0
    %5164 = vmatprep.mubr.f32.mxu0 0.0
    %5165 = vmatmul.mubr.f32.gmra.mrb[0].mxu0 %v5098
    %v5166 = vpop.f32.mrb[0].mxu0
    %v5167 = vadd.f32 %v499, %v5166
    %v5168 = vpop.f32.mrb[0].mxu0
    %5169 = vdwg.mxu0
    %v5170 = vxor.u32 %v5167, 2147483648
    %v5171 = vmul.f32 %v5170, 1.442695
    %v5172 = vpow.pop %v5171
    %v5173 = vadd.f32 %v5172, 1.0
    %v5174 = vrcp.pop %v5173
    %v5175 = vmul.f32 1.0, %v5174
    %v5176 = vtanh.pop %v5167
    %v5177 = vmul.f32 %v5175, %v4533
    %5179 = vrot.lane.b32.xlu0 %v5176, 64
    %v5180 = vpop.permute.xlu0 %5179
    %v5182 = vmul.f32 %v5175, %v5180
    %5184 = vrot.lane.b32.xlu0 %v5182, 32
    %v5185 = vpop.permute.xlu0 %5184
    %v5187 = vadd.f32 %v5177, %v5185
    %v5188 = vtanh.pop %v5187
    %5190 = vrot.lane.b32.xlu0 %v5188, 64
    %v5191 = vpop.permute.xlu0 %5190
    %v5193 = vmul.f32 %v5175, %v5191
    %5194 = vrot.lane.b32.xlu0 %v4325, 38
    %v5195 = vpop.permute.xlu0 %5194
    %5197 = vrot.lane.b32.xlu0 %v4539, 70
    %v5198 = vpop.permute.xlu0 %5197
    %5200 = vrot.lane.b32.xlu0 %v4648, 102
    %v5201 = vpop.permute.xlu0 %5200
    %v5203 = vsel %vm597, %v4762, %v5195
    %v5204 = vsel %vm599, %v5203, %v5198
    %v5205 = vsel %vm601, %v5204, %v5201
    %v5207 = vsel %vm617, %v5205, 0
    %5209 = vmatprep.subr.mxu0 0.0
    %5210 = vmatpush1.msra.mxu0 %v603
    %5211 = vmatprep.subr.mxu0 0.0
    %5212 = vmatpush1.msra.mxu0 %v604
    %5213 = vmatprep.subr.mxu0 0.0
    %5214 = vmatpush1.msra.mxu0 %v605
    %5215 = vmatprep.subr.mxu0 0.0
    %5216 = vmatpush1.msra.mxu0 %v606
    %5217 = vmatprep.subr.mxu0 0.0
    %5218 = vmatpush1.msra.mxu0 %v607
    %5219 = vmatprep.subr.mxu0 0.0
    %5220 = vmatpush1.msra.mxu0 %v608
    %5221 = vmatprep.subr.mxu0 0.0
    %5222 = vmatpush1.msra.mxu0 %v609
    %5223 = vmatprep.subr.mxu0 0.0
    %5224 = vmatpush1.msra.mxu0 %v610
    %5225 = vmatprep.subr.mxu0 0.0
    %5226 = vmatpush1.msra.mxu0 %v611
    %5227 = vmatprep.subr.mxu0 0.0
    %5228 = vmatpush1.msra.mxu0 %v612
    %5229 = vmatprep.subr.mxu0 0.0
    %5230 = vmatpush1.msra.mxu0 %v613
    %5231 = vmatprep.subr.mxu0 0.0
    %5232 = vmatpush1.msra.mxu0 %v614
    %5233 = vmatprep.subr.mxu0 0.0
    %5234 = vmatpush1.msra.mxu0 %v623
    %5235 = vmatprep.subr.mxu0 0.0
    %5236 = vmatpush1.msra.mxu0 0.0
    %5237 = vmatprep.subr.mxu0 0.0
    %5238 = vmatpush1.msra.mxu0 0.0
    %5239 = vmatprep.subr.mxu0 0.0
    %5240 = vmatpush1.msra.mxu0 0.0
    %5241 = vmatprep.subr.mxu0 0.0
    %5242 = vmatpush1.msra.mxu0 0.0
    %5243 = vmatprep.subr.mxu0 0.0
    %5244 = vmatpush1.msra.mxu0 0.0
    %5245 = vmatprep.subr.mxu0 0.0
    %5246 = vmatpush1.msra.mxu0 0.0
    %5247 = vmatprep.subr.mxu0 0.0
    %5248 = vmatpush1.msra.mxu0 0.0
    %5249 = vmatprep.subr.mxu0 0.0
    %5250 = vmatpush1.msra.mxu0 0.0
    %5251 = vmatprep.subr.mxu0 0.0
    %5252 = vmatpush1.msra.mxu0 0.0
    %5253 = vmatprep.subr.mxu0 0.0
    %5254 = vmatpush1.msra.mxu0 0.0
    %5255 = vmatprep.subr.mxu0 0.0
    %5256 = vmatpush1.msra.mxu0 0.0
    %5257 = vmatprep.subr.mxu0 0.0
    %5258 = vmatpush1.msra.mxu0 0.0
    %5259 = vmatprep.subr.mxu0 0.0
    %5260 = vmatpush1.msra.mxu0 0.0
    %5261 = vmatprep.subr.mxu0 0.0
    %5262 = vmatpush1.msra.mxu0 0.0
    %5263 = vmatprep.subr.mxu0 0.0
    %5264 = vmatpush1.msra.mxu0 0.0
    %5265 = vmatprep.subr.mxu0 0.0
    %5266 = vmatpush1.msra.mxu0 0.0
    %5267 = vmatprep.subr.mxu0 0.0
    %5268 = vmatpush1.msra.mxu0 0.0
    %5269 = vmatprep.subr.mxu0 0.0
    %5270 = vmatpush1.msra.mxu0 0.0
    %5271 = vmatprep.subr.mxu0 0.0
    %5272 = vmatpush1.msra.mxu0 0.0
    %5273 = vmatprep.mubr.f32.mxu0 0.0
    %5274 = vmatmul.mubr.f32.gmra.mrb[0].mxu0 %v5207
    %v5275 = vpop.f32.mrb[0].mxu0
    %v5276 = vadd.f32 %v616, %v5275
    %v5277 = vpop.f32.mrb[0].mxu0
    %5278 = vdwg.mxu0
    %v5279 = vxor.u32 %v5276, 2147483648
    %v5280 = vmul.f32 %v5279, 1.442695
    %v5281 = vpow.pop %v5280
    %v5282 = vadd.f32 %v5281, 1.0
    %v5283 = vrcp.pop %v5282
    %v5284 = vmul.f32 1.0, %v5283
    %v5285 = vtanh.pop %v5276
    %v5286 = vmul.f32 %v5284, %v4642
    %5288 = vrot.lane.b32.xlu0 %v5285, 64
    %v5289 = vpop.permute.xlu0 %5288
    %v5291 = vmul.f32 %v5284, %v5289
    %5293 = vrot.lane.b32.xlu0 %v5291, 32
    %v5294 = vpop.permute.xlu0 %5293
    %v5296 = vadd.f32 %v5286, %v5294
    %v5297 = vtanh.pop %v5296
    %5299 = vrot.lane.b32.xlu0 %v5297, 64
    %v5300 = vpop.permute.xlu0 %5299
    %v5302 = vmul.f32 %v5284, %v5300
    %5304 = vrot.lane.b32.xlu0 %v5302, 32
    %v5305 = vpop.permute.xlu0 %5304
    %5307 = vrot.lane.b32.xlu0 %v4753, 64
    %v5308 = vpop.permute.xlu0 %5307
    %v5310 = vsel %vm254, %v5305, %v5308
    %v5312 = vsel %vm265, %v5310, 0
    %5314 = vmatprep.subr.mxu0 0.0
    %5315 = vmatpush1.msra.mxu0 %v724
    %5316 = vmatprep.subr.mxu0 0.0
    %5317 = vmatpush1.msra.mxu0 %v725
    %5318 = vmatprep.subr.mxu0 0.0
    %5319 = vmatpush1.msra.mxu0 %v726
    %5320 = vmatprep.subr.mxu0 0.0
    %5321 = vmatpush1.msra.mxu0 %v727
    %5322 = vmatprep.subr.mxu0 0.0
    %5323 = vmatpush1.msra.mxu0 %v728
    %5324 = vmatprep.subr.mxu0 0.0
    %5325 = vmatpush1.msra.mxu0 %v729
    %5326 = vmatprep.subr.mxu0 0.0
    %5327 = vmatpush1.msra.mxu0 %v730
    %5328 = vmatprep.subr.mxu0 0.0
    %5329 = vmatpush1.msra.mxu0 %v731
    %5330 = vmatprep.subr.mxu0 0.0
    %5331 = vmatpush1.msra.mxu0 0.0
    %5332 = vmatprep.subr.mxu0 0.0
    %5333 = vmatpush1.msra.mxu0 0.0
    %5334 = vmatprep.subr.mxu0 0.0
    %5335 = vmatpush1.msra.mxu0 0.0
    %5336 = vmatprep.subr.mxu0 0.0
    %5337 = vmatpush1.msra.mxu0 0.0
    %5338 = vmatprep.subr.mxu0 0.0
    %5339 = vmatpush1.msra.mxu0 0.0
    %5340 = vmatprep.subr.mxu0 0.0
    %5341 = vmatpush1.msra.mxu0 0.0
    %5342 = vmatprep.subr.mxu0 0.0
    %5343 = vmatpush1.msra.mxu0 0.0
    %5344 = vmatprep.subr.mxu0 0.0
    %5345 = vmatpush1.msra.mxu0 0.0
    %5346 = vmatprep.subr.mxu0 0.0
    %5347 = vmatpush1.msra.mxu0 0.0
    %5348 = vmatprep.subr.mxu0 0.0
    %5349 = vmatpush1.msra.mxu0 0.0
    %5350 = vmatprep.subr.mxu0 0.0
    %5351 = vmatpush1.msra.mxu0 0.0
    %5352 = vmatprep.subr.mxu0 0.0
    %5353 = vmatpush1.msra.mxu0 0.0
    %5354 = vmatprep.subr.mxu0 0.0
    %5355 = vmatpush1.msra.mxu0 0.0
    %5356 = vmatprep.subr.mxu0 0.0
    %5357 = vmatpush1.msra.mxu0 0.0
    %5358 = vmatprep.subr.mxu0 0.0
    %5359 = vmatpush1.msra.mxu0 0.0
    %5360 = vmatprep.subr.mxu0 0.0
    %5361 = vmatpush1.msra.mxu0 0.0
    %5362 = vmatprep.subr.mxu0 0.0
    %5363 = vmatpush1.msra.mxu0 0.0
    %5364 = vmatprep.subr.mxu0 0.0
    %5365 = vmatpush1.msra.mxu0 0.0
    %5366 = vmatprep.subr.mxu0 0.0
    %5367 = vmatpush1.msra.mxu0 0.0
    %5368 = vmatprep.subr.mxu0 0.0
    %5369 = vmatpush1.msra.mxu0 0.0
    %5370 = vmatprep.subr.mxu0 0.0
    %5371 = vmatpush1.msra.mxu0 0.0
    %5372 = vmatprep.subr.mxu0 0.0
    %5373 = vmatpush1.msra.mxu0 0.0
    %5374 = vmatprep.subr.mxu0 0.0
    %5375 = vmatpush1.msra.mxu0 0.0
    %5376 = vmatprep.subr.mxu0 0.0
    %5377 = vmatpush1.msra.mxu0 0.0
    %5378 = vmatprep.mubr.f32.mxu0 0.0
    %5379 = vmatmul.mubr.f32.gmra.mrb[0].mxu0 %v5312
    %v5380 = vpop.f32.mrb[0].mxu0
    %v5381 = vadd.f32 %v732, %v5380
    %v5382 = vpop.f32.mrb[0].mxu0
    %5383 = vdwg.mxu0
    %v5384 = vxor.u32 %v5381, 2147483648
    %v5385 = vmul.f32 %v5384, 1.442695
    %v5386 = vpow.pop %v5385
    %v5387 = vadd.f32 %v5386, 1.0
    %v5388 = vrcp.pop %v5387
    %v5389 = vmul.f32 1.0, %v5388
    %v5390 = vtanh.pop %v5381
    %v5391 = vmul.f32 %v5389, %v4747
    %5393 = vrot.lane.b32.xlu0 %v5390, 64
    %v5394 = vpop.permute.xlu0 %5393
    %v5396 = vmul.f32 %v5389, %v5394
    %5398 = vrot.lane.b32.xlu0 %v5396, 32
    %v5399 = vpop.permute.xlu0 %5398
    %v5401 = vadd.f32 %v5391, %v5399
    %v5402 = vtanh.pop %v5401
    %5404 = vrot.lane.b32.xlu0 %v5402, 64
    %v5405 = vpop.permute.xlu0 %5404
    %v5407 = vmul.f32 %v5389, %v5405
    %v5408 = vadd.f32 %v4754, %v4979
    %v5409 = vadd.f32 %v4755, %v5193
    %v5410 = vadd.f32 %v4756, %v5407
    %5412 = vrot.lane.b32.xlu0 %v5408, 32
    %v5413 = vpop.permute.xlu0 %5412
    %5416 = vrot.lane.b32.xlu0 %v5409, 64
    %v5417 = vpop.permute.xlu0 %5416
    %5420 = vrot.lane.b32.xlu0 %v5410, 96
    %v5421 = vpop.permute.xlu0 %5420
    %v5423 = vsel %vm254, %v5413, %v5417
    %v5424 = vsel %vm265, %v5423, %v5421
    %v5425 = vld [vmem:[%s15] sm:$0x3]
    %v5426 = vmul.f32 %v5424, %v5425
    %vm5427 = vcmask 779264
    %v5428 = vsel %vm5427, %v5426, 0.0
    %5429 = vadd.xlane.f32.xlu0 %v5428
    %v5430 = vpop.xlane.xlu0 %5429
    %v5431 = vld [vmem:[%s16] sm:$0x3]
    %v5432 = vadd.f32 %v5430, %v5431
    %vm5433 = vcmask 1024
    %5434 = vst.msk [vmem:[%s17] sm:$0x3] %vm5433, %v5432
    // Predicated region
    $region90: #{_lambda_.1} parent=1 // pred_check
      _
    $region91: #{_lambda_.1} parent=1 // pred_check_branch
      %5436 = sbr.rel (0) target = $region93
    $region92: #{_lambda_.1} parent=1 // pred_region
      _
    $region93: #{_lambda_.1} parent=1 // pred_fallthru
      _
    // Predicated region
    $region94: #{_lambda_.1} parent=1 // pred_check
      _
    $region95: #{_lambda_.1} parent=1 // pred_check_branch
      %5438 = sbr.rel (0) target = $region97
    $region96: #{_lambda_.1} parent=1 // pred_region
      _
    $region97: #{_lambda_.1} parent=1 // pred_fallthru
      _
    %5439 = vsyncpa [#allocation3], 1
    %5440 = vsyncpa [#allocation5], 1
    %5441 = vsyncpa [#allocation8], 1

</llo_original>
